<compile_context>
chip_gen: v6e
topology: v6e:2x2x1
jax: 0.10.0
libtpu: 0.0.40
codegen_flags: <defaults>
</compile_context>

<pallas_src>
import functools

import numpy as np
import jax
import jax.numpy as jnp
from jax import lax
from jax.experimental import pallas as pl
from jax.experimental.pallas import tpu as pltpu  # noqa: F401

# ----------------------------- configuration (small shapes) -----------------------------
N, E, H, W = 2, 32, 8, 16    # batch, in_channels, height, width
NC = 8                       # num_channels
T = 8                        # max_length
BN_EPS = 1e-5
ENC_STRIDES = [(1, 2), (2, 2), (2, 2), (2, 2)]


# ----------------------------- tap-gather matrices (static, numpy) ----------------------
def _conv_tap_gathers(hin, win, hout, wout, stride):
    """G[t] @ flat(act) selects, for tap t = di*3 + dj of a 3x3/pad-1 conv with the
    given stride, the input pixel feeding each output pixel (all-zero rows where the
    tap falls into the zero padding)."""
    sh, sw = stride
    g = np.zeros((9, hout * wout, hin * win), np.float32)
    for di in range(3):
        for dj in range(3):
            t = di * 3 + dj
            for ho in range(hout):
                hi = sh * ho + di - 1
                if hi < 0 or hi >= hin:
                    continue
                for wo in range(wout):
                    wi = sw * wo + dj - 1
                    if wi < 0 or wi >= win:
                        continue
                    g[t, ho * wout + wo, hi * win + wi] = 1.0
    return g


def _upconv_tap_gathers(hsrc, wsrc, hout, wout):
    """Same, but with the decoder's nearest-neighbour upsample (hsrc,wsrc)->(hout,wout)
    folded into the gather (conv is stride 1, pad 1, output size = upsampled size)."""
    g = np.zeros((9, hout * wout, hsrc * wsrc), np.float32)
    for di in range(3):
        for dj in range(3):
            t = di * 3 + dj
            for ho in range(hout):
                a = ho + di - 1
                if a < 0 or a >= hout:
                    continue
                hs = (a * hsrc) // hout
                for wo in range(wout):
                    b = wo + dj - 1
                    if b < 0 or b >= wout:
                        continue
                    ws = (b * wsrc) // wout
                    g[t, ho * wout + wo, hs * wsrc + ws] = 1.0
    return g


def _positional_encoding_np(max_len, d):
    position = np.arange(max_len, dtype=np.float32)[:, None]
    div_term = np.exp(np.arange(0, d, 2, dtype=np.float32) * (-np.log(10000.0) / d))
    pe = np.zeros((max_len, d), np.float32)
    pe[:, 0::2] = np.sin(position * div_term)
    pe[:, 1::2] = np.cos(position * div_term)
    return pe


# ----------------------------- host-side operand preparation (once, outside jit) --------
def _prepare_operands(params, n, e, h, w, t_len):
    # per-layer spatial tap gathers (encoder convs, decoder upsample+conv), made
    # block-diagonal over the batch (batch rides the sublane axis in the kernel).
    raw = []
    hh, ww = h, w
    for sh, sw in ENC_STRIDES:
        ho, wo = (hh - 1) // sh + 1, (ww - 1) // sw + 1
        raw.append(_conv_tap_gathers(hh, ww, ho, wo, (sh, sw)))
        hh, ww = ho, wo
    for i in range(4):
        th, tw = (2 * hh, 2 * ww) if i < 3 else (h, w)
        raw.append(_upconv_tap_gathers(hh, ww, th, tw))
        hh, ww = th, tw
    g_ops = []
    for g in raw:
        _, so, si = g.shape
        gb = np.zeros((9, n * so, n * si), np.float32)
        for b in range(n):
            gb[:, b * so:(b + 1) * so, b * si:(b + 1) * si] = g
        g_ops.append(jnp.asarray(gb, dtype=jnp.bfloat16))        # 0/1 values: exact in bf16

    # eval-mode BatchNorm folding + per-layer weight matrices (shared across the batch).
    layer_params = list(params["enc"]) + list(params["dec"])
    folded, lane_w = [], 0
    for p in layer_params:
        wt = np.asarray(p["w"], np.float32)
        scale = np.asarray(p["gamma"], np.float32) / np.sqrt(np.asarray(p["var"], np.float32) + BN_EPS)
        wf = wt * scale[:, None, None, None]                                   # (Cout, Cin, 3, 3)
        bf = (np.asarray(p["b"], np.float32) - np.asarray(p["mean"], np.float32)) * scale \
             + np.asarray(p["beta"], np.float32)
        cout, cin = wf.shape[0], wf.shape[1]
        gather_first = cin < cout                  # only the last decoder layer (NC -> E)
        if gather_first:
            wm = np.transpose(wf, (2, 3, 1, 0)).reshape(9 * cin, cout)          # (9*Cin, Cout)
        else:
            wm = np.transpose(wf, (1, 2, 3, 0)).reshape(cin, 9 * cout)          # (Cin, 9*Cout)
        folded.append((wm, bf, cin, cout, gather_first))
        lane_w = max(lane_w, wm.shape[1])

    # one weight slab + one bias slab (12 DMA'd operands total instead of 26).
    meta, blocks, brows, off = [], [], [], 0
    for wm, bf, cin, cout, gather_first in folded:
        r, c = wm.shape
        rpad = -(-r // 16) * 16                    # 16-row aligned blocks (bf16 packing)
        blk = np.zeros((rpad, lane_w), np.float32)
        blk[:r, :c] = wm
        blocks.append(blk)
        brow = np.zeros((lane_w,), np.float32)
        brow[:cout] = bf
        brows.append(brow)
        meta.append((off, cin, cout, bool(gather_first)))
        off += rpad
    assert meta[-1][3], "last decoder layer is expected to be gather-first"
    w_slab = jnp.asarray(np.concatenate(blocks, axis=0), dtype=jnp.bfloat16)
    b_slab = jnp.asarray(np.stack(brows, axis=0), dtype=jnp.float32)

    # q = Linear(PositionalEncoding(zeros)): input independent / batch invariant,
    # pre-scaled by 1/sqrt(E), zero-padded to the slab lane width (no in-kernel slicing).
    # TODO(synk): Dropout(p=0.0) inside PositionalEncoding is a no-op; omitted.
    pe = _positional_encoding_np(t_len, e)
    q = pe @ np.asarray(params["proj_w"], np.float32).T + np.asarray(params["proj_b"], np.float32)
    q = q / np.sqrt(e)
    q_pad = np.zeros((t_len, lane_w), np.float32)
    q_pad[:, :e] = q
    q_op = jnp.asarray(q_pad, dtype=jnp.bfloat16)

    return (q_op, w_slab, b_slab) + tuple(g_ops), tuple(meta)


# ----------------------------- the single fused Pallas kernel ---------------------------
def _fused_kernel(x_ref, q_ref, w_ref, b_ref, *refs, layers, n_batch, hw):
    """Entire PositionAttention forward, VMEM resident.

    x_ref : (N*HW, E) f32   input features, rows = n*HW + h*W + w  (k == v == x)
    q_ref : (T, LW)   bf16  projected positional queries (pre-scaled, zero-padded)
    w_ref : (R, LW)   bf16  BN-folded per-layer weight slab (16-row-aligned blocks)
    b_ref : (8, LW)   f32   per-layer folded biases
    refs  : 8 gather stacks (9, N*S_out, N*S_in) bf16, then vec_ref, sco_ref.
    """
    n_layers = len(layers)
    g_refs = refs[:n_layers]
    vec_ref, sco_ref = refs[n_layers], refs[n_layers + 1]

    x = x_ref[...]
    act = x
    feats = []
    for l, (woff, cin, cout, gather_first) in enumerate(layers):
        g_ref = g_refs[l]
        a16 = act.astype(jnp.bfloat16)
        b_row = b_ref[l:l + 1, :]                                        # (1, LW)
        if not gather_first:
            # channel contraction first (Cout <= Cin): one shared weight dot,
            # then 9 accumulated 0/1 tap-gather dots (MXU, bf16 in / f32 acc).
            w_cat = w_ref[woff:woff + cin, :]                            # (Cin, 9*Cout)
            aw = jnp.dot(a16, w_cat, preferred_element_type=jnp.float32)
            aw16 = aw.astype(jnp.bfloat16)
            acc = jnp.zeros((g_ref.shape[1], cout), jnp.float32)
            for t in range(9):
                acc = acc + jnp.dot(g_ref[t], aw16[:, t * cout:(t + 1) * cout],
                                    preferred_element_type=jnp.float32)
            act = jnp.maximum(acc + b_row[:, :cout], 0.0)                # bias + ReLU
        else:
            # spatial gather first (Cin < Cout): 9 gather dots, one stacked-weight dot.
            gs = [jnp.dot(g_ref[t], a16,
                          preferred_element_type=jnp.float32).astype(jnp.bfloat16)
                  for t in range(9)]
            g_cat = jnp.concatenate(gs, axis=1)                          # (N*S_out, 9*Cin)
            w_stk = w_ref[woff:woff + 9 * cin, :]                        # (9*Cin, LW)
            acc = jnp.dot(g_cat, w_stk, preferred_element_type=jnp.float32)
            act = jnp.maximum(acc + b_row, 0.0)                          # cols >= Cout stay 0
        if l < 4:
            feats.append(act)                                            # encoder features
        elif l < 7:
            act = act + feats[6 - l]                                     # U-Net skips
    k_wide = act                                                         # (N*HW, LW); cols >= E are 0

    # attention: one score dot for the whole batch (q is batch invariant),
    # f32 softmax with EUP approx reciprocal + one Newton step, per-batch p @ v.
    q = q_ref[...]
    s_all = lax.dot_general(q, k_wide.astype(jnp.bfloat16),
                            (((1,), (1,)), ((), ())),
                            preferred_element_type=jnp.float32)          # (T, N*HW)
    for nb in range(n_batch):
        s = s_all[:, nb * hw:(nb + 1) * hw]
        s = s - jnp.max(s, axis=-1, keepdims=True)
        ex = jnp.exp(s)
        denom = jnp.sum(ex, axis=-1, keepdims=True)
        r = pl.reciprocal(denom, approx=True)                            # EUP slot
        r = r * (2.0 - denom * r)                                        # Newton step
        p = ex * r
        sco_ref[nb] = p                                                  # lane-dense (T, 128)
        vec_ref[nb] = jnp.dot(p, x[nb * hw:(nb + 1) * hw, :],            # p @ v stays f32
                              preferred_element_type=jnp.float32)


# ----------------------------- PositionAttention forward --------------------------------
def _forward_impl(x, *ops, meta, dims):
    n, e, h, w, t_len = dims
    hw = h * w
    # (N, E, H, W) -> (N*HW, E): the batch rides the sublane axis inside the kernel.
    x2d = jnp.transpose(x, (0, 2, 3, 1)).reshape(n * hw, e).astype(jnp.float32)
    kernel = functools.partial(_fused_kernel, layers=meta, n_batch=n, hw=hw)
    vec, sco = pl.pallas_call(
        kernel,
        out_shape=(jax.ShapeDtypeStruct((n, t_len, e), jnp.float32),
                   jax.ShapeDtypeStruct((n, t_len, hw), jnp.float32)),
    )(x2d, *ops)
    return vec, sco.reshape(n, t_len, h, w)


def make_position_attention(params, n, e, h, w, t_len):
    """Weight folding / gather construction happens once here (host side), not per trace."""
    ops, meta = _prepare_operands(params, n, e, h, w, t_len)
    fwd = jax.jit(functools.partial(_forward_impl, meta=meta, dims=(n, e, h, w, t_len)))
    return lambda x: fwd(x, *ops)


# ----------------------------- pure-JAX reference (for sanity check) ---------------------
def reference_forward(x_nchw, params):
    def cbr(x, p, stride):
        scale = p["gamma"] / jnp.sqrt(p["var"] + BN_EPS)
        y = lax.conv_general_dilated(x, p["w"], window_strides=stride,
                                     padding=((1, 1), (1, 1)),
                                     dimension_numbers=("NCHW", "OIHW", "NCHW"))
        y = y + p["b"][None, :, None, None]
        y = (y - p["mean"][None, :, None, None]) * scale[None, :, None, None] \
            + p["beta"][None, :, None, None]
        return jnp.maximum(y, 0.0)

    def up(x, oh, ow):
        _, _, hh, ww = x.shape
        hi = (jnp.arange(oh) * hh) // oh
        wi = (jnp.arange(ow) * ww) // ow
        return x[:, :, hi][:, :, :, wi]

    nb, e, h, w = x_nchw.shape
    k = x_nchw
    feats = []
    for i in range(4):
        k = cbr(k, params["enc"][i], ENC_STRIDES[i])
        feats.append(k)
    for i in range(3):
        k = up(k, k.shape[2] * 2, k.shape[3] * 2)
        k = cbr(k, params["dec"][i], (1, 1))
        k = k + feats[2 - i]
    k = up(k, h, w)
    k = cbr(k, params["dec"][3], (1, 1))

    q = jnp.asarray(_positional_encoding_np(T, e)) @ params["proj_w"].T + params["proj_b"]
    q = jnp.broadcast_to(q[None], (nb, T, e))
    s = jnp.einsum("nte,nep->ntp", q, k.reshape(nb, e, h * w)) / (e ** 0.5)
    s = jax.nn.softmax(s, axis=-1)
    v = jnp.transpose(x_nchw, (0, 2, 3, 1)).reshape(nb, h * w, e)
    vecs = jnp.einsum("ntp,npe->nte", s, v)
    return vecs, s.reshape(nb, T, h, w)


# ----------------------------- deterministic parameter setup ----------------------------
def make_conv_params(key, cin, cout):
    k1, k2, k3, k4, k5 = jax.random.split(key, 5)
    return dict(
        w=jax.random.normal(k1, (cout, cin, 3, 3), jnp.float32) / jnp.sqrt(9.0 * cin),
        b=0.01 * jax.random.normal(k2, (cout,), jnp.float32),
        gamma=1.0 + 0.1 * jax.random.normal(k3, (cout,), jnp.float32),
        beta=0.1 * jax.random.normal(k4, (cout,), jnp.float32),
        mean=0.1 * jax.random.normal(k5, (cout,), jnp.float32),
        var=jnp.ones((cout,), jnp.float32),
    )


def make_params(key):
    keys = jax.random.split(key, 10)
    enc_io = [(E, NC), (NC, NC), (NC, NC), (NC, NC)]
    dec_io = [(NC, NC), (NC, NC), (NC, NC), (NC, E)]
    enc = [make_conv_params(keys[i], cin, cout) for i, (cin, cout) in enumerate(enc_io)]
    dec = [make_conv_params(keys[4 + i], cin, cout) for i, (cin, cout) in enumerate(dec_io)]
    proj_w = jax.random.normal(keys[8], (E, E), jnp.float32) / jnp.sqrt(E)
    proj_b = 0.01 * jax.random.normal(keys[9], (E,), jnp.float32)
    return dict(enc=enc, dec=dec, proj_w=proj_w, proj_b=proj_b)


# ----------------------------- main ------------------------------------------------------
if __name__ == "__main__":
    key = jax.random.PRNGKey(0)
    kx, kp = jax.random.split(key)
    x = jax.random.normal(kx, (N, E, H, W), jnp.float32)     # NCHW, like the torch module
    params = make_params(kp)

    fwd = make_position_attention(params, N, E, H, W, T)
    attn_vecs, attn_scores = fwd(x)
    attn_vecs = jax.block_until_ready(attn_vecs)
    attn_scores = jax.block_until_ready(attn_scores)

    assert attn_vecs.shape == (N, T, E)
    assert attn_scores.shape == (N, T, H, W)
    assert bool(jnp.all(jnp.isfinite(attn_vecs))) and bool(jnp.all(jnp.isfinite(attn_scores)))

    # sanity check vs a pure-JAX reference (eval-mode BN).  Tolerance relaxed vs the
    # all-f32 version because the conv/score dots now use bf16 MXU inputs (f32 accum).
    ref_vecs, ref_scores = reference_forward(x, params)
    assert bool(jnp.max(jnp.abs(attn_scores - ref_scores)) < 5e-2)
    assert bool(jnp.max(jnp.abs(attn_vecs - ref_vecs)) < 5e-2)

    print("KERNEL_OK")
</pallas_src>

<mosaic_0001>
module attributes {stable_mosaic.version = 11 : i64} {
  func.func @_fused_kernel(%arg0: memref<256x32xf32, #tpu.memory_space<vmem>>, %arg1: memref<8x72xbf16, #tpu.memory_space<vmem>>, %arg2: memref<208x72xbf16, #tpu.memory_space<vmem>>, %arg3: memref<8x72xf32, #tpu.memory_space<vmem>>, %arg4: memref<9x128x256xbf16, #tpu.memory_space<vmem>>, %arg5: memref<9x32x128xbf16, #tpu.memory_space<vmem>>, %arg6: memref<9x8x32xbf16, #tpu.memory_space<vmem>>, %arg7: memref<9x2x8xbf16, #tpu.memory_space<vmem>>, %arg8: memref<9x8x2xbf16, #tpu.memory_space<vmem>>, %arg9: memref<9x32x8xbf16, #tpu.memory_space<vmem>>, %arg10: memref<9x128x32xbf16, #tpu.memory_space<vmem>>, %arg11: memref<9x256x128xbf16, #tpu.memory_space<vmem>>, %arg12: memref<2x8x32xf32, #tpu.memory_space<vmem>>, %arg13: memref<2x8x128xf32, #tpu.memory_space<vmem>>) attributes {dimension_semantics = [], scalar_prefetch = 0 : i64, scratch_operands = 0 : i64, tpu.core_type = #tpu.core_type<tc>} {
    %c0 = arith.constant 0 : index
    %c0_0 = arith.constant 0 : index
    %0 = vector.load %arg0[%c0, %c0_0] : memref<256x32xf32, #tpu.memory_space<vmem>>, vector<256x32xf32>
    %1 = arith.truncf %0 : vector<256x32xf32> to vector<256x32xbf16>
    %c0_1 = arith.constant 0 : index
    %c0_2 = arith.constant 0 : index
    %2 = vector.load %arg3[%c0_1, %c0_2] : memref<8x72xf32, #tpu.memory_space<vmem>>, vector<1x72xf32>
    %c0_3 = arith.constant 0 : index
    %c0_4 = arith.constant 0 : index
    %3 = vector.load %arg2[%c0_3, %c0_4] : memref<208x72xbf16, #tpu.memory_space<vmem>>, vector<32x72xbf16>
    %cst = arith.constant dense<0.000000e+00> : vector<256x72xf32>
    %4 = tpu.matmul %1, %3, %cst {dimension_numbers = #tpu.dot_dimension_numbers<[1], [0], [0], [1], [0, 0, 1, 1], [], []>} : vector<256x32xbf16>, vector<32x72xbf16>, vector<256x72xf32> -> vector<256x72xf32>
    %5 = arith.truncf %4 : vector<256x72xf32> to vector<256x72xbf16>
    %cst_5 = arith.constant 0.000000e+00 : f32
    %6 = vector.broadcast %cst_5 : f32 to vector<128x8xf32>
    %c0_6 = arith.constant 0 : index
    %c0_7 = arith.constant 0 : index
    %c0_8 = arith.constant 0 : index
    %7 = vector.load %arg4[%c0_6, %c0_7, %c0_8] : memref<9x128x256xbf16, #tpu.memory_space<vmem>>, vector<1x128x256xbf16>
    %8 = vector.shape_cast %7 : vector<1x128x256xbf16> to vector<128x256xbf16>
    %9 = vector.extract_strided_slice %5 {offsets = [0, 0], sizes = [256, 8], strides = [1, 1]} : vector<256x72xbf16> to vector<256x8xbf16>
    %cst_9 = arith.constant dense<0.000000e+00> : vector<128x8xf32>
    %10 = tpu.matmul %8, %9, %cst_9 {dimension_numbers = #tpu.dot_dimension_numbers<[1], [0], [0], [1], [0, 0, 1, 1], [], []>} : vector<128x256xbf16>, vector<256x8xbf16>, vector<128x8xf32> -> vector<128x8xf32>
    %11 = arith.addf %6, %10 : vector<128x8xf32>
    %c1 = arith.constant 1 : index
    %c0_10 = arith.constant 0 : index
    %c0_11 = arith.constant 0 : index
    %12 = vector.load %arg4[%c1, %c0_10, %c0_11] : memref<9x128x256xbf16, #tpu.memory_space<vmem>>, vector<1x128x256xbf16>
    %13 = vector.shape_cast %12 : vector<1x128x256xbf16> to vector<128x256xbf16>
    %14 = vector.extract_strided_slice %5 {offsets = [0, 8], sizes = [256, 8], strides = [1, 1]} : vector<256x72xbf16> to vector<256x8xbf16>
    %cst_12 = arith.constant dense<0.000000e+00> : vector<128x8xf32>
    %15 = tpu.matmul %13, %14, %cst_12 {dimension_numbers = #tpu.dot_dimension_numbers<[1], [0], [0], [1], [0, 0, 1, 1], [], []>} : vector<128x256xbf16>, vector<256x8xbf16>, vector<128x8xf32> -> vector<128x8xf32>
    %16 = arith.addf %11, %15 : vector<128x8xf32>
    %c2 = arith.constant 2 : index
    %c0_13 = arith.constant 0 : index
    %c0_14 = arith.constant 0 : index
    %17 = vector.load %arg4[%c2, %c0_13, %c0_14] : memref<9x128x256xbf16, #tpu.memory_space<vmem>>, vector<1x128x256xbf16>
    %18 = vector.shape_cast %17 : vector<1x128x256xbf16> to vector<128x256xbf16>
    %19 = vector.extract_strided_slice %5 {offsets = [0, 16], sizes = [256, 8], strides = [1, 1]} : vector<256x72xbf16> to vector<256x8xbf16>
    %cst_15 = arith.constant dense<0.000000e+00> : vector<128x8xf32>
    %20 = tpu.matmul %18, %19, %cst_15 {dimension_numbers = #tpu.dot_dimension_numbers<[1], [0], [0], [1], [0, 0, 1, 1], [], []>} : vector<128x256xbf16>, vector<256x8xbf16>, vector<128x8xf32> -> vector<128x8xf32>
    %21 = arith.addf %16, %20 : vector<128x8xf32>
    %c3 = arith.constant 3 : index
    %c0_16 = arith.constant 0 : index
    %c0_17 = arith.constant 0 : index
    %22 = vector.load %arg4[%c3, %c0_16, %c0_17] : memref<9x128x256xbf16, #tpu.memory_space<vmem>>, vector<1x128x256xbf16>
    %23 = vector.shape_cast %22 : vector<1x128x256xbf16> to vector<128x256xbf16>
    %24 = vector.extract_strided_slice %5 {offsets = [0, 24], sizes = [256, 8], strides = [1, 1]} : vector<256x72xbf16> to vector<256x8xbf16>
    %cst_18 = arith.constant dense<0.000000e+00> : vector<128x8xf32>
    %25 = tpu.matmul %23, %24, %cst_18 {dimension_numbers = #tpu.dot_dimension_numbers<[1], [0], [0], [1], [0, 0, 1, 1], [], []>} : vector<128x256xbf16>, vector<256x8xbf16>, vector<128x8xf32> -> vector<128x8xf32>
    %26 = arith.addf %21, %25 : vector<128x8xf32>
    %c4 = arith.constant 4 : index
    %c0_19 = arith.constant 0 : index
    %c0_20 = arith.constant 0 : index
    %27 = vector.load %arg4[%c4, %c0_19, %c0_20] : memref<9x128x256xbf16, #tpu.memory_space<vmem>>, vector<1x128x256xbf16>
    %28 = vector.shape_cast %27 : vector<1x128x256xbf16> to vector<128x256xbf16>
    %29 = vector.extract_strided_slice %5 {offsets = [0, 32], sizes = [256, 8], strides = [1, 1]} : vector<256x72xbf16> to vector<256x8xbf16>
    %cst_21 = arith.constant dense<0.000000e+00> : vector<128x8xf32>
    %30 = tpu.matmul %28, %29, %cst_21 {dimension_numbers = #tpu.dot_dimension_numbers<[1], [0], [0], [1], [0, 0, 1, 1], [], []>} : vector<128x256xbf16>, vector<256x8xbf16>, vector<128x8xf32> -> vector<128x8xf32>
    %31 = arith.addf %26, %30 : vector<128x8xf32>
    %c5 = arith.constant 5 : index
    %c0_22 = arith.constant 0 : index
    %c0_23 = arith.constant 0 : index
    %32 = vector.load %arg4[%c5, %c0_22, %c0_23] : memref<9x128x256xbf16, #tpu.memory_space<vmem>>, vector<1x128x256xbf16>
    %33 = vector.shape_cast %32 : vector<1x128x256xbf16> to vector<128x256xbf16>
    %34 = vector.extract_strided_slice %5 {offsets = [0, 40], sizes = [256, 8], strides = [1, 1]} : vector<256x72xbf16> to vector<256x8xbf16>
    %cst_24 = arith.constant dense<0.000000e+00> : vector<128x8xf32>
    %35 = tpu.matmul %33, %34, %cst_24 {dimension_numbers = #tpu.dot_dimension_numbers<[1], [0], [0], [1], [0, 0, 1, 1], [], []>} : vector<128x256xbf16>, vector<256x8xbf16>, vector<128x8xf32> -> vector<128x8xf32>
    %36 = arith.addf %31, %35 : vector<128x8xf32>
    %c6 = arith.constant 6 : index
    %c0_25 = arith.constant 0 : index
    %c0_26 = arith.constant 0 : index
    %37 = vector.load %arg4[%c6, %c0_25, %c0_26] : memref<9x128x256xbf16, #tpu.memory_space<vmem>>, vector<1x128x256xbf16>
    %38 = vector.shape_cast %37 : vector<1x128x256xbf16> to vector<128x256xbf16>
    %39 = vector.extract_strided_slice %5 {offsets = [0, 48], sizes = [256, 8], strides = [1, 1]} : vector<256x72xbf16> to vector<256x8xbf16>
    %cst_27 = arith.constant dense<0.000000e+00> : vector<128x8xf32>
    %40 = tpu.matmul %38, %39, %cst_27 {dimension_numbers = #tpu.dot_dimension_numbers<[1], [0], [0], [1], [0, 0, 1, 1], [], []>} : vector<128x256xbf16>, vector<256x8xbf16>, vector<128x8xf32> -> vector<128x8xf32>
    %41 = arith.addf %36, %40 : vector<128x8xf32>
    %c7 = arith.constant 7 : index
    %c0_28 = arith.constant 0 : index
    %c0_29 = arith.constant 0 : index
    %42 = vector.load %arg4[%c7, %c0_28, %c0_29] : memref<9x128x256xbf16, #tpu.memory_space<vmem>>, vector<1x128x256xbf16>
    %43 = vector.shape_cast %42 : vector<1x128x256xbf16> to vector<128x256xbf16>
    %44 = vector.extract_strided_slice %5 {offsets = [0, 56], sizes = [256, 8], strides = [1, 1]} : vector<256x72xbf16> to vector<256x8xbf16>
    %cst_30 = arith.constant dense<0.000000e+00> : vector<128x8xf32>
    %45 = tpu.matmul %43, %44, %cst_30 {dimension_numbers = #tpu.dot_dimension_numbers<[1], [0], [0], [1], [0, 0, 1, 1], [], []>} : vector<128x256xbf16>, vector<256x8xbf16>, vector<128x8xf32> -> vector<128x8xf32>
    %46 = arith.addf %41, %45 : vector<128x8xf32>
    %c8 = arith.constant 8 : index
    %c0_31 = arith.constant 0 : index
    %c0_32 = arith.constant 0 : index
    %47 = vector.load %arg4[%c8, %c0_31, %c0_32] : memref<9x128x256xbf16, #tpu.memory_space<vmem>>, vector<1x128x256xbf16>
    %48 = vector.shape_cast %47 : vector<1x128x256xbf16> to vector<128x256xbf16>
    %49 = vector.extract_strided_slice %5 {offsets = [0, 64], sizes = [256, 8], strides = [1, 1]} : vector<256x72xbf16> to vector<256x8xbf16>
    %cst_33 = arith.constant dense<0.000000e+00> : vector<128x8xf32>
    %50 = tpu.matmul %48, %49, %cst_33 {dimension_numbers = #tpu.dot_dimension_numbers<[1], [0], [0], [1], [0, 0, 1, 1], [], []>} : vector<128x256xbf16>, vector<256x8xbf16>, vector<128x8xf32> -> vector<128x8xf32>
    %51 = arith.addf %46, %50 : vector<128x8xf32>
    %52 = vector.extract_strided_slice %2 {offsets = [0, 0], sizes = [1, 8], strides = [1, 1]} : vector<1x72xf32> to vector<1x8xf32>
    %53 = vector.broadcast %52 : vector<1x8xf32> to vector<128x8xf32>
    %54 = arith.addf %51, %53 : vector<128x8xf32>
    %cst_34 = arith.constant 0.000000e+00 : f32
    %55 = vector.broadcast %cst_34 : f32 to vector<128x8xf32>
    %56 = arith.maximumf %54, %55 : vector<128x8xf32>
    %57 = arith.truncf %56 : vector<128x8xf32> to vector<128x8xbf16>
    %c1_35 = arith.constant 1 : index
    %c0_36 = arith.constant 0 : index
    %58 = vector.load %arg3[%c1_35, %c0_36] : memref<8x72xf32, #tpu.memory_space<vmem>>, vector<1x72xf32>
    %c32 = arith.constant 32 : index
    %c0_37 = arith.constant 0 : index
    %59 = vector.load %arg2[%c32, %c0_37] : memref<208x72xbf16, #tpu.memory_space<vmem>>, vector<8x72xbf16>
    %cst_38 = arith.constant dense<0.000000e+00> : vector<128x72xf32>
    %60 = tpu.matmul %57, %59, %cst_38 {dimension_numbers = #tpu.dot_dimension_numbers<[1], [0], [0], [1], [0, 0, 1, 1], [], []>} : vector<128x8xbf16>, vector<8x72xbf16>, vector<128x72xf32> -> vector<128x72xf32>
    %61 = arith.truncf %60 : vector<128x72xf32> to vector<128x72xbf16>
    %cst_39 = arith.constant 0.000000e+00 : f32
    %62 = vector.broadcast %cst_39 : f32 to vector<32x8xf32>
    %c0_40 = arith.constant 0 : index
    %c0_41 = arith.constant 0 : index
    %c0_42 = arith.constant 0 : index
    %63 = vector.load %arg5[%c0_40, %c0_41, %c0_42] : memref<9x32x128xbf16, #tpu.memory_space<vmem>>, vector<1x32x128xbf16>
    %64 = vector.shape_cast %63 : vector<1x32x128xbf16> to vector<32x128xbf16>
    %65 = vector.extract_strided_slice %61 {offsets = [0, 0], sizes = [128, 8], strides = [1, 1]} : vector<128x72xbf16> to vector<128x8xbf16>
    %cst_43 = arith.constant dense<0.000000e+00> : vector<32x8xf32>
    %66 = tpu.matmul %64, %65, %cst_43 {dimension_numbers = #tpu.dot_dimension_numbers<[1], [0], [0], [1], [0, 0, 1, 1], [], []>} : vector<32x128xbf16>, vector<128x8xbf16>, vector<32x8xf32> -> vector<32x8xf32>
    %67 = arith.addf %62, %66 : vector<32x8xf32>
    %c1_44 = arith.constant 1 : index
    %c0_45 = arith.constant 0 : index
    %c0_46 = arith.constant 0 : index
    %68 = vector.load %arg5[%c1_44, %c0_45, %c0_46] : memref<9x32x128xbf16, #tpu.memory_space<vmem>>, vector<1x32x128xbf16>
    %69 = vector.shape_cast %68 : vector<1x32x128xbf16> to vector<32x128xbf16>
    %70 = vector.extract_strided_slice %61 {offsets = [0, 8], sizes = [128, 8], strides = [1, 1]} : vector<128x72xbf16> to vector<128x8xbf16>
    %cst_47 = arith.constant dense<0.000000e+00> : vector<32x8xf32>
    %71 = tpu.matmul %69, %70, %cst_47 {dimension_numbers = #tpu.dot_dimension_numbers<[1], [0], [0], [1], [0, 0, 1, 1], [], []>} : vector<32x128xbf16>, vector<128x8xbf16>, vector<32x8xf32> -> vector<32x8xf32>
    %72 = arith.addf %67, %71 : vector<32x8xf32>
    %c2_48 = arith.constant 2 : index
    %c0_49 = arith.constant 0 : index
    %c0_50 = arith.constant 0 : index
    %73 = vector.load %arg5[%c2_48, %c0_49, %c0_50] : memref<9x32x128xbf16, #tpu.memory_space<vmem>>, vector<1x32x128xbf16>
    %74 = vector.shape_cast %73 : vector<1x32x128xbf16> to vector<32x128xbf16>
    %75 = vector.extract_strided_slice %61 {offsets = [0, 16], sizes = [128, 8], strides = [1, 1]} : vector<128x72xbf16> to vector<128x8xbf16>
    %cst_51 = arith.constant dense<0.000000e+00> : vector<32x8xf32>
    %76 = tpu.matmul %74, %75, %cst_51 {dimension_numbers = #tpu.dot_dimension_numbers<[1], [0], [0], [1], [0, 0, 1, 1], [], []>} : vector<32x128xbf16>, vector<128x8xbf16>, vector<32x8xf32> -> vector<32x8xf32>
    %77 = arith.addf %72, %76 : vector<32x8xf32>
    %c3_52 = arith.constant 3 : index
    %c0_53 = arith.constant 0 : index
    %c0_54 = arith.constant 0 : index
    %78 = vector.load %arg5[%c3_52, %c0_53, %c0_54] : memref<9x32x128xbf16, #tpu.memory_space<vmem>>, vector<1x32x128xbf16>
    %79 = vector.shape_cast %78 : vector<1x32x128xbf16> to vector<32x128xbf16>
    %80 = vector.extract_strided_slice %61 {offsets = [0, 24], sizes = [128, 8], strides = [1, 1]} : vector<128x72xbf16> to vector<128x8xbf16>
    %cst_55 = arith.constant dense<0.000000e+00> : vector<32x8xf32>
    %81 = tpu.matmul %79, %80, %cst_55 {dimension_numbers = #tpu.dot_dimension_numbers<[1], [0], [0], [1], [0, 0, 1, 1], [], []>} : vector<32x128xbf16>, vector<128x8xbf16>, vector<32x8xf32> -> vector<32x8xf32>
    %82 = arith.addf %77, %81 : vector<32x8xf32>
    %c4_56 = arith.constant 4 : index
    %c0_57 = arith.constant 0 : index
    %c0_58 = arith.constant 0 : index
    %83 = vector.load %arg5[%c4_56, %c0_57, %c0_58] : memref<9x32x128xbf16, #tpu.memory_space<vmem>>, vector<1x32x128xbf16>
    %84 = vector.shape_cast %83 : vector<1x32x128xbf16> to vector<32x128xbf16>
    %85 = vector.extract_strided_slice %61 {offsets = [0, 32], sizes = [128, 8], strides = [1, 1]} : vector<128x72xbf16> to vector<128x8xbf16>
    %cst_59 = arith.constant dense<0.000000e+00> : vector<32x8xf32>
    %86 = tpu.matmul %84, %85, %cst_59 {dimension_numbers = #tpu.dot_dimension_numbers<[1], [0], [0], [1], [0, 0, 1, 1], [], []>} : vector<32x128xbf16>, vector<128x8xbf16>, vector<32x8xf32> -> vector<32x8xf32>
    %87 = arith.addf %82, %86 : vector<32x8xf32>
    %c5_60 = arith.constant 5 : index
    %c0_61 = arith.constant 0 : index
    %c0_62 = arith.constant 0 : index
    %88 = vector.load %arg5[%c5_60, %c0_61, %c0_62] : memref<9x32x128xbf16, #tpu.memory_space<vmem>>, vector<1x32x128xbf16>
    %89 = vector.shape_cast %88 : vector<1x32x128xbf16> to vector<32x128xbf16>
    %90 = vector.extract_strided_slice %61 {offsets = [0, 40], sizes = [128, 8], strides = [1, 1]} : vector<128x72xbf16> to vector<128x8xbf16>
    %cst_63 = arith.constant dense<0.000000e+00> : vector<32x8xf32>
    %91 = tpu.matmul %89, %90, %cst_63 {dimension_numbers = #tpu.dot_dimension_numbers<[1], [0], [0], [1], [0, 0, 1, 1], [], []>} : vector<32x128xbf16>, vector<128x8xbf16>, vector<32x8xf32> -> vector<32x8xf32>
    %92 = arith.addf %87, %91 : vector<32x8xf32>
    %c6_64 = arith.constant 6 : index
    %c0_65 = arith.constant 0 : index
    %c0_66 = arith.constant 0 : index
    %93 = vector.load %arg5[%c6_64, %c0_65, %c0_66] : memref<9x32x128xbf16, #tpu.memory_space<vmem>>, vector<1x32x128xbf16>
    %94 = vector.shape_cast %93 : vector<1x32x128xbf16> to vector<32x128xbf16>
    %95 = vector.extract_strided_slice %61 {offsets = [0, 48], sizes = [128, 8], strides = [1, 1]} : vector<128x72xbf16> to vector<128x8xbf16>
    %cst_67 = arith.constant dense<0.000000e+00> : vector<32x8xf32>
    %96 = tpu.matmul %94, %95, %cst_67 {dimension_numbers = #tpu.dot_dimension_numbers<[1], [0], [0], [1], [0, 0, 1, 1], [], []>} : vector<32x128xbf16>, vector<128x8xbf16>, vector<32x8xf32> -> vector<32x8xf32>
    %97 = arith.addf %92, %96 : vector<32x8xf32>
    %c7_68 = arith.constant 7 : index
    %c0_69 = arith.constant 0 : index
    %c0_70 = arith.constant 0 : index
    %98 = vector.load %arg5[%c7_68, %c0_69, %c0_70] : memref<9x32x128xbf16, #tpu.memory_space<vmem>>, vector<1x32x128xbf16>
    %99 = vector.shape_cast %98 : vector<1x32x128xbf16> to vector<32x128xbf16>
    %100 = vector.extract_strided_slice %61 {offsets = [0, 56], sizes = [128, 8], strides = [1, 1]} : vector<128x72xbf16> to vector<128x8xbf16>
    %cst_71 = arith.constant dense<0.000000e+00> : vector<32x8xf32>
    %101 = tpu.matmul %99, %100, %cst_71 {dimension_numbers = #tpu.dot_dimension_numbers<[1], [0], [0], [1], [0, 0, 1, 1], [], []>} : vector<32x128xbf16>, vector<128x8xbf16>, vector<32x8xf32> -> vector<32x8xf32>
    %102 = arith.addf %97, %101 : vector<32x8xf32>
    %c8_72 = arith.constant 8 : index
    %c0_73 = arith.constant 0 : index
    %c0_74 = arith.constant 0 : index
    %103 = vector.load %arg5[%c8_72, %c0_73, %c0_74] : memref<9x32x128xbf16, #tpu.memory_space<vmem>>, vector<1x32x128xbf16>
    %104 = vector.shape_cast %103 : vector<1x32x128xbf16> to vector<32x128xbf16>
    %105 = vector.extract_strided_slice %61 {offsets = [0, 64], sizes = [128, 8], strides = [1, 1]} : vector<128x72xbf16> to vector<128x8xbf16>
    %cst_75 = arith.constant dense<0.000000e+00> : vector<32x8xf32>
    %106 = tpu.matmul %104, %105, %cst_75 {dimension_numbers = #tpu.dot_dimension_numbers<[1], [0], [0], [1], [0, 0, 1, 1], [], []>} : vector<32x128xbf16>, vector<128x8xbf16>, vector<32x8xf32> -> vector<32x8xf32>
    %107 = arith.addf %102, %106 : vector<32x8xf32>
    %108 = vector.extract_strided_slice %58 {offsets = [0, 0], sizes = [1, 8], strides = [1, 1]} : vector<1x72xf32> to vector<1x8xf32>
    %109 = vector.broadcast %108 : vector<1x8xf32> to vector<32x8xf32>
    %110 = arith.addf %107, %109 : vector<32x8xf32>
    %cst_76 = arith.constant 0.000000e+00 : f32
    %111 = vector.broadcast %cst_76 : f32 to vector<32x8xf32>
    %112 = arith.maximumf %110, %111 : vector<32x8xf32>
    %113 = arith.truncf %112 : vector<32x8xf32> to vector<32x8xbf16>
    %c2_77 = arith.constant 2 : index
    %c0_78 = arith.constant 0 : index
    %114 = vector.load %arg3[%c2_77, %c0_78] : memref<8x72xf32, #tpu.memory_space<vmem>>, vector<1x72xf32>
    %c48 = arith.constant 48 : index
    %c0_79 = arith.constant 0 : index
    %115 = vector.load %arg2[%c48, %c0_79] : memref<208x72xbf16, #tpu.memory_space<vmem>>, vector<8x72xbf16>
    %cst_80 = arith.constant dense<0.000000e+00> : vector<32x72xf32>
    %116 = tpu.matmul %113, %115, %cst_80 {dimension_numbers = #tpu.dot_dimension_numbers<[1], [0], [0], [1], [0, 0, 1, 1], [], []>} : vector<32x8xbf16>, vector<8x72xbf16>, vector<32x72xf32> -> vector<32x72xf32>
    %117 = arith.truncf %116 : vector<32x72xf32> to vector<32x72xbf16>
    %cst_81 = arith.constant 0.000000e+00 : f32
    %118 = vector.broadcast %cst_81 : f32 to vector<8x8xf32>
    %c0_82 = arith.constant 0 : index
    %c0_83 = arith.constant 0 : index
    %c0_84 = arith.constant 0 : index
    %119 = vector.load %arg6[%c0_82, %c0_83, %c0_84] : memref<9x8x32xbf16, #tpu.memory_space<vmem>>, vector<1x8x32xbf16>
    %120 = vector.shape_cast %119 : vector<1x8x32xbf16> to vector<8x32xbf16>
    %121 = vector.extract_strided_slice %117 {offsets = [0, 0], sizes = [32, 8], strides = [1, 1]} : vector<32x72xbf16> to vector<32x8xbf16>
    %cst_85 = arith.constant dense<0.000000e+00> : vector<8x8xf32>
    %122 = tpu.matmul %120, %121, %cst_85 {dimension_numbers = #tpu.dot_dimension_numbers<[1], [0], [0], [1], [0, 0, 1, 1], [], []>} : vector<8x32xbf16>, vector<32x8xbf16>, vector<8x8xf32> -> vector<8x8xf32>
    %123 = arith.addf %118, %122 : vector<8x8xf32>
    %c1_86 = arith.constant 1 : index
    %c0_87 = arith.constant 0 : index
    %c0_88 = arith.constant 0 : index
    %124 = vector.load %arg6[%c1_86, %c0_87, %c0_88] : memref<9x8x32xbf16, #tpu.memory_space<vmem>>, vector<1x8x32xbf16>
    %125 = vector.shape_cast %124 : vector<1x8x32xbf16> to vector<8x32xbf16>
    %126 = vector.extract_strided_slice %117 {offsets = [0, 8], sizes = [32, 8], strides = [1, 1]} : vector<32x72xbf16> to vector<32x8xbf16>
    %cst_89 = arith.constant dense<0.000000e+00> : vector<8x8xf32>
    %127 = tpu.matmul %125, %126, %cst_89 {dimension_numbers = #tpu.dot_dimension_numbers<[1], [0], [0], [1], [0, 0, 1, 1], [], []>} : vector<8x32xbf16>, vector<32x8xbf16>, vector<8x8xf32> -> vector<8x8xf32>
    %128 = arith.addf %123, %127 : vector<8x8xf32>
    %c2_90 = arith.constant 2 : index
    %c0_91 = arith.constant 0 : index
    %c0_92 = arith.constant 0 : index
    %129 = vector.load %arg6[%c2_90, %c0_91, %c0_92] : memref<9x8x32xbf16, #tpu.memory_space<vmem>>, vector<1x8x32xbf16>
    %130 = vector.shape_cast %129 : vector<1x8x32xbf16> to vector<8x32xbf16>
    %131 = vector.extract_strided_slice %117 {offsets = [0, 16], sizes = [32, 8], strides = [1, 1]} : vector<32x72xbf16> to vector<32x8xbf16>
    %cst_93 = arith.constant dense<0.000000e+00> : vector<8x8xf32>
    %132 = tpu.matmul %130, %131, %cst_93 {dimension_numbers = #tpu.dot_dimension_numbers<[1], [0], [0], [1], [0, 0, 1, 1], [], []>} : vector<8x32xbf16>, vector<32x8xbf16>, vector<8x8xf32> -> vector<8x8xf32>
    %133 = arith.addf %128, %132 : vector<8x8xf32>
    %c3_94 = arith.constant 3 : index
    %c0_95 = arith.constant 0 : index
    %c0_96 = arith.constant 0 : index
    %134 = vector.load %arg6[%c3_94, %c0_95, %c0_96] : memref<9x8x32xbf16, #tpu.memory_space<vmem>>, vector<1x8x32xbf16>
    %135 = vector.shape_cast %134 : vector<1x8x32xbf16> to vector<8x32xbf16>
    %136 = vector.extract_strided_slice %117 {offsets = [0, 24], sizes = [32, 8], strides = [1, 1]} : vector<32x72xbf16> to vector<32x8xbf16>
    %cst_97 = arith.constant dense<0.000000e+00> : vector<8x8xf32>
    %137 = tpu.matmul %135, %136, %cst_97 {dimension_numbers = #tpu.dot_dimension_numbers<[1], [0], [0], [1], [0, 0, 1, 1], [], []>} : vector<8x32xbf16>, vector<32x8xbf16>, vector<8x8xf32> -> vector<8x8xf32>
    %138 = arith.addf %133, %137 : vector<8x8xf32>
    %c4_98 = arith.constant 4 : index
    %c0_99 = arith.constant 0 : index
    %c0_100 = arith.constant 0 : index
    %139 = vector.load %arg6[%c4_98, %c0_99, %c0_100] : memref<9x8x32xbf16, #tpu.memory_space<vmem>>, vector<1x8x32xbf16>
    %140 = vector.shape_cast %139 : vector<1x8x32xbf16> to vector<8x32xbf16>
    %141 = vector.extract_strided_slice %117 {offsets = [0, 32], sizes = [32, 8], strides = [1, 1]} : vector<32x72xbf16> to vector<32x8xbf16>
    %cst_101 = arith.constant dense<0.000000e+00> : vector<8x8xf32>
    %142 = tpu.matmul %140, %141, %cst_101 {dimension_numbers = #tpu.dot_dimension_numbers<[1], [0], [0], [1], [0, 0, 1, 1], [], []>} : vector<8x32xbf16>, vector<32x8xbf16>, vector<8x8xf32> -> vector<8x8xf32>
    %143 = arith.addf %138, %142 : vector<8x8xf32>
    %c5_102 = arith.constant 5 : index
    %c0_103 = arith.constant 0 : index
    %c0_104 = arith.constant 0 : index
    %144 = vector.load %arg6[%c5_102, %c0_103, %c0_104] : memref<9x8x32xbf16, #tpu.memory_space<vmem>>, vector<1x8x32xbf16>
    %145 = vector.shape_cast %144 : vector<1x8x32xbf16> to vector<8x32xbf16>
    %146 = vector.extract_strided_slice %117 {offsets = [0, 40], sizes = [32, 8], strides = [1, 1]} : vector<32x72xbf16> to vector<32x8xbf16>
    %cst_105 = arith.constant dense<0.000000e+00> : vector<8x8xf32>
    %147 = tpu.matmul %145, %146, %cst_105 {dimension_numbers = #tpu.dot_dimension_numbers<[1], [0], [0], [1], [0, 0, 1, 1], [], []>} : vector<8x32xbf16>, vector<32x8xbf16>, vector<8x8xf32> -> vector<8x8xf32>
    %148 = arith.addf %143, %147 : vector<8x8xf32>
    %c6_106 = arith.constant 6 : index
    %c0_107 = arith.constant 0 : index
    %c0_108 = arith.constant 0 : index
    %149 = vector.load %arg6[%c6_106, %c0_107, %c0_108] : memref<9x8x32xbf16, #tpu.memory_space<vmem>>, vector<1x8x32xbf16>
    %150 = vector.shape_cast %149 : vector<1x8x32xbf16> to vector<8x32xbf16>
    %151 = vector.extract_strided_slice %117 {offsets = [0, 48], sizes = [32, 8], strides = [1, 1]} : vector<32x72xbf16> to vector<32x8xbf16>
    %cst_109 = arith.constant dense<0.000000e+00> : vector<8x8xf32>
    %152 = tpu.matmul %150, %151, %cst_109 {dimension_numbers = #tpu.dot_dimension_numbers<[1], [0], [0], [1], [0, 0, 1, 1], [], []>} : vector<8x32xbf16>, vector<32x8xbf16>, vector<8x8xf32> -> vector<8x8xf32>
    %153 = arith.addf %148, %152 : vector<8x8xf32>
    %c7_110 = arith.constant 7 : index
    %c0_111 = arith.constant 0 : index
    %c0_112 = arith.constant 0 : index
    %154 = vector.load %arg6[%c7_110, %c0_111, %c0_112] : memref<9x8x32xbf16, #tpu.memory_space<vmem>>, vector<1x8x32xbf16>
    %155 = vector.shape_cast %154 : vector<1x8x32xbf16> to vector<8x32xbf16>
    %156 = vector.extract_strided_slice %117 {offsets = [0, 56], sizes = [32, 8], strides = [1, 1]} : vector<32x72xbf16> to vector<32x8xbf16>
    %cst_113 = arith.constant dense<0.000000e+00> : vector<8x8xf32>
    %157 = tpu.matmul %155, %156, %cst_113 {dimension_numbers = #tpu.dot_dimension_numbers<[1], [0], [0], [1], [0, 0, 1, 1], [], []>} : vector<8x32xbf16>, vector<32x8xbf16>, vector<8x8xf32> -> vector<8x8xf32>
    %158 = arith.addf %153, %157 : vector<8x8xf32>
    %c8_114 = arith.constant 8 : index
    %c0_115 = arith.constant 0 : index
    %c0_116 = arith.constant 0 : index
    %159 = vector.load %arg6[%c8_114, %c0_115, %c0_116] : memref<9x8x32xbf16, #tpu.memory_space<vmem>>, vector<1x8x32xbf16>
    %160 = vector.shape_cast %159 : vector<1x8x32xbf16> to vector<8x32xbf16>
    %161 = vector.extract_strided_slice %117 {offsets = [0, 64], sizes = [32, 8], strides = [1, 1]} : vector<32x72xbf16> to vector<32x8xbf16>
    %cst_117 = arith.constant dense<0.000000e+00> : vector<8x8xf32>
    %162 = tpu.matmul %160, %161, %cst_117 {dimension_numbers = #tpu.dot_dimension_numbers<[1], [0], [0], [1], [0, 0, 1, 1], [], []>} : vector<8x32xbf16>, vector<32x8xbf16>, vector<8x8xf32> -> vector<8x8xf32>
    %163 = arith.addf %158, %162 : vector<8x8xf32>
    %164 = vector.extract_strided_slice %114 {offsets = [0, 0], sizes = [1, 8], strides = [1, 1]} : vector<1x72xf32> to vector<1x8xf32>
    %165 = vector.broadcast %164 : vector<1x8xf32> to vector<8x8xf32>
    %166 = arith.addf %163, %165 : vector<8x8xf32>
    %cst_118 = arith.constant 0.000000e+00 : f32
    %167 = vector.broadcast %cst_118 : f32 to vector<8x8xf32>
    %168 = arith.maximumf %166, %167 : vector<8x8xf32>
    %169 = arith.truncf %168 : vector<8x8xf32> to vector<8x8xbf16>
    %c3_119 = arith.constant 3 : index
    %c0_120 = arith.constant 0 : index
    %170 = vector.load %arg3[%c3_119, %c0_120] : memref<8x72xf32, #tpu.memory_space<vmem>>, vector<1x72xf32>
    %c64 = arith.constant 64 : index
    %c0_121 = arith.constant 0 : index
    %171 = vector.load %arg2[%c64, %c0_121] : memref<208x72xbf16, #tpu.memory_space<vmem>>, vector<8x72xbf16>
    %cst_122 = arith.constant dense<0.000000e+00> : vector<8x72xf32>
    %172 = tpu.matmul %169, %171, %cst_122 {dimension_numbers = #tpu.dot_dimension_numbers<[1], [0], [0], [1], [0, 0, 1, 1], [], []>} : vector<8x8xbf16>, vector<8x72xbf16>, vector<8x72xf32> -> vector<8x72xf32>
    %173 = arith.truncf %172 : vector<8x72xf32> to vector<8x72xbf16>
    %cst_123 = arith.constant 0.000000e+00 : f32
    %174 = vector.broadcast %cst_123 : f32 to vector<2x8xf32>
    %c0_124 = arith.constant 0 : index
    %c0_125 = arith.constant 0 : index
    %c0_126 = arith.constant 0 : index
    %175 = vector.load %arg7[%c0_124, %c0_125, %c0_126] : memref<9x2x8xbf16, #tpu.memory_space<vmem>>, vector<1x2x8xbf16>
    %176 = vector.shape_cast %175 : vector<1x2x8xbf16> to vector<2x8xbf16>
    %177 = vector.extract_strided_slice %173 {offsets = [0, 0], sizes = [8, 8], strides = [1, 1]} : vector<8x72xbf16> to vector<8x8xbf16>
    %cst_127 = arith.constant dense<0.000000e+00> : vector<2x8xf32>
    %178 = tpu.matmul %176, %177, %cst_127 {dimension_numbers = #tpu.dot_dimension_numbers<[1], [0], [0], [1], [0, 0, 1, 1], [], []>} : vector<2x8xbf16>, vector<8x8xbf16>, vector<2x8xf32> -> vector<2x8xf32>
    %179 = arith.addf %174, %178 : vector<2x8xf32>
    %c1_128 = arith.constant 1 : index
    %c0_129 = arith.constant 0 : index
    %c0_130 = arith.constant 0 : index
    %180 = vector.load %arg7[%c1_128, %c0_129, %c0_130] : memref<9x2x8xbf16, #tpu.memory_space<vmem>>, vector<1x2x8xbf16>
    %181 = vector.shape_cast %180 : vector<1x2x8xbf16> to vector<2x8xbf16>
    %182 = vector.extract_strided_slice %173 {offsets = [0, 8], sizes = [8, 8], strides = [1, 1]} : vector<8x72xbf16> to vector<8x8xbf16>
    %cst_131 = arith.constant dense<0.000000e+00> : vector<2x8xf32>
    %183 = tpu.matmul %181, %182, %cst_131 {dimension_numbers = #tpu.dot_dimension_numbers<[1], [0], [0], [1], [0, 0, 1, 1], [], []>} : vector<2x8xbf16>, vector<8x8xbf16>, vector<2x8xf32> -> vector<2x8xf32>
    %184 = arith.addf %179, %183 : vector<2x8xf32>
    %c2_132 = arith.constant 2 : index
    %c0_133 = arith.constant 0 : index
    %c0_134 = arith.constant 0 : index
    %185 = vector.load %arg7[%c2_132, %c0_133, %c0_134] : memref<9x2x8xbf16, #tpu.memory_space<vmem>>, vector<1x2x8xbf16>
    %186 = vector.shape_cast %185 : vector<1x2x8xbf16> to vector<2x8xbf16>
    %187 = vector.extract_strided_slice %173 {offsets = [0, 16], sizes = [8, 8], strides = [1, 1]} : vector<8x72xbf16> to vector<8x8xbf16>
    %cst_135 = arith.constant dense<0.000000e+00> : vector<2x8xf32>
    %188 = tpu.matmul %186, %187, %cst_135 {dimension_numbers = #tpu.dot_dimension_numbers<[1], [0], [0], [1], [0, 0, 1, 1], [], []>} : vector<2x8xbf16>, vector<8x8xbf16>, vector<2x8xf32> -> vector<2x8xf32>
    %189 = arith.addf %184, %188 : vector<2x8xf32>
    %c3_136 = arith.constant 3 : index
    %c0_137 = arith.constant 0 : index
    %c0_138 = arith.constant 0 : index
    %190 = vector.load %arg7[%c3_136, %c0_137, %c0_138] : memref<9x2x8xbf16, #tpu.memory_space<vmem>>, vector<1x2x8xbf16>
    %191 = vector.shape_cast %190 : vector<1x2x8xbf16> to vector<2x8xbf16>
    %192 = vector.extract_strided_slice %173 {offsets = [0, 24], sizes = [8, 8], strides = [1, 1]} : vector<8x72xbf16> to vector<8x8xbf16>
    %cst_139 = arith.constant dense<0.000000e+00> : vector<2x8xf32>
    %193 = tpu.matmul %191, %192, %cst_139 {dimension_numbers = #tpu.dot_dimension_numbers<[1], [0], [0], [1], [0, 0, 1, 1], [], []>} : vector<2x8xbf16>, vector<8x8xbf16>, vector<2x8xf32> -> vector<2x8xf32>
    %194 = arith.addf %189, %193 : vector<2x8xf32>
    %c4_140 = arith.constant 4 : index
    %c0_141 = arith.constant 0 : index
    %c0_142 = arith.constant 0 : index
    %195 = vector.load %arg7[%c4_140, %c0_141, %c0_142] : memref<9x2x8xbf16, #tpu.memory_space<vmem>>, vector<1x2x8xbf16>
    %196 = vector.shape_cast %195 : vector<1x2x8xbf16> to vector<2x8xbf16>
    %197 = vector.extract_strided_slice %173 {offsets = [0, 32], sizes = [8, 8], strides = [1, 1]} : vector<8x72xbf16> to vector<8x8xbf16>
    %cst_143 = arith.constant dense<0.000000e+00> : vector<2x8xf32>
    %198 = tpu.matmul %196, %197, %cst_143 {dimension_numbers = #tpu.dot_dimension_numbers<[1], [0], [0], [1], [0, 0, 1, 1], [], []>} : vector<2x8xbf16>, vector<8x8xbf16>, vector<2x8xf32> -> vector<2x8xf32>
    %199 = arith.addf %194, %198 : vector<2x8xf32>
    %c5_144 = arith.constant 5 : index
    %c0_145 = arith.constant 0 : index
    %c0_146 = arith.constant 0 : index
    %200 = vector.load %arg7[%c5_144, %c0_145, %c0_146] : memref<9x2x8xbf16, #tpu.memory_space<vmem>>, vector<1x2x8xbf16>
    %201 = vector.shape_cast %200 : vector<1x2x8xbf16> to vector<2x8xbf16>
    %202 = vector.extract_strided_slice %173 {offsets = [0, 40], sizes = [8, 8], strides = [1, 1]} : vector<8x72xbf16> to vector<8x8xbf16>
    %cst_147 = arith.constant dense<0.000000e+00> : vector<2x8xf32>
    %203 = tpu.matmul %201, %202, %cst_147 {dimension_numbers = #tpu.dot_dimension_numbers<[1], [0], [0], [1], [0, 0, 1, 1], [], []>} : vector<2x8xbf16>, vector<8x8xbf16>, vector<2x8xf32> -> vector<2x8xf32>
    %204 = arith.addf %199, %203 : vector<2x8xf32>
    %c6_148 = arith.constant 6 : index
    %c0_149 = arith.constant 0 : index
    %c0_150 = arith.constant 0 : index
    %205 = vector.load %arg7[%c6_148, %c0_149, %c0_150] : memref<9x2x8xbf16, #tpu.memory_space<vmem>>, vector<1x2x8xbf16>
    %206 = vector.shape_cast %205 : vector<1x2x8xbf16> to vector<2x8xbf16>
    %207 = vector.extract_strided_slice %173 {offsets = [0, 48], sizes = [8, 8], strides = [1, 1]} : vector<8x72xbf16> to vector<8x8xbf16>
    %cst_151 = arith.constant dense<0.000000e+00> : vector<2x8xf32>
    %208 = tpu.matmul %206, %207, %cst_151 {dimension_numbers = #tpu.dot_dimension_numbers<[1], [0], [0], [1], [0, 0, 1, 1], [], []>} : vector<2x8xbf16>, vector<8x8xbf16>, vector<2x8xf32> -> vector<2x8xf32>
    %209 = arith.addf %204, %208 : vector<2x8xf32>
    %c7_152 = arith.constant 7 : index
    %c0_153 = arith.constant 0 : index
    %c0_154 = arith.constant 0 : index
    %210 = vector.load %arg7[%c7_152, %c0_153, %c0_154] : memref<9x2x8xbf16, #tpu.memory_space<vmem>>, vector<1x2x8xbf16>
    %211 = vector.shape_cast %210 : vector<1x2x8xbf16> to vector<2x8xbf16>
    %212 = vector.extract_strided_slice %173 {offsets = [0, 56], sizes = [8, 8], strides = [1, 1]} : vector<8x72xbf16> to vector<8x8xbf16>
    %cst_155 = arith.constant dense<0.000000e+00> : vector<2x8xf32>
    %213 = tpu.matmul %211, %212, %cst_155 {dimension_numbers = #tpu.dot_dimension_numbers<[1], [0], [0], [1], [0, 0, 1, 1], [], []>} : vector<2x8xbf16>, vector<8x8xbf16>, vector<2x8xf32> -> vector<2x8xf32>
    %214 = arith.addf %209, %213 : vector<2x8xf32>
    %c8_156 = arith.constant 8 : index
    %c0_157 = arith.constant 0 : index
    %c0_158 = arith.constant 0 : index
    %215 = vector.load %arg7[%c8_156, %c0_157, %c0_158] : memref<9x2x8xbf16, #tpu.memory_space<vmem>>, vector<1x2x8xbf16>
    %216 = vector.shape_cast %215 : vector<1x2x8xbf16> to vector<2x8xbf16>
    %217 = vector.extract_strided_slice %173 {offsets = [0, 64], sizes = [8, 8], strides = [1, 1]} : vector<8x72xbf16> to vector<8x8xbf16>
    %cst_159 = arith.constant dense<0.000000e+00> : vector<2x8xf32>
    %218 = tpu.matmul %216, %217, %cst_159 {dimension_numbers = #tpu.dot_dimension_numbers<[1], [0], [0], [1], [0, 0, 1, 1], [], []>} : vector<2x8xbf16>, vector<8x8xbf16>, vector<2x8xf32> -> vector<2x8xf32>
    %219 = arith.addf %214, %218 : vector<2x8xf32>
    %220 = vector.extract_strided_slice %170 {offsets = [0, 0], sizes = [1, 8], strides = [1, 1]} : vector<1x72xf32> to vector<1x8xf32>
    %221 = vector.broadcast %220 : vector<1x8xf32> to vector<2x8xf32>
    %222 = arith.addf %219, %221 : vector<2x8xf32>
    %cst_160 = arith.constant 0.000000e+00 : f32
    %223 = vector.broadcast %cst_160 : f32 to vector<2x8xf32>
    %224 = arith.maximumf %222, %223 : vector<2x8xf32>
    %225 = arith.truncf %224 : vector<2x8xf32> to vector<2x8xbf16>
    %c4_161 = arith.constant 4 : index
    %c0_162 = arith.constant 0 : index
    %226 = vector.load %arg3[%c4_161, %c0_162] : memref<8x72xf32, #tpu.memory_space<vmem>>, vector<1x72xf32>
    %c80 = arith.constant 80 : index
    %c0_163 = arith.constant 0 : index
    %227 = vector.load %arg2[%c80, %c0_163] : memref<208x72xbf16, #tpu.memory_space<vmem>>, vector<8x72xbf16>
    %cst_164 = arith.constant dense<0.000000e+00> : vector<2x72xf32>
    %228 = tpu.matmul %225, %227, %cst_164 {dimension_numbers = #tpu.dot_dimension_numbers<[1], [0], [0], [1], [0, 0, 1, 1], [], []>} : vector<2x8xbf16>, vector<8x72xbf16>, vector<2x72xf32> -> vector<2x72xf32>
    %229 = arith.truncf %228 : vector<2x72xf32> to vector<2x72xbf16>
    %cst_165 = arith.constant 0.000000e+00 : f32
    %230 = vector.broadcast %cst_165 : f32 to vector<8x8xf32>
    %c0_166 = arith.constant 0 : index
    %c0_167 = arith.constant 0 : index
    %c0_168 = arith.constant 0 : index
    %231 = vector.load %arg8[%c0_166, %c0_167, %c0_168] : memref<9x8x2xbf16, #tpu.memory_space<vmem>>, vector<1x8x2xbf16>
    %232 = vector.shape_cast %231 : vector<1x8x2xbf16> to vector<8x2xbf16>
    %233 = vector.extract_strided_slice %229 {offsets = [0, 0], sizes = [2, 8], strides = [1, 1]} : vector<2x72xbf16> to vector<2x8xbf16>
    %cst_169 = arith.constant dense<0.000000e+00> : vector<8x8xf32>
    %234 = tpu.matmul %232, %233, %cst_169 {dimension_numbers = #tpu.dot_dimension_numbers<[1], [0], [0], [1], [0, 0, 1, 1], [], []>} : vector<8x2xbf16>, vector<2x8xbf16>, vector<8x8xf32> -> vector<8x8xf32>
    %235 = arith.addf %230, %234 : vector<8x8xf32>
    %c1_170 = arith.constant 1 : index
    %c0_171 = arith.constant 0 : index
    %c0_172 = arith.constant 0 : index
    %236 = vector.load %arg8[%c1_170, %c0_171, %c0_172] : memref<9x8x2xbf16, #tpu.memory_space<vmem>>, vector<1x8x2xbf16>
    %237 = vector.shape_cast %236 : vector<1x8x2xbf16> to vector<8x2xbf16>
    %238 = vector.extract_strided_slice %229 {offsets = [0, 8], sizes = [2, 8], strides = [1, 1]} : vector<2x72xbf16> to vector<2x8xbf16>
    %cst_173 = arith.constant dense<0.000000e+00> : vector<8x8xf32>
    %239 = tpu.matmul %237, %238, %cst_173 {dimension_numbers = #tpu.dot_dimension_numbers<[1], [0], [0], [1], [0, 0, 1, 1], [], []>} : vector<8x2xbf16>, vector<2x8xbf16>, vector<8x8xf32> -> vector<8x8xf32>
    %240 = arith.addf %235, %239 : vector<8x8xf32>
    %c2_174 = arith.constant 2 : index
    %c0_175 = arith.constant 0 : index
    %c0_176 = arith.constant 0 : index
    %241 = vector.load %arg8[%c2_174, %c0_175, %c0_176] : memref<9x8x2xbf16, #tpu.memory_space<vmem>>, vector<1x8x2xbf16>
    %242 = vector.shape_cast %241 : vector<1x8x2xbf16> to vector<8x2xbf16>
    %243 = vector.extract_strided_slice %229 {offsets = [0, 16], sizes = [2, 8], strides = [1, 1]} : vector<2x72xbf16> to vector<2x8xbf16>
    %cst_177 = arith.constant dense<0.000000e+00> : vector<8x8xf32>
    %244 = tpu.matmul %242, %243, %cst_177 {dimension_numbers = #tpu.dot_dimension_numbers<[1], [0], [0], [1], [0, 0, 1, 1], [], []>} : vector<8x2xbf16>, vector<2x8xbf16>, vector<8x8xf32> -> vector<8x8xf32>
    %245 = arith.addf %240, %244 : vector<8x8xf32>
    %c3_178 = arith.constant 3 : index
    %c0_179 = arith.constant 0 : index
    %c0_180 = arith.constant 0 : index
    %246 = vector.load %arg8[%c3_178, %c0_179, %c0_180] : memref<9x8x2xbf16, #tpu.memory_space<vmem>>, vector<1x8x2xbf16>
    %247 = vector.shape_cast %246 : vector<1x8x2xbf16> to vector<8x2xbf16>
    %248 = vector.extract_strided_slice %229 {offsets = [0, 24], sizes = [2, 8], strides = [1, 1]} : vector<2x72xbf16> to vector<2x8xbf16>
    %cst_181 = arith.constant dense<0.000000e+00> : vector<8x8xf32>
    %249 = tpu.matmul %247, %248, %cst_181 {dimension_numbers = #tpu.dot_dimension_numbers<[1], [0], [0], [1], [0, 0, 1, 1], [], []>} : vector<8x2xbf16>, vector<2x8xbf16>, vector<8x8xf32> -> vector<8x8xf32>
    %250 = arith.addf %245, %249 : vector<8x8xf32>
    %c4_182 = arith.constant 4 : index
    %c0_183 = arith.constant 0 : index
    %c0_184 = arith.constant 0 : index
    %251 = vector.load %arg8[%c4_182, %c0_183, %c0_184] : memref<9x8x2xbf16, #tpu.memory_space<vmem>>, vector<1x8x2xbf16>
    %252 = vector.shape_cast %251 : vector<1x8x2xbf16> to vector<8x2xbf16>
    %253 = vector.extract_strided_slice %229 {offsets = [0, 32], sizes = [2, 8], strides = [1, 1]} : vector<2x72xbf16> to vector<2x8xbf16>
    %cst_185 = arith.constant dense<0.000000e+00> : vector<8x8xf32>
    %254 = tpu.matmul %252, %253, %cst_185 {dimension_numbers = #tpu.dot_dimension_numbers<[1], [0], [0], [1], [0, 0, 1, 1], [], []>} : vector<8x2xbf16>, vector<2x8xbf16>, vector<8x8xf32> -> vector<8x8xf32>
    %255 = arith.addf %250, %254 : vector<8x8xf32>
    %c5_186 = arith.constant 5 : index
    %c0_187 = arith.constant 0 : index
    %c0_188 = arith.constant 0 : index
    %256 = vector.load %arg8[%c5_186, %c0_187, %c0_188] : memref<9x8x2xbf16, #tpu.memory_space<vmem>>, vector<1x8x2xbf16>
    %257 = vector.shape_cast %256 : vector<1x8x2xbf16> to vector<8x2xbf16>
    %258 = vector.extract_strided_slice %229 {offsets = [0, 40], sizes = [2, 8], strides = [1, 1]} : vector<2x72xbf16> to vector<2x8xbf16>
    %cst_189 = arith.constant dense<0.000000e+00> : vector<8x8xf32>
    %259 = tpu.matmul %257, %258, %cst_189 {dimension_numbers = #tpu.dot_dimension_numbers<[1], [0], [0], [1], [0, 0, 1, 1], [], []>} : vector<8x2xbf16>, vector<2x8xbf16>, vector<8x8xf32> -> vector<8x8xf32>
    %260 = arith.addf %255, %259 : vector<8x8xf32>
    %c6_190 = arith.constant 6 : index
    %c0_191 = arith.constant 0 : index
    %c0_192 = arith.constant 0 : index
    %261 = vector.load %arg8[%c6_190, %c0_191, %c0_192] : memref<9x8x2xbf16, #tpu.memory_space<vmem>>, vector<1x8x2xbf16>
    %262 = vector.shape_cast %261 : vector<1x8x2xbf16> to vector<8x2xbf16>
    %263 = vector.extract_strided_slice %229 {offsets = [0, 48], sizes = [2, 8], strides = [1, 1]} : vector<2x72xbf16> to vector<2x8xbf16>
    %cst_193 = arith.constant dense<0.000000e+00> : vector<8x8xf32>
    %264 = tpu.matmul %262, %263, %cst_193 {dimension_numbers = #tpu.dot_dimension_numbers<[1], [0], [0], [1], [0, 0, 1, 1], [], []>} : vector<8x2xbf16>, vector<2x8xbf16>, vector<8x8xf32> -> vector<8x8xf32>
    %265 = arith.addf %260, %264 : vector<8x8xf32>
    %c7_194 = arith.constant 7 : index
    %c0_195 = arith.constant 0 : index
    %c0_196 = arith.constant 0 : index
    %266 = vector.load %arg8[%c7_194, %c0_195, %c0_196] : memref<9x8x2xbf16, #tpu.memory_space<vmem>>, vector<1x8x2xbf16>
    %267 = vector.shape_cast %266 : vector<1x8x2xbf16> to vector<8x2xbf16>
    %268 = vector.extract_strided_slice %229 {offsets = [0, 56], sizes = [2, 8], strides = [1, 1]} : vector<2x72xbf16> to vector<2x8xbf16>
    %cst_197 = arith.constant dense<0.000000e+00> : vector<8x8xf32>
    %269 = tpu.matmul %267, %268, %cst_197 {dimension_numbers = #tpu.dot_dimension_numbers<[1], [0], [0], [1], [0, 0, 1, 1], [], []>} : vector<8x2xbf16>, vector<2x8xbf16>, vector<8x8xf32> -> vector<8x8xf32>
    %270 = arith.addf %265, %269 : vector<8x8xf32>
    %c8_198 = arith.constant 8 : index
    %c0_199 = arith.constant 0 : index
    %c0_200 = arith.constant 0 : index
    %271 = vector.load %arg8[%c8_198, %c0_199, %c0_200] : memref<9x8x2xbf16, #tpu.memory_space<vmem>>, vector<1x8x2xbf16>
    %272 = vector.shape_cast %271 : vector<1x8x2xbf16> to vector<8x2xbf16>
    %273 = vector.extract_strided_slice %229 {offsets = [0, 64], sizes = [2, 8], strides = [1, 1]} : vector<2x72xbf16> to vector<2x8xbf16>
    %cst_201 = arith.constant dense<0.000000e+00> : vector<8x8xf32>
    %274 = tpu.matmul %272, %273, %cst_201 {dimension_numbers = #tpu.dot_dimension_numbers<[1], [0], [0], [1], [0, 0, 1, 1], [], []>} : vector<8x2xbf16>, vector<2x8xbf16>, vector<8x8xf32> -> vector<8x8xf32>
    %275 = arith.addf %270, %274 : vector<8x8xf32>
    %276 = vector.extract_strided_slice %226 {offsets = [0, 0], sizes = [1, 8], strides = [1, 1]} : vector<1x72xf32> to vector<1x8xf32>
    %277 = vector.broadcast %276 : vector<1x8xf32> to vector<8x8xf32>
    %278 = arith.addf %275, %277 : vector<8x8xf32>
    %cst_202 = arith.constant 0.000000e+00 : f32
    %279 = vector.broadcast %cst_202 : f32 to vector<8x8xf32>
    %280 = arith.maximumf %278, %279 : vector<8x8xf32>
    %281 = arith.addf %280, %168 : vector<8x8xf32>
    %282 = arith.truncf %281 : vector<8x8xf32> to vector<8x8xbf16>
    %c5_203 = arith.constant 5 : index
    %c0_204 = arith.constant 0 : index
    %283 = vector.load %arg3[%c5_203, %c0_204] : memref<8x72xf32, #tpu.memory_space<vmem>>, vector<1x72xf32>
    %c96 = arith.constant 96 : index
    %c0_205 = arith.constant 0 : index
    %284 = vector.load %arg2[%c96, %c0_205] : memref<208x72xbf16, #tpu.memory_space<vmem>>, vector<8x72xbf16>
    %cst_206 = arith.constant dense<0.000000e+00> : vector<8x72xf32>
    %285 = tpu.matmul %282, %284, %cst_206 {dimension_numbers = #tpu.dot_dimension_numbers<[1], [0], [0], [1], [0, 0, 1, 1], [], []>} : vector<8x8xbf16>, vector<8x72xbf16>, vector<8x72xf32> -> vector<8x72xf32>
    %286 = arith.truncf %285 : vector<8x72xf32> to vector<8x72xbf16>
    %cst_207 = arith.constant 0.000000e+00 : f32
    %287 = vector.broadcast %cst_207 : f32 to vector<32x8xf32>
    %c0_208 = arith.constant 0 : index
    %c0_209 = arith.constant 0 : index
    %c0_210 = arith.constant 0 : index
    %288 = vector.load %arg9[%c0_208, %c0_209, %c0_210] : memref<9x32x8xbf16, #tpu.memory_space<vmem>>, vector<1x32x8xbf16>
    %289 = vector.shape_cast %288 : vector<1x32x8xbf16> to vector<32x8xbf16>
    %290 = vector.extract_strided_slice %286 {offsets = [0, 0], sizes = [8, 8], strides = [1, 1]} : vector<8x72xbf16> to vector<8x8xbf16>
    %cst_211 = arith.constant dense<0.000000e+00> : vector<32x8xf32>
    %291 = tpu.matmul %289, %290, %cst_211 {dimension_numbers = #tpu.dot_dimension_numbers<[1], [0], [0], [1], [0, 0, 1, 1], [], []>} : vector<32x8xbf16>, vector<8x8xbf16>, vector<32x8xf32> -> vector<32x8xf32>
    %292 = arith.addf %287, %291 : vector<32x8xf32>
    %c1_212 = arith.constant 1 : index
    %c0_213 = arith.constant 0 : index
    %c0_214 = arith.constant 0 : index
    %293 = vector.load %arg9[%c1_212, %c0_213, %c0_214] : memref<9x32x8xbf16, #tpu.memory_space<vmem>>, vector<1x32x8xbf16>
    %294 = vector.shape_cast %293 : vector<1x32x8xbf16> to vector<32x8xbf16>
    %295 = vector.extract_strided_slice %286 {offsets = [0, 8], sizes = [8, 8], strides = [1, 1]} : vector<8x72xbf16> to vector<8x8xbf16>
    %cst_215 = arith.constant dense<0.000000e+00> : vector<32x8xf32>
    %296 = tpu.matmul %294, %295, %cst_215 {dimension_numbers = #tpu.dot_dimension_numbers<[1], [0], [0], [1], [0, 0, 1, 1], [], []>} : vector<32x8xbf16>, vector<8x8xbf16>, vector<32x8xf32> -> vector<32x8xf32>
    %297 = arith.addf %292, %296 : vector<32x8xf32>
    %c2_216 = arith.constant 2 : index
    %c0_217 = arith.constant 0 : index
    %c0_218 = arith.constant 0 : index
    %298 = vector.load %arg9[%c2_216, %c0_217, %c0_218] : memref<9x32x8xbf16, #tpu.memory_space<vmem>>, vector<1x32x8xbf16>
    %299 = vector.shape_cast %298 : vector<1x32x8xbf16> to vector<32x8xbf16>
    %300 = vector.extract_strided_slice %286 {offsets = [0, 16], sizes = [8, 8], strides = [1, 1]} : vector<8x72xbf16> to vector<8x8xbf16>
    %cst_219 = arith.constant dense<0.000000e+00> : vector<32x8xf32>
    %301 = tpu.matmul %299, %300, %cst_219 {dimension_numbers = #tpu.dot_dimension_numbers<[1], [0], [0], [1], [0, 0, 1, 1], [], []>} : vector<32x8xbf16>, vector<8x8xbf16>, vector<32x8xf32> -> vector<32x8xf32>
    %302 = arith.addf %297, %301 : vector<32x8xf32>
    %c3_220 = arith.constant 3 : index
    %c0_221 = arith.constant 0 : index
    %c0_222 = arith.constant 0 : index
    %303 = vector.load %arg9[%c3_220, %c0_221, %c0_222] : memref<9x32x8xbf16, #tpu.memory_space<vmem>>, vector<1x32x8xbf16>
    %304 = vector.shape_cast %303 : vector<1x32x8xbf16> to vector<32x8xbf16>
    %305 = vector.extract_strided_slice %286 {offsets = [0, 24], sizes = [8, 8], strides = [1, 1]} : vector<8x72xbf16> to vector<8x8xbf16>
    %cst_223 = arith.constant dense<0.000000e+00> : vector<32x8xf32>
    %306 = tpu.matmul %304, %305, %cst_223 {dimension_numbers = #tpu.dot_dimension_numbers<[1], [0], [0], [1], [0, 0, 1, 1], [], []>} : vector<32x8xbf16>, vector<8x8xbf16>, vector<32x8xf32> -> vector<32x8xf32>
    %307 = arith.addf %302, %306 : vector<32x8xf32>
    %c4_224 = arith.constant 4 : index
    %c0_225 = arith.constant 0 : index
    %c0_226 = arith.constant 0 : index
    %308 = vector.load %arg9[%c4_224, %c0_225, %c0_226] : memref<9x32x8xbf16, #tpu.memory_space<vmem>>, vector<1x32x8xbf16>
    %309 = vector.shape_cast %308 : vector<1x32x8xbf16> to vector<32x8xbf16>
    %310 = vector.extract_strided_slice %286 {offsets = [0, 32], sizes = [8, 8], strides = [1, 1]} : vector<8x72xbf16> to vector<8x8xbf16>
    %cst_227 = arith.constant dense<0.000000e+00> : vector<32x8xf32>
    %311 = tpu.matmul %309, %310, %cst_227 {dimension_numbers = #tpu.dot_dimension_numbers<[1], [0], [0], [1], [0, 0, 1, 1], [], []>} : vector<32x8xbf16>, vector<8x8xbf16>, vector<32x8xf32> -> vector<32x8xf32>
    %312 = arith.addf %307, %311 : vector<32x8xf32>
    %c5_228 = arith.constant 5 : index
    %c0_229 = arith.constant 0 : index
    %c0_230 = arith.constant 0 : index
    %313 = vector.load %arg9[%c5_228, %c0_229, %c0_230] : memref<9x32x8xbf16, #tpu.memory_space<vmem>>, vector<1x32x8xbf16>
    %314 = vector.shape_cast %313 : vector<1x32x8xbf16> to vector<32x8xbf16>
    %315 = vector.extract_strided_slice %286 {offsets = [0, 40], sizes = [8, 8], strides = [1, 1]} : vector<8x72xbf16> to vector<8x8xbf16>
    %cst_231 = arith.constant dense<0.000000e+00> : vector<32x8xf32>
    %316 = tpu.matmul %314, %315, %cst_231 {dimension_numbers = #tpu.dot_dimension_numbers<[1], [0], [0], [1], [0, 0, 1, 1], [], []>} : vector<32x8xbf16>, vector<8x8xbf16>, vector<32x8xf32> -> vector<32x8xf32>
    %317 = arith.addf %312, %316 : vector<32x8xf32>
    %c6_232 = arith.constant 6 : index
    %c0_233 = arith.constant 0 : index
    %c0_234 = arith.constant 0 : index
    %318 = vector.load %arg9[%c6_232, %c0_233, %c0_234] : memref<9x32x8xbf16, #tpu.memory_space<vmem>>, vector<1x32x8xbf16>
    %319 = vector.shape_cast %318 : vector<1x32x8xbf16> to vector<32x8xbf16>
    %320 = vector.extract_strided_slice %286 {offsets = [0, 48], sizes = [8, 8], strides = [1, 1]} : vector<8x72xbf16> to vector<8x8xbf16>
    %cst_235 = arith.constant dense<0.000000e+00> : vector<32x8xf32>
    %321 = tpu.matmul %319, %320, %cst_235 {dimension_numbers = #tpu.dot_dimension_numbers<[1], [0], [0], [1], [0, 0, 1, 1], [], []>} : vector<32x8xbf16>, vector<8x8xbf16>, vector<32x8xf32> -> vector<32x8xf32>
    %322 = arith.addf %317, %321 : vector<32x8xf32>
    %c7_236 = arith.constant 7 : index
    %c0_237 = arith.constant 0 : index
    %c0_238 = arith.constant 0 : index
    %323 = vector.load %arg9[%c7_236, %c0_237, %c0_238] : memref<9x32x8xbf16, #tpu.memory_space<vmem>>, vector<1x32x8xbf16>
    %324 = vector.shape_cast %323 : vector<1x32x8xbf16> to vector<32x8xbf16>
    %325 = vector.extract_strided_slice %286 {offsets = [0, 56], sizes = [8, 8], strides = [1, 1]} : vector<8x72xbf16> to vector<8x8xbf16>
    %cst_239 = arith.constant dense<0.000000e+00> : vector<32x8xf32>
    %326 = tpu.matmul %324, %325, %cst_239 {dimension_numbers = #tpu.dot_dimension_numbers<[1], [0], [0], [1], [0, 0, 1, 1], [], []>} : vector<32x8xbf16>, vector<8x8xbf16>, vector<32x8xf32> -> vector<32x8xf32>
    %327 = arith.addf %322, %326 : vector<32x8xf32>
    %c8_240 = arith.constant 8 : index
    %c0_241 = arith.constant 0 : index
    %c0_242 = arith.constant 0 : index
    %328 = vector.load %arg9[%c8_240, %c0_241, %c0_242] : memref<9x32x8xbf16, #tpu.memory_space<vmem>>, vector<1x32x8xbf16>
    %329 = vector.shape_cast %328 : vector<1x32x8xbf16> to vector<32x8xbf16>
    %330 = vector.extract_strided_slice %286 {offsets = [0, 64], sizes = [8, 8], strides = [1, 1]} : vector<8x72xbf16> to vector<8x8xbf16>
    %cst_243 = arith.constant dense<0.000000e+00> : vector<32x8xf32>
    %331 = tpu.matmul %329, %330, %cst_243 {dimension_numbers = #tpu.dot_dimension_numbers<[1], [0], [0], [1], [0, 0, 1, 1], [], []>} : vector<32x8xbf16>, vector<8x8xbf16>, vector<32x8xf32> -> vector<32x8xf32>
    %332 = arith.addf %327, %331 : vector<32x8xf32>
    %333 = vector.extract_strided_slice %283 {offsets = [0, 0], sizes = [1, 8], strides = [1, 1]} : vector<1x72xf32> to vector<1x8xf32>
    %334 = vector.broadcast %333 : vector<1x8xf32> to vector<32x8xf32>
    %335 = arith.addf %332, %334 : vector<32x8xf32>
    %cst_244 = arith.constant 0.000000e+00 : f32
    %336 = vector.broadcast %cst_244 : f32 to vector<32x8xf32>
    %337 = arith.maximumf %335, %336 : vector<32x8xf32>
    %338 = arith.addf %337, %112 : vector<32x8xf32>
    %339 = arith.truncf %338 : vector<32x8xf32> to vector<32x8xbf16>
    %c6_245 = arith.constant 6 : index
    %c0_246 = arith.constant 0 : index
    %340 = vector.load %arg3[%c6_245, %c0_246] : memref<8x72xf32, #tpu.memory_space<vmem>>, vector<1x72xf32>
    %c112 = arith.constant 112 : index
    %c0_247 = arith.constant 0 : index
    %341 = vector.load %arg2[%c112, %c0_247] : memref<208x72xbf16, #tpu.memory_space<vmem>>, vector<8x72xbf16>
    %cst_248 = arith.constant dense<0.000000e+00> : vector<32x72xf32>
    %342 = tpu.matmul %339, %341, %cst_248 {dimension_numbers = #tpu.dot_dimension_numbers<[1], [0], [0], [1], [0, 0, 1, 1], [], []>} : vector<32x8xbf16>, vector<8x72xbf16>, vector<32x72xf32> -> vector<32x72xf32>
    %343 = arith.truncf %342 : vector<32x72xf32> to vector<32x72xbf16>
    %cst_249 = arith.constant 0.000000e+00 : f32
    %344 = vector.broadcast %cst_249 : f32 to vector<128x8xf32>
    %c0_250 = arith.constant 0 : index
    %c0_251 = arith.constant 0 : index
    %c0_252 = arith.constant 0 : index
    %345 = vector.load %arg10[%c0_250, %c0_251, %c0_252] : memref<9x128x32xbf16, #tpu.memory_space<vmem>>, vector<1x128x32xbf16>
    %346 = vector.shape_cast %345 : vector<1x128x32xbf16> to vector<128x32xbf16>
    %347 = vector.extract_strided_slice %343 {offsets = [0, 0], sizes = [32, 8], strides = [1, 1]} : vector<32x72xbf16> to vector<32x8xbf16>
    %cst_253 = arith.constant dense<0.000000e+00> : vector<128x8xf32>
    %348 = tpu.matmul %346, %347, %cst_253 {dimension_numbers = #tpu.dot_dimension_numbers<[1], [0], [0], [1], [0, 0, 1, 1], [], []>} : vector<128x32xbf16>, vector<32x8xbf16>, vector<128x8xf32> -> vector<128x8xf32>
    %349 = arith.addf %344, %348 : vector<128x8xf32>
    %c1_254 = arith.constant 1 : index
    %c0_255 = arith.constant 0 : index
    %c0_256 = arith.constant 0 : index
    %350 = vector.load %arg10[%c1_254, %c0_255, %c0_256] : memref<9x128x32xbf16, #tpu.memory_space<vmem>>, vector<1x128x32xbf16>
    %351 = vector.shape_cast %350 : vector<1x128x32xbf16> to vector<128x32xbf16>
    %352 = vector.extract_strided_slice %343 {offsets = [0, 8], sizes = [32, 8], strides = [1, 1]} : vector<32x72xbf16> to vector<32x8xbf16>
    %cst_257 = arith.constant dense<0.000000e+00> : vector<128x8xf32>
    %353 = tpu.matmul %351, %352, %cst_257 {dimension_numbers = #tpu.dot_dimension_numbers<[1], [0], [0], [1], [0, 0, 1, 1], [], []>} : vector<128x32xbf16>, vector<32x8xbf16>, vector<128x8xf32> -> vector<128x8xf32>
    %354 = arith.addf %349, %353 : vector<128x8xf32>
    %c2_258 = arith.constant 2 : index
    %c0_259 = arith.constant 0 : index
    %c0_260 = arith.constant 0 : index
    %355 = vector.load %arg10[%c2_258, %c0_259, %c0_260] : memref<9x128x32xbf16, #tpu.memory_space<vmem>>, vector<1x128x32xbf16>
    %356 = vector.shape_cast %355 : vector<1x128x32xbf16> to vector<128x32xbf16>
    %357 = vector.extract_strided_slice %343 {offsets = [0, 16], sizes = [32, 8], strides = [1, 1]} : vector<32x72xbf16> to vector<32x8xbf16>
    %cst_261 = arith.constant dense<0.000000e+00> : vector<128x8xf32>
    %358 = tpu.matmul %356, %357, %cst_261 {dimension_numbers = #tpu.dot_dimension_numbers<[1], [0], [0], [1], [0, 0, 1, 1], [], []>} : vector<128x32xbf16>, vector<32x8xbf16>, vector<128x8xf32> -> vector<128x8xf32>
    %359 = arith.addf %354, %358 : vector<128x8xf32>
    %c3_262 = arith.constant 3 : index
    %c0_263 = arith.constant 0 : index
    %c0_264 = arith.constant 0 : index
    %360 = vector.load %arg10[%c3_262, %c0_263, %c0_264] : memref<9x128x32xbf16, #tpu.memory_space<vmem>>, vector<1x128x32xbf16>
    %361 = vector.shape_cast %360 : vector<1x128x32xbf16> to vector<128x32xbf16>
    %362 = vector.extract_strided_slice %343 {offsets = [0, 24], sizes = [32, 8], strides = [1, 1]} : vector<32x72xbf16> to vector<32x8xbf16>
    %cst_265 = arith.constant dense<0.000000e+00> : vector<128x8xf32>
    %363 = tpu.matmul %361, %362, %cst_265 {dimension_numbers = #tpu.dot_dimension_numbers<[1], [0], [0], [1], [0, 0, 1, 1], [], []>} : vector<128x32xbf16>, vector<32x8xbf16>, vector<128x8xf32> -> vector<128x8xf32>
    %364 = arith.addf %359, %363 : vector<128x8xf32>
    %c4_266 = arith.constant 4 : index
    %c0_267 = arith.constant 0 : index
    %c0_268 = arith.constant 0 : index
    %365 = vector.load %arg10[%c4_266, %c0_267, %c0_268] : memref<9x128x32xbf16, #tpu.memory_space<vmem>>, vector<1x128x32xbf16>
    %366 = vector.shape_cast %365 : vector<1x128x32xbf16> to vector<128x32xbf16>
    %367 = vector.extract_strided_slice %343 {offsets = [0, 32], sizes = [32, 8], strides = [1, 1]} : vector<32x72xbf16> to vector<32x8xbf16>
    %cst_269 = arith.constant dense<0.000000e+00> : vector<128x8xf32>
    %368 = tpu.matmul %366, %367, %cst_269 {dimension_numbers = #tpu.dot_dimension_numbers<[1], [0], [0], [1], [0, 0, 1, 1], [], []>} : vector<128x32xbf16>, vector<32x8xbf16>, vector<128x8xf32> -> vector<128x8xf32>
    %369 = arith.addf %364, %368 : vector<128x8xf32>
    %c5_270 = arith.constant 5 : index
    %c0_271 = arith.constant 0 : index
    %c0_272 = arith.constant 0 : index
    %370 = vector.load %arg10[%c5_270, %c0_271, %c0_272] : memref<9x128x32xbf16, #tpu.memory_space<vmem>>, vector<1x128x32xbf16>
    %371 = vector.shape_cast %370 : vector<1x128x32xbf16> to vector<128x32xbf16>
    %372 = vector.extract_strided_slice %343 {offsets = [0, 40], sizes = [32, 8], strides = [1, 1]} : vector<32x72xbf16> to vector<32x8xbf16>
    %cst_273 = arith.constant dense<0.000000e+00> : vector<128x8xf32>
    %373 = tpu.matmul %371, %372, %cst_273 {dimension_numbers = #tpu.dot_dimension_numbers<[1], [0], [0], [1], [0, 0, 1, 1], [], []>} : vector<128x32xbf16>, vector<32x8xbf16>, vector<128x8xf32> -> vector<128x8xf32>
    %374 = arith.addf %369, %373 : vector<128x8xf32>
    %c6_274 = arith.constant 6 : index
    %c0_275 = arith.constant 0 : index
    %c0_276 = arith.constant 0 : index
    %375 = vector.load %arg10[%c6_274, %c0_275, %c0_276] : memref<9x128x32xbf16, #tpu.memory_space<vmem>>, vector<1x128x32xbf16>
    %376 = vector.shape_cast %375 : vector<1x128x32xbf16> to vector<128x32xbf16>
    %377 = vector.extract_strided_slice %343 {offsets = [0, 48], sizes = [32, 8], strides = [1, 1]} : vector<32x72xbf16> to vector<32x8xbf16>
    %cst_277 = arith.constant dense<0.000000e+00> : vector<128x8xf32>
    %378 = tpu.matmul %376, %377, %cst_277 {dimension_numbers = #tpu.dot_dimension_numbers<[1], [0], [0], [1], [0, 0, 1, 1], [], []>} : vector<128x32xbf16>, vector<32x8xbf16>, vector<128x8xf32> -> vector<128x8xf32>
    %379 = arith.addf %374, %378 : vector<128x8xf32>
    %c7_278 = arith.constant 7 : index
    %c0_279 = arith.constant 0 : index
    %c0_280 = arith.constant 0 : index
    %380 = vector.load %arg10[%c7_278, %c0_279, %c0_280] : memref<9x128x32xbf16, #tpu.memory_space<vmem>>, vector<1x128x32xbf16>
    %381 = vector.shape_cast %380 : vector<1x128x32xbf16> to vector<128x32xbf16>
    %382 = vector.extract_strided_slice %343 {offsets = [0, 56], sizes = [32, 8], strides = [1, 1]} : vector<32x72xbf16> to vector<32x8xbf16>
    %cst_281 = arith.constant dense<0.000000e+00> : vector<128x8xf32>
    %383 = tpu.matmul %381, %382, %cst_281 {dimension_numbers = #tpu.dot_dimension_numbers<[1], [0], [0], [1], [0, 0, 1, 1], [], []>} : vector<128x32xbf16>, vector<32x8xbf16>, vector<128x8xf32> -> vector<128x8xf32>
    %384 = arith.addf %379, %383 : vector<128x8xf32>
    %c8_282 = arith.constant 8 : index
    %c0_283 = arith.constant 0 : index
    %c0_284 = arith.constant 0 : index
    %385 = vector.load %arg10[%c8_282, %c0_283, %c0_284] : memref<9x128x32xbf16, #tpu.memory_space<vmem>>, vector<1x128x32xbf16>
    %386 = vector.shape_cast %385 : vector<1x128x32xbf16> to vector<128x32xbf16>
    %387 = vector.extract_strided_slice %343 {offsets = [0, 64], sizes = [32, 8], strides = [1, 1]} : vector<32x72xbf16> to vector<32x8xbf16>
    %cst_285 = arith.constant dense<0.000000e+00> : vector<128x8xf32>
    %388 = tpu.matmul %386, %387, %cst_285 {dimension_numbers = #tpu.dot_dimension_numbers<[1], [0], [0], [1], [0, 0, 1, 1], [], []>} : vector<128x32xbf16>, vector<32x8xbf16>, vector<128x8xf32> -> vector<128x8xf32>
    %389 = arith.addf %384, %388 : vector<128x8xf32>
    %390 = vector.extract_strided_slice %340 {offsets = [0, 0], sizes = [1, 8], strides = [1, 1]} : vector<1x72xf32> to vector<1x8xf32>
    %391 = vector.broadcast %390 : vector<1x8xf32> to vector<128x8xf32>
    %392 = arith.addf %389, %391 : vector<128x8xf32>
    %cst_286 = arith.constant 0.000000e+00 : f32
    %393 = vector.broadcast %cst_286 : f32 to vector<128x8xf32>
    %394 = arith.maximumf %392, %393 : vector<128x8xf32>
    %395 = arith.addf %394, %56 : vector<128x8xf32>
    %396 = arith.truncf %395 : vector<128x8xf32> to vector<128x8xbf16>
    %c7_287 = arith.constant 7 : index
    %c0_288 = arith.constant 0 : index
    %397 = vector.load %arg3[%c7_287, %c0_288] : memref<8x72xf32, #tpu.memory_space<vmem>>, vector<1x72xf32>
    %c0_289 = arith.constant 0 : index
    %c0_290 = arith.constant 0 : index
    %c0_291 = arith.constant 0 : index
    %398 = vector.load %arg11[%c0_289, %c0_290, %c0_291] : memref<9x256x128xbf16, #tpu.memory_space<vmem>>, vector<1x256x128xbf16>
    %399 = vector.shape_cast %398 : vector<1x256x128xbf16> to vector<256x128xbf16>
    %cst_292 = arith.constant dense<0.000000e+00> : vector<256x8xf32>
    %400 = tpu.matmul %399, %396, %cst_292 {dimension_numbers = #tpu.dot_dimension_numbers<[1], [0], [0], [1], [0, 0, 1, 1], [], []>} : vector<256x128xbf16>, vector<128x8xbf16>, vector<256x8xf32> -> vector<256x8xf32>
    %401 = arith.truncf %400 : vector<256x8xf32> to vector<256x8xbf16>
    %c1_293 = arith.constant 1 : index
    %c0_294 = arith.constant 0 : index
    %c0_295 = arith.constant 0 : index
    %402 = vector.load %arg11[%c1_293, %c0_294, %c0_295] : memref<9x256x128xbf16, #tpu.memory_space<vmem>>, vector<1x256x128xbf16>
    %403 = vector.shape_cast %402 : vector<1x256x128xbf16> to vector<256x128xbf16>
    %cst_296 = arith.constant dense<0.000000e+00> : vector<256x8xf32>
    %404 = tpu.matmul %403, %396, %cst_296 {dimension_numbers = #tpu.dot_dimension_numbers<[1], [0], [0], [1], [0, 0, 1, 1], [], []>} : vector<256x128xbf16>, vector<128x8xbf16>, vector<256x8xf32> -> vector<256x8xf32>
    %405 = arith.truncf %404 : vector<256x8xf32> to vector<256x8xbf16>
    %c2_297 = arith.constant 2 : index
    %c0_298 = arith.constant 0 : index
    %c0_299 = arith.constant 0 : index
    %406 = vector.load %arg11[%c2_297, %c0_298, %c0_299] : memref<9x256x128xbf16, #tpu.memory_space<vmem>>, vector<1x256x128xbf16>
    %407 = vector.shape_cast %406 : vector<1x256x128xbf16> to vector<256x128xbf16>
    %cst_300 = arith.constant dense<0.000000e+00> : vector<256x8xf32>
    %408 = tpu.matmul %407, %396, %cst_300 {dimension_numbers = #tpu.dot_dimension_numbers<[1], [0], [0], [1], [0, 0, 1, 1], [], []>} : vector<256x128xbf16>, vector<128x8xbf16>, vector<256x8xf32> -> vector<256x8xf32>
    %409 = arith.truncf %408 : vector<256x8xf32> to vector<256x8xbf16>
    %c3_301 = arith.constant 3 : index
    %c0_302 = arith.constant 0 : index
    %c0_303 = arith.constant 0 : index
    %410 = vector.load %arg11[%c3_301, %c0_302, %c0_303] : memref<9x256x128xbf16, #tpu.memory_space<vmem>>, vector<1x256x128xbf16>
    %411 = vector.shape_cast %410 : vector<1x256x128xbf16> to vector<256x128xbf16>
    %cst_304 = arith.constant dense<0.000000e+00> : vector<256x8xf32>
    %412 = tpu.matmul %411, %396, %cst_304 {dimension_numbers = #tpu.dot_dimension_numbers<[1], [0], [0], [1], [0, 0, 1, 1], [], []>} : vector<256x128xbf16>, vector<128x8xbf16>, vector<256x8xf32> -> vector<256x8xf32>
    %413 = arith.truncf %412 : vector<256x8xf32> to vector<256x8xbf16>
    %c4_305 = arith.constant 4 : index
    %c0_306 = arith.constant 0 : index
    %c0_307 = arith.constant 0 : index
    %414 = vector.load %arg11[%c4_305, %c0_306, %c0_307] : memref<9x256x128xbf16, #tpu.memory_space<vmem>>, vector<1x256x128xbf16>
    %415 = vector.shape_cast %414 : vector<1x256x128xbf16> to vector<256x128xbf16>
    %cst_308 = arith.constant dense<0.000000e+00> : vector<256x8xf32>
    %416 = tpu.matmul %415, %396, %cst_308 {dimension_numbers = #tpu.dot_dimension_numbers<[1], [0], [0], [1], [0, 0, 1, 1], [], []>} : vector<256x128xbf16>, vector<128x8xbf16>, vector<256x8xf32> -> vector<256x8xf32>
    %417 = arith.truncf %416 : vector<256x8xf32> to vector<256x8xbf16>
    %c5_309 = arith.constant 5 : index
    %c0_310 = arith.constant 0 : index
    %c0_311 = arith.constant 0 : index
    %418 = vector.load %arg11[%c5_309, %c0_310, %c0_311] : memref<9x256x128xbf16, #tpu.memory_space<vmem>>, vector<1x256x128xbf16>
    %419 = vector.shape_cast %418 : vector<1x256x128xbf16> to vector<256x128xbf16>
    %cst_312 = arith.constant dense<0.000000e+00> : vector<256x8xf32>
    %420 = tpu.matmul %419, %396, %cst_312 {dimension_numbers = #tpu.dot_dimension_numbers<[1], [0], [0], [1], [0, 0, 1, 1], [], []>} : vector<256x128xbf16>, vector<128x8xbf16>, vector<256x8xf32> -> vector<256x8xf32>
    %421 = arith.truncf %420 : vector<256x8xf32> to vector<256x8xbf16>
    %c6_313 = arith.constant 6 : index
    %c0_314 = arith.constant 0 : index
    %c0_315 = arith.constant 0 : index
    %422 = vector.load %arg11[%c6_313, %c0_314, %c0_315] : memref<9x256x128xbf16, #tpu.memory_space<vmem>>, vector<1x256x128xbf16>
    %423 = vector.shape_cast %422 : vector<1x256x128xbf16> to vector<256x128xbf16>
    %cst_316 = arith.constant dense<0.000000e+00> : vector<256x8xf32>
    %424 = tpu.matmul %423, %396, %cst_316 {dimension_numbers = #tpu.dot_dimension_numbers<[1], [0], [0], [1], [0, 0, 1, 1], [], []>} : vector<256x128xbf16>, vector<128x8xbf16>, vector<256x8xf32> -> vector<256x8xf32>
    %425 = arith.truncf %424 : vector<256x8xf32> to vector<256x8xbf16>
    %c7_317 = arith.constant 7 : index
    %c0_318 = arith.constant 0 : index
    %c0_319 = arith.constant 0 : index
    %426 = vector.load %arg11[%c7_317, %c0_318, %c0_319] : memref<9x256x128xbf16, #tpu.memory_space<vmem>>, vector<1x256x128xbf16>
    %427 = vector.shape_cast %426 : vector<1x256x128xbf16> to vector<256x128xbf16>
    %cst_320 = arith.constant dense<0.000000e+00> : vector<256x8xf32>
    %428 = tpu.matmul %427, %396, %cst_320 {dimension_numbers = #tpu.dot_dimension_numbers<[1], [0], [0], [1], [0, 0, 1, 1], [], []>} : vector<256x128xbf16>, vector<128x8xbf16>, vector<256x8xf32> -> vector<256x8xf32>
    %429 = arith.truncf %428 : vector<256x8xf32> to vector<256x8xbf16>
    %c8_321 = arith.constant 8 : index
    %c0_322 = arith.constant 0 : index
    %c0_323 = arith.constant 0 : index
    %430 = vector.load %arg11[%c8_321, %c0_322, %c0_323] : memref<9x256x128xbf16, #tpu.memory_space<vmem>>, vector<1x256x128xbf16>
    %431 = vector.shape_cast %430 : vector<1x256x128xbf16> to vector<256x128xbf16>
    %cst_324 = arith.constant dense<0.000000e+00> : vector<256x8xf32>
    %432 = tpu.matmul %431, %396, %cst_324 {dimension_numbers = #tpu.dot_dimension_numbers<[1], [0], [0], [1], [0, 0, 1, 1], [], []>} : vector<256x128xbf16>, vector<128x8xbf16>, vector<256x8xf32> -> vector<256x8xf32>
    %433 = arith.truncf %432 : vector<256x8xf32> to vector<256x8xbf16>
    %434 = tpu.concatenate %401, %405, %409, %413, %417, %421, %425, %429, %433 in 1 : vector<256x8xbf16>, vector<256x8xbf16>, vector<256x8xbf16>, vector<256x8xbf16>, vector<256x8xbf16>, vector<256x8xbf16>, vector<256x8xbf16>, vector<256x8xbf16>, vector<256x8xbf16> -> vector<256x72xbf16>
    %c128 = arith.constant 128 : index
    %c0_325 = arith.constant 0 : index
    %435 = vector.load %arg2[%c128, %c0_325] : memref<208x72xbf16, #tpu.memory_space<vmem>>, vector<72x72xbf16>
    %cst_326 = arith.constant dense<0.000000e+00> : vector<256x72xf32>
    %436 = tpu.matmul %434, %435, %cst_326 {dimension_numbers = #tpu.dot_dimension_numbers<[1], [0], [0], [1], [0, 0, 1, 1], [], []>} : vector<256x72xbf16>, vector<72x72xbf16>, vector<256x72xf32> -> vector<256x72xf32>
    %437 = vector.broadcast %397 : vector<1x72xf32> to vector<256x72xf32>
    %438 = arith.addf %436, %437 : vector<256x72xf32>
    %cst_327 = arith.constant 0.000000e+00 : f32
    %439 = vector.broadcast %cst_327 : f32 to vector<256x72xf32>
    %440 = arith.maximumf %438, %439 : vector<256x72xf32>
    %c0_328 = arith.constant 0 : index
    %c0_329 = arith.constant 0 : index
    %441 = vector.load %arg1[%c0_328, %c0_329] : memref<8x72xbf16, #tpu.memory_space<vmem>>, vector<8x72xbf16>
    %442 = arith.truncf %440 : vector<256x72xf32> to vector<256x72xbf16>
    %cst_330 = arith.constant dense<0.000000e+00> : vector<8x256xf32>
    %443 = tpu.matmul %441, %442, %cst_330 {dimension_numbers = #tpu.dot_dimension_numbers<[1], [1], [0], [0], [0, 0, 1, 0], [], []>} : vector<8x72xbf16>, vector<256x72xbf16>, vector<8x256xf32> -> vector<8x256xf32>
    %444 = vector.extract_strided_slice %443 {offsets = [0, 0], sizes = [8, 128], strides = [1, 1]} : vector<8x256xf32> to vector<8x128xf32>
    %cst_331 = arith.constant dense<0xFF800000> : vector<8xf32>
    %445 = vector.multi_reduction <maximumf>, %444, %cst_331 [1] : vector<8x128xf32> to vector<8xf32>
    %446 = vector.shape_cast %445 : vector<8xf32> to vector<8x1xf32>
    %447 = vector.broadcast %446 : vector<8x1xf32> to vector<8x128xf32>
    %448 = arith.subf %444, %447 : vector<8x128xf32>
    %449 = math.exp %448 : vector<8x128xf32>
    %cst_332 = arith.constant dense<0.000000e+00> : vector<8xf32>
    %450 = vector.multi_reduction <add>, %449, %cst_332 [1] : vector<8x128xf32> to vector<8xf32>
    %451 = vector.shape_cast %450 : vector<8xf32> to vector<8x1xf32>
    %452 = tpu.reciprocal %451 {approx = true} : vector<8x1xf32> -> vector<8x1xf32>
    %453 = arith.mulf %451, %452 : vector<8x1xf32>
    %cst_333 = arith.constant 2.000000e+00 : f32
    %454 = vector.broadcast %cst_333 : f32 to vector<8x1xf32>
    %455 = arith.subf %454, %453 : vector<8x1xf32>
    %456 = arith.mulf %452, %455 : vector<8x1xf32>
    %457 = vector.broadcast %456 : vector<8x1xf32> to vector<8x128xf32>
    %458 = arith.mulf %449, %457 : vector<8x128xf32>
    %c0_334 = arith.constant 0 : index
    %c0_335 = arith.constant 0 : index
    %c0_336 = arith.constant 0 : index
    %459 = vector.load %arg13[%c0_334, %c0_335, %c0_336] : memref<2x8x128xf32, #tpu.memory_space<vmem>>, vector<1x8x128xf32>
    %460 = vector.shape_cast %459 : vector<1x8x128xf32> to vector<8x128xf32>
    %461 = vector.shape_cast %458 : vector<8x128xf32> to vector<1x8x128xf32>
    tpu.vector_store %arg13[%c0_334, %c0_335, %c0_336], %461 {strides = array<i32>} : memref<2x8x128xf32, #tpu.memory_space<vmem>>, vector<1x8x128xf32>,
    %462 = vector.extract_strided_slice %0 {offsets = [0, 0], sizes = [128, 32], strides = [1, 1]} : vector<256x32xf32> to vector<128x32xf32>
    %cst_337 = arith.constant dense<0.000000e+00> : vector<8x32xf32>
    %463 = tpu.matmul %458, %462, %cst_337 {dimension_numbers = #tpu.dot_dimension_numbers<[1], [0], [0], [1], [0, 0, 1, 1], [], []>} : vector<8x128xf32>, vector<128x32xf32>, vector<8x32xf32> -> vector<8x32xf32>
    %c0_338 = arith.constant 0 : index
    %c0_339 = arith.constant 0 : index
    %c0_340 = arith.constant 0 : index
    %464 = vector.load %arg12[%c0_338, %c0_339, %c0_340] : memref<2x8x32xf32, #tpu.memory_space<vmem>>, vector<1x8x32xf32>
    %465 = vector.shape_cast %464 : vector<1x8x32xf32> to vector<8x32xf32>
    %466 = vector.shape_cast %463 : vector<8x32xf32> to vector<1x8x32xf32>
    tpu.vector_store %arg12[%c0_338, %c0_339, %c0_340], %466 {strides = array<i32>} : memref<2x8x32xf32, #tpu.memory_space<vmem>>, vector<1x8x32xf32>,
    %467 = vector.extract_strided_slice %443 {offsets = [0, 128], sizes = [8, 128], strides = [1, 1]} : vector<8x256xf32> to vector<8x128xf32>
    %cst_341 = arith.constant dense<0xFF800000> : vector<8xf32>
    %468 = vector.multi_reduction <maximumf>, %467, %cst_341 [1] : vector<8x128xf32> to vector<8xf32>
    %469 = vector.shape_cast %468 : vector<8xf32> to vector<8x1xf32>
    %470 = vector.broadcast %469 : vector<8x1xf32> to vector<8x128xf32>
    %471 = arith.subf %467, %470 : vector<8x128xf32>
    %472 = math.exp %471 : vector<8x128xf32>
    %cst_342 = arith.constant dense<0.000000e+00> : vector<8xf32>
    %473 = vector.multi_reduction <add>, %472, %cst_342 [1] : vector<8x128xf32> to vector<8xf32>
    %474 = vector.shape_cast %473 : vector<8xf32> to vector<8x1xf32>
    %475 = tpu.reciprocal %474 {approx = true} : vector<8x1xf32> -> vector<8x1xf32>
    %476 = arith.mulf %474, %475 : vector<8x1xf32>
    %cst_343 = arith.constant 2.000000e+00 : f32
    %477 = vector.broadcast %cst_343 : f32 to vector<8x1xf32>
    %478 = arith.subf %477, %476 : vector<8x1xf32>
    %479 = arith.mulf %475, %478 : vector<8x1xf32>
    %480 = vector.broadcast %479 : vector<8x1xf32> to vector<8x128xf32>
    %481 = arith.mulf %472, %480 : vector<8x128xf32>
    %c1_344 = arith.constant 1 : index
    %c0_345 = arith.constant 0 : index
    %c0_346 = arith.constant 0 : index
    %482 = vector.load %arg13[%c1_344, %c0_345, %c0_346] : memref<2x8x128xf32, #tpu.memory_space<vmem>>, vector<1x8x128xf32>
    %483 = vector.shape_cast %482 : vector<1x8x128xf32> to vector<8x128xf32>
    %484 = vector.shape_cast %481 : vector<8x128xf32> to vector<1x8x128xf32>
    tpu.vector_store %arg13[%c1_344, %c0_345, %c0_346], %484 {strides = array<i32>} : memref<2x8x128xf32, #tpu.memory_space<vmem>>, vector<1x8x128xf32>,
    %485 = vector.extract_strided_slice %0 {offsets = [128, 0], sizes = [128, 32], strides = [1, 1]} : vector<256x32xf32> to vector<128x32xf32>
    %cst_347 = arith.constant dense<0.000000e+00> : vector<8x32xf32>
    %486 = tpu.matmul %481, %485, %cst_347 {dimension_numbers = #tpu.dot_dimension_numbers<[1], [0], [0], [1], [0, 0, 1, 1], [], []>} : vector<8x128xf32>, vector<128x32xf32>, vector<8x32xf32> -> vector<8x32xf32>
    %c1_348 = arith.constant 1 : index
    %c0_349 = arith.constant 0 : index
    %c0_350 = arith.constant 0 : index
    %487 = vector.load %arg12[%c1_348, %c0_349, %c0_350] : memref<2x8x32xf32, #tpu.memory_space<vmem>>, vector<1x8x32xf32>
    %488 = vector.shape_cast %487 : vector<1x8x32xf32> to vector<8x32xf32>
    %489 = vector.shape_cast %486 : vector<8x32xf32> to vector<1x8x32xf32>
    tpu.vector_store %arg12[%c1_348, %c0_349, %c0_350], %489 {strides = array<i32>} : memref<2x8x32xf32, #tpu.memory_space<vmem>>, vector<1x8x32xf32>,
    return
  }
}

</mosaic_0001>

<llo_original>
// kernel: _forward_impl.1
$region0: #{_forward_impl.1}
  #allocation0 [shape = 'u32[]', space=smem, size = 0x4, offset = 0x4, fixed_abs, tag = 'smem constant byte address 0x4 - core index']
  #allocation1 [shape = 'u32[144,128]{1,0:T(1,128)}', space=vmem, size = 0x12000, scoped, tag = 'internal scratch']
  %s0 = inlined_call_operand.hbm [shape: f32[256,32], index: 0, kind: input, shape index: {}]
  %s1 = inlined_call_operand.vmem [shape: bf16[8,72], index: 1, kind: input, shape index: {}]
  %s2 = inlined_call_operand.vmem [shape: bf16[208,72], index: 2, kind: input, shape index: {}]
  %s3 = inlined_call_operand.hbm [shape: f32[8,72], index: 3, kind: input, shape index: {}]
  %s4 = inlined_call_operand.hbm [shape: bf16[9,128,256], index: 4, kind: input, shape index: {}]
  %s5 = inlined_call_operand.hbm [shape: bf16[9,32,128], index: 5, kind: input, shape index: {}]
  %s6 = inlined_call_operand.hbm [shape: bf16[9,8,32], index: 6, kind: input, shape index: {}]
  %s7 = inlined_call_operand.vmem [shape: bf16[9,2,8], index: 7, kind: input, shape index: {}]
  %s8 = inlined_call_operand.vmem [shape: bf16[9,8,2], index: 8, kind: input, shape index: {}]
  %s9 = inlined_call_operand.vmem [shape: bf16[9,32,8], index: 9, kind: input, shape index: {}]
  %s10 = inlined_call_operand.vmem [shape: bf16[9,128,32], index: 10, kind: input, shape index: {}]
  %s11 = inlined_call_operand.vmem [shape: bf16[9,256,128], index: 11, kind: input, shape index: {}]
  %s12 = inlined_call_operand.hbm [shape: f32[2,8,32], index: 12, kind: output, shape index: {0}]
  %s13 = inlined_call_operand.vmem [shape: f32[2,8,128], index: 13, kind: output, shape index: {1}]
  %14 = xla_tuple %s12, %s13
  %s15 = sld [smem:[#allocation0]]
  $region86: #{_forward_impl.1} parent=0
    _
  %s17 = ssub.s32 1, %s15
  %s18 = scalar_select 0, %s17, %s15
  $region1: #{_forward_impl.1} parent=0
    #allocation2 [shape = 'u8[131072]{0}', space=vmem, size = 0x20000, scoped, tag = 'input window, operand 0, single buffered']
    #allocation3 [shape = 's32[1]{0}', space=sflag, size = 0x4, scoped, tag = 'scoped memory for _forward_impl.1']
    #allocation4 [shape = 's32[1]{0}', space=sflag, size = 0x4, scoped, tag = 'scoped memory for _forward_impl.1']
    #allocation5 [shape = 'u8[4096]{0}', space=vmem, size = 0x1000, scoped, tag = 'input window, operand 3, single buffered']
    #allocation6 [shape = 's32[1]{0}', space=sflag, size = 0x4, scoped, tag = 'scoped memory for _forward_impl.1']
    #allocation7 [shape = 'u8[589824]{0}', space=vmem, size = 0x90000, scoped, tag = 'input window, operand 4, single buffered']
    #allocation8 [shape = 'u8[73728]{0}', space=vmem, size = 0x12000, scoped, tag = 'input window, operand 5, single buffered']
    #allocation9 [shape = 's32[1]{0}', space=sflag, size = 0x4, scoped, tag = 'scoped memory for _forward_impl.1']
    #allocation10 [shape = 'u8[18432]{0}', space=vmem, size = 0x4800, scoped, tag = 'input window, operand 6, single buffered']
    #allocation11 [shape = 'u8[8192]{0}', space=vmem, size = 0x2000, scoped, tag = 'output window, operand 0, single buffered']
    %19 = vsyncpa [#allocation3], 0
    %20 = vsyncpa [#allocation6], 0
    %21 = vsyncpa [#allocation9], 0
    %22 = vsyncpa [#allocation4], 0
    // Predicated region
    $region2: #{_forward_impl.1} parent=1 // pred_check
      _
    $region3: #{_forward_impl.1} parent=1 // pred_check_branch
      %24 = sbr.rel (0) target = $region5
    $region4: #{_forward_impl.1} parent=1 // pred_region
      %s26 = ssub.s32 4096, 4096
      %27 = vsyncadd [#allocation3], %s26
      %s28 = sshll.u32 [#allocation2], 4
      %s29 = int_to_ptr.vmem [resolvable:$true] %s28
      %34 = dma.hbm_to_vmem [thread:$0]  %s0, 4096, %s29, [#allocation3], 128, 128, 8
    $region5: #{_forward_impl.1} parent=1 // pred_fallthru
      _
    // Predicated region
    $region6: #{_forward_impl.1} parent=1 // pred_check
      _
    $region7: #{_forward_impl.1} parent=1 // pred_check_branch
      %36 = sbr.rel (0) target = $region9
    $region8: #{_forward_impl.1} parent=1 // pred_region
      _
    $region9: #{_forward_impl.1} parent=1 // pred_fallthru
      _
    // Predicated region
    $region10: #{_forward_impl.1} parent=1 // pred_check
      _
    $region11: #{_forward_impl.1} parent=1 // pred_check_branch
      %38 = sbr.rel (0) target = $region13
    $region12: #{_forward_impl.1} parent=1 // pred_region
      _
    $region13: #{_forward_impl.1} parent=1 // pred_fallthru
      _
    // Predicated region
    $region14: #{_forward_impl.1} parent=1 // pred_check
      _
    $region15: #{_forward_impl.1} parent=1 // pred_check_branch
      %40 = sbr.rel (0) target = $region17
    $region16: #{_forward_impl.1} parent=1 // pred_region
      %s42 = ssub.s32 128, 128
      %43 = vsyncadd [#allocation6], %s42
      %s45 = sshll.u32 [#allocation5], 4
      %s46 = int_to_ptr.vmem [resolvable:$true] %s45
      %48 = dma.hbm_to_vmem [thread:$0]  %s3, 128, %s46, [#allocation6]
    $region17: #{_forward_impl.1} parent=1 // pred_fallthru
      _
    // Predicated region
    $region18: #{_forward_impl.1} parent=1 // pred_check
      _
    $region19: #{_forward_impl.1} parent=1 // pred_check_branch
      %50 = sbr.rel (0) target = $region21
    $region20: #{_forward_impl.1} parent=1 // pred_region
      %s52 = ssub.s32 18432, 18432
      %53 = vsyncadd [#allocation6], %s52
      %s54 = sshll.u32 [#allocation7], 4
      %s55 = int_to_ptr.vmem [resolvable:$true] %s54
      %60 = dma.hbm_to_vmem [thread:$0]  %s4, 18432, %s55, [#allocation6], 128, 128, 8
    $region21: #{_forward_impl.1} parent=1 // pred_fallthru
      _
    // Predicated region
    $region22: #{_forward_impl.1} parent=1 // pred_check
      _
    $region23: #{_forward_impl.1} parent=1 // pred_check_branch
      %62 = sbr.rel (0) target = $region25
    $region24: #{_forward_impl.1} parent=1 // pred_region
      %s64 = ssub.s32 2304, 2304
      %65 = vsyncadd [#allocation9], %s64
      %s66 = sshll.u32 [#allocation8], 4
      %s67 = int_to_ptr.vmem [resolvable:$true] %s66
      %72 = dma.hbm_to_vmem [thread:$0]  %s5, 2304, %s67, [#allocation9], 64, 64, 4
    $region25: #{_forward_impl.1} parent=1 // pred_fallthru
      _
    // Predicated region
    $region26: #{_forward_impl.1} parent=1 // pred_check
      _
    $region27: #{_forward_impl.1} parent=1 // pred_check_branch
      %74 = sbr.rel (0) target = $region29
    $region28: #{_forward_impl.1} parent=1 // pred_region
      %s76 = ssub.s32 576, 576
      %77 = vsyncadd [#allocation9], %s76
      %s78 = sshll.u32 [#allocation10], 4
      %s79 = int_to_ptr.vmem [resolvable:$true] %s78
      %84 = dma.hbm_to_vmem [thread:$0]  %s6, 576, %s79, [#allocation9], 64, 64, 4
    $region29: #{_forward_impl.1} parent=1 // pred_fallthru
      _
    // Predicated region
    $region30: #{_forward_impl.1} parent=1 // pred_check
      _
    $region31: #{_forward_impl.1} parent=1 // pred_check_branch
      %86 = sbr.rel (0) target = $region33
    $region32: #{_forward_impl.1} parent=1 // pred_region
      _
    $region33: #{_forward_impl.1} parent=1 // pred_fallthru
      _
    // Predicated region
    $region34: #{_forward_impl.1} parent=1 // pred_check
      _
    $region35: #{_forward_impl.1} parent=1 // pred_check_branch
      %88 = sbr.rel (0) target = $region37
    $region36: #{_forward_impl.1} parent=1 // pred_region
      _
    $region37: #{_forward_impl.1} parent=1 // pred_fallthru
      _
    // Predicated region
    $region38: #{_forward_impl.1} parent=1 // pred_check
      _
    $region39: #{_forward_impl.1} parent=1 // pred_check_branch
      %90 = sbr.rel (0) target = $region41
    $region40: #{_forward_impl.1} parent=1 // pred_region
      _
    $region41: #{_forward_impl.1} parent=1 // pred_fallthru
      _
    // Predicated region
    $region42: #{_forward_impl.1} parent=1 // pred_check
      _
    $region43: #{_forward_impl.1} parent=1 // pred_check_branch
      %92 = sbr.rel (0) target = $region45
    $region44: #{_forward_impl.1} parent=1 // pred_region
      _
    $region45: #{_forward_impl.1} parent=1 // pred_fallthru
      _
    // Predicated region
    $region46: #{_forward_impl.1} parent=1 // pred_check
      _
    $region47: #{_forward_impl.1} parent=1 // pred_check_branch
      %94 = sbr.rel (0) target = $region49
    $region48: #{_forward_impl.1} parent=1 // pred_region
      _
    $region49: #{_forward_impl.1} parent=1 // pred_fallthru
      _
    // Predicated region
    $region50: #{_forward_impl.1} parent=1 // pred_check
      _
    $region51: #{_forward_impl.1} parent=1 // pred_check_branch
      %96 = sbr.rel (0) target = $region53
    $region52: #{_forward_impl.1} parent=1 // pred_region
      %97 = dma.done [#allocation3], 4096
    $region53: #{_forward_impl.1} parent=1 // pred_fallthru
      _
    // Predicated region
    $region54: #{_forward_impl.1} parent=1 // pred_check
      _
    $region55: #{_forward_impl.1} parent=1 // pred_check_branch
      %99 = sbr.rel (0) target = $region57
    $region56: #{_forward_impl.1} parent=1 // pred_region
      %100 = dma.done [#allocation6], 128
    $region57: #{_forward_impl.1} parent=1 // pred_fallthru
      _
    // Predicated region
    $region58: #{_forward_impl.1} parent=1 // pred_check
      _
    $region59: #{_forward_impl.1} parent=1 // pred_check_branch
      %102 = sbr.rel (0) target = $region61
    $region60: #{_forward_impl.1} parent=1 // pred_region
      %103 = dma.done [#allocation6], 18432
    $region61: #{_forward_impl.1} parent=1 // pred_fallthru
      _
    // Predicated region
    $region62: #{_forward_impl.1} parent=1 // pred_check
      _
    $region63: #{_forward_impl.1} parent=1 // pred_check_branch
      %105 = sbr.rel (0) target = $region65
    $region64: #{_forward_impl.1} parent=1 // pred_region
      %106 = dma.done [#allocation9], 2304
    $region65: #{_forward_impl.1} parent=1 // pred_fallthru
      _
    // Predicated region
    $region66: #{_forward_impl.1} parent=1 // pred_check
      _
    $region67: #{_forward_impl.1} parent=1 // pred_check_branch
      %108 = sbr.rel (0) target = $region69
    $region68: #{_forward_impl.1} parent=1 // pred_region
      %109 = dma.done [#allocation9], 576
    $region69: #{_forward_impl.1} parent=1 // pred_fallthru
      _
    %v111 = vld [vmem:[#allocation2] sm:$0xff]
    %v112 = vld [vmem:[#allocation2 + $0x8] sm:$0xff]
    %v113 = vld [vmem:[#allocation2 + $0x10] sm:$0xff]
    %v114 = vld [vmem:[#allocation2 + $0x18] sm:$0xff]
    %v115 = vld [vmem:[#allocation2 + $0x20] sm:$0xff]
    %v116 = vld [vmem:[#allocation2 + $0x28] sm:$0xff]
    %v117 = vld [vmem:[#allocation2 + $0x30] sm:$0xff]
    %v118 = vld [vmem:[#allocation2 + $0x38] sm:$0xff]
    %v119 = vld [vmem:[#allocation2 + $0x40] sm:$0xff]
    %v120 = vld [vmem:[#allocation2 + $0x48] sm:$0xff]
    %v121 = vld [vmem:[#allocation2 + $0x50] sm:$0xff]
    %v122 = vld [vmem:[#allocation2 + $0x58] sm:$0xff]
    %v123 = vld [vmem:[#allocation2 + $0x60] sm:$0xff]
    %v124 = vld [vmem:[#allocation2 + $0x68] sm:$0xff]
    %v125 = vld [vmem:[#allocation2 + $0x70] sm:$0xff]
    %v126 = vld [vmem:[#allocation2 + $0x78] sm:$0xff]
    %v127 = vld [vmem:[#allocation2 + $0x80] sm:$0xff]
    %v128 = vld [vmem:[#allocation2 + $0x88] sm:$0xff]
    %v129 = vld [vmem:[#allocation2 + $0x90] sm:$0xff]
    %v130 = vld [vmem:[#allocation2 + $0x98] sm:$0xff]
    %v131 = vld [vmem:[#allocation2 + $0xa0] sm:$0xff]
    %v132 = vld [vmem:[#allocation2 + $0xa8] sm:$0xff]
    %v133 = vld [vmem:[#allocation2 + $0xb0] sm:$0xff]
    %v134 = vld [vmem:[#allocation2 + $0xb8] sm:$0xff]
    %v135 = vld [vmem:[#allocation2 + $0xc0] sm:$0xff]
    %v136 = vld [vmem:[#allocation2 + $0xc8] sm:$0xff]
    %v137 = vld [vmem:[#allocation2 + $0xd0] sm:$0xff]
    %v138 = vld [vmem:[#allocation2 + $0xd8] sm:$0xff]
    %v139 = vld [vmem:[#allocation2 + $0xe0] sm:$0xff]
    %v140 = vld [vmem:[#allocation2 + $0xe8] sm:$0xff]
    %v141 = vld [vmem:[#allocation2 + $0xf0] sm:$0xff]
    %v142 = vld [vmem:[#allocation2 + $0xf8] sm:$0xff]
    %v143 = vpack.c.bf16 %v112, %v111
    %v144 = vpack.c.bf16 %v114, %v113
    %v145 = vpack.c.bf16 %v116, %v115
    %v146 = vpack.c.bf16 %v118, %v117
    %v147 = vpack.c.bf16 %v120, %v119
    %v148 = vpack.c.bf16 %v122, %v121
    %v149 = vpack.c.bf16 %v124, %v123
    %v150 = vpack.c.bf16 %v126, %v125
    %v151 = vpack.c.bf16 %v128, %v127
    %v152 = vpack.c.bf16 %v130, %v129
    %v153 = vpack.c.bf16 %v132, %v131
    %v154 = vpack.c.bf16 %v134, %v133
    %v155 = vpack.c.bf16 %v136, %v135
    %v156 = vpack.c.bf16 %v138, %v137
    %v157 = vpack.c.bf16 %v140, %v139
    %v158 = vpack.c.bf16 %v142, %v141
    %v159 = vld [vmem:[#allocation5] sm:$0x1]
    %v160 = vld [vmem:[%s2] sm:$0xf]
    %v161 = vld [vmem:[%s2 + $0x4] sm:$0xf]
    %v162 = vld [vmem:[%s2 + $0x8] sm:$0xf]
    %v163 = vld [vmem:[%s2 + $0xc] sm:$0xf]
    %v168 = vunpack.c.l.b16 %v160
    %v169 = vunpack.c.l.b16 %v161
    %v170 = vunpack.c.l.b16 %v162
    %v171 = vunpack.c.l.b16 %v163
    %v172 = vpack.c.b16 %v169, %v168
    %v173 = vpack.c.b16 %v171, %v170
    %vm176 = vcmask 261120
    %v178 = vsel %vm176, %v143, 0
    %v181 = vsel %vm176, %v144, 0
    %v184 = vsel %vm176, %v145, 0
    %v187 = vsel %vm176, %v146, 0
    %v190 = vsel %vm176, %v147, 0
    %v193 = vsel %vm176, %v148, 0
    %v196 = vsel %vm176, %v149, 0
    %v199 = vsel %vm176, %v150, 0
    %v202 = vsel %vm176, %v151, 0
    %v205 = vsel %vm176, %v152, 0
    %v208 = vsel %vm176, %v153, 0
    %v211 = vsel %vm176, %v154, 0
    %v214 = vsel %vm176, %v155, 0
    %v217 = vsel %vm176, %v156, 0
    %v220 = vsel %vm176, %v157, 0
    %v223 = vsel %vm176, %v158, 0
    %225 = vmatprep.subr.bf16.mxu0 0
    %226 = vmatpush1.bf16.msra.mxu0 0
    %227 = vmatprep.subr.bf16.mxu0 0
    %228 = vmatpush1.bf16.msra.mxu0 0
    %229 = vmatprep.subr.bf16.mxu0 0
    %230 = vmatpush1.bf16.msra.mxu0 0
    %231 = vmatprep.subr.bf16.mxu0 0
    %232 = vmatpush1.bf16.msra.mxu0 0
    %233 = vmatprep.subr.bf16.mxu0 0
    %234 = vmatpush1.bf16.msra.mxu0 0
    %235 = vmatprep.subr.bf16.mxu0 0
    %236 = vmatpush1.bf16.msra.mxu0 0
    %237 = vmatprep.subr.bf16.mxu0 0
    %238 = vmatpush1.bf16.msra.mxu0 %v173
    %239 = vmatprep.subr.bf16.mxu0 0
    %240 = vmatpush1.bf16.msra.mxu0 %v172
    %241 = vmatprep.subr.bf16.mxu0 0
    %242 = vmatpush2.bf16.msra.mxu0 0
    %243 = vmatprep.subr.bf16.mxu0 0
    %244 = vmatpush2.bf16.msra.mxu0 0
    %245 = vmatprep.subr.bf16.mxu0 0
    %246 = vmatpush2.bf16.msra.mxu0 0
    %247 = vmatprep.subr.bf16.mxu0 0
    %248 = vmatpush2.bf16.msra.mxu0 0
    %249 = vmatprep.subr.bf16.mxu0 0
    %250 = vmatpush2.bf16.msra.mxu0 0
    %251 = vmatprep.subr.bf16.mxu0 0
    %252 = vmatpush2.bf16.msra.mxu0 0
    %253 = vmatprep.subr.bf16.mxu0 0
    %254 = vmatpush2.bf16.msra.mxu0 0
    %255 = vmatprep.subr.bf16.mxu0 0
    %256 = vmatpush2.bf16.msra.mxu0 0
    %257 = vmatprep.mubr.bf16.mxu0 0
    %258 = vmatmul.mubr.bf16.gmra.mxu0 %v178
    %v259 = vpop.f32.mrf.mxu0
    %v260 = vadd.f32 0.0, %v259
    %v261 = vpop.f32.mrf.mxu0
    %v262 = vpop.f32.mrf.mxu0
    %v263 = vadd.f32 0.0, %v262
    %v264 = vpop.f32.mrf.mxu0
    %265 = vmatprep.mubr.bf16.mxu0 0
    %266 = vmatmul.mubr.bf16.gmra.mxu0 %v181
    %v267 = vpop.f32.mrf.mxu0
    %v268 = vadd.f32 0.0, %v267
    %v269 = vpop.f32.mrf.mxu0
    %v270 = vpop.f32.mrf.mxu0
    %v271 = vadd.f32 0.0, %v270
    %v272 = vpop.f32.mrf.mxu0
    %273 = vmatprep.mubr.bf16.mxu0 0
    %274 = vmatmul.mubr.bf16.gmra.mxu0 %v184
    %v275 = vpop.f32.mrf.mxu0
    %v276 = vadd.f32 0.0, %v275
    %v277 = vpop.f32.mrf.mxu0
    %v278 = vpop.f32.mrf.mxu0
    %v279 = vadd.f32 0.0, %v278
    %v280 = vpop.f32.mrf.mxu0
    %281 = vmatprep.mubr.bf16.mxu0 0
    %282 = vmatmul.mubr.bf16.gmra.mxu0 %v187
    %v283 = vpop.f32.mrf.mxu0
    %v284 = vadd.f32 0.0, %v283
    %v285 = vpop.f32.mrf.mxu0
    %v286 = vpop.f32.mrf.mxu0
    %v287 = vadd.f32 0.0, %v286
    %v288 = vpop.f32.mrf.mxu0
    %289 = vmatprep.mubr.bf16.mxu0 0
    %290 = vmatmul.mubr.bf16.gmra.mxu0 %v190
    %v291 = vpop.f32.mrf.mxu0
    %v292 = vadd.f32 0.0, %v291
    %v293 = vpop.f32.mrf.mxu0
    %v294 = vpop.f32.mrf.mxu0
    %v295 = vadd.f32 0.0, %v294
    %v296 = vpop.f32.mrf.mxu0
    %297 = vmatprep.mubr.bf16.mxu0 0
    %298 = vmatmul.mubr.bf16.gmra.mxu0 %v193
    %v299 = vpop.f32.mrf.mxu0
    %v300 = vadd.f32 0.0, %v299
    %v301 = vpop.f32.mrf.mxu0
    %v302 = vpop.f32.mrf.mxu0
    %v303 = vadd.f32 0.0, %v302
    %v304 = vpop.f32.mrf.mxu0
    %305 = vmatprep.mubr.bf16.mxu0 0
    %306 = vmatmul.mubr.bf16.gmra.mxu0 %v196
    %v307 = vpop.f32.mrf.mxu0
    %v308 = vadd.f32 0.0, %v307
    %v309 = vpop.f32.mrf.mxu0
    %v310 = vpop.f32.mrf.mxu0
    %v311 = vadd.f32 0.0, %v310
    %v312 = vpop.f32.mrf.mxu0
    %313 = vmatprep.mubr.bf16.mxu0 0
    %314 = vmatmul.mubr.bf16.gmra.mxu0 %v199
    %v315 = vpop.f32.mrf.mxu0
    %v316 = vadd.f32 0.0, %v315
    %v317 = vpop.f32.mrf.mxu0
    %v318 = vpop.f32.mrf.mxu0
    %v319 = vadd.f32 0.0, %v318
    %v320 = vpop.f32.mrf.mxu0
    %321 = vmatprep.mubr.bf16.mxu0 0
    %322 = vmatmul.mubr.bf16.gmra.mxu0 %v202
    %v323 = vpop.f32.mrf.mxu0
    %v324 = vadd.f32 0.0, %v323
    %v325 = vpop.f32.mrf.mxu0
    %v326 = vpop.f32.mrf.mxu0
    %v327 = vadd.f32 0.0, %v326
    %v328 = vpop.f32.mrf.mxu0
    %329 = vmatprep.mubr.bf16.mxu0 0
    %330 = vmatmul.mubr.bf16.gmra.mxu0 %v205
    %v331 = vpop.f32.mrf.mxu0
    %v332 = vadd.f32 0.0, %v331
    %v333 = vpop.f32.mrf.mxu0
    %v334 = vpop.f32.mrf.mxu0
    %v335 = vadd.f32 0.0, %v334
    %v336 = vpop.f32.mrf.mxu0
    %337 = vmatprep.mubr.bf16.mxu0 0
    %338 = vmatmul.mubr.bf16.gmra.mxu0 %v208
    %v339 = vpop.f32.mrf.mxu0
    %v340 = vadd.f32 0.0, %v339
    %v341 = vpop.f32.mrf.mxu0
    %v342 = vpop.f32.mrf.mxu0
    %v343 = vadd.f32 0.0, %v342
    %v344 = vpop.f32.mrf.mxu0
    %345 = vmatprep.mubr.bf16.mxu0 0
    %346 = vmatmul.mubr.bf16.gmra.mxu0 %v211
    %v347 = vpop.f32.mrf.mxu0
    %v348 = vadd.f32 0.0, %v347
    %v349 = vpop.f32.mrf.mxu0
    %v350 = vpop.f32.mrf.mxu0
    %v351 = vadd.f32 0.0, %v350
    %v352 = vpop.f32.mrf.mxu0
    %353 = vmatprep.mubr.bf16.mxu0 0
    %354 = vmatmul.mubr.bf16.gmra.mxu0 %v214
    %v355 = vpop.f32.mrf.mxu0
    %v356 = vadd.f32 0.0, %v355
    %v357 = vpop.f32.mrf.mxu0
    %v358 = vpop.f32.mrf.mxu0
    %v359 = vadd.f32 0.0, %v358
    %v360 = vpop.f32.mrf.mxu0
    %361 = vmatprep.mubr.bf16.mxu0 0
    %362 = vmatmul.mubr.bf16.gmra.mxu0 %v217
    %v363 = vpop.f32.mrf.mxu0
    %v364 = vadd.f32 0.0, %v363
    %v365 = vpop.f32.mrf.mxu0
    %v366 = vpop.f32.mrf.mxu0
    %v367 = vadd.f32 0.0, %v366
    %v368 = vpop.f32.mrf.mxu0
    %369 = vmatprep.mubr.bf16.mxu0 0
    %370 = vmatmul.mubr.bf16.gmra.mxu0 %v220
    %v371 = vpop.f32.mrf.mxu0
    %v372 = vadd.f32 0.0, %v371
    %v373 = vpop.f32.mrf.mxu0
    %v374 = vpop.f32.mrf.mxu0
    %v375 = vadd.f32 0.0, %v374
    %v376 = vpop.f32.mrf.mxu0
    %377 = vmatprep.mubr.bf16.mxu0 0
    %378 = vmatmul.mubr.bf16.gmra.mxu0 %v223
    %v379 = vpop.f32.mrf.mxu0
    %v380 = vadd.f32 0.0, %v379
    %v381 = vpop.f32.mrf.mxu0
    %v382 = vpop.f32.mrf.mxu0
    %v383 = vadd.f32 0.0, %v382
    %v384 = vpop.f32.mrf.mxu0
    %385 = vdwg.mxu0
    %v386 = vpack.c.bf16 %v263, %v260
    %v387 = vpack.c.bf16 %v271, %v268
    %v388 = vpack.c.bf16 %v279, %v276
    %v389 = vpack.c.bf16 %v287, %v284
    %v390 = vpack.c.bf16 %v295, %v292
    %v391 = vpack.c.bf16 %v303, %v300
    %v392 = vpack.c.bf16 %v311, %v308
    %v393 = vpack.c.bf16 %v319, %v316
    %v394 = vpack.c.bf16 %v327, %v324
    %v395 = vpack.c.bf16 %v335, %v332
    %v396 = vpack.c.bf16 %v343, %v340
    %v397 = vpack.c.bf16 %v351, %v348
    %v398 = vpack.c.bf16 %v359, %v356
    %v399 = vpack.c.bf16 %v367, %v364
    %v400 = vpack.c.bf16 %v375, %v372
    %v401 = vpack.c.bf16 %v383, %v380
    %v402 = vld [vmem:[#allocation7] sm:$0xff]
    %v403 = vld [vmem:[#allocation7 + $0x8] sm:$0xff]
    %v404 = vld [vmem:[#allocation7 + $0x10] sm:$0xff]
    %v405 = vld [vmem:[#allocation7 + $0x18] sm:$0xff]
    %v406 = vld [vmem:[#allocation7 + $0x20] sm:$0xff]
    %v407 = vld [vmem:[#allocation7 + $0x28] sm:$0xff]
    %v408 = vld [vmem:[#allocation7 + $0x30] sm:$0xff]
    %v409 = vld [vmem:[#allocation7 + $0x38] sm:$0xff]
    %v410 = vld [vmem:[#allocation7 + $0x40] sm:$0xff]
    %v411 = vld [vmem:[#allocation7 + $0x48] sm:$0xff]
    %v412 = vld [vmem:[#allocation7 + $0x50] sm:$0xff]
    %v413 = vld [vmem:[#allocation7 + $0x58] sm:$0xff]
    %v414 = vld [vmem:[#allocation7 + $0x60] sm:$0xff]
    %v415 = vld [vmem:[#allocation7 + $0x68] sm:$0xff]
    %v416 = vld [vmem:[#allocation7 + $0x70] sm:$0xff]
    %v417 = vld [vmem:[#allocation7 + $0x78] sm:$0xff]
    %s418 = scalar_lea.vmem [#allocation7], 128
    %v419 = vld [vmem:[%s418] sm:$0xff]
    %v420 = vld [vmem:[%s418 + $0x8] sm:$0xff]
    %v421 = vld [vmem:[%s418 + $0x10] sm:$0xff]
    %v422 = vld [vmem:[%s418 + $0x18] sm:$0xff]
    %v423 = vld [vmem:[%s418 + $0x20] sm:$0xff]
    %v424 = vld [vmem:[%s418 + $0x28] sm:$0xff]
    %v425 = vld [vmem:[%s418 + $0x30] sm:$0xff]
    %v426 = vld [vmem:[%s418 + $0x38] sm:$0xff]
    %v427 = vld [vmem:[%s418 + $0x40] sm:$0xff]
    %v428 = vld [vmem:[%s418 + $0x48] sm:$0xff]
    %v429 = vld [vmem:[%s418 + $0x50] sm:$0xff]
    %v430 = vld [vmem:[%s418 + $0x58] sm:$0xff]
    %v431 = vld [vmem:[%s418 + $0x60] sm:$0xff]
    %v432 = vld [vmem:[%s418 + $0x68] sm:$0xff]
    %v433 = vld [vmem:[%s418 + $0x70] sm:$0xff]
    %v434 = vld [vmem:[%s418 + $0x78] sm:$0xff]
    %v451 = vunpack.c.l.b16 %v419
    %v452 = vunpack.c.h.b16 %v419
    %v453 = vunpack.c.l.b16 %v420
    %v454 = vunpack.c.h.b16 %v420
    %v455 = vunpack.c.l.b16 %v421
    %v456 = vunpack.c.h.b16 %v421
    %v457 = vunpack.c.l.b16 %v422
    %v458 = vunpack.c.h.b16 %v422
    %v459 = vunpack.c.l.b16 %v423
    %v460 = vunpack.c.h.b16 %v423
    %v461 = vunpack.c.l.b16 %v424
    %v462 = vunpack.c.h.b16 %v424
    %v463 = vunpack.c.l.b16 %v425
    %v464 = vunpack.c.h.b16 %v425
    %v465 = vunpack.c.l.b16 %v426
    %v466 = vunpack.c.h.b16 %v426
    %v467 = vunpack.c.l.b16 %v427
    %v468 = vunpack.c.h.b16 %v427
    %v469 = vunpack.c.l.b16 %v428
    %v470 = vunpack.c.h.b16 %v428
    %v471 = vunpack.c.l.b16 %v429
    %v472 = vunpack.c.h.b16 %v429
    %v473 = vunpack.c.l.b16 %v430
    %v474 = vunpack.c.h.b16 %v430
    %v475 = vunpack.c.l.b16 %v431
    %v476 = vunpack.c.h.b16 %v431
    %v477 = vunpack.c.l.b16 %v432
    %v478 = vunpack.c.h.b16 %v432
    %v479 = vunpack.c.l.b16 %v433
    %v480 = vunpack.c.h.b16 %v433
    %v481 = vunpack.c.l.b16 %v434
    %v482 = vunpack.c.h.b16 %v434
    %v483 = vpack.c.b16 %v453, %v451
    %v484 = vpack.c.b16 %v454, %v452
    %v485 = vpack.c.b16 %v457, %v455
    %v486 = vpack.c.b16 %v458, %v456
    %v487 = vpack.c.b16 %v461, %v459
    %v488 = vpack.c.b16 %v462, %v460
    %v489 = vpack.c.b16 %v465, %v463
    %v490 = vpack.c.b16 %v466, %v464
    %v491 = vpack.c.b16 %v469, %v467
    %v492 = vpack.c.b16 %v470, %v468
    %v493 = vpack.c.b16 %v473, %v471
    %v494 = vpack.c.b16 %v474, %v472
    %v495 = vpack.c.b16 %v477, %v475
    %v496 = vpack.c.b16 %v478, %v476
    %v497 = vpack.c.b16 %v481, %v479
    %v498 = vpack.c.b16 %v482, %v480
    %531 = vrot.lane.b32.xlu0 %v386, 120
    %v532 = vpop.permute.xlu0 %531
    %533 = vrot.lane.b32.xlu0 %v387, 120
    %v534 = vpop.permute.xlu0 %533
    %535 = vrot.lane.b32.xlu0 %v388, 120
    %v536 = vpop.permute.xlu0 %535
    %537 = vrot.lane.b32.xlu0 %v389, 120
    %v538 = vpop.permute.xlu0 %537
    %539 = vrot.lane.b32.xlu0 %v390, 120
    %v540 = vpop.permute.xlu0 %539
    %541 = vrot.lane.b32.xlu0 %v391, 120
    %v542 = vpop.permute.xlu0 %541
    %543 = vrot.lane.b32.xlu0 %v392, 120
    %v544 = vpop.permute.xlu0 %543
    %545 = vrot.lane.b32.xlu0 %v393, 120
    %v546 = vpop.permute.xlu0 %545
    %547 = vrot.lane.b32.xlu0 %v394, 120
    %v548 = vpop.permute.xlu0 %547
    %549 = vrot.lane.b32.xlu0 %v395, 120
    %v550 = vpop.permute.xlu0 %549
    %551 = vrot.lane.b32.xlu0 %v396, 120
    %v552 = vpop.permute.xlu0 %551
    %553 = vrot.lane.b32.xlu0 %v397, 120
    %v554 = vpop.permute.xlu0 %553
    %555 = vrot.lane.b32.xlu0 %v398, 120
    %v556 = vpop.permute.xlu0 %555
    %557 = vrot.lane.b32.xlu0 %v399, 120
    %v558 = vpop.permute.xlu0 %557
    %559 = vrot.lane.b32.xlu0 %v400, 120
    %v560 = vpop.permute.xlu0 %559
    %561 = vrot.lane.b32.xlu0 %v401, 120
    %v562 = vpop.permute.xlu0 %561
    %579 = vmatprep.subr.bf16.mxu0 0
    %580 = vmatpush1.bf16.msra.mxu0 %v546
    %581 = vmatprep.subr.bf16.mxu0 0
    %582 = vmatpush1.bf16.msra.mxu0 %v544
    %583 = vmatprep.subr.bf16.mxu0 0
    %584 = vmatpush1.bf16.msra.mxu0 %v542
    %585 = vmatprep.subr.bf16.mxu0 0
    %586 = vmatpush1.bf16.msra.mxu0 %v540
    %587 = vmatprep.subr.bf16.mxu0 0
    %588 = vmatpush1.bf16.msra.mxu0 %v538
    %589 = vmatprep.subr.bf16.mxu0 0
    %590 = vmatpush1.bf16.msra.mxu0 %v536
    %591 = vmatprep.subr.bf16.mxu0 0
    %592 = vmatpush1.bf16.msra.mxu0 %v534
    %593 = vmatprep.subr.bf16.mxu0 0
    %594 = vmatpush1.bf16.msra.mxu0 %v532
    %595 = vmatprep.subr.bf16.mxu0 0
    %596 = vmatpush2.bf16.msra.mxu0 %v562
    %597 = vmatprep.subr.bf16.mxu0 0
    %598 = vmatpush2.bf16.msra.mxu0 %v560
    %599 = vmatprep.subr.bf16.mxu0 0
    %600 = vmatpush2.bf16.msra.mxu0 %v558
    %601 = vmatprep.subr.bf16.mxu0 0
    %602 = vmatpush2.bf16.msra.mxu0 %v556
    %603 = vmatprep.subr.bf16.mxu0 0
    %604 = vmatpush2.bf16.msra.mxu0 %v554
    %605 = vmatprep.subr.bf16.mxu0 0
    %606 = vmatpush2.bf16.msra.mxu0 %v552
    %607 = vmatprep.subr.bf16.mxu0 0
    %608 = vmatpush2.bf16.msra.mxu0 %v550
    %609 = vmatprep.subr.bf16.mxu0 0
    %610 = vmatpush2.bf16.msra.mxu0 %v548
    %611 = vmatprep.mubr.bf16.mxu0 %v484
    %612 = vmatmul.mubr.bf16.gmra.mxu0 %v483
    %v613 = vpop.f32.mrf.mxu0
    %v614 = vadd.f32 0.0, %v613
    %v615 = vpop.f32.mrf.mxu0
    %v616 = vpop.f32.mrf.mxu0
    %v617 = vadd.f32 0.0, %v616
    %v618 = vpop.f32.mrf.mxu0
    %619 = vmatprep.mubr.bf16.mxu0 %v486
    %620 = vmatmul.mubr.bf16.gmra.mxu0 %v485
    %v621 = vpop.f32.mrf.mxu0
    %v622 = vadd.f32 0.0, %v621
    %v623 = vpop.f32.mrf.mxu0
    %v624 = vpop.f32.mrf.mxu0
    %v625 = vadd.f32 0.0, %v624
    %v626 = vpop.f32.mrf.mxu0
    %627 = vmatprep.mubr.bf16.mxu0 %v488
    %628 = vmatmul.mubr.bf16.gmra.mxu0 %v487
    %v629 = vpop.f32.mrf.mxu0
    %v630 = vadd.f32 0.0, %v629
    %v631 = vpop.f32.mrf.mxu0
    %v632 = vpop.f32.mrf.mxu0
    %v633 = vadd.f32 0.0, %v632
    %v634 = vpop.f32.mrf.mxu0
    %635 = vmatprep.mubr.bf16.mxu0 %v490
    %636 = vmatmul.mubr.bf16.gmra.mxu0 %v489
    %v637 = vpop.f32.mrf.mxu0
    %v638 = vadd.f32 0.0, %v637
    %v639 = vpop.f32.mrf.mxu0
    %v640 = vpop.f32.mrf.mxu0
    %v641 = vadd.f32 0.0, %v640
    %v642 = vpop.f32.mrf.mxu0
    %643 = vmatprep.mubr.bf16.mxu0 %v492
    %644 = vmatmul.mubr.bf16.gmra.mxu0 %v491
    %v645 = vpop.f32.mrf.mxu0
    %v646 = vadd.f32 0.0, %v645
    %v647 = vpop.f32.mrf.mxu0
    %v648 = vpop.f32.mrf.mxu0
    %v649 = vadd.f32 0.0, %v648
    %v650 = vpop.f32.mrf.mxu0
    %651 = vmatprep.mubr.bf16.mxu0 %v494
    %652 = vmatmul.mubr.bf16.gmra.mxu0 %v493
    %v653 = vpop.f32.mrf.mxu0
    %v654 = vadd.f32 0.0, %v653
    %v655 = vpop.f32.mrf.mxu0
    %v656 = vpop.f32.mrf.mxu0
    %v657 = vadd.f32 0.0, %v656
    %v658 = vpop.f32.mrf.mxu0
    %659 = vmatprep.mubr.bf16.mxu0 %v496
    %660 = vmatmul.mubr.bf16.gmra.mxu0 %v495
    %v661 = vpop.f32.mrf.mxu0
    %v662 = vadd.f32 0.0, %v661
    %v663 = vpop.f32.mrf.mxu0
    %v664 = vpop.f32.mrf.mxu0
    %v665 = vadd.f32 0.0, %v664
    %v666 = vpop.f32.mrf.mxu0
    %667 = vmatprep.mubr.bf16.mxu0 %v498
    %668 = vmatmul.mubr.bf16.gmra.mxu0 %v497
    %v669 = vpop.f32.mrf.mxu0
    %v670 = vadd.f32 0.0, %v669
    %v671 = vpop.f32.mrf.mxu0
    %v672 = vpop.f32.mrf.mxu0
    %v673 = vadd.f32 0.0, %v672
    %v674 = vpop.f32.mrf.mxu0
    %675 = vdwg.mxu0
    %v692 = vunpack.c.l.b16 %v402
    %v693 = vunpack.c.h.b16 %v402
    %v694 = vunpack.c.l.b16 %v403
    %v695 = vunpack.c.h.b16 %v403
    %v696 = vunpack.c.l.b16 %v404
    %v697 = vunpack.c.h.b16 %v404
    %v698 = vunpack.c.l.b16 %v405
    %v699 = vunpack.c.h.b16 %v405
    %v700 = vunpack.c.l.b16 %v406
    %v701 = vunpack.c.h.b16 %v406
    %v702 = vunpack.c.l.b16 %v407
    %v703 = vunpack.c.h.b16 %v407
    %v704 = vunpack.c.l.b16 %v408
    %v705 = vunpack.c.h.b16 %v408
    %v706 = vunpack.c.l.b16 %v409
    %v707 = vunpack.c.h.b16 %v409
    %v708 = vunpack.c.l.b16 %v410
    %v709 = vunpack.c.h.b16 %v410
    %v710 = vunpack.c.l.b16 %v411
    %v711 = vunpack.c.h.b16 %v411
    %v712 = vunpack.c.l.b16 %v412
    %v713 = vunpack.c.h.b16 %v412
    %v714 = vunpack.c.l.b16 %v413
    %v715 = vunpack.c.h.b16 %v413
    %v716 = vunpack.c.l.b16 %v414
    %v717 = vunpack.c.h.b16 %v414
    %v718 = vunpack.c.l.b16 %v415
    %v719 = vunpack.c.h.b16 %v415
    %v720 = vunpack.c.l.b16 %v416
    %v721 = vunpack.c.h.b16 %v416
    %v722 = vunpack.c.l.b16 %v417
    %v723 = vunpack.c.h.b16 %v417
    %v724 = vpack.c.b16 %v694, %v692
    %v725 = vpack.c.b16 %v695, %v693
    %v726 = vpack.c.b16 %v698, %v696
    %v727 = vpack.c.b16 %v699, %v697
    %v728 = vpack.c.b16 %v702, %v700
    %v729 = vpack.c.b16 %v703, %v701
    %v730 = vpack.c.b16 %v706, %v704
    %v731 = vpack.c.b16 %v707, %v705
    %v732 = vpack.c.b16 %v710, %v708
    %v733 = vpack.c.b16 %v711, %v709
    %v734 = vpack.c.b16 %v714, %v712
    %v735 = vpack.c.b16 %v715, %v713
    %v736 = vpack.c.b16 %v718, %v716
    %v737 = vpack.c.b16 %v719, %v717
    %v738 = vpack.c.b16 %v722, %v720
    %v739 = vpack.c.b16 %v723, %v721
    %756 = vmatprep.subr.bf16.mxu0 0
    %757 = vmatpush1.bf16.msra.mxu0 %v393
    %758 = vmatprep.subr.bf16.mxu0 0
    %759 = vmatpush1.bf16.msra.mxu0 %v392
    %760 = vmatprep.subr.bf16.mxu0 0
    %761 = vmatpush1.bf16.msra.mxu0 %v391
    %762 = vmatprep.subr.bf16.mxu0 0
    %763 = vmatpush1.bf16.msra.mxu0 %v390
    %764 = vmatprep.subr.bf16.mxu0 0
    %765 = vmatpush1.bf16.msra.mxu0 %v389
    %766 = vmatprep.subr.bf16.mxu0 0
    %767 = vmatpush1.bf16.msra.mxu0 %v388
    %768 = vmatprep.subr.bf16.mxu0 0
    %769 = vmatpush1.bf16.msra.mxu0 %v387
    %770 = vmatprep.subr.bf16.mxu0 0
    %771 = vmatpush1.bf16.msra.mxu0 %v386
    %772 = vmatprep.subr.bf16.mxu0 0
    %773 = vmatpush2.bf16.msra.mxu0 %v401
    %774 = vmatprep.subr.bf16.mxu0 0
    %775 = vmatpush2.bf16.msra.mxu0 %v400
    %776 = vmatprep.subr.bf16.mxu0 0
    %777 = vmatpush2.bf16.msra.mxu0 %v399
    %778 = vmatprep.subr.bf16.mxu0 0
    %779 = vmatpush2.bf16.msra.mxu0 %v398
    %780 = vmatprep.subr.bf16.mxu0 0
    %781 = vmatpush2.bf16.msra.mxu0 %v397
    %782 = vmatprep.subr.bf16.mxu0 0
    %783 = vmatpush2.bf16.msra.mxu0 %v396
    %784 = vmatprep.subr.bf16.mxu0 0
    %785 = vmatpush2.bf16.msra.mxu0 %v395
    %786 = vmatprep.subr.bf16.mxu0 0
    %787 = vmatpush2.bf16.msra.mxu0 %v394
    %788 = vmatprep.mubr.bf16.mxu0 %v725
    %789 = vmatmul.mubr.bf16.gmra.mxu0 %v724
    %v790 = vpop.f32.mrf.mxu0
    %v791 = vadd.f32 %v614, %v790
    %v792 = vpop.f32.mrf.mxu0
    %v793 = vpop.f32.mrf.mxu0
    %v794 = vadd.f32 %v617, %v793
    %v795 = vpop.f32.mrf.mxu0
    %796 = vmatprep.mubr.bf16.mxu0 %v727
    %797 = vmatmul.mubr.bf16.gmra.mxu0 %v726
    %v798 = vpop.f32.mrf.mxu0
    %v799 = vadd.f32 %v622, %v798
    %v800 = vpop.f32.mrf.mxu0
    %v801 = vpop.f32.mrf.mxu0
    %v802 = vadd.f32 %v625, %v801
    %v803 = vpop.f32.mrf.mxu0
    %804 = vmatprep.mubr.bf16.mxu0 %v729
    %805 = vmatmul.mubr.bf16.gmra.mxu0 %v728
    %v806 = vpop.f32.mrf.mxu0
    %v807 = vadd.f32 %v630, %v806
    %v808 = vpop.f32.mrf.mxu0
    %v809 = vpop.f32.mrf.mxu0
    %v810 = vadd.f32 %v633, %v809
    %v811 = vpop.f32.mrf.mxu0
    %812 = vmatprep.mubr.bf16.mxu0 %v731
    %813 = vmatmul.mubr.bf16.gmra.mxu0 %v730
    %v814 = vpop.f32.mrf.mxu0
    %v815 = vadd.f32 %v638, %v814
    %v816 = vpop.f32.mrf.mxu0
    %v817 = vpop.f32.mrf.mxu0
    %v818 = vadd.f32 %v641, %v817
    %v819 = vpop.f32.mrf.mxu0
    %820 = vmatprep.mubr.bf16.mxu0 %v733
    %821 = vmatmul.mubr.bf16.gmra.mxu0 %v732
    %v822 = vpop.f32.mrf.mxu0
    %v823 = vadd.f32 %v646, %v822
    %v824 = vpop.f32.mrf.mxu0
    %v825 = vpop.f32.mrf.mxu0
    %v826 = vadd.f32 %v649, %v825
    %v827 = vpop.f32.mrf.mxu0
    %828 = vmatprep.mubr.bf16.mxu0 %v735
    %829 = vmatmul.mubr.bf16.gmra.mxu0 %v734
    %v830 = vpop.f32.mrf.mxu0
    %v831 = vadd.f32 %v654, %v830
    %v832 = vpop.f32.mrf.mxu0
    %v833 = vpop.f32.mrf.mxu0
    %v834 = vadd.f32 %v657, %v833
    %v835 = vpop.f32.mrf.mxu0
    %836 = vmatprep.mubr.bf16.mxu0 %v737
    %837 = vmatmul.mubr.bf16.gmra.mxu0 %v736
    %v838 = vpop.f32.mrf.mxu0
    %v839 = vadd.f32 %v662, %v838
    %v840 = vpop.f32.mrf.mxu0
    %v841 = vpop.f32.mrf.mxu0
    %v842 = vadd.f32 %v665, %v841
    %v843 = vpop.f32.mrf.mxu0
    %844 = vmatprep.mubr.bf16.mxu0 %v739
    %845 = vmatmul.mubr.bf16.gmra.mxu0 %v738
    %v846 = vpop.f32.mrf.mxu0
    %v847 = vadd.f32 %v670, %v846
    %v848 = vpop.f32.mrf.mxu0
    %v849 = vpop.f32.mrf.mxu0
    %v850 = vadd.f32 %v673, %v849
    %v851 = vpop.f32.mrf.mxu0
    %852 = vdwg.mxu0
    %s853 = scalar_lea.vmem [#allocation7], 256
    %v854 = vld [vmem:[%s853] sm:$0xff]
    %v855 = vld [vmem:[%s853 + $0x8] sm:$0xff]
    %v856 = vld [vmem:[%s853 + $0x10] sm:$0xff]
    %v857 = vld [vmem:[%s853 + $0x18] sm:$0xff]
    %v858 = vld [vmem:[%s853 + $0x20] sm:$0xff]
    %v859 = vld [vmem:[%s853 + $0x28] sm:$0xff]
    %v860 = vld [vmem:[%s853 + $0x30] sm:$0xff]
    %v861 = vld [vmem:[%s853 + $0x38] sm:$0xff]
    %v862 = vld [vmem:[%s853 + $0x40] sm:$0xff]
    %v863 = vld [vmem:[%s853 + $0x48] sm:$0xff]
    %v864 = vld [vmem:[%s853 + $0x50] sm:$0xff]
    %v865 = vld [vmem:[%s853 + $0x58] sm:$0xff]
    %v866 = vld [vmem:[%s853 + $0x60] sm:$0xff]
    %v867 = vld [vmem:[%s853 + $0x68] sm:$0xff]
    %v868 = vld [vmem:[%s853 + $0x70] sm:$0xff]
    %v869 = vld [vmem:[%s853 + $0x78] sm:$0xff]
    %v886 = vunpack.c.l.b16 %v854
    %v887 = vunpack.c.h.b16 %v854
    %v888 = vunpack.c.l.b16 %v855
    %v889 = vunpack.c.h.b16 %v855
    %v890 = vunpack.c.l.b16 %v856
    %v891 = vunpack.c.h.b16 %v856
    %v892 = vunpack.c.l.b16 %v857
    %v893 = vunpack.c.h.b16 %v857
    %v894 = vunpack.c.l.b16 %v858
    %v895 = vunpack.c.h.b16 %v858
    %v896 = vunpack.c.l.b16 %v859
    %v897 = vunpack.c.h.b16 %v859
    %v898 = vunpack.c.l.b16 %v860
    %v899 = vunpack.c.h.b16 %v860
    %v900 = vunpack.c.l.b16 %v861
    %v901 = vunpack.c.h.b16 %v861
    %v902 = vunpack.c.l.b16 %v862
    %v903 = vunpack.c.h.b16 %v862
    %v904 = vunpack.c.l.b16 %v863
    %v905 = vunpack.c.h.b16 %v863
    %v906 = vunpack.c.l.b16 %v864
    %v907 = vunpack.c.h.b16 %v864
    %v908 = vunpack.c.l.b16 %v865
    %v909 = vunpack.c.h.b16 %v865
    %v910 = vunpack.c.l.b16 %v866
    %v911 = vunpack.c.h.b16 %v866
    %v912 = vunpack.c.l.b16 %v867
    %v913 = vunpack.c.h.b16 %v867
    %v914 = vunpack.c.l.b16 %v868
    %v915 = vunpack.c.h.b16 %v868
    %v916 = vunpack.c.l.b16 %v869
    %v917 = vunpack.c.h.b16 %v869
    %v918 = vpack.c.b16 %v888, %v886
    %v919 = vpack.c.b16 %v889, %v887
    %v920 = vpack.c.b16 %v892, %v890
    %v921 = vpack.c.b16 %v893, %v891
    %v922 = vpack.c.b16 %v896, %v894
    %v923 = vpack.c.b16 %v897, %v895
    %v924 = vpack.c.b16 %v900, %v898
    %v925 = vpack.c.b16 %v901, %v899
    %v926 = vpack.c.b16 %v904, %v902
    %v927 = vpack.c.b16 %v905, %v903
    %v928 = vpack.c.b16 %v908, %v906
    %v929 = vpack.c.b16 %v909, %v907
    %v930 = vpack.c.b16 %v912, %v910
    %v931 = vpack.c.b16 %v913, %v911
    %v932 = vpack.c.b16 %v916, %v914
    %v933 = vpack.c.b16 %v917, %v915
    %950 = vrot.lane.b32.xlu0 %v386, 112
    %v951 = vpop.permute.xlu0 %950
    %952 = vrot.lane.b32.xlu0 %v387, 112
    %v953 = vpop.permute.xlu0 %952
    %954 = vrot.lane.b32.xlu0 %v388, 112
    %v955 = vpop.permute.xlu0 %954
    %956 = vrot.lane.b32.xlu0 %v389, 112
    %v957 = vpop.permute.xlu0 %956
    %958 = vrot.lane.b32.xlu0 %v390, 112
    %v959 = vpop.permute.xlu0 %958
    %960 = vrot.lane.b32.xlu0 %v391, 112
    %v961 = vpop.permute.xlu0 %960
    %962 = vrot.lane.b32.xlu0 %v392, 112
    %v963 = vpop.permute.xlu0 %962
    %964 = vrot.lane.b32.xlu0 %v393, 112
    %v965 = vpop.permute.xlu0 %964
    %966 = vrot.lane.b32.xlu0 %v394, 112
    %v967 = vpop.permute.xlu0 %966
    %968 = vrot.lane.b32.xlu0 %v395, 112
    %v969 = vpop.permute.xlu0 %968
    %970 = vrot.lane.b32.xlu0 %v396, 112
    %v971 = vpop.permute.xlu0 %970
    %972 = vrot.lane.b32.xlu0 %v397, 112
    %v973 = vpop.permute.xlu0 %972
    %974 = vrot.lane.b32.xlu0 %v398, 112
    %v975 = vpop.permute.xlu0 %974
    %976 = vrot.lane.b32.xlu0 %v399, 112
    %v977 = vpop.permute.xlu0 %976
    %978 = vrot.lane.b32.xlu0 %v400, 112
    %v979 = vpop.permute.xlu0 %978
    %980 = vrot.lane.b32.xlu0 %v401, 112
    %v981 = vpop.permute.xlu0 %980
    %998 = vmatprep.subr.bf16.mxu0 0
    %999 = vmatpush1.bf16.msra.mxu0 %v965
    %1000 = vmatprep.subr.bf16.mxu0 0
    %1001 = vmatpush1.bf16.msra.mxu0 %v963
    %1002 = vmatprep.subr.bf16.mxu0 0
    %1003 = vmatpush1.bf16.msra.mxu0 %v961
    %1004 = vmatprep.subr.bf16.mxu0 0
    %1005 = vmatpush1.bf16.msra.mxu0 %v959
    %1006 = vmatprep.subr.bf16.mxu0 0
    %1007 = vmatpush1.bf16.msra.mxu0 %v957
    %1008 = vmatprep.subr.bf16.mxu0 0
    %1009 = vmatpush1.bf16.msra.mxu0 %v955
    %1010 = vmatprep.subr.bf16.mxu0 0
    %1011 = vmatpush1.bf16.msra.mxu0 %v953
    %1012 = vmatprep.subr.bf16.mxu0 0
    %1013 = vmatpush1.bf16.msra.mxu0 %v951
    %1014 = vmatprep.subr.bf16.mxu0 0
    %1015 = vmatpush2.bf16.msra.mxu0 %v981
    %1016 = vmatprep.subr.bf16.mxu0 0
    %1017 = vmatpush2.bf16.msra.mxu0 %v979
    %1018 = vmatprep.subr.bf16.mxu0 0
    %1019 = vmatpush2.bf16.msra.mxu0 %v977
    %1020 = vmatprep.subr.bf16.mxu0 0
    %1021 = vmatpush2.bf16.msra.mxu0 %v975
    %1022 = vmatprep.subr.bf16.mxu0 0
    %1023 = vmatpush2.bf16.msra.mxu0 %v973
    %1024 = vmatprep.subr.bf16.mxu0 0
    %1025 = vmatpush2.bf16.msra.mxu0 %v971
    %1026 = vmatprep.subr.bf16.mxu0 0
    %1027 = vmatpush2.bf16.msra.mxu0 %v969
    %1028 = vmatprep.subr.bf16.mxu0 0
    %1029 = vmatpush2.bf16.msra.mxu0 %v967
    %1030 = vmatprep.mubr.bf16.mxu0 %v919
    %1031 = vmatmul.mubr.bf16.gmra.mxu0 %v918
    %v1032 = vpop.f32.mrf.mxu0
    %v1033 = vadd.f32 0.0, %v1032
    %v1034 = vpop.f32.mrf.mxu0
    %v1035 = vpop.f32.mrf.mxu0
    %v1036 = vadd.f32 0.0, %v1035
    %v1037 = vpop.f32.mrf.mxu0
    %1038 = vmatprep.mubr.bf16.mxu0 %v921
    %1039 = vmatmul.mubr.bf16.gmra.mxu0 %v920
    %v1040 = vpop.f32.mrf.mxu0
    %v1041 = vadd.f32 0.0, %v1040
    %v1042 = vpop.f32.mrf.mxu0
    %v1043 = vpop.f32.mrf.mxu0
    %v1044 = vadd.f32 0.0, %v1043
    %v1045 = vpop.f32.mrf.mxu0
    %1046 = vmatprep.mubr.bf16.mxu0 %v923
    %1047 = vmatmul.mubr.bf16.gmra.mxu0 %v922
    %v1048 = vpop.f32.mrf.mxu0
    %v1049 = vadd.f32 0.0, %v1048
    %v1050 = vpop.f32.mrf.mxu0
    %v1051 = vpop.f32.mrf.mxu0
    %v1052 = vadd.f32 0.0, %v1051
    %v1053 = vpop.f32.mrf.mxu0
    %1054 = vmatprep.mubr.bf16.mxu0 %v925
    %1055 = vmatmul.mubr.bf16.gmra.mxu0 %v924
    %v1056 = vpop.f32.mrf.mxu0
    %v1057 = vadd.f32 0.0, %v1056
    %v1058 = vpop.f32.mrf.mxu0
    %v1059 = vpop.f32.mrf.mxu0
    %v1060 = vadd.f32 0.0, %v1059
    %v1061 = vpop.f32.mrf.mxu0
    %1062 = vmatprep.mubr.bf16.mxu0 %v927
    %1063 = vmatmul.mubr.bf16.gmra.mxu0 %v926
    %v1064 = vpop.f32.mrf.mxu0
    %v1065 = vadd.f32 0.0, %v1064
    %v1066 = vpop.f32.mrf.mxu0
    %v1067 = vpop.f32.mrf.mxu0
    %v1068 = vadd.f32 0.0, %v1067
    %v1069 = vpop.f32.mrf.mxu0
    %1070 = vmatprep.mubr.bf16.mxu0 %v929
    %1071 = vmatmul.mubr.bf16.gmra.mxu0 %v928
    %v1072 = vpop.f32.mrf.mxu0
    %v1073 = vadd.f32 0.0, %v1072
    %v1074 = vpop.f32.mrf.mxu0
    %v1075 = vpop.f32.mrf.mxu0
    %v1076 = vadd.f32 0.0, %v1075
    %v1077 = vpop.f32.mrf.mxu0
    %1078 = vmatprep.mubr.bf16.mxu0 %v931
    %1079 = vmatmul.mubr.bf16.gmra.mxu0 %v930
    %v1080 = vpop.f32.mrf.mxu0
    %v1081 = vadd.f32 0.0, %v1080
    %v1082 = vpop.f32.mrf.mxu0
    %v1083 = vpop.f32.mrf.mxu0
    %v1084 = vadd.f32 0.0, %v1083
    %v1085 = vpop.f32.mrf.mxu0
    %1086 = vmatprep.mubr.bf16.mxu0 %v933
    %1087 = vmatmul.mubr.bf16.gmra.mxu0 %v932
    %v1088 = vpop.f32.mrf.mxu0
    %v1089 = vadd.f32 0.0, %v1088
    %v1090 = vpop.f32.mrf.mxu0
    %v1091 = vpop.f32.mrf.mxu0
    %v1092 = vadd.f32 0.0, %v1091
    %v1093 = vpop.f32.mrf.mxu0
    %1094 = vdwg.mxu0
    %v1095 = vadd.f32 %v791, %v1033
    %v1096 = vadd.f32 %v794, %v1036
    %v1097 = vadd.f32 %v799, %v1041
    %v1098 = vadd.f32 %v802, %v1044
    %v1099 = vadd.f32 %v807, %v1049
    %v1100 = vadd.f32 %v810, %v1052
    %v1101 = vadd.f32 %v815, %v1057
    %v1102 = vadd.f32 %v818, %v1060
    %v1103 = vadd.f32 %v823, %v1065
    %v1104 = vadd.f32 %v826, %v1068
    %v1105 = vadd.f32 %v831, %v1073
    %v1106 = vadd.f32 %v834, %v1076
    %v1107 = vadd.f32 %v839, %v1081
    %v1108 = vadd.f32 %v842, %v1084
    %v1109 = vadd.f32 %v847, %v1089
    %v1110 = vadd.f32 %v850, %v1092
    %s1111 = scalar_lea.vmem [#allocation7], 384
    %v1112 = vld [vmem:[%s1111] sm:$0xff]
    %v1113 = vld [vmem:[%s1111 + $0x8] sm:$0xff]
    %v1114 = vld [vmem:[%s1111 + $0x10] sm:$0xff]
    %v1115 = vld [vmem:[%s1111 + $0x18] sm:$0xff]
    %v1116 = vld [vmem:[%s1111 + $0x20] sm:$0xff]
    %v1117 = vld [vmem:[%s1111 + $0x28] sm:$0xff]
    %v1118 = vld [vmem:[%s1111 + $0x30] sm:$0xff]
    %v1119 = vld [vmem:[%s1111 + $0x38] sm:$0xff]
    %v1120 = vld [vmem:[%s1111 + $0x40] sm:$0xff]
    %v1121 = vld [vmem:[%s1111 + $0x48] sm:$0xff]
    %v1122 = vld [vmem:[%s1111 + $0x50] sm:$0xff]
    %v1123 = vld [vmem:[%s1111 + $0x58] sm:$0xff]
    %v1124 = vld [vmem:[%s1111 + $0x60] sm:$0xff]
    %v1125 = vld [vmem:[%s1111 + $0x68] sm:$0xff]
    %v1126 = vld [vmem:[%s1111 + $0x70] sm:$0xff]
    %v1127 = vld [vmem:[%s1111 + $0x78] sm:$0xff]
    %v1144 = vunpack.c.l.b16 %v1112
    %v1145 = vunpack.c.h.b16 %v1112
    %v1146 = vunpack.c.l.b16 %v1113
    %v1147 = vunpack.c.h.b16 %v1113
    %v1148 = vunpack.c.l.b16 %v1114
    %v1149 = vunpack.c.h.b16 %v1114
    %v1150 = vunpack.c.l.b16 %v1115
    %v1151 = vunpack.c.h.b16 %v1115
    %v1152 = vunpack.c.l.b16 %v1116
    %v1153 = vunpack.c.h.b16 %v1116
    %v1154 = vunpack.c.l.b16 %v1117
    %v1155 = vunpack.c.h.b16 %v1117
    %v1156 = vunpack.c.l.b16 %v1118
    %v1157 = vunpack.c.h.b16 %v1118
    %v1158 = vunpack.c.l.b16 %v1119
    %v1159 = vunpack.c.h.b16 %v1119
    %v1160 = vunpack.c.l.b16 %v1120
    %v1161 = vunpack.c.h.b16 %v1120
    %v1162 = vunpack.c.l.b16 %v1121
    %v1163 = vunpack.c.h.b16 %v1121
    %v1164 = vunpack.c.l.b16 %v1122
    %v1165 = vunpack.c.h.b16 %v1122
    %v1166 = vunpack.c.l.b16 %v1123
    %v1167 = vunpack.c.h.b16 %v1123
    %v1168 = vunpack.c.l.b16 %v1124
    %v1169 = vunpack.c.h.b16 %v1124
    %v1170 = vunpack.c.l.b16 %v1125
    %v1171 = vunpack.c.h.b16 %v1125
    %v1172 = vunpack.c.l.b16 %v1126
    %v1173 = vunpack.c.h.b16 %v1126
    %v1174 = vunpack.c.l.b16 %v1127
    %v1175 = vunpack.c.h.b16 %v1127
    %v1176 = vpack.c.b16 %v1146, %v1144
    %v1177 = vpack.c.b16 %v1147, %v1145
    %v1178 = vpack.c.b16 %v1150, %v1148
    %v1179 = vpack.c.b16 %v1151, %v1149
    %v1180 = vpack.c.b16 %v1154, %v1152
    %v1181 = vpack.c.b16 %v1155, %v1153
    %v1182 = vpack.c.b16 %v1158, %v1156
    %v1183 = vpack.c.b16 %v1159, %v1157
    %v1184 = vpack.c.b16 %v1162, %v1160
    %v1185 = vpack.c.b16 %v1163, %v1161
    %v1186 = vpack.c.b16 %v1166, %v1164
    %v1187 = vpack.c.b16 %v1167, %v1165
    %v1188 = vpack.c.b16 %v1170, %v1168
    %v1189 = vpack.c.b16 %v1171, %v1169
    %v1190 = vpack.c.b16 %v1174, %v1172
    %v1191 = vpack.c.b16 %v1175, %v1173
    %1208 = vrot.lane.b32.xlu0 %v386, 104
    %v1209 = vpop.permute.xlu0 %1208
    %1210 = vrot.lane.b32.xlu0 %v387, 104
    %v1211 = vpop.permute.xlu0 %1210
    %1212 = vrot.lane.b32.xlu0 %v388, 104
    %v1213 = vpop.permute.xlu0 %1212
    %1214 = vrot.lane.b32.xlu0 %v389, 104
    %v1215 = vpop.permute.xlu0 %1214
    %1216 = vrot.lane.b32.xlu0 %v390, 104
    %v1217 = vpop.permute.xlu0 %1216
    %1218 = vrot.lane.b32.xlu0 %v391, 104
    %v1219 = vpop.permute.xlu0 %1218
    %1220 = vrot.lane.b32.xlu0 %v392, 104
    %v1221 = vpop.permute.xlu0 %1220
    %1222 = vrot.lane.b32.xlu0 %v393, 104
    %v1223 = vpop.permute.xlu0 %1222
    %1224 = vrot.lane.b32.xlu0 %v394, 104
    %v1225 = vpop.permute.xlu0 %1224
    %1226 = vrot.lane.b32.xlu0 %v395, 104
    %v1227 = vpop.permute.xlu0 %1226
    %1228 = vrot.lane.b32.xlu0 %v396, 104
    %v1229 = vpop.permute.xlu0 %1228
    %1230 = vrot.lane.b32.xlu0 %v397, 104
    %v1231 = vpop.permute.xlu0 %1230
    %1232 = vrot.lane.b32.xlu0 %v398, 104
    %v1233 = vpop.permute.xlu0 %1232
    %1234 = vrot.lane.b32.xlu0 %v399, 104
    %v1235 = vpop.permute.xlu0 %1234
    %1236 = vrot.lane.b32.xlu0 %v400, 104
    %v1237 = vpop.permute.xlu0 %1236
    %1238 = vrot.lane.b32.xlu0 %v401, 104
    %v1239 = vpop.permute.xlu0 %1238
    %1256 = vmatprep.subr.bf16.mxu0 0
    %1257 = vmatpush1.bf16.msra.mxu0 %v1223
    %1258 = vmatprep.subr.bf16.mxu0 0
    %1259 = vmatpush1.bf16.msra.mxu0 %v1221
    %1260 = vmatprep.subr.bf16.mxu0 0
    %1261 = vmatpush1.bf16.msra.mxu0 %v1219
    %1262 = vmatprep.subr.bf16.mxu0 0
    %1263 = vmatpush1.bf16.msra.mxu0 %v1217
    %1264 = vmatprep.subr.bf16.mxu0 0
    %1265 = vmatpush1.bf16.msra.mxu0 %v1215
    %1266 = vmatprep.subr.bf16.mxu0 0
    %1267 = vmatpush1.bf16.msra.mxu0 %v1213
    %1268 = vmatprep.subr.bf16.mxu0 0
    %1269 = vmatpush1.bf16.msra.mxu0 %v1211
    %1270 = vmatprep.subr.bf16.mxu0 0
    %1271 = vmatpush1.bf16.msra.mxu0 %v1209
    %1272 = vmatprep.subr.bf16.mxu0 0
    %1273 = vmatpush2.bf16.msra.mxu0 %v1239
    %1274 = vmatprep.subr.bf16.mxu0 0
    %1275 = vmatpush2.bf16.msra.mxu0 %v1237
    %1276 = vmatprep.subr.bf16.mxu0 0
    %1277 = vmatpush2.bf16.msra.mxu0 %v1235
    %1278 = vmatprep.subr.bf16.mxu0 0
    %1279 = vmatpush2.bf16.msra.mxu0 %v1233
    %1280 = vmatprep.subr.bf16.mxu0 0
    %1281 = vmatpush2.bf16.msra.mxu0 %v1231
    %1282 = vmatprep.subr.bf16.mxu0 0
    %1283 = vmatpush2.bf16.msra.mxu0 %v1229
    %1284 = vmatprep.subr.bf16.mxu0 0
    %1285 = vmatpush2.bf16.msra.mxu0 %v1227
    %1286 = vmatprep.subr.bf16.mxu0 0
    %1287 = vmatpush2.bf16.msra.mxu0 %v1225
    %1288 = vmatprep.mubr.bf16.mxu0 %v1177
    %1289 = vmatmul.mubr.bf16.gmra.mxu0 %v1176
    %v1290 = vpop.f32.mrf.mxu0
    %v1291 = vadd.f32 0.0, %v1290
    %v1292 = vpop.f32.mrf.mxu0
    %v1293 = vpop.f32.mrf.mxu0
    %v1294 = vadd.f32 0.0, %v1293
    %v1295 = vpop.f32.mrf.mxu0
    %1296 = vmatprep.mubr.bf16.mxu0 %v1179
    %1297 = vmatmul.mubr.bf16.gmra.mxu0 %v1178
    %v1298 = vpop.f32.mrf.mxu0
    %v1299 = vadd.f32 0.0, %v1298
    %v1300 = vpop.f32.mrf.mxu0
    %v1301 = vpop.f32.mrf.mxu0
    %v1302 = vadd.f32 0.0, %v1301
    %v1303 = vpop.f32.mrf.mxu0
    %1304 = vmatprep.mubr.bf16.mxu0 %v1181
    %1305 = vmatmul.mubr.bf16.gmra.mxu0 %v1180
    %v1306 = vpop.f32.mrf.mxu0
    %v1307 = vadd.f32 0.0, %v1306
    %v1308 = vpop.f32.mrf.mxu0
    %v1309 = vpop.f32.mrf.mxu0
    %v1310 = vadd.f32 0.0, %v1309
    %v1311 = vpop.f32.mrf.mxu0
    %1312 = vmatprep.mubr.bf16.mxu0 %v1183
    %1313 = vmatmul.mubr.bf16.gmra.mxu0 %v1182
    %v1314 = vpop.f32.mrf.mxu0
    %v1315 = vadd.f32 0.0, %v1314
    %v1316 = vpop.f32.mrf.mxu0
    %v1317 = vpop.f32.mrf.mxu0
    %v1318 = vadd.f32 0.0, %v1317
    %v1319 = vpop.f32.mrf.mxu0
    %1320 = vmatprep.mubr.bf16.mxu0 %v1185
    %1321 = vmatmul.mubr.bf16.gmra.mxu0 %v1184
    %v1322 = vpop.f32.mrf.mxu0
    %v1323 = vadd.f32 0.0, %v1322
    %v1324 = vpop.f32.mrf.mxu0
    %v1325 = vpop.f32.mrf.mxu0
    %v1326 = vadd.f32 0.0, %v1325
    %v1327 = vpop.f32.mrf.mxu0
    %1328 = vmatprep.mubr.bf16.mxu0 %v1187
    %1329 = vmatmul.mubr.bf16.gmra.mxu0 %v1186
    %v1330 = vpop.f32.mrf.mxu0
    %v1331 = vadd.f32 0.0, %v1330
    %v1332 = vpop.f32.mrf.mxu0
    %v1333 = vpop.f32.mrf.mxu0
    %v1334 = vadd.f32 0.0, %v1333
    %v1335 = vpop.f32.mrf.mxu0
    %1336 = vmatprep.mubr.bf16.mxu0 %v1189
    %1337 = vmatmul.mubr.bf16.gmra.mxu0 %v1188
    %v1338 = vpop.f32.mrf.mxu0
    %v1339 = vadd.f32 0.0, %v1338
    %v1340 = vpop.f32.mrf.mxu0
    %v1341 = vpop.f32.mrf.mxu0
    %v1342 = vadd.f32 0.0, %v1341
    %v1343 = vpop.f32.mrf.mxu0
    %1344 = vmatprep.mubr.bf16.mxu0 %v1191
    %1345 = vmatmul.mubr.bf16.gmra.mxu0 %v1190
    %v1346 = vpop.f32.mrf.mxu0
    %v1347 = vadd.f32 0.0, %v1346
    %v1348 = vpop.f32.mrf.mxu0
    %v1349 = vpop.f32.mrf.mxu0
    %v1350 = vadd.f32 0.0, %v1349
    %v1351 = vpop.f32.mrf.mxu0
    %1352 = vdwg.mxu0
    %v1353 = vadd.f32 %v1095, %v1291
    %v1354 = vadd.f32 %v1096, %v1294
    %v1355 = vadd.f32 %v1097, %v1299
    %v1356 = vadd.f32 %v1098, %v1302
    %v1357 = vadd.f32 %v1099, %v1307
    %v1358 = vadd.f32 %v1100, %v1310
    %v1359 = vadd.f32 %v1101, %v1315
    %v1360 = vadd.f32 %v1102, %v1318
    %v1361 = vadd.f32 %v1103, %v1323
    %v1362 = vadd.f32 %v1104, %v1326
    %v1363 = vadd.f32 %v1105, %v1331
    %v1364 = vadd.f32 %v1106, %v1334
    %v1365 = vadd.f32 %v1107, %v1339
    %v1366 = vadd.f32 %v1108, %v1342
    %v1367 = vadd.f32 %v1109, %v1347
    %v1368 = vadd.f32 %v1110, %v1350
    %s1369 = scalar_lea.vmem [#allocation7], 512
    %v1370 = vld [vmem:[%s1369] sm:$0xff]
    %v1371 = vld [vmem:[%s1369 + $0x8] sm:$0xff]
    %v1372 = vld [vmem:[%s1369 + $0x10] sm:$0xff]
    %v1373 = vld [vmem:[%s1369 + $0x18] sm:$0xff]
    %v1374 = vld [vmem:[%s1369 + $0x20] sm:$0xff]
    %v1375 = vld [vmem:[%s1369 + $0x28] sm:$0xff]
    %v1376 = vld [vmem:[%s1369 + $0x30] sm:$0xff]
    %v1377 = vld [vmem:[%s1369 + $0x38] sm:$0xff]
    %v1378 = vld [vmem:[%s1369 + $0x40] sm:$0xff]
    %v1379 = vld [vmem:[%s1369 + $0x48] sm:$0xff]
    %v1380 = vld [vmem:[%s1369 + $0x50] sm:$0xff]
    %v1381 = vld [vmem:[%s1369 + $0x58] sm:$0xff]
    %v1382 = vld [vmem:[%s1369 + $0x60] sm:$0xff]
    %v1383 = vld [vmem:[%s1369 + $0x68] sm:$0xff]
    %v1384 = vld [vmem:[%s1369 + $0x70] sm:$0xff]
    %v1385 = vld [vmem:[%s1369 + $0x78] sm:$0xff]
    %v1402 = vunpack.c.l.b16 %v1370
    %v1403 = vunpack.c.h.b16 %v1370
    %v1404 = vunpack.c.l.b16 %v1371
    %v1405 = vunpack.c.h.b16 %v1371
    %v1406 = vunpack.c.l.b16 %v1372
    %v1407 = vunpack.c.h.b16 %v1372
    %v1408 = vunpack.c.l.b16 %v1373
    %v1409 = vunpack.c.h.b16 %v1373
    %v1410 = vunpack.c.l.b16 %v1374
    %v1411 = vunpack.c.h.b16 %v1374
    %v1412 = vunpack.c.l.b16 %v1375
    %v1413 = vunpack.c.h.b16 %v1375
    %v1414 = vunpack.c.l.b16 %v1376
    %v1415 = vunpack.c.h.b16 %v1376
    %v1416 = vunpack.c.l.b16 %v1377
    %v1417 = vunpack.c.h.b16 %v1377
    %v1418 = vunpack.c.l.b16 %v1378
    %v1419 = vunpack.c.h.b16 %v1378
    %v1420 = vunpack.c.l.b16 %v1379
    %v1421 = vunpack.c.h.b16 %v1379
    %v1422 = vunpack.c.l.b16 %v1380
    %v1423 = vunpack.c.h.b16 %v1380
    %v1424 = vunpack.c.l.b16 %v1381
    %v1425 = vunpack.c.h.b16 %v1381
    %v1426 = vunpack.c.l.b16 %v1382
    %v1427 = vunpack.c.h.b16 %v1382
    %v1428 = vunpack.c.l.b16 %v1383
    %v1429 = vunpack.c.h.b16 %v1383
    %v1430 = vunpack.c.l.b16 %v1384
    %v1431 = vunpack.c.h.b16 %v1384
    %v1432 = vunpack.c.l.b16 %v1385
    %v1433 = vunpack.c.h.b16 %v1385
    %v1434 = vpack.c.b16 %v1404, %v1402
    %v1435 = vpack.c.b16 %v1405, %v1403
    %v1436 = vpack.c.b16 %v1408, %v1406
    %v1437 = vpack.c.b16 %v1409, %v1407
    %v1438 = vpack.c.b16 %v1412, %v1410
    %v1439 = vpack.c.b16 %v1413, %v1411
    %v1440 = vpack.c.b16 %v1416, %v1414
    %v1441 = vpack.c.b16 %v1417, %v1415
    %v1442 = vpack.c.b16 %v1420, %v1418
    %v1443 = vpack.c.b16 %v1421, %v1419
    %v1444 = vpack.c.b16 %v1424, %v1422
    %v1445 = vpack.c.b16 %v1425, %v1423
    %v1446 = vpack.c.b16 %v1428, %v1426
    %v1447 = vpack.c.b16 %v1429, %v1427
    %v1448 = vpack.c.b16 %v1432, %v1430
    %v1449 = vpack.c.b16 %v1433, %v1431
    %1466 = vrot.lane.b32.xlu0 %v386, 96
    %v1467 = vpop.permute.xlu0 %1466
    %1468 = vrot.lane.b32.xlu0 %v387, 96
    %v1469 = vpop.permute.xlu0 %1468
    %1470 = vrot.lane.b32.xlu0 %v388, 96
    %v1471 = vpop.permute.xlu0 %1470
    %1472 = vrot.lane.b32.xlu0 %v389, 96
    %v1473 = vpop.permute.xlu0 %1472
    %1474 = vrot.lane.b32.xlu0 %v390, 96
    %v1475 = vpop.permute.xlu0 %1474
    %1476 = vrot.lane.b32.xlu0 %v391, 96
    %v1477 = vpop.permute.xlu0 %1476
    %1478 = vrot.lane.b32.xlu0 %v392, 96
    %v1479 = vpop.permute.xlu0 %1478
    %1480 = vrot.lane.b32.xlu0 %v393, 96
    %v1481 = vpop.permute.xlu0 %1480
    %1482 = vrot.lane.b32.xlu0 %v394, 96
    %v1483 = vpop.permute.xlu0 %1482
    %1484 = vrot.lane.b32.xlu0 %v395, 96
    %v1485 = vpop.permute.xlu0 %1484
    %1486 = vrot.lane.b32.xlu0 %v396, 96
    %v1487 = vpop.permute.xlu0 %1486
    %1488 = vrot.lane.b32.xlu0 %v397, 96
    %v1489 = vpop.permute.xlu0 %1488
    %1490 = vrot.lane.b32.xlu0 %v398, 96
    %v1491 = vpop.permute.xlu0 %1490
    %1492 = vrot.lane.b32.xlu0 %v399, 96
    %v1493 = vpop.permute.xlu0 %1492
    %1494 = vrot.lane.b32.xlu0 %v400, 96
    %v1495 = vpop.permute.xlu0 %1494
    %1496 = vrot.lane.b32.xlu0 %v401, 96
    %v1497 = vpop.permute.xlu0 %1496
    %1514 = vmatprep.subr.bf16.mxu0 0
    %1515 = vmatpush1.bf16.msra.mxu0 %v1481
    %1516 = vmatprep.subr.bf16.mxu0 0
    %1517 = vmatpush1.bf16.msra.mxu0 %v1479
    %1518 = vmatprep.subr.bf16.mxu0 0
    %1519 = vmatpush1.bf16.msra.mxu0 %v1477
    %1520 = vmatprep.subr.bf16.mxu0 0
    %1521 = vmatpush1.bf16.msra.mxu0 %v1475
    %1522 = vmatprep.subr.bf16.mxu0 0
    %1523 = vmatpush1.bf16.msra.mxu0 %v1473
    %1524 = vmatprep.subr.bf16.mxu0 0
    %1525 = vmatpush1.bf16.msra.mxu0 %v1471
    %1526 = vmatprep.subr.bf16.mxu0 0
    %1527 = vmatpush1.bf16.msra.mxu0 %v1469
    %1528 = vmatprep.subr.bf16.mxu0 0
    %1529 = vmatpush1.bf16.msra.mxu0 %v1467
    %1530 = vmatprep.subr.bf16.mxu0 0
    %1531 = vmatpush2.bf16.msra.mxu0 %v1497
    %1532 = vmatprep.subr.bf16.mxu0 0
    %1533 = vmatpush2.bf16.msra.mxu0 %v1495
    %1534 = vmatprep.subr.bf16.mxu0 0
    %1535 = vmatpush2.bf16.msra.mxu0 %v1493
    %1536 = vmatprep.subr.bf16.mxu0 0
    %1537 = vmatpush2.bf16.msra.mxu0 %v1491
    %1538 = vmatprep.subr.bf16.mxu0 0
    %1539 = vmatpush2.bf16.msra.mxu0 %v1489
    %1540 = vmatprep.subr.bf16.mxu0 0
    %1541 = vmatpush2.bf16.msra.mxu0 %v1487
    %1542 = vmatprep.subr.bf16.mxu0 0
    %1543 = vmatpush2.bf16.msra.mxu0 %v1485
    %1544 = vmatprep.subr.bf16.mxu0 0
    %1545 = vmatpush2.bf16.msra.mxu0 %v1483
    %1546 = vmatprep.mubr.bf16.mxu0 %v1435
    %1547 = vmatmul.mubr.bf16.gmra.mxu0 %v1434
    %v1548 = vpop.f32.mrf.mxu0
    %v1549 = vadd.f32 0.0, %v1548
    %v1550 = vpop.f32.mrf.mxu0
    %v1551 = vpop.f32.mrf.mxu0
    %v1552 = vadd.f32 0.0, %v1551
    %v1553 = vpop.f32.mrf.mxu0
    %1554 = vmatprep.mubr.bf16.mxu0 %v1437
    %1555 = vmatmul.mubr.bf16.gmra.mxu0 %v1436
    %v1556 = vpop.f32.mrf.mxu0
    %v1557 = vadd.f32 0.0, %v1556
    %v1558 = vpop.f32.mrf.mxu0
    %v1559 = vpop.f32.mrf.mxu0
    %v1560 = vadd.f32 0.0, %v1559
    %v1561 = vpop.f32.mrf.mxu0
    %1562 = vmatprep.mubr.bf16.mxu0 %v1439
    %1563 = vmatmul.mubr.bf16.gmra.mxu0 %v1438
    %v1564 = vpop.f32.mrf.mxu0
    %v1565 = vadd.f32 0.0, %v1564
    %v1566 = vpop.f32.mrf.mxu0
    %v1567 = vpop.f32.mrf.mxu0
    %v1568 = vadd.f32 0.0, %v1567
    %v1569 = vpop.f32.mrf.mxu0
    %1570 = vmatprep.mubr.bf16.mxu0 %v1441
    %1571 = vmatmul.mubr.bf16.gmra.mxu0 %v1440
    %v1572 = vpop.f32.mrf.mxu0
    %v1573 = vadd.f32 0.0, %v1572
    %v1574 = vpop.f32.mrf.mxu0
    %v1575 = vpop.f32.mrf.mxu0
    %v1576 = vadd.f32 0.0, %v1575
    %v1577 = vpop.f32.mrf.mxu0
    %1578 = vmatprep.mubr.bf16.mxu0 %v1443
    %1579 = vmatmul.mubr.bf16.gmra.mxu0 %v1442
    %v1580 = vpop.f32.mrf.mxu0
    %v1581 = vadd.f32 0.0, %v1580
    %v1582 = vpop.f32.mrf.mxu0
    %v1583 = vpop.f32.mrf.mxu0
    %v1584 = vadd.f32 0.0, %v1583
    %v1585 = vpop.f32.mrf.mxu0
    %1586 = vmatprep.mubr.bf16.mxu0 %v1445
    %1587 = vmatmul.mubr.bf16.gmra.mxu0 %v1444
    %v1588 = vpop.f32.mrf.mxu0
    %v1589 = vadd.f32 0.0, %v1588
    %v1590 = vpop.f32.mrf.mxu0
    %v1591 = vpop.f32.mrf.mxu0
    %v1592 = vadd.f32 0.0, %v1591
    %v1593 = vpop.f32.mrf.mxu0
    %1594 = vmatprep.mubr.bf16.mxu0 %v1447
    %1595 = vmatmul.mubr.bf16.gmra.mxu0 %v1446
    %v1596 = vpop.f32.mrf.mxu0
    %v1597 = vadd.f32 0.0, %v1596
    %v1598 = vpop.f32.mrf.mxu0
    %v1599 = vpop.f32.mrf.mxu0
    %v1600 = vadd.f32 0.0, %v1599
    %v1601 = vpop.f32.mrf.mxu0
    %1602 = vmatprep.mubr.bf16.mxu0 %v1449
    %1603 = vmatmul.mubr.bf16.gmra.mxu0 %v1448
    %v1604 = vpop.f32.mrf.mxu0
    %v1605 = vadd.f32 0.0, %v1604
    %v1606 = vpop.f32.mrf.mxu0
    %v1607 = vpop.f32.mrf.mxu0
    %v1608 = vadd.f32 0.0, %v1607
    %v1609 = vpop.f32.mrf.mxu0
    %1610 = vdwg.mxu0
    %v1611 = vadd.f32 %v1353, %v1549
    %v1612 = vadd.f32 %v1354, %v1552
    %v1613 = vadd.f32 %v1355, %v1557
    %v1614 = vadd.f32 %v1356, %v1560
    %v1615 = vadd.f32 %v1357, %v1565
    %v1616 = vadd.f32 %v1358, %v1568
    %v1617 = vadd.f32 %v1359, %v1573
    %v1618 = vadd.f32 %v1360, %v1576
    %v1619 = vadd.f32 %v1361, %v1581
    %v1620 = vadd.f32 %v1362, %v1584
    %v1621 = vadd.f32 %v1363, %v1589
    %v1622 = vadd.f32 %v1364, %v1592
    %v1623 = vadd.f32 %v1365, %v1597
    %v1624 = vadd.f32 %v1366, %v1600
    %v1625 = vadd.f32 %v1367, %v1605
    %v1626 = vadd.f32 %v1368, %v1608
    %s1627 = scalar_lea.vmem [#allocation7], 640
    %v1628 = vld [vmem:[%s1627] sm:$0xff]
    %v1629 = vld [vmem:[%s1627 + $0x8] sm:$0xff]
    %v1630 = vld [vmem:[%s1627 + $0x10] sm:$0xff]
    %v1631 = vld [vmem:[%s1627 + $0x18] sm:$0xff]
    %v1632 = vld [vmem:[%s1627 + $0x20] sm:$0xff]
    %v1633 = vld [vmem:[%s1627 + $0x28] sm:$0xff]
    %v1634 = vld [vmem:[%s1627 + $0x30] sm:$0xff]
    %v1635 = vld [vmem:[%s1627 + $0x38] sm:$0xff]
    %v1636 = vld [vmem:[%s1627 + $0x40] sm:$0xff]
    %v1637 = vld [vmem:[%s1627 + $0x48] sm:$0xff]
    %v1638 = vld [vmem:[%s1627 + $0x50] sm:$0xff]
    %v1639 = vld [vmem:[%s1627 + $0x58] sm:$0xff]
    %v1640 = vld [vmem:[%s1627 + $0x60] sm:$0xff]
    %v1641 = vld [vmem:[%s1627 + $0x68] sm:$0xff]
    %v1642 = vld [vmem:[%s1627 + $0x70] sm:$0xff]
    %v1643 = vld [vmem:[%s1627 + $0x78] sm:$0xff]
    %v1660 = vunpack.c.l.b16 %v1628
    %v1661 = vunpack.c.h.b16 %v1628
    %v1662 = vunpack.c.l.b16 %v1629
    %v1663 = vunpack.c.h.b16 %v1629
    %v1664 = vunpack.c.l.b16 %v1630
    %v1665 = vunpack.c.h.b16 %v1630
    %v1666 = vunpack.c.l.b16 %v1631
    %v1667 = vunpack.c.h.b16 %v1631
    %v1668 = vunpack.c.l.b16 %v1632
    %v1669 = vunpack.c.h.b16 %v1632
    %v1670 = vunpack.c.l.b16 %v1633
    %v1671 = vunpack.c.h.b16 %v1633
    %v1672 = vunpack.c.l.b16 %v1634
    %v1673 = vunpack.c.h.b16 %v1634
    %v1674 = vunpack.c.l.b16 %v1635
    %v1675 = vunpack.c.h.b16 %v1635
    %v1676 = vunpack.c.l.b16 %v1636
    %v1677 = vunpack.c.h.b16 %v1636
    %v1678 = vunpack.c.l.b16 %v1637
    %v1679 = vunpack.c.h.b16 %v1637
    %v1680 = vunpack.c.l.b16 %v1638
    %v1681 = vunpack.c.h.b16 %v1638
    %v1682 = vunpack.c.l.b16 %v1639
    %v1683 = vunpack.c.h.b16 %v1639
    %v1684 = vunpack.c.l.b16 %v1640
    %v1685 = vunpack.c.h.b16 %v1640
    %v1686 = vunpack.c.l.b16 %v1641
    %v1687 = vunpack.c.h.b16 %v1641
    %v1688 = vunpack.c.l.b16 %v1642
    %v1689 = vunpack.c.h.b16 %v1642
    %v1690 = vunpack.c.l.b16 %v1643
    %v1691 = vunpack.c.h.b16 %v1643
    %v1692 = vpack.c.b16 %v1662, %v1660
    %v1693 = vpack.c.b16 %v1663, %v1661
    %v1694 = vpack.c.b16 %v1666, %v1664
    %v1695 = vpack.c.b16 %v1667, %v1665
    %v1696 = vpack.c.b16 %v1670, %v1668
    %v1697 = vpack.c.b16 %v1671, %v1669
    %v1698 = vpack.c.b16 %v1674, %v1672
    %v1699 = vpack.c.b16 %v1675, %v1673
    %v1700 = vpack.c.b16 %v1678, %v1676
    %v1701 = vpack.c.b16 %v1679, %v1677
    %v1702 = vpack.c.b16 %v1682, %v1680
    %v1703 = vpack.c.b16 %v1683, %v1681
    %v1704 = vpack.c.b16 %v1686, %v1684
    %v1705 = vpack.c.b16 %v1687, %v1685
    %v1706 = vpack.c.b16 %v1690, %v1688
    %v1707 = vpack.c.b16 %v1691, %v1689
    %1724 = vrot.lane.b32.xlu0 %v386, 88
    %v1725 = vpop.permute.xlu0 %1724
    %1726 = vrot.lane.b32.xlu0 %v387, 88
    %v1727 = vpop.permute.xlu0 %1726
    %1728 = vrot.lane.b32.xlu0 %v388, 88
    %v1729 = vpop.permute.xlu0 %1728
    %1730 = vrot.lane.b32.xlu0 %v389, 88
    %v1731 = vpop.permute.xlu0 %1730
    %1732 = vrot.lane.b32.xlu0 %v390, 88
    %v1733 = vpop.permute.xlu0 %1732
    %1734 = vrot.lane.b32.xlu0 %v391, 88
    %v1735 = vpop.permute.xlu0 %1734
    %1736 = vrot.lane.b32.xlu0 %v392, 88
    %v1737 = vpop.permute.xlu0 %1736
    %1738 = vrot.lane.b32.xlu0 %v393, 88
    %v1739 = vpop.permute.xlu0 %1738
    %1740 = vrot.lane.b32.xlu0 %v394, 88
    %v1741 = vpop.permute.xlu0 %1740
    %1742 = vrot.lane.b32.xlu0 %v395, 88
    %v1743 = vpop.permute.xlu0 %1742
    %1744 = vrot.lane.b32.xlu0 %v396, 88
    %v1745 = vpop.permute.xlu0 %1744
    %1746 = vrot.lane.b32.xlu0 %v397, 88
    %v1747 = vpop.permute.xlu0 %1746
    %1748 = vrot.lane.b32.xlu0 %v398, 88
    %v1749 = vpop.permute.xlu0 %1748
    %1750 = vrot.lane.b32.xlu0 %v399, 88
    %v1751 = vpop.permute.xlu0 %1750
    %1752 = vrot.lane.b32.xlu0 %v400, 88
    %v1753 = vpop.permute.xlu0 %1752
    %1754 = vrot.lane.b32.xlu0 %v401, 88
    %v1755 = vpop.permute.xlu0 %1754
    %1772 = vmatprep.subr.bf16.mxu0 0
    %1773 = vmatpush1.bf16.msra.mxu0 %v1739
    %1774 = vmatprep.subr.bf16.mxu0 0
    %1775 = vmatpush1.bf16.msra.mxu0 %v1737
    %1776 = vmatprep.subr.bf16.mxu0 0
    %1777 = vmatpush1.bf16.msra.mxu0 %v1735
    %1778 = vmatprep.subr.bf16.mxu0 0
    %1779 = vmatpush1.bf16.msra.mxu0 %v1733
    %1780 = vmatprep.subr.bf16.mxu0 0
    %1781 = vmatpush1.bf16.msra.mxu0 %v1731
    %1782 = vmatprep.subr.bf16.mxu0 0
    %1783 = vmatpush1.bf16.msra.mxu0 %v1729
    %1784 = vmatprep.subr.bf16.mxu0 0
    %1785 = vmatpush1.bf16.msra.mxu0 %v1727
    %1786 = vmatprep.subr.bf16.mxu0 0
    %1787 = vmatpush1.bf16.msra.mxu0 %v1725
    %1788 = vmatprep.subr.bf16.mxu0 0
    %1789 = vmatpush2.bf16.msra.mxu0 %v1755
    %1790 = vmatprep.subr.bf16.mxu0 0
    %1791 = vmatpush2.bf16.msra.mxu0 %v1753
    %1792 = vmatprep.subr.bf16.mxu0 0
    %1793 = vmatpush2.bf16.msra.mxu0 %v1751
    %1794 = vmatprep.subr.bf16.mxu0 0
    %1795 = vmatpush2.bf16.msra.mxu0 %v1749
    %1796 = vmatprep.subr.bf16.mxu0 0
    %1797 = vmatpush2.bf16.msra.mxu0 %v1747
    %1798 = vmatprep.subr.bf16.mxu0 0
    %1799 = vmatpush2.bf16.msra.mxu0 %v1745
    %1800 = vmatprep.subr.bf16.mxu0 0
    %1801 = vmatpush2.bf16.msra.mxu0 %v1743
    %1802 = vmatprep.subr.bf16.mxu0 0
    %1803 = vmatpush2.bf16.msra.mxu0 %v1741
    %1804 = vmatprep.mubr.bf16.mxu0 %v1693
    %1805 = vmatmul.mubr.bf16.gmra.mxu0 %v1692
    %v1806 = vpop.f32.mrf.mxu0
    %v1807 = vadd.f32 0.0, %v1806
    %v1808 = vpop.f32.mrf.mxu0
    %v1809 = vpop.f32.mrf.mxu0
    %v1810 = vadd.f32 0.0, %v1809
    %v1811 = vpop.f32.mrf.mxu0
    %1812 = vmatprep.mubr.bf16.mxu0 %v1695
    %1813 = vmatmul.mubr.bf16.gmra.mxu0 %v1694
    %v1814 = vpop.f32.mrf.mxu0
    %v1815 = vadd.f32 0.0, %v1814
    %v1816 = vpop.f32.mrf.mxu0
    %v1817 = vpop.f32.mrf.mxu0
    %v1818 = vadd.f32 0.0, %v1817
    %v1819 = vpop.f32.mrf.mxu0
    %1820 = vmatprep.mubr.bf16.mxu0 %v1697
    %1821 = vmatmul.mubr.bf16.gmra.mxu0 %v1696
    %v1822 = vpop.f32.mrf.mxu0
    %v1823 = vadd.f32 0.0, %v1822
    %v1824 = vpop.f32.mrf.mxu0
    %v1825 = vpop.f32.mrf.mxu0
    %v1826 = vadd.f32 0.0, %v1825
    %v1827 = vpop.f32.mrf.mxu0
    %1828 = vmatprep.mubr.bf16.mxu0 %v1699
    %1829 = vmatmul.mubr.bf16.gmra.mxu0 %v1698
    %v1830 = vpop.f32.mrf.mxu0
    %v1831 = vadd.f32 0.0, %v1830
    %v1832 = vpop.f32.mrf.mxu0
    %v1833 = vpop.f32.mrf.mxu0
    %v1834 = vadd.f32 0.0, %v1833
    %v1835 = vpop.f32.mrf.mxu0
    %1836 = vmatprep.mubr.bf16.mxu0 %v1701
    %1837 = vmatmul.mubr.bf16.gmra.mxu0 %v1700
    %v1838 = vpop.f32.mrf.mxu0
    %v1839 = vadd.f32 0.0, %v1838
    %v1840 = vpop.f32.mrf.mxu0
    %v1841 = vpop.f32.mrf.mxu0
    %v1842 = vadd.f32 0.0, %v1841
    %v1843 = vpop.f32.mrf.mxu0
    %1844 = vmatprep.mubr.bf16.mxu0 %v1703
    %1845 = vmatmul.mubr.bf16.gmra.mxu0 %v1702
    %v1846 = vpop.f32.mrf.mxu0
    %v1847 = vadd.f32 0.0, %v1846
    %v1848 = vpop.f32.mrf.mxu0
    %v1849 = vpop.f32.mrf.mxu0
    %v1850 = vadd.f32 0.0, %v1849
    %v1851 = vpop.f32.mrf.mxu0
    %1852 = vmatprep.mubr.bf16.mxu0 %v1705
    %1853 = vmatmul.mubr.bf16.gmra.mxu0 %v1704
    %v1854 = vpop.f32.mrf.mxu0
    %v1855 = vadd.f32 0.0, %v1854
    %v1856 = vpop.f32.mrf.mxu0
    %v1857 = vpop.f32.mrf.mxu0
    %v1858 = vadd.f32 0.0, %v1857
    %v1859 = vpop.f32.mrf.mxu0
    %1860 = vmatprep.mubr.bf16.mxu0 %v1707
    %1861 = vmatmul.mubr.bf16.gmra.mxu0 %v1706
    %v1862 = vpop.f32.mrf.mxu0
    %v1863 = vadd.f32 0.0, %v1862
    %v1864 = vpop.f32.mrf.mxu0
    %v1865 = vpop.f32.mrf.mxu0
    %v1866 = vadd.f32 0.0, %v1865
    %v1867 = vpop.f32.mrf.mxu0
    %1868 = vdwg.mxu0
    %v1869 = vadd.f32 %v1611, %v1807
    %v1870 = vadd.f32 %v1612, %v1810
    %v1871 = vadd.f32 %v1613, %v1815
    %v1872 = vadd.f32 %v1614, %v1818
    %v1873 = vadd.f32 %v1615, %v1823
    %v1874 = vadd.f32 %v1616, %v1826
    %v1875 = vadd.f32 %v1617, %v1831
    %v1876 = vadd.f32 %v1618, %v1834
    %v1877 = vadd.f32 %v1619, %v1839
    %v1878 = vadd.f32 %v1620, %v1842
    %v1879 = vadd.f32 %v1621, %v1847
    %v1880 = vadd.f32 %v1622, %v1850
    %v1881 = vadd.f32 %v1623, %v1855
    %v1882 = vadd.f32 %v1624, %v1858
    %v1883 = vadd.f32 %v1625, %v1863
    %v1884 = vadd.f32 %v1626, %v1866
    %s1885 = scalar_lea.vmem [#allocation7], 768
    %v1886 = vld [vmem:[%s1885] sm:$0xff]
    %v1887 = vld [vmem:[%s1885 + $0x8] sm:$0xff]
    %v1888 = vld [vmem:[%s1885 + $0x10] sm:$0xff]
    %v1889 = vld [vmem:[%s1885 + $0x18] sm:$0xff]
    %v1890 = vld [vmem:[%s1885 + $0x20] sm:$0xff]
    %v1891 = vld [vmem:[%s1885 + $0x28] sm:$0xff]
    %v1892 = vld [vmem:[%s1885 + $0x30] sm:$0xff]
    %v1893 = vld [vmem:[%s1885 + $0x38] sm:$0xff]
    %v1894 = vld [vmem:[%s1885 + $0x40] sm:$0xff]
    %v1895 = vld [vmem:[%s1885 + $0x48] sm:$0xff]
    %v1896 = vld [vmem:[%s1885 + $0x50] sm:$0xff]
    %v1897 = vld [vmem:[%s1885 + $0x58] sm:$0xff]
    %v1898 = vld [vmem:[%s1885 + $0x60] sm:$0xff]
    %v1899 = vld [vmem:[%s1885 + $0x68] sm:$0xff]
    %v1900 = vld [vmem:[%s1885 + $0x70] sm:$0xff]
    %v1901 = vld [vmem:[%s1885 + $0x78] sm:$0xff]
    %v1918 = vunpack.c.l.b16 %v1886
    %v1919 = vunpack.c.h.b16 %v1886
    %v1920 = vunpack.c.l.b16 %v1887
    %v1921 = vunpack.c.h.b16 %v1887
    %v1922 = vunpack.c.l.b16 %v1888
    %v1923 = vunpack.c.h.b16 %v1888
    %v1924 = vunpack.c.l.b16 %v1889
    %v1925 = vunpack.c.h.b16 %v1889
    %v1926 = vunpack.c.l.b16 %v1890
    %v1927 = vunpack.c.h.b16 %v1890
    %v1928 = vunpack.c.l.b16 %v1891
    %v1929 = vunpack.c.h.b16 %v1891
    %v1930 = vunpack.c.l.b16 %v1892
    %v1931 = vunpack.c.h.b16 %v1892
    %v1932 = vunpack.c.l.b16 %v1893
    %v1933 = vunpack.c.h.b16 %v1893
    %v1934 = vunpack.c.l.b16 %v1894
    %v1935 = vunpack.c.h.b16 %v1894
    %v1936 = vunpack.c.l.b16 %v1895
    %v1937 = vunpack.c.h.b16 %v1895
    %v1938 = vunpack.c.l.b16 %v1896
    %v1939 = vunpack.c.h.b16 %v1896
    %v1940 = vunpack.c.l.b16 %v1897
    %v1941 = vunpack.c.h.b16 %v1897
    %v1942 = vunpack.c.l.b16 %v1898
    %v1943 = vunpack.c.h.b16 %v1898
    %v1944 = vunpack.c.l.b16 %v1899
    %v1945 = vunpack.c.h.b16 %v1899
    %v1946 = vunpack.c.l.b16 %v1900
    %v1947 = vunpack.c.h.b16 %v1900
    %v1948 = vunpack.c.l.b16 %v1901
    %v1949 = vunpack.c.h.b16 %v1901
    %v1950 = vpack.c.b16 %v1920, %v1918
    %v1951 = vpack.c.b16 %v1921, %v1919
    %v1952 = vpack.c.b16 %v1924, %v1922
    %v1953 = vpack.c.b16 %v1925, %v1923
    %v1954 = vpack.c.b16 %v1928, %v1926
    %v1955 = vpack.c.b16 %v1929, %v1927
    %v1956 = vpack.c.b16 %v1932, %v1930
    %v1957 = vpack.c.b16 %v1933, %v1931
    %v1958 = vpack.c.b16 %v1936, %v1934
    %v1959 = vpack.c.b16 %v1937, %v1935
    %v1960 = vpack.c.b16 %v1940, %v1938
    %v1961 = vpack.c.b16 %v1941, %v1939
    %v1962 = vpack.c.b16 %v1944, %v1942
    %v1963 = vpack.c.b16 %v1945, %v1943
    %v1964 = vpack.c.b16 %v1948, %v1946
    %v1965 = vpack.c.b16 %v1949, %v1947
    %1982 = vrot.lane.b32.xlu0 %v386, 80
    %v1983 = vpop.permute.xlu0 %1982
    %1984 = vrot.lane.b32.xlu0 %v387, 80
    %v1985 = vpop.permute.xlu0 %1984
    %1986 = vrot.lane.b32.xlu0 %v388, 80
    %v1987 = vpop.permute.xlu0 %1986
    %1988 = vrot.lane.b32.xlu0 %v389, 80
    %v1989 = vpop.permute.xlu0 %1988
    %1990 = vrot.lane.b32.xlu0 %v390, 80
    %v1991 = vpop.permute.xlu0 %1990
    %1992 = vrot.lane.b32.xlu0 %v391, 80
    %v1993 = vpop.permute.xlu0 %1992
    %1994 = vrot.lane.b32.xlu0 %v392, 80
    %v1995 = vpop.permute.xlu0 %1994
    %1996 = vrot.lane.b32.xlu0 %v393, 80
    %v1997 = vpop.permute.xlu0 %1996
    %1998 = vrot.lane.b32.xlu0 %v394, 80
    %v1999 = vpop.permute.xlu0 %1998
    %2000 = vrot.lane.b32.xlu0 %v395, 80
    %v2001 = vpop.permute.xlu0 %2000
    %2002 = vrot.lane.b32.xlu0 %v396, 80
    %v2003 = vpop.permute.xlu0 %2002
    %2004 = vrot.lane.b32.xlu0 %v397, 80
    %v2005 = vpop.permute.xlu0 %2004
    %2006 = vrot.lane.b32.xlu0 %v398, 80
    %v2007 = vpop.permute.xlu0 %2006
    %2008 = vrot.lane.b32.xlu0 %v399, 80
    %v2009 = vpop.permute.xlu0 %2008
    %2010 = vrot.lane.b32.xlu0 %v400, 80
    %v2011 = vpop.permute.xlu0 %2010
    %2012 = vrot.lane.b32.xlu0 %v401, 80
    %v2013 = vpop.permute.xlu0 %2012
    %2030 = vmatprep.subr.bf16.mxu0 0
    %2031 = vmatpush1.bf16.msra.mxu0 %v1997
    %2032 = vmatprep.subr.bf16.mxu0 0
    %2033 = vmatpush1.bf16.msra.mxu0 %v1995
    %2034 = vmatprep.subr.bf16.mxu0 0
    %2035 = vmatpush1.bf16.msra.mxu0 %v1993
    %2036 = vmatprep.subr.bf16.mxu0 0
    %2037 = vmatpush1.bf16.msra.mxu0 %v1991
    %2038 = vmatprep.subr.bf16.mxu0 0
    %2039 = vmatpush1.bf16.msra.mxu0 %v1989
    %2040 = vmatprep.subr.bf16.mxu0 0
    %2041 = vmatpush1.bf16.msra.mxu0 %v1987
    %2042 = vmatprep.subr.bf16.mxu0 0
    %2043 = vmatpush1.bf16.msra.mxu0 %v1985
    %2044 = vmatprep.subr.bf16.mxu0 0
    %2045 = vmatpush1.bf16.msra.mxu0 %v1983
    %2046 = vmatprep.subr.bf16.mxu0 0
    %2047 = vmatpush2.bf16.msra.mxu0 %v2013
    %2048 = vmatprep.subr.bf16.mxu0 0
    %2049 = vmatpush2.bf16.msra.mxu0 %v2011
    %2050 = vmatprep.subr.bf16.mxu0 0
    %2051 = vmatpush2.bf16.msra.mxu0 %v2009
    %2052 = vmatprep.subr.bf16.mxu0 0
    %2053 = vmatpush2.bf16.msra.mxu0 %v2007
    %2054 = vmatprep.subr.bf16.mxu0 0
    %2055 = vmatpush2.bf16.msra.mxu0 %v2005
    %2056 = vmatprep.subr.bf16.mxu0 0
    %2057 = vmatpush2.bf16.msra.mxu0 %v2003
    %2058 = vmatprep.subr.bf16.mxu0 0
    %2059 = vmatpush2.bf16.msra.mxu0 %v2001
    %2060 = vmatprep.subr.bf16.mxu0 0
    %2061 = vmatpush2.bf16.msra.mxu0 %v1999
    %2062 = vmatprep.mubr.bf16.mxu0 %v1951
    %2063 = vmatmul.mubr.bf16.gmra.mxu0 %v1950
    %v2064 = vpop.f32.mrf.mxu0
    %v2065 = vadd.f32 0.0, %v2064
    %v2066 = vpop.f32.mrf.mxu0
    %v2067 = vpop.f32.mrf.mxu0
    %v2068 = vadd.f32 0.0, %v2067
    %v2069 = vpop.f32.mrf.mxu0
    %2070 = vmatprep.mubr.bf16.mxu0 %v1953
    %2071 = vmatmul.mubr.bf16.gmra.mxu0 %v1952
    %v2072 = vpop.f32.mrf.mxu0
    %v2073 = vadd.f32 0.0, %v2072
    %v2074 = vpop.f32.mrf.mxu0
    %v2075 = vpop.f32.mrf.mxu0
    %v2076 = vadd.f32 0.0, %v2075
    %v2077 = vpop.f32.mrf.mxu0
    %2078 = vmatprep.mubr.bf16.mxu0 %v1955
    %2079 = vmatmul.mubr.bf16.gmra.mxu0 %v1954
    %v2080 = vpop.f32.mrf.mxu0
    %v2081 = vadd.f32 0.0, %v2080
    %v2082 = vpop.f32.mrf.mxu0
    %v2083 = vpop.f32.mrf.mxu0
    %v2084 = vadd.f32 0.0, %v2083
    %v2085 = vpop.f32.mrf.mxu0
    %2086 = vmatprep.mubr.bf16.mxu0 %v1957
    %2087 = vmatmul.mubr.bf16.gmra.mxu0 %v1956
    %v2088 = vpop.f32.mrf.mxu0
    %v2089 = vadd.f32 0.0, %v2088
    %v2090 = vpop.f32.mrf.mxu0
    %v2091 = vpop.f32.mrf.mxu0
    %v2092 = vadd.f32 0.0, %v2091
    %v2093 = vpop.f32.mrf.mxu0
    %2094 = vmatprep.mubr.bf16.mxu0 %v1959
    %2095 = vmatmul.mubr.bf16.gmra.mxu0 %v1958
    %v2096 = vpop.f32.mrf.mxu0
    %v2097 = vadd.f32 0.0, %v2096
    %v2098 = vpop.f32.mrf.mxu0
    %v2099 = vpop.f32.mrf.mxu0
    %v2100 = vadd.f32 0.0, %v2099
    %v2101 = vpop.f32.mrf.mxu0
    %2102 = vmatprep.mubr.bf16.mxu0 %v1961
    %2103 = vmatmul.mubr.bf16.gmra.mxu0 %v1960
    %v2104 = vpop.f32.mrf.mxu0
    %v2105 = vadd.f32 0.0, %v2104
    %v2106 = vpop.f32.mrf.mxu0
    %v2107 = vpop.f32.mrf.mxu0
    %v2108 = vadd.f32 0.0, %v2107
    %v2109 = vpop.f32.mrf.mxu0
    %2110 = vmatprep.mubr.bf16.mxu0 %v1963
    %2111 = vmatmul.mubr.bf16.gmra.mxu0 %v1962
    %v2112 = vpop.f32.mrf.mxu0
    %v2113 = vadd.f32 0.0, %v2112
    %v2114 = vpop.f32.mrf.mxu0
    %v2115 = vpop.f32.mrf.mxu0
    %v2116 = vadd.f32 0.0, %v2115
    %v2117 = vpop.f32.mrf.mxu0
    %2118 = vmatprep.mubr.bf16.mxu0 %v1965
    %2119 = vmatmul.mubr.bf16.gmra.mxu0 %v1964
    %v2120 = vpop.f32.mrf.mxu0
    %v2121 = vadd.f32 0.0, %v2120
    %v2122 = vpop.f32.mrf.mxu0
    %v2123 = vpop.f32.mrf.mxu0
    %v2124 = vadd.f32 0.0, %v2123
    %v2125 = vpop.f32.mrf.mxu0
    %2126 = vdwg.mxu0
    %v2127 = vadd.f32 %v1869, %v2065
    %v2128 = vadd.f32 %v1870, %v2068
    %v2129 = vadd.f32 %v1871, %v2073
    %v2130 = vadd.f32 %v1872, %v2076
    %v2131 = vadd.f32 %v1873, %v2081
    %v2132 = vadd.f32 %v1874, %v2084
    %v2133 = vadd.f32 %v1875, %v2089
    %v2134 = vadd.f32 %v1876, %v2092
    %v2135 = vadd.f32 %v1877, %v2097
    %v2136 = vadd.f32 %v1878, %v2100
    %v2137 = vadd.f32 %v1879, %v2105
    %v2138 = vadd.f32 %v1880, %v2108
    %v2139 = vadd.f32 %v1881, %v2113
    %v2140 = vadd.f32 %v1882, %v2116
    %v2141 = vadd.f32 %v1883, %v2121
    %v2142 = vadd.f32 %v1884, %v2124
    %s2143 = scalar_lea.vmem [#allocation7], 896
    %v2144 = vld [vmem:[%s2143] sm:$0xff]
    %v2145 = vld [vmem:[%s2143 + $0x8] sm:$0xff]
    %v2146 = vld [vmem:[%s2143 + $0x10] sm:$0xff]
    %v2147 = vld [vmem:[%s2143 + $0x18] sm:$0xff]
    %v2148 = vld [vmem:[%s2143 + $0x20] sm:$0xff]
    %v2149 = vld [vmem:[%s2143 + $0x28] sm:$0xff]
    %v2150 = vld [vmem:[%s2143 + $0x30] sm:$0xff]
    %v2151 = vld [vmem:[%s2143 + $0x38] sm:$0xff]
    %v2152 = vld [vmem:[%s2143 + $0x40] sm:$0xff]
    %v2153 = vld [vmem:[%s2143 + $0x48] sm:$0xff]
    %v2154 = vld [vmem:[%s2143 + $0x50] sm:$0xff]
    %v2155 = vld [vmem:[%s2143 + $0x58] sm:$0xff]
    %v2156 = vld [vmem:[%s2143 + $0x60] sm:$0xff]
    %v2157 = vld [vmem:[%s2143 + $0x68] sm:$0xff]
    %v2158 = vld [vmem:[%s2143 + $0x70] sm:$0xff]
    %v2159 = vld [vmem:[%s2143 + $0x78] sm:$0xff]
    %v2176 = vunpack.c.l.b16 %v2144
    %v2177 = vunpack.c.h.b16 %v2144
    %v2178 = vunpack.c.l.b16 %v2145
    %v2179 = vunpack.c.h.b16 %v2145
    %v2180 = vunpack.c.l.b16 %v2146
    %v2181 = vunpack.c.h.b16 %v2146
    %v2182 = vunpack.c.l.b16 %v2147
    %v2183 = vunpack.c.h.b16 %v2147
    %v2184 = vunpack.c.l.b16 %v2148
    %v2185 = vunpack.c.h.b16 %v2148
    %v2186 = vunpack.c.l.b16 %v2149
    %v2187 = vunpack.c.h.b16 %v2149
    %v2188 = vunpack.c.l.b16 %v2150
    %v2189 = vunpack.c.h.b16 %v2150
    %v2190 = vunpack.c.l.b16 %v2151
    %v2191 = vunpack.c.h.b16 %v2151
    %v2192 = vunpack.c.l.b16 %v2152
    %v2193 = vunpack.c.h.b16 %v2152
    %v2194 = vunpack.c.l.b16 %v2153
    %v2195 = vunpack.c.h.b16 %v2153
    %v2196 = vunpack.c.l.b16 %v2154
    %v2197 = vunpack.c.h.b16 %v2154
    %v2198 = vunpack.c.l.b16 %v2155
    %v2199 = vunpack.c.h.b16 %v2155
    %v2200 = vunpack.c.l.b16 %v2156
    %v2201 = vunpack.c.h.b16 %v2156
    %v2202 = vunpack.c.l.b16 %v2157
    %v2203 = vunpack.c.h.b16 %v2157
    %v2204 = vunpack.c.l.b16 %v2158
    %v2205 = vunpack.c.h.b16 %v2158
    %v2206 = vunpack.c.l.b16 %v2159
    %v2207 = vunpack.c.h.b16 %v2159
    %v2208 = vpack.c.b16 %v2178, %v2176
    %v2209 = vpack.c.b16 %v2179, %v2177
    %v2210 = vpack.c.b16 %v2182, %v2180
    %v2211 = vpack.c.b16 %v2183, %v2181
    %v2212 = vpack.c.b16 %v2186, %v2184
    %v2213 = vpack.c.b16 %v2187, %v2185
    %v2214 = vpack.c.b16 %v2190, %v2188
    %v2215 = vpack.c.b16 %v2191, %v2189
    %v2216 = vpack.c.b16 %v2194, %v2192
    %v2217 = vpack.c.b16 %v2195, %v2193
    %v2218 = vpack.c.b16 %v2198, %v2196
    %v2219 = vpack.c.b16 %v2199, %v2197
    %v2220 = vpack.c.b16 %v2202, %v2200
    %v2221 = vpack.c.b16 %v2203, %v2201
    %v2222 = vpack.c.b16 %v2206, %v2204
    %v2223 = vpack.c.b16 %v2207, %v2205
    %2240 = vrot.lane.b32.xlu0 %v386, 72
    %v2241 = vpop.permute.xlu0 %2240
    %2242 = vrot.lane.b32.xlu0 %v387, 72
    %v2243 = vpop.permute.xlu0 %2242
    %2244 = vrot.lane.b32.xlu0 %v388, 72
    %v2245 = vpop.permute.xlu0 %2244
    %2246 = vrot.lane.b32.xlu0 %v389, 72
    %v2247 = vpop.permute.xlu0 %2246
    %2248 = vrot.lane.b32.xlu0 %v390, 72
    %v2249 = vpop.permute.xlu0 %2248
    %2250 = vrot.lane.b32.xlu0 %v391, 72
    %v2251 = vpop.permute.xlu0 %2250
    %2252 = vrot.lane.b32.xlu0 %v392, 72
    %v2253 = vpop.permute.xlu0 %2252
    %2254 = vrot.lane.b32.xlu0 %v393, 72
    %v2255 = vpop.permute.xlu0 %2254
    %2256 = vrot.lane.b32.xlu0 %v394, 72
    %v2257 = vpop.permute.xlu0 %2256
    %2258 = vrot.lane.b32.xlu0 %v395, 72
    %v2259 = vpop.permute.xlu0 %2258
    %2260 = vrot.lane.b32.xlu0 %v396, 72
    %v2261 = vpop.permute.xlu0 %2260
    %2262 = vrot.lane.b32.xlu0 %v397, 72
    %v2263 = vpop.permute.xlu0 %2262
    %2264 = vrot.lane.b32.xlu0 %v398, 72
    %v2265 = vpop.permute.xlu0 %2264
    %2266 = vrot.lane.b32.xlu0 %v399, 72
    %v2267 = vpop.permute.xlu0 %2266
    %2268 = vrot.lane.b32.xlu0 %v400, 72
    %v2269 = vpop.permute.xlu0 %2268
    %2270 = vrot.lane.b32.xlu0 %v401, 72
    %v2271 = vpop.permute.xlu0 %2270
    %2288 = vmatprep.subr.bf16.mxu0 0
    %2289 = vmatpush1.bf16.msra.mxu0 %v2255
    %2290 = vmatprep.subr.bf16.mxu0 0
    %2291 = vmatpush1.bf16.msra.mxu0 %v2253
    %2292 = vmatprep.subr.bf16.mxu0 0
    %2293 = vmatpush1.bf16.msra.mxu0 %v2251
    %2294 = vmatprep.subr.bf16.mxu0 0
    %2295 = vmatpush1.bf16.msra.mxu0 %v2249
    %2296 = vmatprep.subr.bf16.mxu0 0
    %2297 = vmatpush1.bf16.msra.mxu0 %v2247
    %2298 = vmatprep.subr.bf16.mxu0 0
    %2299 = vmatpush1.bf16.msra.mxu0 %v2245
    %2300 = vmatprep.subr.bf16.mxu0 0
    %2301 = vmatpush1.bf16.msra.mxu0 %v2243
    %2302 = vmatprep.subr.bf16.mxu0 0
    %2303 = vmatpush1.bf16.msra.mxu0 %v2241
    %2304 = vmatprep.subr.bf16.mxu0 0
    %2305 = vmatpush2.bf16.msra.mxu0 %v2271
    %2306 = vmatprep.subr.bf16.mxu0 0
    %2307 = vmatpush2.bf16.msra.mxu0 %v2269
    %2308 = vmatprep.subr.bf16.mxu0 0
    %2309 = vmatpush2.bf16.msra.mxu0 %v2267
    %2310 = vmatprep.subr.bf16.mxu0 0
    %2311 = vmatpush2.bf16.msra.mxu0 %v2265
    %2312 = vmatprep.subr.bf16.mxu0 0
    %2313 = vmatpush2.bf16.msra.mxu0 %v2263
    %2314 = vmatprep.subr.bf16.mxu0 0
    %2315 = vmatpush2.bf16.msra.mxu0 %v2261
    %2316 = vmatprep.subr.bf16.mxu0 0
    %2317 = vmatpush2.bf16.msra.mxu0 %v2259
    %2318 = vmatprep.subr.bf16.mxu0 0
    %2319 = vmatpush2.bf16.msra.mxu0 %v2257
    %2320 = vmatprep.mubr.bf16.mxu0 %v2209
    %2321 = vmatmul.mubr.bf16.gmra.mxu0 %v2208
    %v2322 = vpop.f32.mrf.mxu0
    %v2323 = vadd.f32 0.0, %v2322
    %v2324 = vpop.f32.mrf.mxu0
    %v2325 = vpop.f32.mrf.mxu0
    %v2326 = vadd.f32 0.0, %v2325
    %v2327 = vpop.f32.mrf.mxu0
    %2328 = vmatprep.mubr.bf16.mxu0 %v2211
    %2329 = vmatmul.mubr.bf16.gmra.mxu0 %v2210
    %v2330 = vpop.f32.mrf.mxu0
    %v2331 = vadd.f32 0.0, %v2330
    %v2332 = vpop.f32.mrf.mxu0
    %v2333 = vpop.f32.mrf.mxu0
    %v2334 = vadd.f32 0.0, %v2333
    %v2335 = vpop.f32.mrf.mxu0
    %2336 = vmatprep.mubr.bf16.mxu0 %v2213
    %2337 = vmatmul.mubr.bf16.gmra.mxu0 %v2212
    %v2338 = vpop.f32.mrf.mxu0
    %v2339 = vadd.f32 0.0, %v2338
    %v2340 = vpop.f32.mrf.mxu0
    %v2341 = vpop.f32.mrf.mxu0
    %v2342 = vadd.f32 0.0, %v2341
    %v2343 = vpop.f32.mrf.mxu0
    %2344 = vmatprep.mubr.bf16.mxu0 %v2215
    %2345 = vmatmul.mubr.bf16.gmra.mxu0 %v2214
    %v2346 = vpop.f32.mrf.mxu0
    %v2347 = vadd.f32 0.0, %v2346
    %v2348 = vpop.f32.mrf.mxu0
    %v2349 = vpop.f32.mrf.mxu0
    %v2350 = vadd.f32 0.0, %v2349
    %v2351 = vpop.f32.mrf.mxu0
    %2352 = vmatprep.mubr.bf16.mxu0 %v2217
    %2353 = vmatmul.mubr.bf16.gmra.mxu0 %v2216
    %v2354 = vpop.f32.mrf.mxu0
    %v2355 = vadd.f32 0.0, %v2354
    %v2356 = vpop.f32.mrf.mxu0
    %v2357 = vpop.f32.mrf.mxu0
    %v2358 = vadd.f32 0.0, %v2357
    %v2359 = vpop.f32.mrf.mxu0
    %2360 = vmatprep.mubr.bf16.mxu0 %v2219
    %2361 = vmatmul.mubr.bf16.gmra.mxu0 %v2218
    %v2362 = vpop.f32.mrf.mxu0
    %v2363 = vadd.f32 0.0, %v2362
    %v2364 = vpop.f32.mrf.mxu0
    %v2365 = vpop.f32.mrf.mxu0
    %v2366 = vadd.f32 0.0, %v2365
    %v2367 = vpop.f32.mrf.mxu0
    %2368 = vmatprep.mubr.bf16.mxu0 %v2221
    %2369 = vmatmul.mubr.bf16.gmra.mxu0 %v2220
    %v2370 = vpop.f32.mrf.mxu0
    %v2371 = vadd.f32 0.0, %v2370
    %v2372 = vpop.f32.mrf.mxu0
    %v2373 = vpop.f32.mrf.mxu0
    %v2374 = vadd.f32 0.0, %v2373
    %v2375 = vpop.f32.mrf.mxu0
    %2376 = vmatprep.mubr.bf16.mxu0 %v2223
    %2377 = vmatmul.mubr.bf16.gmra.mxu0 %v2222
    %v2378 = vpop.f32.mrf.mxu0
    %v2379 = vadd.f32 0.0, %v2378
    %v2380 = vpop.f32.mrf.mxu0
    %v2381 = vpop.f32.mrf.mxu0
    %v2382 = vadd.f32 0.0, %v2381
    %v2383 = vpop.f32.mrf.mxu0
    %2384 = vdwg.mxu0
    %v2385 = vadd.f32 %v2127, %v2323
    %v2386 = vadd.f32 %v2128, %v2326
    %v2387 = vadd.f32 %v2129, %v2331
    %v2388 = vadd.f32 %v2130, %v2334
    %v2389 = vadd.f32 %v2131, %v2339
    %v2390 = vadd.f32 %v2132, %v2342
    %v2391 = vadd.f32 %v2133, %v2347
    %v2392 = vadd.f32 %v2134, %v2350
    %v2393 = vadd.f32 %v2135, %v2355
    %v2394 = vadd.f32 %v2136, %v2358
    %v2395 = vadd.f32 %v2137, %v2363
    %v2396 = vadd.f32 %v2138, %v2366
    %v2397 = vadd.f32 %v2139, %v2371
    %v2398 = vadd.f32 %v2140, %v2374
    %v2399 = vadd.f32 %v2141, %v2379
    %v2400 = vadd.f32 %v2142, %v2382
    %s2401 = scalar_lea.vmem [#allocation7], 1024
    %v2402 = vld [vmem:[%s2401] sm:$0xff]
    %v2403 = vld [vmem:[%s2401 + $0x8] sm:$0xff]
    %v2404 = vld [vmem:[%s2401 + $0x10] sm:$0xff]
    %v2405 = vld [vmem:[%s2401 + $0x18] sm:$0xff]
    %v2406 = vld [vmem:[%s2401 + $0x20] sm:$0xff]
    %v2407 = vld [vmem:[%s2401 + $0x28] sm:$0xff]
    %v2408 = vld [vmem:[%s2401 + $0x30] sm:$0xff]
    %v2409 = vld [vmem:[%s2401 + $0x38] sm:$0xff]
    %v2410 = vld [vmem:[%s2401 + $0x40] sm:$0xff]
    %v2411 = vld [vmem:[%s2401 + $0x48] sm:$0xff]
    %v2412 = vld [vmem:[%s2401 + $0x50] sm:$0xff]
    %v2413 = vld [vmem:[%s2401 + $0x58] sm:$0xff]
    %v2414 = vld [vmem:[%s2401 + $0x60] sm:$0xff]
    %v2415 = vld [vmem:[%s2401 + $0x68] sm:$0xff]
    %v2416 = vld [vmem:[%s2401 + $0x70] sm:$0xff]
    %v2417 = vld [vmem:[%s2401 + $0x78] sm:$0xff]
    %v2434 = vunpack.c.l.b16 %v2402
    %v2435 = vunpack.c.h.b16 %v2402
    %v2436 = vunpack.c.l.b16 %v2403
    %v2437 = vunpack.c.h.b16 %v2403
    %v2438 = vunpack.c.l.b16 %v2404
    %v2439 = vunpack.c.h.b16 %v2404
    %v2440 = vunpack.c.l.b16 %v2405
    %v2441 = vunpack.c.h.b16 %v2405
    %v2442 = vunpack.c.l.b16 %v2406
    %v2443 = vunpack.c.h.b16 %v2406
    %v2444 = vunpack.c.l.b16 %v2407
    %v2445 = vunpack.c.h.b16 %v2407
    %v2446 = vunpack.c.l.b16 %v2408
    %v2447 = vunpack.c.h.b16 %v2408
    %v2448 = vunpack.c.l.b16 %v2409
    %v2449 = vunpack.c.h.b16 %v2409
    %v2450 = vunpack.c.l.b16 %v2410
    %v2451 = vunpack.c.h.b16 %v2410
    %v2452 = vunpack.c.l.b16 %v2411
    %v2453 = vunpack.c.h.b16 %v2411
    %v2454 = vunpack.c.l.b16 %v2412
    %v2455 = vunpack.c.h.b16 %v2412
    %v2456 = vunpack.c.l.b16 %v2413
    %v2457 = vunpack.c.h.b16 %v2413
    %v2458 = vunpack.c.l.b16 %v2414
    %v2459 = vunpack.c.h.b16 %v2414
    %v2460 = vunpack.c.l.b16 %v2415
    %v2461 = vunpack.c.h.b16 %v2415
    %v2462 = vunpack.c.l.b16 %v2416
    %v2463 = vunpack.c.h.b16 %v2416
    %v2464 = vunpack.c.l.b16 %v2417
    %v2465 = vunpack.c.h.b16 %v2417
    %v2466 = vpack.c.b16 %v2436, %v2434
    %v2467 = vpack.c.b16 %v2437, %v2435
    %v2468 = vpack.c.b16 %v2440, %v2438
    %v2469 = vpack.c.b16 %v2441, %v2439
    %v2470 = vpack.c.b16 %v2444, %v2442
    %v2471 = vpack.c.b16 %v2445, %v2443
    %v2472 = vpack.c.b16 %v2448, %v2446
    %v2473 = vpack.c.b16 %v2449, %v2447
    %v2474 = vpack.c.b16 %v2452, %v2450
    %v2475 = vpack.c.b16 %v2453, %v2451
    %v2476 = vpack.c.b16 %v2456, %v2454
    %v2477 = vpack.c.b16 %v2457, %v2455
    %v2478 = vpack.c.b16 %v2460, %v2458
    %v2479 = vpack.c.b16 %v2461, %v2459
    %v2480 = vpack.c.b16 %v2464, %v2462
    %v2481 = vpack.c.b16 %v2465, %v2463
    %2498 = vrot.lane.b32.xlu0 %v386, 64
    %v2499 = vpop.permute.xlu0 %2498
    %2500 = vrot.lane.b32.xlu0 %v387, 64
    %v2501 = vpop.permute.xlu0 %2500
    %2502 = vrot.lane.b32.xlu0 %v388, 64
    %v2503 = vpop.permute.xlu0 %2502
    %2504 = vrot.lane.b32.xlu0 %v389, 64
    %v2505 = vpop.permute.xlu0 %2504
    %2506 = vrot.lane.b32.xlu0 %v390, 64
    %v2507 = vpop.permute.xlu0 %2506
    %2508 = vrot.lane.b32.xlu0 %v391, 64
    %v2509 = vpop.permute.xlu0 %2508
    %2510 = vrot.lane.b32.xlu0 %v392, 64
    %v2511 = vpop.permute.xlu0 %2510
    %2512 = vrot.lane.b32.xlu0 %v393, 64
    %v2513 = vpop.permute.xlu0 %2512
    %2514 = vrot.lane.b32.xlu0 %v394, 64
    %v2515 = vpop.permute.xlu0 %2514
    %2516 = vrot.lane.b32.xlu0 %v395, 64
    %v2517 = vpop.permute.xlu0 %2516
    %2518 = vrot.lane.b32.xlu0 %v396, 64
    %v2519 = vpop.permute.xlu0 %2518
    %2520 = vrot.lane.b32.xlu0 %v397, 64
    %v2521 = vpop.permute.xlu0 %2520
    %2522 = vrot.lane.b32.xlu0 %v398, 64
    %v2523 = vpop.permute.xlu0 %2522
    %2524 = vrot.lane.b32.xlu0 %v399, 64
    %v2525 = vpop.permute.xlu0 %2524
    %2526 = vrot.lane.b32.xlu0 %v400, 64
    %v2527 = vpop.permute.xlu0 %2526
    %2528 = vrot.lane.b32.xlu0 %v401, 64
    %v2529 = vpop.permute.xlu0 %2528
    %2546 = vmatprep.subr.bf16.mxu0 0
    %2547 = vmatpush1.bf16.msra.mxu0 %v2513
    %2548 = vmatprep.subr.bf16.mxu0 0
    %2549 = vmatpush1.bf16.msra.mxu0 %v2511
    %2550 = vmatprep.subr.bf16.mxu0 0
    %2551 = vmatpush1.bf16.msra.mxu0 %v2509
    %2552 = vmatprep.subr.bf16.mxu0 0
    %2553 = vmatpush1.bf16.msra.mxu0 %v2507
    %2554 = vmatprep.subr.bf16.mxu0 0
    %2555 = vmatpush1.bf16.msra.mxu0 %v2505
    %2556 = vmatprep.subr.bf16.mxu0 0
    %2557 = vmatpush1.bf16.msra.mxu0 %v2503
    %2558 = vmatprep.subr.bf16.mxu0 0
    %2559 = vmatpush1.bf16.msra.mxu0 %v2501
    %2560 = vmatprep.subr.bf16.mxu0 0
    %2561 = vmatpush1.bf16.msra.mxu0 %v2499
    %2562 = vmatprep.subr.bf16.mxu0 0
    %2563 = vmatpush2.bf16.msra.mxu0 %v2529
    %2564 = vmatprep.subr.bf16.mxu0 0
    %2565 = vmatpush2.bf16.msra.mxu0 %v2527
    %2566 = vmatprep.subr.bf16.mxu0 0
    %2567 = vmatpush2.bf16.msra.mxu0 %v2525
    %2568 = vmatprep.subr.bf16.mxu0 0
    %2569 = vmatpush2.bf16.msra.mxu0 %v2523
    %2570 = vmatprep.subr.bf16.mxu0 0
    %2571 = vmatpush2.bf16.msra.mxu0 %v2521
    %2572 = vmatprep.subr.bf16.mxu0 0
    %2573 = vmatpush2.bf16.msra.mxu0 %v2519
    %2574 = vmatprep.subr.bf16.mxu0 0
    %2575 = vmatpush2.bf16.msra.mxu0 %v2517
    %2576 = vmatprep.subr.bf16.mxu0 0
    %2577 = vmatpush2.bf16.msra.mxu0 %v2515
    %2578 = vmatprep.mubr.bf16.mxu0 %v2467
    %2579 = vmatmul.mubr.bf16.gmra.mxu0 %v2466
    %v2580 = vpop.f32.mrf.mxu0
    %v2581 = vadd.f32 0.0, %v2580
    %v2582 = vpop.f32.mrf.mxu0
    %v2583 = vpop.f32.mrf.mxu0
    %v2584 = vadd.f32 0.0, %v2583
    %v2585 = vpop.f32.mrf.mxu0
    %2586 = vmatprep.mubr.bf16.mxu0 %v2469
    %2587 = vmatmul.mubr.bf16.gmra.mxu0 %v2468
    %v2588 = vpop.f32.mrf.mxu0
    %v2589 = vadd.f32 0.0, %v2588
    %v2590 = vpop.f32.mrf.mxu0
    %v2591 = vpop.f32.mrf.mxu0
    %v2592 = vadd.f32 0.0, %v2591
    %v2593 = vpop.f32.mrf.mxu0
    %2594 = vmatprep.mubr.bf16.mxu0 %v2471
    %2595 = vmatmul.mubr.bf16.gmra.mxu0 %v2470
    %v2596 = vpop.f32.mrf.mxu0
    %v2597 = vadd.f32 0.0, %v2596
    %v2598 = vpop.f32.mrf.mxu0
    %v2599 = vpop.f32.mrf.mxu0
    %v2600 = vadd.f32 0.0, %v2599
    %v2601 = vpop.f32.mrf.mxu0
    %2602 = vmatprep.mubr.bf16.mxu0 %v2473
    %2603 = vmatmul.mubr.bf16.gmra.mxu0 %v2472
    %v2604 = vpop.f32.mrf.mxu0
    %v2605 = vadd.f32 0.0, %v2604
    %v2606 = vpop.f32.mrf.mxu0
    %v2607 = vpop.f32.mrf.mxu0
    %v2608 = vadd.f32 0.0, %v2607
    %v2609 = vpop.f32.mrf.mxu0
    %2610 = vmatprep.mubr.bf16.mxu0 %v2475
    %2611 = vmatmul.mubr.bf16.gmra.mxu0 %v2474
    %v2612 = vpop.f32.mrf.mxu0
    %v2613 = vadd.f32 0.0, %v2612
    %v2614 = vpop.f32.mrf.mxu0
    %v2615 = vpop.f32.mrf.mxu0
    %v2616 = vadd.f32 0.0, %v2615
    %v2617 = vpop.f32.mrf.mxu0
    %2618 = vmatprep.mubr.bf16.mxu0 %v2477
    %2619 = vmatmul.mubr.bf16.gmra.mxu0 %v2476
    %v2620 = vpop.f32.mrf.mxu0
    %v2621 = vadd.f32 0.0, %v2620
    %v2622 = vpop.f32.mrf.mxu0
    %v2623 = vpop.f32.mrf.mxu0
    %v2624 = vadd.f32 0.0, %v2623
    %v2625 = vpop.f32.mrf.mxu0
    %2626 = vmatprep.mubr.bf16.mxu0 %v2479
    %2627 = vmatmul.mubr.bf16.gmra.mxu0 %v2478
    %v2628 = vpop.f32.mrf.mxu0
    %v2629 = vadd.f32 0.0, %v2628
    %v2630 = vpop.f32.mrf.mxu0
    %v2631 = vpop.f32.mrf.mxu0
    %v2632 = vadd.f32 0.0, %v2631
    %v2633 = vpop.f32.mrf.mxu0
    %2634 = vmatprep.mubr.bf16.mxu0 %v2481
    %2635 = vmatmul.mubr.bf16.gmra.mxu0 %v2480
    %v2636 = vpop.f32.mrf.mxu0
    %v2637 = vadd.f32 0.0, %v2636
    %v2638 = vpop.f32.mrf.mxu0
    %v2639 = vpop.f32.mrf.mxu0
    %v2640 = vadd.f32 0.0, %v2639
    %v2641 = vpop.f32.mrf.mxu0
    %2642 = vdwg.mxu0
    %v2643 = vadd.f32 %v2385, %v2581
    %v2644 = vadd.f32 %v2386, %v2584
    %v2645 = vadd.f32 %v2387, %v2589
    %v2646 = vadd.f32 %v2388, %v2592
    %v2647 = vadd.f32 %v2389, %v2597
    %v2648 = vadd.f32 %v2390, %v2600
    %v2649 = vadd.f32 %v2391, %v2605
    %v2650 = vadd.f32 %v2392, %v2608
    %v2651 = vadd.f32 %v2393, %v2613
    %v2652 = vadd.f32 %v2394, %v2616
    %v2653 = vadd.f32 %v2395, %v2621
    %v2654 = vadd.f32 %v2396, %v2624
    %v2655 = vadd.f32 %v2397, %v2629
    %v2656 = vadd.f32 %v2398, %v2632
    %v2657 = vadd.f32 %v2399, %v2637
    %v2658 = vadd.f32 %v2400, %v2640
    %v2659 = vlaneseq
    %v2660 = vshrl.u32 %v2659, 7
    %v2661 = vsub.s32 0, %v2660
    %v2662 = vrot.slane %v159, %v2661
    %v2663 = vadd.f32 %v2643, %v2662
    %v2664 = vadd.f32 %v2644, %v2662
    %v2665 = vadd.f32 %v2645, %v2662
    %v2666 = vadd.f32 %v2646, %v2662
    %v2667 = vadd.f32 %v2647, %v2662
    %v2668 = vadd.f32 %v2648, %v2662
    %v2669 = vadd.f32 %v2649, %v2662
    %v2670 = vadd.f32 %v2650, %v2662
    %v2671 = vadd.f32 %v2651, %v2662
    %v2672 = vadd.f32 %v2652, %v2662
    %v2673 = vadd.f32 %v2653, %v2662
    %v2674 = vadd.f32 %v2654, %v2662
    %v2675 = vadd.f32 %v2655, %v2662
    %v2676 = vadd.f32 %v2656, %v2662
    %v2677 = vadd.f32 %v2657, %v2662
    %v2678 = vadd.f32 %v2658, %v2662
    %v2679 = vmax.f32 %v2663, 0.0
    %v2680 = vmax.f32 %v2664, 0.0
    %v2681 = vmax.f32 %v2665, 0.0
    %v2682 = vmax.f32 %v2666, 0.0
    %v2683 = vmax.f32 %v2667, 0.0
    %v2684 = vmax.f32 %v2668, 0.0
    %v2685 = vmax.f32 %v2669, 0.0
    %v2686 = vmax.f32 %v2670, 0.0
    %v2687 = vmax.f32 %v2671, 0.0
    %v2688 = vmax.f32 %v2672, 0.0
    %v2689 = vmax.f32 %v2673, 0.0
    %v2690 = vmax.f32 %v2674, 0.0
    %v2691 = vmax.f32 %v2675, 0.0
    %v2692 = vmax.f32 %v2676, 0.0
    %v2693 = vmax.f32 %v2677, 0.0
    %v2694 = vmax.f32 %v2678, 0.0
    %v2695 = vpack.c.bf16 %v2680, %v2679
    %v2696 = vpack.c.bf16 %v2682, %v2681
    %v2697 = vpack.c.bf16 %v2684, %v2683
    %v2698 = vpack.c.bf16 %v2686, %v2685
    %v2699 = vpack.c.bf16 %v2688, %v2687
    %v2700 = vpack.c.bf16 %v2690, %v2689
    %v2701 = vpack.c.bf16 %v2692, %v2691
    %v2702 = vpack.c.bf16 %v2694, %v2693
    %v2703 = vld [vmem:[#allocation5 + $0x1] sm:$0x1]
    %v2704 = vld [vmem:[%s2 + $0x10] sm:$0xf]
    %vm2705 = vcmask 64512
    %v2707 = vsel %vm2705, %v2695, 0
    %v2710 = vsel %vm2705, %v2696, 0
    %v2713 = vsel %vm2705, %v2697, 0
    %v2716 = vsel %vm2705, %v2698, 0
    %v2719 = vsel %vm2705, %v2699, 0
    %v2722 = vsel %vm2705, %v2700, 0
    %v2725 = vsel %vm2705, %v2701, 0
    %v2728 = vsel %vm2705, %v2702, 0
    %vm2730 = vcmask 1043456
    %v2732 = vsel %vm2730, %v2704, 0
    %2734 = vmatprep.subr.bf16.mxu0 0
    %2735 = vmatpush1.bf16.msra.mxu0 0
    %2736 = vmatprep.subr.bf16.mxu0 0
    %2737 = vmatpush1.bf16.msra.mxu0 0
    %2738 = vmatprep.subr.bf16.mxu0 0
    %2739 = vmatpush1.bf16.msra.mxu0 0
    %2740 = vmatprep.subr.bf16.mxu0 0
    %2741 = vmatpush1.bf16.msra.mxu0 0
    %2742 = vmatprep.subr.bf16.mxu0 0
    %2743 = vmatpush1.bf16.msra.mxu0 0
    %2744 = vmatprep.subr.bf16.mxu0 0
    %2745 = vmatpush1.bf16.msra.mxu0 0
    %2746 = vmatprep.subr.bf16.mxu0 0
    %2747 = vmatpush1.bf16.msra.mxu0 0
    %2748 = vmatprep.subr.bf16.mxu0 0
    %2749 = vmatpush1.bf16.msra.mxu0 %v2732
    %2750 = vmatprep.subr.bf16.mxu0 0
    %2751 = vmatpush2.bf16.msra.mxu0 0
    %2752 = vmatprep.subr.bf16.mxu0 0
    %2753 = vmatpush2.bf16.msra.mxu0 0
    %2754 = vmatprep.subr.bf16.mxu0 0
    %2755 = vmatpush2.bf16.msra.mxu0 0
    %2756 = vmatprep.subr.bf16.mxu0 0
    %2757 = vmatpush2.bf16.msra.mxu0 0
    %2758 = vmatprep.subr.bf16.mxu0 0
    %2759 = vmatpush2.bf16.msra.mxu0 0
    %2760 = vmatprep.subr.bf16.mxu0 0
    %2761 = vmatpush2.bf16.msra.mxu0 0
    %2762 = vmatprep.subr.bf16.mxu0 0
    %2763 = vmatpush2.bf16.msra.mxu0 0
    %2764 = vmatprep.subr.bf16.mxu0 0
    %2765 = vmatpush2.bf16.msra.mxu0 0
    %2766 = vmatprep.mubr.bf16.mxu0 0
    %2767 = vmatmul.mubr.bf16.gmra.mxu0 %v2707
    %v2768 = vpop.f32.mrf.mxu0
    %v2769 = vadd.f32 0.0, %v2768
    %v2770 = vpop.f32.mrf.mxu0
    %v2771 = vpop.f32.mrf.mxu0
    %v2772 = vadd.f32 0.0, %v2771
    %v2773 = vpop.f32.mrf.mxu0
    %2774 = vmatprep.mubr.bf16.mxu0 0
    %2775 = vmatmul.mubr.bf16.gmra.mxu0 %v2710
    %v2776 = vpop.f32.mrf.mxu0
    %v2777 = vadd.f32 0.0, %v2776
    %v2778 = vpop.f32.mrf.mxu0
    %v2779 = vpop.f32.mrf.mxu0
    %v2780 = vadd.f32 0.0, %v2779
    %v2781 = vpop.f32.mrf.mxu0
    %2782 = vmatprep.mubr.bf16.mxu0 0
    %2783 = vmatmul.mubr.bf16.gmra.mxu0 %v2713
    %v2784 = vpop.f32.mrf.mxu0
    %v2785 = vadd.f32 0.0, %v2784
    %v2786 = vpop.f32.mrf.mxu0
    %v2787 = vpop.f32.mrf.mxu0
    %v2788 = vadd.f32 0.0, %v2787
    %v2789 = vpop.f32.mrf.mxu0
    %2790 = vmatprep.mubr.bf16.mxu0 0
    %2791 = vmatmul.mubr.bf16.gmra.mxu0 %v2716
    %v2792 = vpop.f32.mrf.mxu0
    %v2793 = vadd.f32 0.0, %v2792
    %v2794 = vpop.f32.mrf.mxu0
    %v2795 = vpop.f32.mrf.mxu0
    %v2796 = vadd.f32 0.0, %v2795
    %v2797 = vpop.f32.mrf.mxu0
    %2798 = vmatprep.mubr.bf16.mxu0 0
    %2799 = vmatmul.mubr.bf16.gmra.mxu0 %v2719
    %v2800 = vpop.f32.mrf.mxu0
    %v2801 = vadd.f32 0.0, %v2800
    %v2802 = vpop.f32.mrf.mxu0
    %v2803 = vpop.f32.mrf.mxu0
    %v2804 = vadd.f32 0.0, %v2803
    %v2805 = vpop.f32.mrf.mxu0
    %2806 = vmatprep.mubr.bf16.mxu0 0
    %2807 = vmatmul.mubr.bf16.gmra.mxu0 %v2722
    %v2808 = vpop.f32.mrf.mxu0
    %v2809 = vadd.f32 0.0, %v2808
    %v2810 = vpop.f32.mrf.mxu0
    %v2811 = vpop.f32.mrf.mxu0
    %v2812 = vadd.f32 0.0, %v2811
    %v2813 = vpop.f32.mrf.mxu0
    %2814 = vmatprep.mubr.bf16.mxu0 0
    %2815 = vmatmul.mubr.bf16.gmra.mxu0 %v2725
    %v2816 = vpop.f32.mrf.mxu0
    %v2817 = vadd.f32 0.0, %v2816
    %v2818 = vpop.f32.mrf.mxu0
    %v2819 = vpop.f32.mrf.mxu0
    %v2820 = vadd.f32 0.0, %v2819
    %v2821 = vpop.f32.mrf.mxu0
    %2822 = vmatprep.mubr.bf16.mxu0 0
    %2823 = vmatmul.mubr.bf16.gmra.mxu0 %v2728
    %v2824 = vpop.f32.mrf.mxu0
    %v2825 = vadd.f32 0.0, %v2824
    %v2826 = vpop.f32.mrf.mxu0
    %v2827 = vpop.f32.mrf.mxu0
    %v2828 = vadd.f32 0.0, %v2827
    %v2829 = vpop.f32.mrf.mxu0
    %2830 = vdwg.mxu0
    %v2831 = vpack.c.bf16 %v2772, %v2769
    %v2832 = vpack.c.bf16 %v2780, %v2777
    %v2833 = vpack.c.bf16 %v2788, %v2785
    %v2834 = vpack.c.bf16 %v2796, %v2793
    %v2835 = vpack.c.bf16 %v2804, %v2801
    %v2836 = vpack.c.bf16 %v2812, %v2809
    %v2837 = vpack.c.bf16 %v2820, %v2817
    %v2838 = vpack.c.bf16 %v2828, %v2825
    %v2839 = vld [vmem:[#allocation8] sm:$0xf]
    %v2840 = vld [vmem:[#allocation8 + $0x4] sm:$0xf]
    %v2841 = vld [vmem:[#allocation8 + $0x8] sm:$0xf]
    %v2842 = vld [vmem:[#allocation8 + $0xc] sm:$0xf]
    %s2843 = scalar_lea.vmem [#allocation8], 16
    %v2844 = vld [vmem:[%s2843] sm:$0xf]
    %v2845 = vld [vmem:[%s2843 + $0x4] sm:$0xf]
    %v2846 = vld [vmem:[%s2843 + $0x8] sm:$0xf]
    %v2847 = vld [vmem:[%s2843 + $0xc] sm:$0xf]
    %v2852 = vunpack.c.l.b16 %v2844
    %v2853 = vunpack.c.l.b16 %v2845
    %v2854 = vunpack.c.l.b16 %v2846
    %v2855 = vunpack.c.l.b16 %v2847
    %v2856 = vpack.c.b16 %v2853, %v2852
    %v2857 = vpack.c.b16 %v2855, %v2854
    %2868 = vrot.lane.b32.xlu0 %v2831, 120
    %v2869 = vpop.permute.xlu0 %2868
    %2870 = vrot.lane.b32.xlu0 %v2832, 120
    %v2871 = vpop.permute.xlu0 %2870
    %2872 = vrot.lane.b32.xlu0 %v2833, 120
    %v2873 = vpop.permute.xlu0 %2872
    %2874 = vrot.lane.b32.xlu0 %v2834, 120
    %v2875 = vpop.permute.xlu0 %2874
    %2876 = vrot.lane.b32.xlu0 %v2835, 120
    %v2877 = vpop.permute.xlu0 %2876
    %2878 = vrot.lane.b32.xlu0 %v2836, 120
    %v2879 = vpop.permute.xlu0 %2878
    %2880 = vrot.lane.b32.xlu0 %v2837, 120
    %v2881 = vpop.permute.xlu0 %2880
    %2882 = vrot.lane.b32.xlu0 %v2838, 120
    %v2883 = vpop.permute.xlu0 %2882
    %2892 = vmatprep.subr.bf16.mxu0 0
    %2893 = vmatpush1.bf16.msra.mxu0 %v2883
    %2894 = vmatprep.subr.bf16.mxu0 0
    %2895 = vmatpush1.bf16.msra.mxu0 %v2881
    %2896 = vmatprep.subr.bf16.mxu0 0
    %2897 = vmatpush1.bf16.msra.mxu0 %v2879
    %2898 = vmatprep.subr.bf16.mxu0 0
    %2899 = vmatpush1.bf16.msra.mxu0 %v2877
    %2900 = vmatprep.subr.bf16.mxu0 0
    %2901 = vmatpush1.bf16.msra.mxu0 %v2875
    %2902 = vmatprep.subr.bf16.mxu0 0
    %2903 = vmatpush1.bf16.msra.mxu0 %v2873
    %2904 = vmatprep.subr.bf16.mxu0 0
    %2905 = vmatpush1.bf16.msra.mxu0 %v2871
    %2906 = vmatprep.subr.bf16.mxu0 0
    %2907 = vmatpush1.bf16.msra.mxu0 %v2869
    %2908 = vmatprep.subr.bf16.mxu0 0
    %2909 = vmatpush2.bf16.msra.mxu0 0
    %2910 = vmatprep.subr.bf16.mxu0 0
    %2911 = vmatpush2.bf16.msra.mxu0 0
    %2912 = vmatprep.subr.bf16.mxu0 0
    %2913 = vmatpush2.bf16.msra.mxu0 0
    %2914 = vmatprep.subr.bf16.mxu0 0
    %2915 = vmatpush2.bf16.msra.mxu0 0
    %2916 = vmatprep.subr.bf16.mxu0 0
    %2917 = vmatpush2.bf16.msra.mxu0 0
    %2918 = vmatprep.subr.bf16.mxu0 0
    %2919 = vmatpush2.bf16.msra.mxu0 0
    %2920 = vmatprep.subr.bf16.mxu0 0
    %2921 = vmatpush2.bf16.msra.mxu0 0
    %2922 = vmatprep.subr.bf16.mxu0 0
    %2923 = vmatpush2.bf16.msra.mxu0 0
    %2924 = vmatprep.mubr.bf16.mxu0 0
    %2925 = vmatmul.mubr.bf16.gmra.mxu0 %v2856
    %v2926 = vpop.f32.mrf.mxu0
    %v2927 = vadd.f32 0.0, %v2926
    %v2928 = vpop.f32.mrf.mxu0
    %v2929 = vpop.f32.mrf.mxu0
    %v2930 = vadd.f32 0.0, %v2929
    %v2931 = vpop.f32.mrf.mxu0
    %2932 = vmatprep.mubr.bf16.mxu0 0
    %2933 = vmatmul.mubr.bf16.gmra.mxu0 %v2857
    %v2934 = vpop.f32.mrf.mxu0
    %v2935 = vadd.f32 0.0, %v2934
    %v2936 = vpop.f32.mrf.mxu0
    %v2937 = vpop.f32.mrf.mxu0
    %v2938 = vadd.f32 0.0, %v2937
    %v2939 = vpop.f32.mrf.mxu0
    %2940 = vdwg.mxu0
    %v2945 = vunpack.c.l.b16 %v2839
    %v2946 = vunpack.c.l.b16 %v2840
    %v2947 = vunpack.c.l.b16 %v2841
    %v2948 = vunpack.c.l.b16 %v2842
    %v2949 = vpack.c.b16 %v2946, %v2945
    %v2950 = vpack.c.b16 %v2948, %v2947
    %2953 = vmatprep.subr.bf16.mxu0 0
    %2954 = vmatpush1.bf16.msra.mxu0 %v2838
    %2955 = vmatprep.subr.bf16.mxu0 0
    %2956 = vmatpush1.bf16.msra.mxu0 %v2837
    %2957 = vmatprep.subr.bf16.mxu0 0
    %2958 = vmatpush1.bf16.msra.mxu0 %v2836
    %2959 = vmatprep.subr.bf16.mxu0 0
    %2960 = vmatpush1.bf16.msra.mxu0 %v2835
    %2961 = vmatprep.subr.bf16.mxu0 0
    %2962 = vmatpush1.bf16.msra.mxu0 %v2834
    %2963 = vmatprep.subr.bf16.mxu0 0
    %2964 = vmatpush1.bf16.msra.mxu0 %v2833
    %2965 = vmatprep.subr.bf16.mxu0 0
    %2966 = vmatpush1.bf16.msra.mxu0 %v2832
    %2967 = vmatprep.subr.bf16.mxu0 0
    %2968 = vmatpush1.bf16.msra.mxu0 %v2831
    %2969 = vmatprep.subr.bf16.mxu0 0
    %2970 = vmatpush2.bf16.msra.mxu0 0
    %2971 = vmatprep.subr.bf16.mxu0 0
    %2972 = vmatpush2.bf16.msra.mxu0 0
    %2973 = vmatprep.subr.bf16.mxu0 0
    %2974 = vmatpush2.bf16.msra.mxu0 0
    %2975 = vmatprep.subr.bf16.mxu0 0
    %2976 = vmatpush2.bf16.msra.mxu0 0
    %2977 = vmatprep.subr.bf16.mxu0 0
    %2978 = vmatpush2.bf16.msra.mxu0 0
    %2979 = vmatprep.subr.bf16.mxu0 0
    %2980 = vmatpush2.bf16.msra.mxu0 0
    %2981 = vmatprep.subr.bf16.mxu0 0
    %2982 = vmatpush2.bf16.msra.mxu0 0
    %2983 = vmatprep.subr.bf16.mxu0 0
    %2984 = vmatpush2.bf16.msra.mxu0 0
    %2985 = vmatprep.mubr.bf16.mxu0 0
    %2986 = vmatmul.mubr.bf16.gmra.mxu0 %v2949
    %v2987 = vpop.f32.mrf.mxu0
    %v2988 = vadd.f32 %v2927, %v2987
    %v2989 = vpop.f32.mrf.mxu0
    %v2990 = vpop.f32.mrf.mxu0
    %v2991 = vadd.f32 %v2930, %v2990
    %v2992 = vpop.f32.mrf.mxu0
    %2993 = vmatprep.mubr.bf16.mxu0 0
    %2994 = vmatmul.mubr.bf16.gmra.mxu0 %v2950
    %v2995 = vpop.f32.mrf.mxu0
    %v2996 = vadd.f32 %v2935, %v2995
    %v2997 = vpop.f32.mrf.mxu0
    %v2998 = vpop.f32.mrf.mxu0
    %v2999 = vadd.f32 %v2938, %v2998
    %v3000 = vpop.f32.mrf.mxu0
    %3001 = vdwg.mxu0
    %s3002 = scalar_lea.vmem [#allocation8], 32
    %v3003 = vld [vmem:[%s3002] sm:$0xf]
    %v3004 = vld [vmem:[%s3002 + $0x4] sm:$0xf]
    %v3005 = vld [vmem:[%s3002 + $0x8] sm:$0xf]
    %v3006 = vld [vmem:[%s3002 + $0xc] sm:$0xf]
    %v3011 = vunpack.c.l.b16 %v3003
    %v3012 = vunpack.c.l.b16 %v3004
    %v3013 = vunpack.c.l.b16 %v3005
    %v3014 = vunpack.c.l.b16 %v3006
    %v3015 = vpack.c.b16 %v3012, %v3011
    %v3016 = vpack.c.b16 %v3014, %v3013
    %3019 = vrot.lane.b32.xlu0 %v2831, 112
    %v3020 = vpop.permute.xlu0 %3019
    %3021 = vrot.lane.b32.xlu0 %v2832, 112
    %v3022 = vpop.permute.xlu0 %3021
    %3023 = vrot.lane.b32.xlu0 %v2833, 112
    %v3024 = vpop.permute.xlu0 %3023
    %3025 = vrot.lane.b32.xlu0 %v2834, 112
    %v3026 = vpop.permute.xlu0 %3025
    %3027 = vrot.lane.b32.xlu0 %v2835, 112
    %v3028 = vpop.permute.xlu0 %3027
    %3029 = vrot.lane.b32.xlu0 %v2836, 112
    %v3030 = vpop.permute.xlu0 %3029
    %3031 = vrot.lane.b32.xlu0 %v2837, 112
    %v3032 = vpop.permute.xlu0 %3031
    %3033 = vrot.lane.b32.xlu0 %v2838, 112
    %v3034 = vpop.permute.xlu0 %3033
    %3043 = vmatprep.subr.bf16.mxu0 0
    %3044 = vmatpush1.bf16.msra.mxu0 %v3034
    %3045 = vmatprep.subr.bf16.mxu0 0
    %3046 = vmatpush1.bf16.msra.mxu0 %v3032
    %3047 = vmatprep.subr.bf16.mxu0 0
    %3048 = vmatpush1.bf16.msra.mxu0 %v3030
    %3049 = vmatprep.subr.bf16.mxu0 0
    %3050 = vmatpush1.bf16.msra.mxu0 %v3028
    %3051 = vmatprep.subr.bf16.mxu0 0
    %3052 = vmatpush1.bf16.msra.mxu0 %v3026
    %3053 = vmatprep.subr.bf16.mxu0 0
    %3054 = vmatpush1.bf16.msra.mxu0 %v3024
    %3055 = vmatprep.subr.bf16.mxu0 0
    %3056 = vmatpush1.bf16.msra.mxu0 %v3022
    %3057 = vmatprep.subr.bf16.mxu0 0
    %3058 = vmatpush1.bf16.msra.mxu0 %v3020
    %3059 = vmatprep.subr.bf16.mxu0 0
    %3060 = vmatpush2.bf16.msra.mxu0 0
    %3061 = vmatprep.subr.bf16.mxu0 0
    %3062 = vmatpush2.bf16.msra.mxu0 0
    %3063 = vmatprep.subr.bf16.mxu0 0
    %3064 = vmatpush2.bf16.msra.mxu0 0
    %3065 = vmatprep.subr.bf16.mxu0 0
    %3066 = vmatpush2.bf16.msra.mxu0 0
    %3067 = vmatprep.subr.bf16.mxu0 0
    %3068 = vmatpush2.bf16.msra.mxu0 0
    %3069 = vmatprep.subr.bf16.mxu0 0
    %3070 = vmatpush2.bf16.msra.mxu0 0
    %3071 = vmatprep.subr.bf16.mxu0 0
    %3072 = vmatpush2.bf16.msra.mxu0 0
    %3073 = vmatprep.subr.bf16.mxu0 0
    %3074 = vmatpush2.bf16.msra.mxu0 0
    %3075 = vmatprep.mubr.bf16.mxu0 0
    %3076 = vmatmul.mubr.bf16.gmra.mxu0 %v3015
    %v3077 = vpop.f32.mrf.mxu0
    %v3078 = vadd.f32 0.0, %v3077
    %v3079 = vpop.f32.mrf.mxu0
    %v3080 = vpop.f32.mrf.mxu0
    %v3081 = vadd.f32 0.0, %v3080
    %v3082 = vpop.f32.mrf.mxu0
    %3083 = vmatprep.mubr.bf16.mxu0 0
    %3084 = vmatmul.mubr.bf16.gmra.mxu0 %v3016
    %v3085 = vpop.f32.mrf.mxu0
    %v3086 = vadd.f32 0.0, %v3085
    %v3087 = vpop.f32.mrf.mxu0
    %v3088 = vpop.f32.mrf.mxu0
    %v3089 = vadd.f32 0.0, %v3088
    %v3090 = vpop.f32.mrf.mxu0
    %3091 = vdwg.mxu0
    %v3092 = vadd.f32 %v2988, %v3078
    %v3093 = vadd.f32 %v2991, %v3081
    %v3094 = vadd.f32 %v2996, %v3086
    %v3095 = vadd.f32 %v2999, %v3089
    %s3096 = scalar_lea.vmem [#allocation8], 48
    %v3097 = vld [vmem:[%s3096] sm:$0xf]
    %v3098 = vld [vmem:[%s3096 + $0x4] sm:$0xf]
    %v3099 = vld [vmem:[%s3096 + $0x8] sm:$0xf]
    %v3100 = vld [vmem:[%s3096 + $0xc] sm:$0xf]
    %v3105 = vunpack.c.l.b16 %v3097
    %v3106 = vunpack.c.l.b16 %v3098
    %v3107 = vunpack.c.l.b16 %v3099
    %v3108 = vunpack.c.l.b16 %v3100
    %v3109 = vpack.c.b16 %v3106, %v3105
    %v3110 = vpack.c.b16 %v3108, %v3107
    %3113 = vrot.lane.b32.xlu0 %v2831, 104
    %v3114 = vpop.permute.xlu0 %3113
    %3115 = vrot.lane.b32.xlu0 %v2832, 104
    %v3116 = vpop.permute.xlu0 %3115
    %3117 = vrot.lane.b32.xlu0 %v2833, 104
    %v3118 = vpop.permute.xlu0 %3117
    %3119 = vrot.lane.b32.xlu0 %v2834, 104
    %v3120 = vpop.permute.xlu0 %3119
    %3121 = vrot.lane.b32.xlu0 %v2835, 104
    %v3122 = vpop.permute.xlu0 %3121
    %3123 = vrot.lane.b32.xlu0 %v2836, 104
    %v3124 = vpop.permute.xlu0 %3123
    %3125 = vrot.lane.b32.xlu0 %v2837, 104
    %v3126 = vpop.permute.xlu0 %3125
    %3127 = vrot.lane.b32.xlu0 %v2838, 104
    %v3128 = vpop.permute.xlu0 %3127
    %3137 = vmatprep.subr.bf16.mxu0 0
    %3138 = vmatpush1.bf16.msra.mxu0 %v3128
    %3139 = vmatprep.subr.bf16.mxu0 0
    %3140 = vmatpush1.bf16.msra.mxu0 %v3126
    %3141 = vmatprep.subr.bf16.mxu0 0
    %3142 = vmatpush1.bf16.msra.mxu0 %v3124
    %3143 = vmatprep.subr.bf16.mxu0 0
    %3144 = vmatpush1.bf16.msra.mxu0 %v3122
    %3145 = vmatprep.subr.bf16.mxu0 0
    %3146 = vmatpush1.bf16.msra.mxu0 %v3120
    %3147 = vmatprep.subr.bf16.mxu0 0
    %3148 = vmatpush1.bf16.msra.mxu0 %v3118
    %3149 = vmatprep.subr.bf16.mxu0 0
    %3150 = vmatpush1.bf16.msra.mxu0 %v3116
    %3151 = vmatprep.subr.bf16.mxu0 0
    %3152 = vmatpush1.bf16.msra.mxu0 %v3114
    %3153 = vmatprep.subr.bf16.mxu0 0
    %3154 = vmatpush2.bf16.msra.mxu0 0
    %3155 = vmatprep.subr.bf16.mxu0 0
    %3156 = vmatpush2.bf16.msra.mxu0 0
    %3157 = vmatprep.subr.bf16.mxu0 0
    %3158 = vmatpush2.bf16.msra.mxu0 0
    %3159 = vmatprep.subr.bf16.mxu0 0
    %3160 = vmatpush2.bf16.msra.mxu0 0
    %3161 = vmatprep.subr.bf16.mxu0 0
    %3162 = vmatpush2.bf16.msra.mxu0 0
    %3163 = vmatprep.subr.bf16.mxu0 0
    %3164 = vmatpush2.bf16.msra.mxu0 0
    %3165 = vmatprep.subr.bf16.mxu0 0
    %3166 = vmatpush2.bf16.msra.mxu0 0
    %3167 = vmatprep.subr.bf16.mxu0 0
    %3168 = vmatpush2.bf16.msra.mxu0 0
    %3169 = vmatprep.mubr.bf16.mxu0 0
    %3170 = vmatmul.mubr.bf16.gmra.mxu0 %v3109
    %v3171 = vpop.f32.mrf.mxu0
    %v3172 = vadd.f32 0.0, %v3171
    %v3173 = vpop.f32.mrf.mxu0
    %v3174 = vpop.f32.mrf.mxu0
    %v3175 = vadd.f32 0.0, %v3174
    %v3176 = vpop.f32.mrf.mxu0
    %3177 = vmatprep.mubr.bf16.mxu0 0
    %3178 = vmatmul.mubr.bf16.gmra.mxu0 %v3110
    %v3179 = vpop.f32.mrf.mxu0
    %v3180 = vadd.f32 0.0, %v3179
    %v3181 = vpop.f32.mrf.mxu0
    %v3182 = vpop.f32.mrf.mxu0
    %v3183 = vadd.f32 0.0, %v3182
    %v3184 = vpop.f32.mrf.mxu0
    %3185 = vdwg.mxu0
    %v3186 = vadd.f32 %v3092, %v3172
    %v3187 = vadd.f32 %v3093, %v3175
    %v3188 = vadd.f32 %v3094, %v3180
    %v3189 = vadd.f32 %v3095, %v3183
    %s3190 = scalar_lea.vmem [#allocation8], 64
    %v3191 = vld [vmem:[%s3190] sm:$0xf]
    %v3192 = vld [vmem:[%s3190 + $0x4] sm:$0xf]
    %v3193 = vld [vmem:[%s3190 + $0x8] sm:$0xf]
    %v3194 = vld [vmem:[%s3190 + $0xc] sm:$0xf]
    %v3199 = vunpack.c.l.b16 %v3191
    %v3200 = vunpack.c.l.b16 %v3192
    %v3201 = vunpack.c.l.b16 %v3193
    %v3202 = vunpack.c.l.b16 %v3194
    %v3203 = vpack.c.b16 %v3200, %v3199
    %v3204 = vpack.c.b16 %v3202, %v3201
    %3207 = vrot.lane.b32.xlu0 %v2831, 96
    %v3208 = vpop.permute.xlu0 %3207
    %3209 = vrot.lane.b32.xlu0 %v2832, 96
    %v3210 = vpop.permute.xlu0 %3209
    %3211 = vrot.lane.b32.xlu0 %v2833, 96
    %v3212 = vpop.permute.xlu0 %3211
    %3213 = vrot.lane.b32.xlu0 %v2834, 96
    %v3214 = vpop.permute.xlu0 %3213
    %3215 = vrot.lane.b32.xlu0 %v2835, 96
    %v3216 = vpop.permute.xlu0 %3215
    %3217 = vrot.lane.b32.xlu0 %v2836, 96
    %v3218 = vpop.permute.xlu0 %3217
    %3219 = vrot.lane.b32.xlu0 %v2837, 96
    %v3220 = vpop.permute.xlu0 %3219
    %3221 = vrot.lane.b32.xlu0 %v2838, 96
    %v3222 = vpop.permute.xlu0 %3221
    %3231 = vmatprep.subr.bf16.mxu0 0
    %3232 = vmatpush1.bf16.msra.mxu0 %v3222
    %3233 = vmatprep.subr.bf16.mxu0 0
    %3234 = vmatpush1.bf16.msra.mxu0 %v3220
    %3235 = vmatprep.subr.bf16.mxu0 0
    %3236 = vmatpush1.bf16.msra.mxu0 %v3218
    %3237 = vmatprep.subr.bf16.mxu0 0
    %3238 = vmatpush1.bf16.msra.mxu0 %v3216
    %3239 = vmatprep.subr.bf16.mxu0 0
    %3240 = vmatpush1.bf16.msra.mxu0 %v3214
    %3241 = vmatprep.subr.bf16.mxu0 0
    %3242 = vmatpush1.bf16.msra.mxu0 %v3212
    %3243 = vmatprep.subr.bf16.mxu0 0
    %3244 = vmatpush1.bf16.msra.mxu0 %v3210
    %3245 = vmatprep.subr.bf16.mxu0 0
    %3246 = vmatpush1.bf16.msra.mxu0 %v3208
    %3247 = vmatprep.subr.bf16.mxu0 0
    %3248 = vmatpush2.bf16.msra.mxu0 0
    %3249 = vmatprep.subr.bf16.mxu0 0
    %3250 = vmatpush2.bf16.msra.mxu0 0
    %3251 = vmatprep.subr.bf16.mxu0 0
    %3252 = vmatpush2.bf16.msra.mxu0 0
    %3253 = vmatprep.subr.bf16.mxu0 0
    %3254 = vmatpush2.bf16.msra.mxu0 0
    %3255 = vmatprep.subr.bf16.mxu0 0
    %3256 = vmatpush2.bf16.msra.mxu0 0
    %3257 = vmatprep.subr.bf16.mxu0 0
    %3258 = vmatpush2.bf16.msra.mxu0 0
    %3259 = vmatprep.subr.bf16.mxu0 0
    %3260 = vmatpush2.bf16.msra.mxu0 0
    %3261 = vmatprep.subr.bf16.mxu0 0
    %3262 = vmatpush2.bf16.msra.mxu0 0
    %3263 = vmatprep.mubr.bf16.mxu0 0
    %3264 = vmatmul.mubr.bf16.gmra.mxu0 %v3203
    %v3265 = vpop.f32.mrf.mxu0
    %v3266 = vadd.f32 0.0, %v3265
    %v3267 = vpop.f32.mrf.mxu0
    %v3268 = vpop.f32.mrf.mxu0
    %v3269 = vadd.f32 0.0, %v3268
    %v3270 = vpop.f32.mrf.mxu0
    %3271 = vmatprep.mubr.bf16.mxu0 0
    %3272 = vmatmul.mubr.bf16.gmra.mxu0 %v3204
    %v3273 = vpop.f32.mrf.mxu0
    %v3274 = vadd.f32 0.0, %v3273
    %v3275 = vpop.f32.mrf.mxu0
    %v3276 = vpop.f32.mrf.mxu0
    %v3277 = vadd.f32 0.0, %v3276
    %v3278 = vpop.f32.mrf.mxu0
    %3279 = vdwg.mxu0
    %v3280 = vadd.f32 %v3186, %v3266
    %v3281 = vadd.f32 %v3187, %v3269
    %v3282 = vadd.f32 %v3188, %v3274
    %v3283 = vadd.f32 %v3189, %v3277
    %s3284 = scalar_lea.vmem [#allocation8], 80
    %v3285 = vld [vmem:[%s3284] sm:$0xf]
    %v3286 = vld [vmem:[%s3284 + $0x4] sm:$0xf]
    %v3287 = vld [vmem:[%s3284 + $0x8] sm:$0xf]
    %v3288 = vld [vmem:[%s3284 + $0xc] sm:$0xf]
    %v3293 = vunpack.c.l.b16 %v3285
    %v3294 = vunpack.c.l.b16 %v3286
    %v3295 = vunpack.c.l.b16 %v3287
    %v3296 = vunpack.c.l.b16 %v3288
    %v3297 = vpack.c.b16 %v3294, %v3293
    %v3298 = vpack.c.b16 %v3296, %v3295
    %3301 = vrot.lane.b32.xlu0 %v2831, 88
    %v3302 = vpop.permute.xlu0 %3301
    %3303 = vrot.lane.b32.xlu0 %v2832, 88
    %v3304 = vpop.permute.xlu0 %3303
    %3305 = vrot.lane.b32.xlu0 %v2833, 88
    %v3306 = vpop.permute.xlu0 %3305
    %3307 = vrot.lane.b32.xlu0 %v2834, 88
    %v3308 = vpop.permute.xlu0 %3307
    %3309 = vrot.lane.b32.xlu0 %v2835, 88
    %v3310 = vpop.permute.xlu0 %3309
    %3311 = vrot.lane.b32.xlu0 %v2836, 88
    %v3312 = vpop.permute.xlu0 %3311
    %3313 = vrot.lane.b32.xlu0 %v2837, 88
    %v3314 = vpop.permute.xlu0 %3313
    %3315 = vrot.lane.b32.xlu0 %v2838, 88
    %v3316 = vpop.permute.xlu0 %3315
    %3325 = vmatprep.subr.bf16.mxu0 0
    %3326 = vmatpush1.bf16.msra.mxu0 %v3316
    %3327 = vmatprep.subr.bf16.mxu0 0
    %3328 = vmatpush1.bf16.msra.mxu0 %v3314
    %3329 = vmatprep.subr.bf16.mxu0 0
    %3330 = vmatpush1.bf16.msra.mxu0 %v3312
    %3331 = vmatprep.subr.bf16.mxu0 0
    %3332 = vmatpush1.bf16.msra.mxu0 %v3310
    %3333 = vmatprep.subr.bf16.mxu0 0
    %3334 = vmatpush1.bf16.msra.mxu0 %v3308
    %3335 = vmatprep.subr.bf16.mxu0 0
    %3336 = vmatpush1.bf16.msra.mxu0 %v3306
    %3337 = vmatprep.subr.bf16.mxu0 0
    %3338 = vmatpush1.bf16.msra.mxu0 %v3304
    %3339 = vmatprep.subr.bf16.mxu0 0
    %3340 = vmatpush1.bf16.msra.mxu0 %v3302
    %3341 = vmatprep.subr.bf16.mxu0 0
    %3342 = vmatpush2.bf16.msra.mxu0 0
    %3343 = vmatprep.subr.bf16.mxu0 0
    %3344 = vmatpush2.bf16.msra.mxu0 0
    %3345 = vmatprep.subr.bf16.mxu0 0
    %3346 = vmatpush2.bf16.msra.mxu0 0
    %3347 = vmatprep.subr.bf16.mxu0 0
    %3348 = vmatpush2.bf16.msra.mxu0 0
    %3349 = vmatprep.subr.bf16.mxu0 0
    %3350 = vmatpush2.bf16.msra.mxu0 0
    %3351 = vmatprep.subr.bf16.mxu0 0
    %3352 = vmatpush2.bf16.msra.mxu0 0
    %3353 = vmatprep.subr.bf16.mxu0 0
    %3354 = vmatpush2.bf16.msra.mxu0 0
    %3355 = vmatprep.subr.bf16.mxu0 0
    %3356 = vmatpush2.bf16.msra.mxu0 0
    %3357 = vmatprep.mubr.bf16.mxu0 0
    %3358 = vmatmul.mubr.bf16.gmra.mxu0 %v3297
    %v3359 = vpop.f32.mrf.mxu0
    %v3360 = vadd.f32 0.0, %v3359
    %v3361 = vpop.f32.mrf.mxu0
    %v3362 = vpop.f32.mrf.mxu0
    %v3363 = vadd.f32 0.0, %v3362
    %v3364 = vpop.f32.mrf.mxu0
    %3365 = vmatprep.mubr.bf16.mxu0 0
    %3366 = vmatmul.mubr.bf16.gmra.mxu0 %v3298
    %v3367 = vpop.f32.mrf.mxu0
    %v3368 = vadd.f32 0.0, %v3367
    %v3369 = vpop.f32.mrf.mxu0
    %v3370 = vpop.f32.mrf.mxu0
    %v3371 = vadd.f32 0.0, %v3370
    %v3372 = vpop.f32.mrf.mxu0
    %3373 = vdwg.mxu0
    %v3374 = vadd.f32 %v3280, %v3360
    %v3375 = vadd.f32 %v3281, %v3363
    %v3376 = vadd.f32 %v3282, %v3368
    %v3377 = vadd.f32 %v3283, %v3371
    %s3378 = scalar_lea.vmem [#allocation8], 96
    %v3379 = vld [vmem:[%s3378] sm:$0xf]
    %v3380 = vld [vmem:[%s3378 + $0x4] sm:$0xf]
    %v3381 = vld [vmem:[%s3378 + $0x8] sm:$0xf]
    %v3382 = vld [vmem:[%s3378 + $0xc] sm:$0xf]
    %v3387 = vunpack.c.l.b16 %v3379
    %v3388 = vunpack.c.l.b16 %v3380
    %v3389 = vunpack.c.l.b16 %v3381
    %v3390 = vunpack.c.l.b16 %v3382
    %v3391 = vpack.c.b16 %v3388, %v3387
    %v3392 = vpack.c.b16 %v3390, %v3389
    %3395 = vrot.lane.b32.xlu0 %v2831, 80
    %v3396 = vpop.permute.xlu0 %3395
    %3397 = vrot.lane.b32.xlu0 %v2832, 80
    %v3398 = vpop.permute.xlu0 %3397
    %3399 = vrot.lane.b32.xlu0 %v2833, 80
    %v3400 = vpop.permute.xlu0 %3399
    %3401 = vrot.lane.b32.xlu0 %v2834, 80
    %v3402 = vpop.permute.xlu0 %3401
    %3403 = vrot.lane.b32.xlu0 %v2835, 80
    %v3404 = vpop.permute.xlu0 %3403
    %3405 = vrot.lane.b32.xlu0 %v2836, 80
    %v3406 = vpop.permute.xlu0 %3405
    %3407 = vrot.lane.b32.xlu0 %v2837, 80
    %v3408 = vpop.permute.xlu0 %3407
    %3409 = vrot.lane.b32.xlu0 %v2838, 80
    %v3410 = vpop.permute.xlu0 %3409
    %3419 = vmatprep.subr.bf16.mxu0 0
    %3420 = vmatpush1.bf16.msra.mxu0 %v3410
    %3421 = vmatprep.subr.bf16.mxu0 0
    %3422 = vmatpush1.bf16.msra.mxu0 %v3408
    %3423 = vmatprep.subr.bf16.mxu0 0
    %3424 = vmatpush1.bf16.msra.mxu0 %v3406
    %3425 = vmatprep.subr.bf16.mxu0 0
    %3426 = vmatpush1.bf16.msra.mxu0 %v3404
    %3427 = vmatprep.subr.bf16.mxu0 0
    %3428 = vmatpush1.bf16.msra.mxu0 %v3402
    %3429 = vmatprep.subr.bf16.mxu0 0
    %3430 = vmatpush1.bf16.msra.mxu0 %v3400
    %3431 = vmatprep.subr.bf16.mxu0 0
    %3432 = vmatpush1.bf16.msra.mxu0 %v3398
    %3433 = vmatprep.subr.bf16.mxu0 0
    %3434 = vmatpush1.bf16.msra.mxu0 %v3396
    %3435 = vmatprep.subr.bf16.mxu0 0
    %3436 = vmatpush2.bf16.msra.mxu0 0
    %3437 = vmatprep.subr.bf16.mxu0 0
    %3438 = vmatpush2.bf16.msra.mxu0 0
    %3439 = vmatprep.subr.bf16.mxu0 0
    %3440 = vmatpush2.bf16.msra.mxu0 0
    %3441 = vmatprep.subr.bf16.mxu0 0
    %3442 = vmatpush2.bf16.msra.mxu0 0
    %3443 = vmatprep.subr.bf16.mxu0 0
    %3444 = vmatpush2.bf16.msra.mxu0 0
    %3445 = vmatprep.subr.bf16.mxu0 0
    %3446 = vmatpush2.bf16.msra.mxu0 0
    %3447 = vmatprep.subr.bf16.mxu0 0
    %3448 = vmatpush2.bf16.msra.mxu0 0
    %3449 = vmatprep.subr.bf16.mxu0 0
    %3450 = vmatpush2.bf16.msra.mxu0 0
    %3451 = vmatprep.mubr.bf16.mxu0 0
    %3452 = vmatmul.mubr.bf16.gmra.mxu0 %v3391
    %v3453 = vpop.f32.mrf.mxu0
    %v3454 = vadd.f32 0.0, %v3453
    %v3455 = vpop.f32.mrf.mxu0
    %v3456 = vpop.f32.mrf.mxu0
    %v3457 = vadd.f32 0.0, %v3456
    %v3458 = vpop.f32.mrf.mxu0
    %3459 = vmatprep.mubr.bf16.mxu0 0
    %3460 = vmatmul.mubr.bf16.gmra.mxu0 %v3392
    %v3461 = vpop.f32.mrf.mxu0
    %v3462 = vadd.f32 0.0, %v3461
    %v3463 = vpop.f32.mrf.mxu0
    %v3464 = vpop.f32.mrf.mxu0
    %v3465 = vadd.f32 0.0, %v3464
    %v3466 = vpop.f32.mrf.mxu0
    %3467 = vdwg.mxu0
    %v3468 = vadd.f32 %v3374, %v3454
    %v3469 = vadd.f32 %v3375, %v3457
    %v3470 = vadd.f32 %v3376, %v3462
    %v3471 = vadd.f32 %v3377, %v3465
    %s3472 = scalar_lea.vmem [#allocation8], 112
    %v3473 = vld [vmem:[%s3472] sm:$0xf]
    %v3474 = vld [vmem:[%s3472 + $0x4] sm:$0xf]
    %v3475 = vld [vmem:[%s3472 + $0x8] sm:$0xf]
    %v3476 = vld [vmem:[%s3472 + $0xc] sm:$0xf]
    %v3481 = vunpack.c.l.b16 %v3473
    %v3482 = vunpack.c.l.b16 %v3474
    %v3483 = vunpack.c.l.b16 %v3475
    %v3484 = vunpack.c.l.b16 %v3476
    %v3485 = vpack.c.b16 %v3482, %v3481
    %v3486 = vpack.c.b16 %v3484, %v3483
    %3489 = vrot.lane.b32.xlu0 %v2831, 72
    %v3490 = vpop.permute.xlu0 %3489
    %3491 = vrot.lane.b32.xlu0 %v2832, 72
    %v3492 = vpop.permute.xlu0 %3491
    %3493 = vrot.lane.b32.xlu0 %v2833, 72
    %v3494 = vpop.permute.xlu0 %3493
    %3495 = vrot.lane.b32.xlu0 %v2834, 72
    %v3496 = vpop.permute.xlu0 %3495
    %3497 = vrot.lane.b32.xlu0 %v2835, 72
    %v3498 = vpop.permute.xlu0 %3497
    %3499 = vrot.lane.b32.xlu0 %v2836, 72
    %v3500 = vpop.permute.xlu0 %3499
    %3501 = vrot.lane.b32.xlu0 %v2837, 72
    %v3502 = vpop.permute.xlu0 %3501
    %3503 = vrot.lane.b32.xlu0 %v2838, 72
    %v3504 = vpop.permute.xlu0 %3503
    %3513 = vmatprep.subr.bf16.mxu0 0
    %3514 = vmatpush1.bf16.msra.mxu0 %v3504
    %3515 = vmatprep.subr.bf16.mxu0 0
    %3516 = vmatpush1.bf16.msra.mxu0 %v3502
    %3517 = vmatprep.subr.bf16.mxu0 0
    %3518 = vmatpush1.bf16.msra.mxu0 %v3500
    %3519 = vmatprep.subr.bf16.mxu0 0
    %3520 = vmatpush1.bf16.msra.mxu0 %v3498
    %3521 = vmatprep.subr.bf16.mxu0 0
    %3522 = vmatpush1.bf16.msra.mxu0 %v3496
    %3523 = vmatprep.subr.bf16.mxu0 0
    %3524 = vmatpush1.bf16.msra.mxu0 %v3494
    %3525 = vmatprep.subr.bf16.mxu0 0
    %3526 = vmatpush1.bf16.msra.mxu0 %v3492
    %3527 = vmatprep.subr.bf16.mxu0 0
    %3528 = vmatpush1.bf16.msra.mxu0 %v3490
    %3529 = vmatprep.subr.bf16.mxu0 0
    %3530 = vmatpush2.bf16.msra.mxu0 0
    %3531 = vmatprep.subr.bf16.mxu0 0
    %3532 = vmatpush2.bf16.msra.mxu0 0
    %3533 = vmatprep.subr.bf16.mxu0 0
    %3534 = vmatpush2.bf16.msra.mxu0 0
    %3535 = vmatprep.subr.bf16.mxu0 0
    %3536 = vmatpush2.bf16.msra.mxu0 0
    %3537 = vmatprep.subr.bf16.mxu0 0
    %3538 = vmatpush2.bf16.msra.mxu0 0
    %3539 = vmatprep.subr.bf16.mxu0 0
    %3540 = vmatpush2.bf16.msra.mxu0 0
    %3541 = vmatprep.subr.bf16.mxu0 0
    %3542 = vmatpush2.bf16.msra.mxu0 0
    %3543 = vmatprep.subr.bf16.mxu0 0
    %3544 = vmatpush2.bf16.msra.mxu0 0
    %3545 = vmatprep.mubr.bf16.mxu0 0
    %3546 = vmatmul.mubr.bf16.gmra.mxu0 %v3485
    %v3547 = vpop.f32.mrf.mxu0
    %v3548 = vadd.f32 0.0, %v3547
    %v3549 = vpop.f32.mrf.mxu0
    %v3550 = vpop.f32.mrf.mxu0
    %v3551 = vadd.f32 0.0, %v3550
    %v3552 = vpop.f32.mrf.mxu0
    %3553 = vmatprep.mubr.bf16.mxu0 0
    %3554 = vmatmul.mubr.bf16.gmra.mxu0 %v3486
    %v3555 = vpop.f32.mrf.mxu0
    %v3556 = vadd.f32 0.0, %v3555
    %v3557 = vpop.f32.mrf.mxu0
    %v3558 = vpop.f32.mrf.mxu0
    %v3559 = vadd.f32 0.0, %v3558
    %v3560 = vpop.f32.mrf.mxu0
    %3561 = vdwg.mxu0
    %v3562 = vadd.f32 %v3468, %v3548
    %v3563 = vadd.f32 %v3469, %v3551
    %v3564 = vadd.f32 %v3470, %v3556
    %v3565 = vadd.f32 %v3471, %v3559
    %s3566 = scalar_lea.vmem [#allocation8], 128
    %v3567 = vld [vmem:[%s3566] sm:$0xf]
    %v3568 = vld [vmem:[%s3566 + $0x4] sm:$0xf]
    %v3569 = vld [vmem:[%s3566 + $0x8] sm:$0xf]
    %v3570 = vld [vmem:[%s3566 + $0xc] sm:$0xf]
    %v3575 = vunpack.c.l.b16 %v3567
    %v3576 = vunpack.c.l.b16 %v3568
    %v3577 = vunpack.c.l.b16 %v3569
    %v3578 = vunpack.c.l.b16 %v3570
    %v3579 = vpack.c.b16 %v3576, %v3575
    %v3580 = vpack.c.b16 %v3578, %v3577
    %3583 = vrot.lane.b32.xlu0 %v2831, 64
    %v3584 = vpop.permute.xlu0 %3583
    %3585 = vrot.lane.b32.xlu0 %v2832, 64
    %v3586 = vpop.permute.xlu0 %3585
    %3587 = vrot.lane.b32.xlu0 %v2833, 64
    %v3588 = vpop.permute.xlu0 %3587
    %3589 = vrot.lane.b32.xlu0 %v2834, 64
    %v3590 = vpop.permute.xlu0 %3589
    %3591 = vrot.lane.b32.xlu0 %v2835, 64
    %v3592 = vpop.permute.xlu0 %3591
    %3593 = vrot.lane.b32.xlu0 %v2836, 64
    %v3594 = vpop.permute.xlu0 %3593
    %3595 = vrot.lane.b32.xlu0 %v2837, 64
    %v3596 = vpop.permute.xlu0 %3595
    %3597 = vrot.lane.b32.xlu0 %v2838, 64
    %v3598 = vpop.permute.xlu0 %3597
    %3607 = vmatprep.subr.bf16.mxu0 0
    %3608 = vmatpush1.bf16.msra.mxu0 %v3598
    %3609 = vmatprep.subr.bf16.mxu0 0
    %3610 = vmatpush1.bf16.msra.mxu0 %v3596
    %3611 = vmatprep.subr.bf16.mxu0 0
    %3612 = vmatpush1.bf16.msra.mxu0 %v3594
    %3613 = vmatprep.subr.bf16.mxu0 0
    %3614 = vmatpush1.bf16.msra.mxu0 %v3592
    %3615 = vmatprep.subr.bf16.mxu0 0
    %3616 = vmatpush1.bf16.msra.mxu0 %v3590
    %3617 = vmatprep.subr.bf16.mxu0 0
    %3618 = vmatpush1.bf16.msra.mxu0 %v3588
    %3619 = vmatprep.subr.bf16.mxu0 0
    %3620 = vmatpush1.bf16.msra.mxu0 %v3586
    %3621 = vmatprep.subr.bf16.mxu0 0
    %3622 = vmatpush1.bf16.msra.mxu0 %v3584
    %3623 = vmatprep.subr.bf16.mxu0 0
    %3624 = vmatpush2.bf16.msra.mxu0 0
    %3625 = vmatprep.subr.bf16.mxu0 0
    %3626 = vmatpush2.bf16.msra.mxu0 0
    %3627 = vmatprep.subr.bf16.mxu0 0
    %3628 = vmatpush2.bf16.msra.mxu0 0
    %3629 = vmatprep.subr.bf16.mxu0 0
    %3630 = vmatpush2.bf16.msra.mxu0 0
    %3631 = vmatprep.subr.bf16.mxu0 0
    %3632 = vmatpush2.bf16.msra.mxu0 0
    %3633 = vmatprep.subr.bf16.mxu0 0
    %3634 = vmatpush2.bf16.msra.mxu0 0
    %3635 = vmatprep.subr.bf16.mxu0 0
    %3636 = vmatpush2.bf16.msra.mxu0 0
    %3637 = vmatprep.subr.bf16.mxu0 0
    %3638 = vmatpush2.bf16.msra.mxu0 0
    %3639 = vmatprep.mubr.bf16.mxu0 0
    %3640 = vmatmul.mubr.bf16.gmra.mxu0 %v3579
    %v3641 = vpop.f32.mrf.mxu0
    %v3642 = vadd.f32 0.0, %v3641
    %v3643 = vpop.f32.mrf.mxu0
    %v3644 = vpop.f32.mrf.mxu0
    %v3645 = vadd.f32 0.0, %v3644
    %v3646 = vpop.f32.mrf.mxu0
    %3647 = vmatprep.mubr.bf16.mxu0 0
    %3648 = vmatmul.mubr.bf16.gmra.mxu0 %v3580
    %v3649 = vpop.f32.mrf.mxu0
    %v3650 = vadd.f32 0.0, %v3649
    %v3651 = vpop.f32.mrf.mxu0
    %v3652 = vpop.f32.mrf.mxu0
    %v3653 = vadd.f32 0.0, %v3652
    %v3654 = vpop.f32.mrf.mxu0
    %3655 = vdwg.mxu0
    %v3656 = vadd.f32 %v3562, %v3642
    %v3657 = vadd.f32 %v3563, %v3645
    %v3658 = vadd.f32 %v3564, %v3650
    %v3659 = vadd.f32 %v3565, %v3653
    %v3660 = vlaneseq
    %v3661 = vshrl.u32 %v3660, 7
    %v3662 = vsub.s32 0, %v3661
    %v3663 = vrot.slane %v2703, %v3662
    %v3664 = vadd.f32 %v3656, %v3663
    %v3665 = vadd.f32 %v3657, %v3663
    %v3666 = vadd.f32 %v3658, %v3663
    %v3667 = vadd.f32 %v3659, %v3663
    %v3668 = vmax.f32 %v3664, 0.0
    %v3669 = vmax.f32 %v3665, 0.0
    %v3670 = vmax.f32 %v3666, 0.0
    %v3671 = vmax.f32 %v3667, 0.0
    %v3672 = vpack.c.bf16 %v3669, %v3668
    %v3673 = vpack.c.bf16 %v3671, %v3670
    %v3674 = vld [vmem:[#allocation5 + $0x2] sm:$0x1]
    %v3675 = vld [vmem:[%s2 + $0x18] sm:$0xf]
    %v3677 = vsel %vm2705, %v3672, 0
    %v3680 = vsel %vm2705, %v3673, 0
    %v3683 = vsel %vm2730, %v3675, 0
    %3685 = vmatprep.subr.bf16.mxu0 0
    %3686 = vmatpush1.bf16.msra.mxu0 0
    %3687 = vmatprep.subr.bf16.mxu0 0
    %3688 = vmatpush1.bf16.msra.mxu0 0
    %3689 = vmatprep.subr.bf16.mxu0 0
    %3690 = vmatpush1.bf16.msra.mxu0 0
    %3691 = vmatprep.subr.bf16.mxu0 0
    %3692 = vmatpush1.bf16.msra.mxu0 0
    %3693 = vmatprep.subr.bf16.mxu0 0
    %3694 = vmatpush1.bf16.msra.mxu0 0
    %3695 = vmatprep.subr.bf16.mxu0 0
    %3696 = vmatpush1.bf16.msra.mxu0 0
    %3697 = vmatprep.subr.bf16.mxu0 0
    %3698 = vmatpush1.bf16.msra.mxu0 0
    %3699 = vmatprep.subr.bf16.mxu0 0
    %3700 = vmatpush1.bf16.msra.mxu0 %v3683
    %3701 = vmatprep.subr.bf16.mxu0 0
    %3702 = vmatpush2.bf16.msra.mxu0 0
    %3703 = vmatprep.subr.bf16.mxu0 0
    %3704 = vmatpush2.bf16.msra.mxu0 0
    %3705 = vmatprep.subr.bf16.mxu0 0
    %3706 = vmatpush2.bf16.msra.mxu0 0
    %3707 = vmatprep.subr.bf16.mxu0 0
    %3708 = vmatpush2.bf16.msra.mxu0 0
    %3709 = vmatprep.subr.bf16.mxu0 0
    %3710 = vmatpush2.bf16.msra.mxu0 0
    %3711 = vmatprep.subr.bf16.mxu0 0
    %3712 = vmatpush2.bf16.msra.mxu0 0
    %3713 = vmatprep.subr.bf16.mxu0 0
    %3714 = vmatpush2.bf16.msra.mxu0 0
    %3715 = vmatprep.subr.bf16.mxu0 0
    %3716 = vmatpush2.bf16.msra.mxu0 0
    %3717 = vmatprep.mubr.bf16.mxu0 0
    %3718 = vmatmul.mubr.bf16.gmra.mxu0 %v3677
    %v3719 = vpop.f32.mrf.mxu0
    %v3720 = vadd.f32 0.0, %v3719
    %v3721 = vpop.f32.mrf.mxu0
    %v3722 = vpop.f32.mrf.mxu0
    %v3723 = vadd.f32 0.0, %v3722
    %v3724 = vpop.f32.mrf.mxu0
    %3725 = vmatprep.mubr.bf16.mxu0 0
    %3726 = vmatmul.mubr.bf16.gmra.mxu0 %v3680
    %v3727 = vpop.f32.mrf.mxu0
    %v3728 = vadd.f32 0.0, %v3727
    %v3729 = vpop.f32.mrf.mxu0
    %v3730 = vpop.f32.mrf.mxu0
    %v3731 = vadd.f32 0.0, %v3730
    %v3732 = vpop.f32.mrf.mxu0
    %3733 = vdwg.mxu0
    %v3734 = vpack.c.bf16 %v3723, %v3720
    %v3735 = vpack.c.bf16 %v3731, %v3728
    %v3736 = vld [vmem:[#allocation10] sm:$0xf]
    %s3737 = scalar_lea.vmem [#allocation10], 4
    %v3738 = vld [vmem:[%s3737] sm:$0xf]
    %3741 = vrot.lane.b32.xlu0 %v3734, 120
    %v3742 = vpop.permute.xlu0 %3741
    %3743 = vrot.lane.b32.xlu0 %v3735, 120
    %v3744 = vpop.permute.xlu0 %3743
    %v3748 = vsel %vm176, %v3738, 0
    %3750 = vmatprep.subr.bf16.mxu0 0
    %3751 = vmatpush1.bf16.msra.mxu0 0
    %3752 = vmatprep.subr.bf16.mxu0 0
    %3753 = vmatpush1.bf16.msra.mxu0 0
    %3754 = vmatprep.subr.bf16.mxu0 0
    %3755 = vmatpush1.bf16.msra.mxu0 0
    %3756 = vmatprep.subr.bf16.mxu0 0
    %3757 = vmatpush1.bf16.msra.mxu0 0
    %3758 = vmatprep.subr.bf16.mxu0 0
    %3759 = vmatpush1.bf16.msra.mxu0 0
    %3760 = vmatprep.subr.bf16.mxu0 0
    %3761 = vmatpush1.bf16.msra.mxu0 0
    %3762 = vmatprep.subr.bf16.mxu0 0
    %3763 = vmatpush1.bf16.msra.mxu0 %v3744
    %3764 = vmatprep.subr.bf16.mxu0 0
    %3765 = vmatpush1.bf16.msra.mxu0 %v3742
    %3766 = vmatprep.subr.bf16.mxu0 0
    %3767 = vmatpush2.bf16.msra.mxu0 0
    %3768 = vmatprep.subr.bf16.mxu0 0
    %3769 = vmatpush2.bf16.msra.mxu0 0
    %3770 = vmatprep.subr.bf16.mxu0 0
    %3771 = vmatpush2.bf16.msra.mxu0 0
    %3772 = vmatprep.subr.bf16.mxu0 0
    %3773 = vmatpush2.bf16.msra.mxu0 0
    %3774 = vmatprep.subr.bf16.mxu0 0
    %3775 = vmatpush2.bf16.msra.mxu0 0
    %3776 = vmatprep.subr.bf16.mxu0 0
    %3777 = vmatpush2.bf16.msra.mxu0 0
    %3778 = vmatprep.subr.bf16.mxu0 0
    %3779 = vmatpush2.bf16.msra.mxu0 0
    %3780 = vmatprep.subr.bf16.mxu0 0
    %3781 = vmatpush2.bf16.msra.mxu0 0
    %3782 = vmatprep.mubr.bf16.mxu0 0
    %3783 = vmatmul.mubr.bf16.gmra.mxu0 %v3748
    %v3784 = vpop.f32.mrf.mxu0
    %v3785 = vadd.f32 0.0, %v3784
    %v3786 = vpop.f32.mrf.mxu0
    %v3787 = vpop.f32.mrf.mxu0
    %v3788 = vpop.f32.mrf.mxu0
    %3789 = vdwg.mxu0
    %v3791 = vsel %vm176, %v3736, 0
    %3793 = vmatprep.subr.bf16.mxu0 0
    %3794 = vmatpush1.bf16.msra.mxu0 0
    %3795 = vmatprep.subr.bf16.mxu0 0
    %3796 = vmatpush1.bf16.msra.mxu0 0
    %3797 = vmatprep.subr.bf16.mxu0 0
    %3798 = vmatpush1.bf16.msra.mxu0 0
    %3799 = vmatprep.subr.bf16.mxu0 0
    %3800 = vmatpush1.bf16.msra.mxu0 0
    %3801 = vmatprep.subr.bf16.mxu0 0
    %3802 = vmatpush1.bf16.msra.mxu0 0
    %3803 = vmatprep.subr.bf16.mxu0 0
    %3804 = vmatpush1.bf16.msra.mxu0 0
    %3805 = vmatprep.subr.bf16.mxu0 0
    %3806 = vmatpush1.bf16.msra.mxu0 %v3735
    %3807 = vmatprep.subr.bf16.mxu0 0
    %3808 = vmatpush1.bf16.msra.mxu0 %v3734
    %3809 = vmatprep.subr.bf16.mxu0 0
    %3810 = vmatpush2.bf16.msra.mxu0 0
    %3811 = vmatprep.subr.bf16.mxu0 0
    %3812 = vmatpush2.bf16.msra.mxu0 0
    %3813 = vmatprep.subr.bf16.mxu0 0
    %3814 = vmatpush2.bf16.msra.mxu0 0
    %3815 = vmatprep.subr.bf16.mxu0 0
    %3816 = vmatpush2.bf16.msra.mxu0 0
    %3817 = vmatprep.subr.bf16.mxu0 0
    %3818 = vmatpush2.bf16.msra.mxu0 0
    %3819 = vmatprep.subr.bf16.mxu0 0
    %3820 = vmatpush2.bf16.msra.mxu0 0
    %3821 = vmatprep.subr.bf16.mxu0 0
    %3822 = vmatpush2.bf16.msra.mxu0 0
    %3823 = vmatprep.subr.bf16.mxu0 0
    %3824 = vmatpush2.bf16.msra.mxu0 0
    %3825 = vmatprep.mubr.bf16.mxu0 0
    %3826 = vmatmul.mubr.bf16.gmra.mxu0 %v3791
    %v3827 = vpop.f32.mrf.mxu0
    %v3828 = vadd.f32 %v3785, %v3827
    %v3829 = vpop.f32.mrf.mxu0
    %v3830 = vpop.f32.mrf.mxu0
    %v3831 = vpop.f32.mrf.mxu0
    %3832 = vdwg.mxu0
    %s3833 = scalar_lea.vmem [#allocation10], 8
    %v3834 = vld [vmem:[%s3833] sm:$0xf]
    %3835 = vrot.lane.b32.xlu0 %v3734, 112
    %v3836 = vpop.permute.xlu0 %3835
    %3837 = vrot.lane.b32.xlu0 %v3735, 112
    %v3838 = vpop.permute.xlu0 %3837
    %v3842 = vsel %vm176, %v3834, 0
    %3844 = vmatprep.subr.bf16.mxu0 0
    %3845 = vmatpush1.bf16.msra.mxu0 0
    %3846 = vmatprep.subr.bf16.mxu0 0
    %3847 = vmatpush1.bf16.msra.mxu0 0
    %3848 = vmatprep.subr.bf16.mxu0 0
    %3849 = vmatpush1.bf16.msra.mxu0 0
    %3850 = vmatprep.subr.bf16.mxu0 0
    %3851 = vmatpush1.bf16.msra.mxu0 0
    %3852 = vmatprep.subr.bf16.mxu0 0
    %3853 = vmatpush1.bf16.msra.mxu0 0
    %3854 = vmatprep.subr.bf16.mxu0 0
    %3855 = vmatpush1.bf16.msra.mxu0 0
    %3856 = vmatprep.subr.bf16.mxu0 0
    %3857 = vmatpush1.bf16.msra.mxu0 %v3838
    %3858 = vmatprep.subr.bf16.mxu0 0
    %3859 = vmatpush1.bf16.msra.mxu0 %v3836
    %3860 = vmatprep.subr.bf16.mxu0 0
    %3861 = vmatpush2.bf16.msra.mxu0 0
    %3862 = vmatprep.subr.bf16.mxu0 0
    %3863 = vmatpush2.bf16.msra.mxu0 0
    %3864 = vmatprep.subr.bf16.mxu0 0
    %3865 = vmatpush2.bf16.msra.mxu0 0
    %3866 = vmatprep.subr.bf16.mxu0 0
    %3867 = vmatpush2.bf16.msra.mxu0 0
    %3868 = vmatprep.subr.bf16.mxu0 0
    %3869 = vmatpush2.bf16.msra.mxu0 0
    %3870 = vmatprep.subr.bf16.mxu0 0
    %3871 = vmatpush2.bf16.msra.mxu0 0
    %3872 = vmatprep.subr.bf16.mxu0 0
    %3873 = vmatpush2.bf16.msra.mxu0 0
    %3874 = vmatprep.subr.bf16.mxu0 0
    %3875 = vmatpush2.bf16.msra.mxu0 0
    %3876 = vmatprep.mubr.bf16.mxu0 0
    %3877 = vmatmul.mubr.bf16.gmra.mxu0 %v3842
    %v3878 = vpop.f32.mrf.mxu0
    %v3879 = vadd.f32 0.0, %v3878
    %v3880 = vpop.f32.mrf.mxu0
    %v3881 = vpop.f32.mrf.mxu0
    %v3882 = vpop.f32.mrf.mxu0
    %3883 = vdwg.mxu0
    %v3884 = vadd.f32 %v3828, %v3879
    %s3885 = scalar_lea.vmem [#allocation10], 12
    %v3886 = vld [vmem:[%s3885] sm:$0xf]
    %3887 = vrot.lane.b32.xlu0 %v3734, 104
    %v3888 = vpop.permute.xlu0 %3887
    %3889 = vrot.lane.b32.xlu0 %v3735, 104
    %v3890 = vpop.permute.xlu0 %3889
    %v3894 = vsel %vm176, %v3886, 0
    %3896 = vmatprep.subr.bf16.mxu0 0
    %3897 = vmatpush1.bf16.msra.mxu0 0
    %3898 = vmatprep.subr.bf16.mxu0 0
    %3899 = vmatpush1.bf16.msra.mxu0 0
    %3900 = vmatprep.subr.bf16.mxu0 0
    %3901 = vmatpush1.bf16.msra.mxu0 0
    %3902 = vmatprep.subr.bf16.mxu0 0
    %3903 = vmatpush1.bf16.msra.mxu0 0
    %3904 = vmatprep.subr.bf16.mxu0 0
    %3905 = vmatpush1.bf16.msra.mxu0 0
    %3906 = vmatprep.subr.bf16.mxu0 0
    %3907 = vmatpush1.bf16.msra.mxu0 0
    %3908 = vmatprep.subr.bf16.mxu0 0
    %3909 = vmatpush1.bf16.msra.mxu0 %v3890
    %3910 = vmatprep.subr.bf16.mxu0 0
    %3911 = vmatpush1.bf16.msra.mxu0 %v3888
    %3912 = vmatprep.subr.bf16.mxu0 0
    %3913 = vmatpush2.bf16.msra.mxu0 0
    %3914 = vmatprep.subr.bf16.mxu0 0
    %3915 = vmatpush2.bf16.msra.mxu0 0
    %3916 = vmatprep.subr.bf16.mxu0 0
    %3917 = vmatpush2.bf16.msra.mxu0 0
    %3918 = vmatprep.subr.bf16.mxu0 0
    %3919 = vmatpush2.bf16.msra.mxu0 0
    %3920 = vmatprep.subr.bf16.mxu0 0
    %3921 = vmatpush2.bf16.msra.mxu0 0
    %3922 = vmatprep.subr.bf16.mxu0 0
    %3923 = vmatpush2.bf16.msra.mxu0 0
    %3924 = vmatprep.subr.bf16.mxu0 0
    %3925 = vmatpush2.bf16.msra.mxu0 0
    %3926 = vmatprep.subr.bf16.mxu0 0
    %3927 = vmatpush2.bf16.msra.mxu0 0
    %3928 = vmatprep.mubr.bf16.mxu0 0
    %3929 = vmatmul.mubr.bf16.gmra.mxu0 %v3894
    %v3930 = vpop.f32.mrf.mxu0
    %v3931 = vadd.f32 0.0, %v3930
    %v3932 = vpop.f32.mrf.mxu0
    %v3933 = vpop.f32.mrf.mxu0
    %v3934 = vpop.f32.mrf.mxu0
    %3935 = vdwg.mxu0
    %v3936 = vadd.f32 %v3884, %v3931
    %s3937 = scalar_lea.vmem [#allocation10], 16
    %v3938 = vld [vmem:[%s3937] sm:$0xf]
    %3939 = vrot.lane.b32.xlu0 %v3734, 96
    %v3940 = vpop.permute.xlu0 %3939
    %3941 = vrot.lane.b32.xlu0 %v3735, 96
    %v3942 = vpop.permute.xlu0 %3941
    %v3946 = vsel %vm176, %v3938, 0
    %3948 = vmatprep.subr.bf16.mxu0 0
    %3949 = vmatpush1.bf16.msra.mxu0 0
    %3950 = vmatprep.subr.bf16.mxu0 0
    %3951 = vmatpush1.bf16.msra.mxu0 0
    %3952 = vmatprep.subr.bf16.mxu0 0
    %3953 = vmatpush1.bf16.msra.mxu0 0
    %3954 = vmatprep.subr.bf16.mxu0 0
    %3955 = vmatpush1.bf16.msra.mxu0 0
    %3956 = vmatprep.subr.bf16.mxu0 0
    %3957 = vmatpush1.bf16.msra.mxu0 0
    %3958 = vmatprep.subr.bf16.mxu0 0
    %3959 = vmatpush1.bf16.msra.mxu0 0
    %3960 = vmatprep.subr.bf16.mxu0 0
    %3961 = vmatpush1.bf16.msra.mxu0 %v3942
    %3962 = vmatprep.subr.bf16.mxu0 0
    %3963 = vmatpush1.bf16.msra.mxu0 %v3940
    %3964 = vmatprep.subr.bf16.mxu0 0
    %3965 = vmatpush2.bf16.msra.mxu0 0
    %3966 = vmatprep.subr.bf16.mxu0 0
    %3967 = vmatpush2.bf16.msra.mxu0 0
    %3968 = vmatprep.subr.bf16.mxu0 0
    %3969 = vmatpush2.bf16.msra.mxu0 0
    %3970 = vmatprep.subr.bf16.mxu0 0
    %3971 = vmatpush2.bf16.msra.mxu0 0
    %3972 = vmatprep.subr.bf16.mxu0 0
    %3973 = vmatpush2.bf16.msra.mxu0 0
    %3974 = vmatprep.subr.bf16.mxu0 0
    %3975 = vmatpush2.bf16.msra.mxu0 0
    %3976 = vmatprep.subr.bf16.mxu0 0
    %3977 = vmatpush2.bf16.msra.mxu0 0
    %3978 = vmatprep.subr.bf16.mxu0 0
    %3979 = vmatpush2.bf16.msra.mxu0 0
    %3980 = vmatprep.mubr.bf16.mxu0 0
    %3981 = vmatmul.mubr.bf16.gmra.mxu0 %v3946
    %v3982 = vpop.f32.mrf.mxu0
    %v3983 = vadd.f32 0.0, %v3982
    %v3984 = vpop.f32.mrf.mxu0
    %v3985 = vpop.f32.mrf.mxu0
    %v3986 = vpop.f32.mrf.mxu0
    %3987 = vdwg.mxu0
    %v3988 = vadd.f32 %v3936, %v3983
    %s3989 = scalar_lea.vmem [#allocation10], 20
    %v3990 = vld [vmem:[%s3989] sm:$0xf]
    %3991 = vrot.lane.b32.xlu0 %v3734, 88
    %v3992 = vpop.permute.xlu0 %3991
    %3993 = vrot.lane.b32.xlu0 %v3735, 88
    %v3994 = vpop.permute.xlu0 %3993
    %v3998 = vsel %vm176, %v3990, 0
    %4000 = vmatprep.subr.bf16.mxu0 0
    %4001 = vmatpush1.bf16.msra.mxu0 0
    %4002 = vmatprep.subr.bf16.mxu0 0
    %4003 = vmatpush1.bf16.msra.mxu0 0
    %4004 = vmatprep.subr.bf16.mxu0 0
    %4005 = vmatpush1.bf16.msra.mxu0 0
    %4006 = vmatprep.subr.bf16.mxu0 0
    %4007 = vmatpush1.bf16.msra.mxu0 0
    %4008 = vmatprep.subr.bf16.mxu0 0
    %4009 = vmatpush1.bf16.msra.mxu0 0
    %4010 = vmatprep.subr.bf16.mxu0 0
    %4011 = vmatpush1.bf16.msra.mxu0 0
    %4012 = vmatprep.subr.bf16.mxu0 0
    %4013 = vmatpush1.bf16.msra.mxu0 %v3994
    %4014 = vmatprep.subr.bf16.mxu0 0
    %4015 = vmatpush1.bf16.msra.mxu0 %v3992
    %4016 = vmatprep.subr.bf16.mxu0 0
    %4017 = vmatpush2.bf16.msra.mxu0 0
    %4018 = vmatprep.subr.bf16.mxu0 0
    %4019 = vmatpush2.bf16.msra.mxu0 0
    %4020 = vmatprep.subr.bf16.mxu0 0
    %4021 = vmatpush2.bf16.msra.mxu0 0
    %4022 = vmatprep.subr.bf16.mxu0 0
    %4023 = vmatpush2.bf16.msra.mxu0 0
    %4024 = vmatprep.subr.bf16.mxu0 0
    %4025 = vmatpush2.bf16.msra.mxu0 0
    %4026 = vmatprep.subr.bf16.mxu0 0
    %4027 = vmatpush2.bf16.msra.mxu0 0
    %4028 = vmatprep.subr.bf16.mxu0 0
    %4029 = vmatpush2.bf16.msra.mxu0 0
    %4030 = vmatprep.subr.bf16.mxu0 0
    %4031 = vmatpush2.bf16.msra.mxu0 0
    %4032 = vmatprep.mubr.bf16.mxu0 0
    %4033 = vmatmul.mubr.bf16.gmra.mxu0 %v3998
    %v4034 = vpop.f32.mrf.mxu0
    %v4035 = vadd.f32 0.0, %v4034
    %v4036 = vpop.f32.mrf.mxu0
    %v4037 = vpop.f32.mrf.mxu0
    %v4038 = vpop.f32.mrf.mxu0
    %4039 = vdwg.mxu0
    %v4040 = vadd.f32 %v3988, %v4035
    %s4041 = scalar_lea.vmem [#allocation10], 24
    %v4042 = vld [vmem:[%s4041] sm:$0xf]
    %4043 = vrot.lane.b32.xlu0 %v3734, 80
    %v4044 = vpop.permute.xlu0 %4043
    %4045 = vrot.lane.b32.xlu0 %v3735, 80
    %v4046 = vpop.permute.xlu0 %4045
    %v4050 = vsel %vm176, %v4042, 0
    %4052 = vmatprep.subr.bf16.mxu0 0
    %4053 = vmatpush1.bf16.msra.mxu0 0
    %4054 = vmatprep.subr.bf16.mxu0 0
    %4055 = vmatpush1.bf16.msra.mxu0 0
    %4056 = vmatprep.subr.bf16.mxu0 0
    %4057 = vmatpush1.bf16.msra.mxu0 0
    %4058 = vmatprep.subr.bf16.mxu0 0
    %4059 = vmatpush1.bf16.msra.mxu0 0
    %4060 = vmatprep.subr.bf16.mxu0 0
    %4061 = vmatpush1.bf16.msra.mxu0 0
    %4062 = vmatprep.subr.bf16.mxu0 0
    %4063 = vmatpush1.bf16.msra.mxu0 0
    %4064 = vmatprep.subr.bf16.mxu0 0
    %4065 = vmatpush1.bf16.msra.mxu0 %v4046
    %4066 = vmatprep.subr.bf16.mxu0 0
    %4067 = vmatpush1.bf16.msra.mxu0 %v4044
    %4068 = vmatprep.subr.bf16.mxu0 0
    %4069 = vmatpush2.bf16.msra.mxu0 0
    %4070 = vmatprep.subr.bf16.mxu0 0
    %4071 = vmatpush2.bf16.msra.mxu0 0
    %4072 = vmatprep.subr.bf16.mxu0 0
    %4073 = vmatpush2.bf16.msra.mxu0 0
    %4074 = vmatprep.subr.bf16.mxu0 0
    %4075 = vmatpush2.bf16.msra.mxu0 0
    %4076 = vmatprep.subr.bf16.mxu0 0
    %4077 = vmatpush2.bf16.msra.mxu0 0
    %4078 = vmatprep.subr.bf16.mxu0 0
    %4079 = vmatpush2.bf16.msra.mxu0 0
    %4080 = vmatprep.subr.bf16.mxu0 0
    %4081 = vmatpush2.bf16.msra.mxu0 0
    %4082 = vmatprep.subr.bf16.mxu0 0
    %4083 = vmatpush2.bf16.msra.mxu0 0
    %4084 = vmatprep.mubr.bf16.mxu0 0
    %4085 = vmatmul.mubr.bf16.gmra.mxu0 %v4050
    %v4086 = vpop.f32.mrf.mxu0
    %v4087 = vadd.f32 0.0, %v4086
    %v4088 = vpop.f32.mrf.mxu0
    %v4089 = vpop.f32.mrf.mxu0
    %v4090 = vpop.f32.mrf.mxu0
    %4091 = vdwg.mxu0
    %v4092 = vadd.f32 %v4040, %v4087
    %s4093 = scalar_lea.vmem [#allocation10], 28
    %v4094 = vld [vmem:[%s4093] sm:$0xf]
    %4095 = vrot.lane.b32.xlu0 %v3734, 72
    %v4096 = vpop.permute.xlu0 %4095
    %4097 = vrot.lane.b32.xlu0 %v3735, 72
    %v4098 = vpop.permute.xlu0 %4097
    %v4102 = vsel %vm176, %v4094, 0
    %4104 = vmatprep.subr.bf16.mxu0 0
    %4105 = vmatpush1.bf16.msra.mxu0 0
    %4106 = vmatprep.subr.bf16.mxu0 0
    %4107 = vmatpush1.bf16.msra.mxu0 0
    %4108 = vmatprep.subr.bf16.mxu0 0
    %4109 = vmatpush1.bf16.msra.mxu0 0
    %4110 = vmatprep.subr.bf16.mxu0 0
    %4111 = vmatpush1.bf16.msra.mxu0 0
    %4112 = vmatprep.subr.bf16.mxu0 0
    %4113 = vmatpush1.bf16.msra.mxu0 0
    %4114 = vmatprep.subr.bf16.mxu0 0
    %4115 = vmatpush1.bf16.msra.mxu0 0
    %4116 = vmatprep.subr.bf16.mxu0 0
    %4117 = vmatpush1.bf16.msra.mxu0 %v4098
    %4118 = vmatprep.subr.bf16.mxu0 0
    %4119 = vmatpush1.bf16.msra.mxu0 %v4096
    %4120 = vmatprep.subr.bf16.mxu0 0
    %4121 = vmatpush2.bf16.msra.mxu0 0
    %4122 = vmatprep.subr.bf16.mxu0 0
    %4123 = vmatpush2.bf16.msra.mxu0 0
    %4124 = vmatprep.subr.bf16.mxu0 0
    %4125 = vmatpush2.bf16.msra.mxu0 0
    %4126 = vmatprep.subr.bf16.mxu0 0
    %4127 = vmatpush2.bf16.msra.mxu0 0
    %4128 = vmatprep.subr.bf16.mxu0 0
    %4129 = vmatpush2.bf16.msra.mxu0 0
    %4130 = vmatprep.subr.bf16.mxu0 0
    %4131 = vmatpush2.bf16.msra.mxu0 0
    %4132 = vmatprep.subr.bf16.mxu0 0
    %4133 = vmatpush2.bf16.msra.mxu0 0
    %4134 = vmatprep.subr.bf16.mxu0 0
    %4135 = vmatpush2.bf16.msra.mxu0 0
    %4136 = vmatprep.mubr.bf16.mxu0 0
    %4137 = vmatmul.mubr.bf16.gmra.mxu0 %v4102
    %v4138 = vpop.f32.mrf.mxu0
    %v4139 = vadd.f32 0.0, %v4138
    %v4140 = vpop.f32.mrf.mxu0
    %v4141 = vpop.f32.mrf.mxu0
    %v4142 = vpop.f32.mrf.mxu0
    %4143 = vdwg.mxu0
    %v4144 = vadd.f32 %v4092, %v4139
    %s4145 = scalar_lea.vmem [#allocation10], 32
    %v4146 = vld [vmem:[%s4145] sm:$0xf]
    %4147 = vrot.lane.b32.xlu0 %v3734, 64
    %v4148 = vpop.permute.xlu0 %4147
    %4149 = vrot.lane.b32.xlu0 %v3735, 64
    %v4150 = vpop.permute.xlu0 %4149
    %v4154 = vsel %vm176, %v4146, 0
    %4156 = vmatprep.subr.bf16.mxu0 0
    %4157 = vmatpush1.bf16.msra.mxu0 0
    %4158 = vmatprep.subr.bf16.mxu0 0
    %4159 = vmatpush1.bf16.msra.mxu0 0
    %4160 = vmatprep.subr.bf16.mxu0 0
    %4161 = vmatpush1.bf16.msra.mxu0 0
    %4162 = vmatprep.subr.bf16.mxu0 0
    %4163 = vmatpush1.bf16.msra.mxu0 0
    %4164 = vmatprep.subr.bf16.mxu0 0
    %4165 = vmatpush1.bf16.msra.mxu0 0
    %4166 = vmatprep.subr.bf16.mxu0 0
    %4167 = vmatpush1.bf16.msra.mxu0 0
    %4168 = vmatprep.subr.bf16.mxu0 0
    %4169 = vmatpush1.bf16.msra.mxu0 %v4150
    %4170 = vmatprep.subr.bf16.mxu0 0
    %4171 = vmatpush1.bf16.msra.mxu0 %v4148
    %4172 = vmatprep.subr.bf16.mxu0 0
    %4173 = vmatpush2.bf16.msra.mxu0 0
    %4174 = vmatprep.subr.bf16.mxu0 0
    %4175 = vmatpush2.bf16.msra.mxu0 0
    %4176 = vmatprep.subr.bf16.mxu0 0
    %4177 = vmatpush2.bf16.msra.mxu0 0
    %4178 = vmatprep.subr.bf16.mxu0 0
    %4179 = vmatpush2.bf16.msra.mxu0 0
    %4180 = vmatprep.subr.bf16.mxu0 0
    %4181 = vmatpush2.bf16.msra.mxu0 0
    %4182 = vmatprep.subr.bf16.mxu0 0
    %4183 = vmatpush2.bf16.msra.mxu0 0
    %4184 = vmatprep.subr.bf16.mxu0 0
    %4185 = vmatpush2.bf16.msra.mxu0 0
    %4186 = vmatprep.subr.bf16.mxu0 0
    %4187 = vmatpush2.bf16.msra.mxu0 0
    %4188 = vmatprep.mubr.bf16.mxu0 0
    %4189 = vmatmul.mubr.bf16.gmra.mxu0 %v4154
    %v4190 = vpop.f32.mrf.mxu0
    %v4191 = vadd.f32 0.0, %v4190
    %v4192 = vpop.f32.mrf.mxu0
    %v4193 = vpop.f32.mrf.mxu0
    %v4194 = vpop.f32.mrf.mxu0
    %4195 = vdwg.mxu0
    %v4196 = vadd.f32 %v4144, %v4191
    %v4197 = vlaneseq
    %v4198 = vshrl.u32 %v4197, 7
    %v4199 = vsub.s32 0, %v4198
    %v4200 = vrot.slane %v3674, %v4199
    %v4201 = vadd.f32 %v4196, %v4200
    %v4202 = vmax.f32 %v4201, 0.0
    %v4203 = vpack.c.bf16 %v4202, %v4202
    %v4204 = vld [vmem:[#allocation5 + $0x3] sm:$0x1]
    %v4205 = vld [vmem:[%s2 + $0x20] sm:$0xf]
    %v4207 = vsel %vm2705, %v4203, 0
    %v4210 = vsel %vm2730, %v4205, 0
    %4212 = vmatprep.subr.bf16.mxu0 0
    %4213 = vmatpush1.bf16.msra.mxu0 0
    %4214 = vmatprep.subr.bf16.mxu0 0
    %4215 = vmatpush1.bf16.msra.mxu0 0
    %4216 = vmatprep.subr.bf16.mxu0 0
    %4217 = vmatpush1.bf16.msra.mxu0 0
    %4218 = vmatprep.subr.bf16.mxu0 0
    %4219 = vmatpush1.bf16.msra.mxu0 0
    %4220 = vmatprep.subr.bf16.mxu0 0
    %4221 = vmatpush1.bf16.msra.mxu0 0
    %4222 = vmatprep.subr.bf16.mxu0 0
    %4223 = vmatpush1.bf16.msra.mxu0 0
    %4224 = vmatprep.subr.bf16.mxu0 0
    %4225 = vmatpush1.bf16.msra.mxu0 0
    %4226 = vmatprep.subr.bf16.mxu0 0
    %4227 = vmatpush1.bf16.msra.mxu0 %v4210
    %4228 = vmatprep.subr.bf16.mxu0 0
    %4229 = vmatpush2.bf16.msra.mxu0 0
    %4230 = vmatprep.subr.bf16.mxu0 0
    %4231 = vmatpush2.bf16.msra.mxu0 0
    %4232 = vmatprep.subr.bf16.mxu0 0
    %4233 = vmatpush2.bf16.msra.mxu0 0
    %4234 = vmatprep.subr.bf16.mxu0 0
    %4235 = vmatpush2.bf16.msra.mxu0 0
    %4236 = vmatprep.subr.bf16.mxu0 0
    %4237 = vmatpush2.bf16.msra.mxu0 0
    %4238 = vmatprep.subr.bf16.mxu0 0
    %4239 = vmatpush2.bf16.msra.mxu0 0
    %4240 = vmatprep.subr.bf16.mxu0 0
    %4241 = vmatpush2.bf16.msra.mxu0 0
    %4242 = vmatprep.subr.bf16.mxu0 0
    %4243 = vmatpush2.bf16.msra.mxu0 0
    %4244 = vmatprep.mubr.bf16.mxu0 0
    %4245 = vmatmul.mubr.bf16.gmra.mxu0 %v4207
    %v4246 = vpop.f32.mrf.mxu0
    %v4247 = vadd.f32 0.0, %v4246
    %v4248 = vpop.f32.mrf.mxu0
    %v4249 = vpop.f32.mrf.mxu0
    %v4250 = vpop.f32.mrf.mxu0
    %4251 = vdwg.mxu0
    %v4252 = vpack.c.bf16 %v4247, %v4247
    %v4253 = vld [vmem:[%s7] sm:$0x1]
    %s4254 = scalar_lea.vmem %s7, 1
    %v4255 = vld [vmem:[%s4254] sm:$0x1]
    %4257 = vrot.lane.b32.xlu0 %v4252, 120
    %v4258 = vpop.permute.xlu0 %4257
    %v4260 = vsel %vm2705, %v4255, 0
    %v4263 = vsel %vm2730, %v4258, 0
    %4265 = vmatprep.subr.bf16.mxu0 0
    %4266 = vmatpush1.bf16.msra.mxu0 0
    %4267 = vmatprep.subr.bf16.mxu0 0
    %4268 = vmatpush1.bf16.msra.mxu0 0
    %4269 = vmatprep.subr.bf16.mxu0 0
    %4270 = vmatpush1.bf16.msra.mxu0 0
    %4271 = vmatprep.subr.bf16.mxu0 0
    %4272 = vmatpush1.bf16.msra.mxu0 0
    %4273 = vmatprep.subr.bf16.mxu0 0
    %4274 = vmatpush1.bf16.msra.mxu0 0
    %4275 = vmatprep.subr.bf16.mxu0 0
    %4276 = vmatpush1.bf16.msra.mxu0 0
    %4277 = vmatprep.subr.bf16.mxu0 0
    %4278 = vmatpush1.bf16.msra.mxu0 0
    %4279 = vmatprep.subr.bf16.mxu0 0
    %4280 = vmatpush1.bf16.msra.mxu0 %v4263
    %4281 = vmatprep.subr.bf16.mxu0 0
    %4282 = vmatpush2.bf16.msra.mxu0 0
    %4283 = vmatprep.subr.bf16.mxu0 0
    %4284 = vmatpush2.bf16.msra.mxu0 0
    %4285 = vmatprep.subr.bf16.mxu0 0
    %4286 = vmatpush2.bf16.msra.mxu0 0
    %4287 = vmatprep.subr.bf16.mxu0 0
    %4288 = vmatpush2.bf16.msra.mxu0 0
    %4289 = vmatprep.subr.bf16.mxu0 0
    %4290 = vmatpush2.bf16.msra.mxu0 0
    %4291 = vmatprep.subr.bf16.mxu0 0
    %4292 = vmatpush2.bf16.msra.mxu0 0
    %4293 = vmatprep.subr.bf16.mxu0 0
    %4294 = vmatpush2.bf16.msra.mxu0 0
    %4295 = vmatprep.subr.bf16.mxu0 0
    %4296 = vmatpush2.bf16.msra.mxu0 0
    %4297 = vmatprep.mubr.bf16.mxu0 0
    %4298 = vmatmul.mubr.bf16.gmra.mxu0 %v4260
    %v4299 = vpop.f32.mrf.mxu0
    %v4300 = vadd.f32 0.0, %v4299
    %v4301 = vpop.f32.mrf.mxu0
    %v4302 = vpop.f32.mrf.mxu0
    %v4303 = vpop.f32.mrf.mxu0
    %4304 = vdwg.mxu0
    %v4306 = vsel %vm2705, %v4253, 0
    %v4309 = vsel %vm2730, %v4252, 0
    %4311 = vmatprep.subr.bf16.mxu0 0
    %4312 = vmatpush1.bf16.msra.mxu0 0
    %4313 = vmatprep.subr.bf16.mxu0 0
    %4314 = vmatpush1.bf16.msra.mxu0 0
    %4315 = vmatprep.subr.bf16.mxu0 0
    %4316 = vmatpush1.bf16.msra.mxu0 0
    %4317 = vmatprep.subr.bf16.mxu0 0
    %4318 = vmatpush1.bf16.msra.mxu0 0
    %4319 = vmatprep.subr.bf16.mxu0 0
    %4320 = vmatpush1.bf16.msra.mxu0 0
    %4321 = vmatprep.subr.bf16.mxu0 0
    %4322 = vmatpush1.bf16.msra.mxu0 0
    %4323 = vmatprep.subr.bf16.mxu0 0
    %4324 = vmatpush1.bf16.msra.mxu0 0
    %4325 = vmatprep.subr.bf16.mxu0 0
    %4326 = vmatpush1.bf16.msra.mxu0 %v4309
    %4327 = vmatprep.subr.bf16.mxu0 0
    %4328 = vmatpush2.bf16.msra.mxu0 0
    %4329 = vmatprep.subr.bf16.mxu0 0
    %4330 = vmatpush2.bf16.msra.mxu0 0
    %4331 = vmatprep.subr.bf16.mxu0 0
    %4332 = vmatpush2.bf16.msra.mxu0 0
    %4333 = vmatprep.subr.bf16.mxu0 0
    %4334 = vmatpush2.bf16.msra.mxu0 0
    %4335 = vmatprep.subr.bf16.mxu0 0
    %4336 = vmatpush2.bf16.msra.mxu0 0
    %4337 = vmatprep.subr.bf16.mxu0 0
    %4338 = vmatpush2.bf16.msra.mxu0 0
    %4339 = vmatprep.subr.bf16.mxu0 0
    %4340 = vmatpush2.bf16.msra.mxu0 0
    %4341 = vmatprep.subr.bf16.mxu0 0
    %4342 = vmatpush2.bf16.msra.mxu0 0
    %4343 = vmatprep.mubr.bf16.mxu0 0
    %4344 = vmatmul.mubr.bf16.gmra.mxu0 %v4306
    %v4345 = vpop.f32.mrf.mxu0
    %v4346 = vadd.f32 %v4300, %v4345
    %v4347 = vpop.f32.mrf.mxu0
    %v4348 = vpop.f32.mrf.mxu0
    %v4349 = vpop.f32.mrf.mxu0
    %4350 = vdwg.mxu0
    %s4351 = scalar_lea.vmem %s7, 2
    %v4352 = vld [vmem:[%s4351] sm:$0x1]
    %4353 = vrot.lane.b32.xlu0 %v4252, 112
    %v4354 = vpop.permute.xlu0 %4353
    %v4356 = vsel %vm2705, %v4352, 0
    %v4359 = vsel %vm2730, %v4354, 0
    %4361 = vmatprep.subr.bf16.mxu0 0
    %4362 = vmatpush1.bf16.msra.mxu0 0
    %4363 = vmatprep.subr.bf16.mxu0 0
    %4364 = vmatpush1.bf16.msra.mxu0 0
    %4365 = vmatprep.subr.bf16.mxu0 0
    %4366 = vmatpush1.bf16.msra.mxu0 0
    %4367 = vmatprep.subr.bf16.mxu0 0
    %4368 = vmatpush1.bf16.msra.mxu0 0
    %4369 = vmatprep.subr.bf16.mxu0 0
    %4370 = vmatpush1.bf16.msra.mxu0 0
    %4371 = vmatprep.subr.bf16.mxu0 0
    %4372 = vmatpush1.bf16.msra.mxu0 0
    %4373 = vmatprep.subr.bf16.mxu0 0
    %4374 = vmatpush1.bf16.msra.mxu0 0
    %4375 = vmatprep.subr.bf16.mxu0 0
    %4376 = vmatpush1.bf16.msra.mxu0 %v4359
    %4377 = vmatprep.subr.bf16.mxu0 0
    %4378 = vmatpush2.bf16.msra.mxu0 0
    %4379 = vmatprep.subr.bf16.mxu0 0
    %4380 = vmatpush2.bf16.msra.mxu0 0
    %4381 = vmatprep.subr.bf16.mxu0 0
    %4382 = vmatpush2.bf16.msra.mxu0 0
    %4383 = vmatprep.subr.bf16.mxu0 0
    %4384 = vmatpush2.bf16.msra.mxu0 0
    %4385 = vmatprep.subr.bf16.mxu0 0
    %4386 = vmatpush2.bf16.msra.mxu0 0
    %4387 = vmatprep.subr.bf16.mxu0 0
    %4388 = vmatpush2.bf16.msra.mxu0 0
    %4389 = vmatprep.subr.bf16.mxu0 0
    %4390 = vmatpush2.bf16.msra.mxu0 0
    %4391 = vmatprep.subr.bf16.mxu0 0
    %4392 = vmatpush2.bf16.msra.mxu0 0
    %4393 = vmatprep.mubr.bf16.mxu0 0
    %4394 = vmatmul.mubr.bf16.gmra.mxu0 %v4356
    %v4395 = vpop.f32.mrf.mxu0
    %v4396 = vadd.f32 0.0, %v4395
    %v4397 = vpop.f32.mrf.mxu0
    %v4398 = vpop.f32.mrf.mxu0
    %v4399 = vpop.f32.mrf.mxu0
    %4400 = vdwg.mxu0
    %v4401 = vadd.f32 %v4346, %v4396
    %s4402 = scalar_lea.vmem %s7, 3
    %v4403 = vld [vmem:[%s4402] sm:$0x1]
    %4404 = vrot.lane.b32.xlu0 %v4252, 104
    %v4405 = vpop.permute.xlu0 %4404
    %v4407 = vsel %vm2705, %v4403, 0
    %v4410 = vsel %vm2730, %v4405, 0
    %4412 = vmatprep.subr.bf16.mxu0 0
    %4413 = vmatpush1.bf16.msra.mxu0 0
    %4414 = vmatprep.subr.bf16.mxu0 0
    %4415 = vmatpush1.bf16.msra.mxu0 0
    %4416 = vmatprep.subr.bf16.mxu0 0
    %4417 = vmatpush1.bf16.msra.mxu0 0
    %4418 = vmatprep.subr.bf16.mxu0 0
    %4419 = vmatpush1.bf16.msra.mxu0 0
    %4420 = vmatprep.subr.bf16.mxu0 0
    %4421 = vmatpush1.bf16.msra.mxu0 0
    %4422 = vmatprep.subr.bf16.mxu0 0
    %4423 = vmatpush1.bf16.msra.mxu0 0
    %4424 = vmatprep.subr.bf16.mxu0 0
    %4425 = vmatpush1.bf16.msra.mxu0 0
    %4426 = vmatprep.subr.bf16.mxu0 0
    %4427 = vmatpush1.bf16.msra.mxu0 %v4410
    %4428 = vmatprep.subr.bf16.mxu0 0
    %4429 = vmatpush2.bf16.msra.mxu0 0
    %4430 = vmatprep.subr.bf16.mxu0 0
    %4431 = vmatpush2.bf16.msra.mxu0 0
    %4432 = vmatprep.subr.bf16.mxu0 0
    %4433 = vmatpush2.bf16.msra.mxu0 0
    %4434 = vmatprep.subr.bf16.mxu0 0
    %4435 = vmatpush2.bf16.msra.mxu0 0
    %4436 = vmatprep.subr.bf16.mxu0 0
    %4437 = vmatpush2.bf16.msra.mxu0 0
    %4438 = vmatprep.subr.bf16.mxu0 0
    %4439 = vmatpush2.bf16.msra.mxu0 0
    %4440 = vmatprep.subr.bf16.mxu0 0
    %4441 = vmatpush2.bf16.msra.mxu0 0
    %4442 = vmatprep.subr.bf16.mxu0 0
    %4443 = vmatpush2.bf16.msra.mxu0 0
    %4444 = vmatprep.mubr.bf16.mxu0 0
    %4445 = vmatmul.mubr.bf16.gmra.mxu0 %v4407
    %v4446 = vpop.f32.mrf.mxu0
    %v4447 = vadd.f32 0.0, %v4446
    %v4448 = vpop.f32.mrf.mxu0
    %v4449 = vpop.f32.mrf.mxu0
    %v4450 = vpop.f32.mrf.mxu0
    %4451 = vdwg.mxu0
    %v4452 = vadd.f32 %v4401, %v4447
    %s4453 = scalar_lea.vmem %s7, 4
    %v4454 = vld [vmem:[%s4453] sm:$0x1]
    %4455 = vrot.lane.b32.xlu0 %v4252, 96
    %v4456 = vpop.permute.xlu0 %4455
    %v4458 = vsel %vm2705, %v4454, 0
    %v4461 = vsel %vm2730, %v4456, 0
    %4463 = vmatprep.subr.bf16.mxu0 0
    %4464 = vmatpush1.bf16.msra.mxu0 0
    %4465 = vmatprep.subr.bf16.mxu0 0
    %4466 = vmatpush1.bf16.msra.mxu0 0
    %4467 = vmatprep.subr.bf16.mxu0 0
    %4468 = vmatpush1.bf16.msra.mxu0 0
    %4469 = vmatprep.subr.bf16.mxu0 0
    %4470 = vmatpush1.bf16.msra.mxu0 0
    %4471 = vmatprep.subr.bf16.mxu0 0
    %4472 = vmatpush1.bf16.msra.mxu0 0
    %4473 = vmatprep.subr.bf16.mxu0 0
    %4474 = vmatpush1.bf16.msra.mxu0 0
    %4475 = vmatprep.subr.bf16.mxu0 0
    %4476 = vmatpush1.bf16.msra.mxu0 0
    %4477 = vmatprep.subr.bf16.mxu0 0
    %4478 = vmatpush1.bf16.msra.mxu0 %v4461
    %4479 = vmatprep.subr.bf16.mxu0 0
    %4480 = vmatpush2.bf16.msra.mxu0 0
    %4481 = vmatprep.subr.bf16.mxu0 0
    %4482 = vmatpush2.bf16.msra.mxu0 0
    %4483 = vmatprep.subr.bf16.mxu0 0
    %4484 = vmatpush2.bf16.msra.mxu0 0
    %4485 = vmatprep.subr.bf16.mxu0 0
    %4486 = vmatpush2.bf16.msra.mxu0 0
    %4487 = vmatprep.subr.bf16.mxu0 0
    %4488 = vmatpush2.bf16.msra.mxu0 0
    %4489 = vmatprep.subr.bf16.mxu0 0
    %4490 = vmatpush2.bf16.msra.mxu0 0
    %4491 = vmatprep.subr.bf16.mxu0 0
    %4492 = vmatpush2.bf16.msra.mxu0 0
    %4493 = vmatprep.subr.bf16.mxu0 0
    %4494 = vmatpush2.bf16.msra.mxu0 0
    %4495 = vmatprep.mubr.bf16.mxu0 0
    %4496 = vmatmul.mubr.bf16.gmra.mxu0 %v4458
    %v4497 = vpop.f32.mrf.mxu0
    %v4498 = vadd.f32 0.0, %v4497
    %v4499 = vpop.f32.mrf.mxu0
    %v4500 = vpop.f32.mrf.mxu0
    %v4501 = vpop.f32.mrf.mxu0
    %4502 = vdwg.mxu0
    %v4503 = vadd.f32 %v4452, %v4498
    %s4504 = scalar_lea.vmem %s7, 5
    %v4505 = vld [vmem:[%s4504] sm:$0x1]
    %4506 = vrot.lane.b32.xlu0 %v4252, 88
    %v4507 = vpop.permute.xlu0 %4506
    %v4509 = vsel %vm2705, %v4505, 0
    %v4512 = vsel %vm2730, %v4507, 0
    %4514 = vmatprep.subr.bf16.mxu0 0
    %4515 = vmatpush1.bf16.msra.mxu0 0
    %4516 = vmatprep.subr.bf16.mxu0 0
    %4517 = vmatpush1.bf16.msra.mxu0 0
    %4518 = vmatprep.subr.bf16.mxu0 0
    %4519 = vmatpush1.bf16.msra.mxu0 0
    %4520 = vmatprep.subr.bf16.mxu0 0
    %4521 = vmatpush1.bf16.msra.mxu0 0
    %4522 = vmatprep.subr.bf16.mxu0 0
    %4523 = vmatpush1.bf16.msra.mxu0 0
    %4524 = vmatprep.subr.bf16.mxu0 0
    %4525 = vmatpush1.bf16.msra.mxu0 0
    %4526 = vmatprep.subr.bf16.mxu0 0
    %4527 = vmatpush1.bf16.msra.mxu0 0
    %4528 = vmatprep.subr.bf16.mxu0 0
    %4529 = vmatpush1.bf16.msra.mxu0 %v4512
    %4530 = vmatprep.subr.bf16.mxu0 0
    %4531 = vmatpush2.bf16.msra.mxu0 0
    %4532 = vmatprep.subr.bf16.mxu0 0
    %4533 = vmatpush2.bf16.msra.mxu0 0
    %4534 = vmatprep.subr.bf16.mxu0 0
    %4535 = vmatpush2.bf16.msra.mxu0 0
    %4536 = vmatprep.subr.bf16.mxu0 0
    %4537 = vmatpush2.bf16.msra.mxu0 0
    %4538 = vmatprep.subr.bf16.mxu0 0
    %4539 = vmatpush2.bf16.msra.mxu0 0
    %4540 = vmatprep.subr.bf16.mxu0 0
    %4541 = vmatpush2.bf16.msra.mxu0 0
    %4542 = vmatprep.subr.bf16.mxu0 0
    %4543 = vmatpush2.bf16.msra.mxu0 0
    %4544 = vmatprep.subr.bf16.mxu0 0
    %4545 = vmatpush2.bf16.msra.mxu0 0
    %4546 = vmatprep.mubr.bf16.mxu0 0
    %4547 = vmatmul.mubr.bf16.gmra.mxu0 %v4509
    %v4548 = vpop.f32.mrf.mxu0
    %v4549 = vadd.f32 0.0, %v4548
    %v4550 = vpop.f32.mrf.mxu0
    %v4551 = vpop.f32.mrf.mxu0
    %v4552 = vpop.f32.mrf.mxu0
    %4553 = vdwg.mxu0
    %v4554 = vadd.f32 %v4503, %v4549
    %s4555 = scalar_lea.vmem %s7, 6
    %v4556 = vld [vmem:[%s4555] sm:$0x1]
    %4557 = vrot.lane.b32.xlu0 %v4252, 80
    %v4558 = vpop.permute.xlu0 %4557
    %v4560 = vsel %vm2705, %v4556, 0
    %v4563 = vsel %vm2730, %v4558, 0
    %4565 = vmatprep.subr.bf16.mxu0 0
    %4566 = vmatpush1.bf16.msra.mxu0 0
    %4567 = vmatprep.subr.bf16.mxu0 0
    %4568 = vmatpush1.bf16.msra.mxu0 0
    %4569 = vmatprep.subr.bf16.mxu0 0
    %4570 = vmatpush1.bf16.msra.mxu0 0
    %4571 = vmatprep.subr.bf16.mxu0 0
    %4572 = vmatpush1.bf16.msra.mxu0 0
    %4573 = vmatprep.subr.bf16.mxu0 0
    %4574 = vmatpush1.bf16.msra.mxu0 0
    %4575 = vmatprep.subr.bf16.mxu0 0
    %4576 = vmatpush1.bf16.msra.mxu0 0
    %4577 = vmatprep.subr.bf16.mxu0 0
    %4578 = vmatpush1.bf16.msra.mxu0 0
    %4579 = vmatprep.subr.bf16.mxu0 0
    %4580 = vmatpush1.bf16.msra.mxu0 %v4563
    %4581 = vmatprep.subr.bf16.mxu0 0
    %4582 = vmatpush2.bf16.msra.mxu0 0
    %4583 = vmatprep.subr.bf16.mxu0 0
    %4584 = vmatpush2.bf16.msra.mxu0 0
    %4585 = vmatprep.subr.bf16.mxu0 0
    %4586 = vmatpush2.bf16.msra.mxu0 0
    %4587 = vmatprep.subr.bf16.mxu0 0
    %4588 = vmatpush2.bf16.msra.mxu0 0
    %4589 = vmatprep.subr.bf16.mxu0 0
    %4590 = vmatpush2.bf16.msra.mxu0 0
    %4591 = vmatprep.subr.bf16.mxu0 0
    %4592 = vmatpush2.bf16.msra.mxu0 0
    %4593 = vmatprep.subr.bf16.mxu0 0
    %4594 = vmatpush2.bf16.msra.mxu0 0
    %4595 = vmatprep.subr.bf16.mxu0 0
    %4596 = vmatpush2.bf16.msra.mxu0 0
    %4597 = vmatprep.mubr.bf16.mxu0 0
    %4598 = vmatmul.mubr.bf16.gmra.mxu0 %v4560
    %v4599 = vpop.f32.mrf.mxu0
    %v4600 = vadd.f32 0.0, %v4599
    %v4601 = vpop.f32.mrf.mxu0
    %v4602 = vpop.f32.mrf.mxu0
    %v4603 = vpop.f32.mrf.mxu0
    %4604 = vdwg.mxu0
    %v4605 = vadd.f32 %v4554, %v4600
    %s4606 = scalar_lea.vmem %s7, 7
    %v4607 = vld [vmem:[%s4606] sm:$0x1]
    %4608 = vrot.lane.b32.xlu0 %v4252, 72
    %v4609 = vpop.permute.xlu0 %4608
    %v4611 = vsel %vm2705, %v4607, 0
    %v4614 = vsel %vm2730, %v4609, 0
    %4616 = vmatprep.subr.bf16.mxu0 0
    %4617 = vmatpush1.bf16.msra.mxu0 0
    %4618 = vmatprep.subr.bf16.mxu0 0
    %4619 = vmatpush1.bf16.msra.mxu0 0
    %4620 = vmatprep.subr.bf16.mxu0 0
    %4621 = vmatpush1.bf16.msra.mxu0 0
    %4622 = vmatprep.subr.bf16.mxu0 0
    %4623 = vmatpush1.bf16.msra.mxu0 0
    %4624 = vmatprep.subr.bf16.mxu0 0
    %4625 = vmatpush1.bf16.msra.mxu0 0
    %4626 = vmatprep.subr.bf16.mxu0 0
    %4627 = vmatpush1.bf16.msra.mxu0 0
    %4628 = vmatprep.subr.bf16.mxu0 0
    %4629 = vmatpush1.bf16.msra.mxu0 0
    %4630 = vmatprep.subr.bf16.mxu0 0
    %4631 = vmatpush1.bf16.msra.mxu0 %v4614
    %4632 = vmatprep.subr.bf16.mxu0 0
    %4633 = vmatpush2.bf16.msra.mxu0 0
    %4634 = vmatprep.subr.bf16.mxu0 0
    %4635 = vmatpush2.bf16.msra.mxu0 0
    %4636 = vmatprep.subr.bf16.mxu0 0
    %4637 = vmatpush2.bf16.msra.mxu0 0
    %4638 = vmatprep.subr.bf16.mxu0 0
    %4639 = vmatpush2.bf16.msra.mxu0 0
    %4640 = vmatprep.subr.bf16.mxu0 0
    %4641 = vmatpush2.bf16.msra.mxu0 0
    %4642 = vmatprep.subr.bf16.mxu0 0
    %4643 = vmatpush2.bf16.msra.mxu0 0
    %4644 = vmatprep.subr.bf16.mxu0 0
    %4645 = vmatpush2.bf16.msra.mxu0 0
    %4646 = vmatprep.subr.bf16.mxu0 0
    %4647 = vmatpush2.bf16.msra.mxu0 0
    %4648 = vmatprep.mubr.bf16.mxu0 0
    %4649 = vmatmul.mubr.bf16.gmra.mxu0 %v4611
    %v4650 = vpop.f32.mrf.mxu0
    %v4651 = vadd.f32 0.0, %v4650
    %v4652 = vpop.f32.mrf.mxu0
    %v4653 = vpop.f32.mrf.mxu0
    %v4654 = vpop.f32.mrf.mxu0
    %4655 = vdwg.mxu0
    %v4656 = vadd.f32 %v4605, %v4651
    %s4657 = scalar_lea.vmem %s7, 8
    %v4658 = vld [vmem:[%s4657] sm:$0x1]
    %4659 = vrot.lane.b32.xlu0 %v4252, 64
    %v4660 = vpop.permute.xlu0 %4659
    %v4662 = vsel %vm2705, %v4658, 0
    %v4665 = vsel %vm2730, %v4660, 0
    %4667 = vmatprep.subr.bf16.mxu0 0
    %4668 = vmatpush1.bf16.msra.mxu0 0
    %4669 = vmatprep.subr.bf16.mxu0 0
    %4670 = vmatpush1.bf16.msra.mxu0 0
    %4671 = vmatprep.subr.bf16.mxu0 0
    %4672 = vmatpush1.bf16.msra.mxu0 0
    %4673 = vmatprep.subr.bf16.mxu0 0
    %4674 = vmatpush1.bf16.msra.mxu0 0
    %4675 = vmatprep.subr.bf16.mxu0 0
    %4676 = vmatpush1.bf16.msra.mxu0 0
    %4677 = vmatprep.subr.bf16.mxu0 0
    %4678 = vmatpush1.bf16.msra.mxu0 0
    %4679 = vmatprep.subr.bf16.mxu0 0
    %4680 = vmatpush1.bf16.msra.mxu0 0
    %4681 = vmatprep.subr.bf16.mxu0 0
    %4682 = vmatpush1.bf16.msra.mxu0 %v4665
    %4683 = vmatprep.subr.bf16.mxu0 0
    %4684 = vmatpush2.bf16.msra.mxu0 0
    %4685 = vmatprep.subr.bf16.mxu0 0
    %4686 = vmatpush2.bf16.msra.mxu0 0
    %4687 = vmatprep.subr.bf16.mxu0 0
    %4688 = vmatpush2.bf16.msra.mxu0 0
    %4689 = vmatprep.subr.bf16.mxu0 0
    %4690 = vmatpush2.bf16.msra.mxu0 0
    %4691 = vmatprep.subr.bf16.mxu0 0
    %4692 = vmatpush2.bf16.msra.mxu0 0
    %4693 = vmatprep.subr.bf16.mxu0 0
    %4694 = vmatpush2.bf16.msra.mxu0 0
    %4695 = vmatprep.subr.bf16.mxu0 0
    %4696 = vmatpush2.bf16.msra.mxu0 0
    %4697 = vmatprep.subr.bf16.mxu0 0
    %4698 = vmatpush2.bf16.msra.mxu0 0
    %4699 = vmatprep.mubr.bf16.mxu0 0
    %4700 = vmatmul.mubr.bf16.gmra.mxu0 %v4662
    %v4701 = vpop.f32.mrf.mxu0
    %v4702 = vadd.f32 0.0, %v4701
    %v4703 = vpop.f32.mrf.mxu0
    %v4704 = vpop.f32.mrf.mxu0
    %v4705 = vpop.f32.mrf.mxu0
    %4706 = vdwg.mxu0
    %v4707 = vadd.f32 %v4656, %v4702
    %v4708 = vlaneseq
    %v4709 = vshrl.u32 %v4708, 7
    %v4710 = vsub.s32 0, %v4709
    %v4711 = vrot.slane %v4204, %v4710
    %v4712 = vadd.f32 %v4707, %v4711
    %v4713 = vmax.f32 %v4712, 0.0
    %v4714 = vpack.c.bf16 %v4713, %v4713
    %v4715 = vld [vmem:[#allocation5 + $0x4] sm:$0x1]
    %v4716 = vld [vmem:[%s2 + $0x28] sm:$0xf]
    %v4718 = vsel %vm2705, %v4714, 0
    %v4721 = vsel %vm2730, %v4716, 0
    %4723 = vmatprep.subr.bf16.mxu0 0
    %4724 = vmatpush1.bf16.msra.mxu0 0
    %4725 = vmatprep.subr.bf16.mxu0 0
    %4726 = vmatpush1.bf16.msra.mxu0 0
    %4727 = vmatprep.subr.bf16.mxu0 0
    %4728 = vmatpush1.bf16.msra.mxu0 0
    %4729 = vmatprep.subr.bf16.mxu0 0
    %4730 = vmatpush1.bf16.msra.mxu0 0
    %4731 = vmatprep.subr.bf16.mxu0 0
    %4732 = vmatpush1.bf16.msra.mxu0 0
    %4733 = vmatprep.subr.bf16.mxu0 0
    %4734 = vmatpush1.bf16.msra.mxu0 0
    %4735 = vmatprep.subr.bf16.mxu0 0
    %4736 = vmatpush1.bf16.msra.mxu0 0
    %4737 = vmatprep.subr.bf16.mxu0 0
    %4738 = vmatpush1.bf16.msra.mxu0 %v4721
    %4739 = vmatprep.subr.bf16.mxu0 0
    %4740 = vmatpush2.bf16.msra.mxu0 0
    %4741 = vmatprep.subr.bf16.mxu0 0
    %4742 = vmatpush2.bf16.msra.mxu0 0
    %4743 = vmatprep.subr.bf16.mxu0 0
    %4744 = vmatpush2.bf16.msra.mxu0 0
    %4745 = vmatprep.subr.bf16.mxu0 0
    %4746 = vmatpush2.bf16.msra.mxu0 0
    %4747 = vmatprep.subr.bf16.mxu0 0
    %4748 = vmatpush2.bf16.msra.mxu0 0
    %4749 = vmatprep.subr.bf16.mxu0 0
    %4750 = vmatpush2.bf16.msra.mxu0 0
    %4751 = vmatprep.subr.bf16.mxu0 0
    %4752 = vmatpush2.bf16.msra.mxu0 0
    %4753 = vmatprep.subr.bf16.mxu0 0
    %4754 = vmatpush2.bf16.msra.mxu0 0
    %4755 = vmatprep.mubr.bf16.mxu0 0
    %4756 = vmatmul.mubr.bf16.gmra.mxu0 %v4718
    %v4757 = vpop.f32.mrf.mxu0
    %v4758 = vadd.f32 0.0, %v4757
    %v4759 = vpop.f32.mrf.mxu0
    %v4760 = vpop.f32.mrf.mxu0
    %v4761 = vpop.f32.mrf.mxu0
    %4762 = vdwg.mxu0
    %v4763 = vpack.c.bf16 %v4758, %v4758
    %v4764 = vld [vmem:[%s8] sm:$0xf]
    %s4765 = scalar_lea.vmem %s8, 4
    %v4766 = vld [vmem:[%s4765] sm:$0xf]
    %4768 = vrot.lane.b32.xlu0 %v4763, 120
    %v4769 = vpop.permute.xlu0 %4768
    %vm4770 = vcmask 15360
    %v4772 = vsel %vm4770, %v4766, 0
    %vm4774 = vcmask 1040384
    %v4776 = vsel %vm4774, %v4769, 0
    %4778 = vmatprep.subr.bf16.mxu0 0
    %4779 = vmatpush1.bf16.msra.mxu0 0
    %4780 = vmatprep.subr.bf16.mxu0 0
    %4781 = vmatpush1.bf16.msra.mxu0 0
    %4782 = vmatprep.subr.bf16.mxu0 0
    %4783 = vmatpush1.bf16.msra.mxu0 0
    %4784 = vmatprep.subr.bf16.mxu0 0
    %4785 = vmatpush1.bf16.msra.mxu0 0
    %4786 = vmatprep.subr.bf16.mxu0 0
    %4787 = vmatpush1.bf16.msra.mxu0 0
    %4788 = vmatprep.subr.bf16.mxu0 0
    %4789 = vmatpush1.bf16.msra.mxu0 0
    %4790 = vmatprep.subr.bf16.mxu0 0
    %4791 = vmatpush1.bf16.msra.mxu0 0
    %4792 = vmatprep.subr.bf16.mxu0 0
    %4793 = vmatpush1.bf16.msra.mxu0 %v4776
    %4794 = vmatprep.subr.bf16.mxu0 0
    %4795 = vmatpush2.bf16.msra.mxu0 0
    %4796 = vmatprep.subr.bf16.mxu0 0
    %4797 = vmatpush2.bf16.msra.mxu0 0
    %4798 = vmatprep.subr.bf16.mxu0 0
    %4799 = vmatpush2.bf16.msra.mxu0 0
    %4800 = vmatprep.subr.bf16.mxu0 0
    %4801 = vmatpush2.bf16.msra.mxu0 0
    %4802 = vmatprep.subr.bf16.mxu0 0
    %4803 = vmatpush2.bf16.msra.mxu0 0
    %4804 = vmatprep.subr.bf16.mxu0 0
    %4805 = vmatpush2.bf16.msra.mxu0 0
    %4806 = vmatprep.subr.bf16.mxu0 0
    %4807 = vmatpush2.bf16.msra.mxu0 0
    %4808 = vmatprep.subr.bf16.mxu0 0
    %4809 = vmatpush2.bf16.msra.mxu0 0
    %4810 = vmatprep.mubr.bf16.mxu0 0
    %4811 = vmatmul.mubr.bf16.gmra.mxu0 %v4772
    %v4812 = vpop.f32.mrf.mxu0
    %v4813 = vadd.f32 0.0, %v4812
    %v4814 = vpop.f32.mrf.mxu0
    %v4815 = vpop.f32.mrf.mxu0
    %v4816 = vpop.f32.mrf.mxu0
    %4817 = vdwg.mxu0
    %v4819 = vsel %vm4770, %v4764, 0
    %v4822 = vsel %vm4774, %v4763, 0
    %4824 = vmatprep.subr.bf16.mxu0 0
    %4825 = vmatpush1.bf16.msra.mxu0 0
    %4826 = vmatprep.subr.bf16.mxu0 0
    %4827 = vmatpush1.bf16.msra.mxu0 0
    %4828 = vmatprep.subr.bf16.mxu0 0
    %4829 = vmatpush1.bf16.msra.mxu0 0
    %4830 = vmatprep.subr.bf16.mxu0 0
    %4831 = vmatpush1.bf16.msra.mxu0 0
    %4832 = vmatprep.subr.bf16.mxu0 0
    %4833 = vmatpush1.bf16.msra.mxu0 0
    %4834 = vmatprep.subr.bf16.mxu0 0
    %4835 = vmatpush1.bf16.msra.mxu0 0
    %4836 = vmatprep.subr.bf16.mxu0 0
    %4837 = vmatpush1.bf16.msra.mxu0 0
    %4838 = vmatprep.subr.bf16.mxu0 0
    %4839 = vmatpush1.bf16.msra.mxu0 %v4822
    %4840 = vmatprep.subr.bf16.mxu0 0
    %4841 = vmatpush2.bf16.msra.mxu0 0
    %4842 = vmatprep.subr.bf16.mxu0 0
    %4843 = vmatpush2.bf16.msra.mxu0 0
    %4844 = vmatprep.subr.bf16.mxu0 0
    %4845 = vmatpush2.bf16.msra.mxu0 0
    %4846 = vmatprep.subr.bf16.mxu0 0
    %4847 = vmatpush2.bf16.msra.mxu0 0
    %4848 = vmatprep.subr.bf16.mxu0 0
    %4849 = vmatpush2.bf16.msra.mxu0 0
    %4850 = vmatprep.subr.bf16.mxu0 0
    %4851 = vmatpush2.bf16.msra.mxu0 0
    %4852 = vmatprep.subr.bf16.mxu0 0
    %4853 = vmatpush2.bf16.msra.mxu0 0
    %4854 = vmatprep.subr.bf16.mxu0 0
    %4855 = vmatpush2.bf16.msra.mxu0 0
    %4856 = vmatprep.mubr.bf16.mxu0 0
    %4857 = vmatmul.mubr.bf16.gmra.mxu0 %v4819
    %v4858 = vpop.f32.mrf.mxu0
    %v4859 = vadd.f32 %v4813, %v4858
    %v4860 = vpop.f32.mrf.mxu0
    %v4861 = vpop.f32.mrf.mxu0
    %v4862 = vpop.f32.mrf.mxu0
    %4863 = vdwg.mxu0
    %s4864 = scalar_lea.vmem %s8, 8
    %v4865 = vld [vmem:[%s4864] sm:$0xf]
    %4866 = vrot.lane.b32.xlu0 %v4763, 112
    %v4867 = vpop.permute.xlu0 %4866
    %v4869 = vsel %vm4770, %v4865, 0
    %v4872 = vsel %vm4774, %v4867, 0
    %4874 = vmatprep.subr.bf16.mxu0 0
    %4875 = vmatpush1.bf16.msra.mxu0 0
    %4876 = vmatprep.subr.bf16.mxu0 0
    %4877 = vmatpush1.bf16.msra.mxu0 0
    %4878 = vmatprep.subr.bf16.mxu0 0
    %4879 = vmatpush1.bf16.msra.mxu0 0
    %4880 = vmatprep.subr.bf16.mxu0 0
    %4881 = vmatpush1.bf16.msra.mxu0 0
    %4882 = vmatprep.subr.bf16.mxu0 0
    %4883 = vmatpush1.bf16.msra.mxu0 0
    %4884 = vmatprep.subr.bf16.mxu0 0
    %4885 = vmatpush1.bf16.msra.mxu0 0
    %4886 = vmatprep.subr.bf16.mxu0 0
    %4887 = vmatpush1.bf16.msra.mxu0 0
    %4888 = vmatprep.subr.bf16.mxu0 0
    %4889 = vmatpush1.bf16.msra.mxu0 %v4872
    %4890 = vmatprep.subr.bf16.mxu0 0
    %4891 = vmatpush2.bf16.msra.mxu0 0
    %4892 = vmatprep.subr.bf16.mxu0 0
    %4893 = vmatpush2.bf16.msra.mxu0 0
    %4894 = vmatprep.subr.bf16.mxu0 0
    %4895 = vmatpush2.bf16.msra.mxu0 0
    %4896 = vmatprep.subr.bf16.mxu0 0
    %4897 = vmatpush2.bf16.msra.mxu0 0
    %4898 = vmatprep.subr.bf16.mxu0 0
    %4899 = vmatpush2.bf16.msra.mxu0 0
    %4900 = vmatprep.subr.bf16.mxu0 0
    %4901 = vmatpush2.bf16.msra.mxu0 0
    %4902 = vmatprep.subr.bf16.mxu0 0
    %4903 = vmatpush2.bf16.msra.mxu0 0
    %4904 = vmatprep.subr.bf16.mxu0 0
    %4905 = vmatpush2.bf16.msra.mxu0 0
    %4906 = vmatprep.mubr.bf16.mxu0 0
    %4907 = vmatmul.mubr.bf16.gmra.mxu0 %v4869
    %v4908 = vpop.f32.mrf.mxu0
    %v4909 = vadd.f32 0.0, %v4908
    %v4910 = vpop.f32.mrf.mxu0
    %v4911 = vpop.f32.mrf.mxu0
    %v4912 = vpop.f32.mrf.mxu0
    %4913 = vdwg.mxu0
    %v4914 = vadd.f32 %v4859, %v4909
    %s4915 = scalar_lea.vmem %s8, 12
    %v4916 = vld [vmem:[%s4915] sm:$0xf]
    %4917 = vrot.lane.b32.xlu0 %v4763, 104
    %v4918 = vpop.permute.xlu0 %4917
    %v4920 = vsel %vm4770, %v4916, 0
    %v4923 = vsel %vm4774, %v4918, 0
    %4925 = vmatprep.subr.bf16.mxu0 0
    %4926 = vmatpush1.bf16.msra.mxu0 0
    %4927 = vmatprep.subr.bf16.mxu0 0
    %4928 = vmatpush1.bf16.msra.mxu0 0
    %4929 = vmatprep.subr.bf16.mxu0 0
    %4930 = vmatpush1.bf16.msra.mxu0 0
    %4931 = vmatprep.subr.bf16.mxu0 0
    %4932 = vmatpush1.bf16.msra.mxu0 0
    %4933 = vmatprep.subr.bf16.mxu0 0
    %4934 = vmatpush1.bf16.msra.mxu0 0
    %4935 = vmatprep.subr.bf16.mxu0 0
    %4936 = vmatpush1.bf16.msra.mxu0 0
    %4937 = vmatprep.subr.bf16.mxu0 0
    %4938 = vmatpush1.bf16.msra.mxu0 0
    %4939 = vmatprep.subr.bf16.mxu0 0
    %4940 = vmatpush1.bf16.msra.mxu0 %v4923
    %4941 = vmatprep.subr.bf16.mxu0 0
    %4942 = vmatpush2.bf16.msra.mxu0 0
    %4943 = vmatprep.subr.bf16.mxu0 0
    %4944 = vmatpush2.bf16.msra.mxu0 0
    %4945 = vmatprep.subr.bf16.mxu0 0
    %4946 = vmatpush2.bf16.msra.mxu0 0
    %4947 = vmatprep.subr.bf16.mxu0 0
    %4948 = vmatpush2.bf16.msra.mxu0 0
    %4949 = vmatprep.subr.bf16.mxu0 0
    %4950 = vmatpush2.bf16.msra.mxu0 0
    %4951 = vmatprep.subr.bf16.mxu0 0
    %4952 = vmatpush2.bf16.msra.mxu0 0
    %4953 = vmatprep.subr.bf16.mxu0 0
    %4954 = vmatpush2.bf16.msra.mxu0 0
    %4955 = vmatprep.subr.bf16.mxu0 0
    %4956 = vmatpush2.bf16.msra.mxu0 0
    %4957 = vmatprep.mubr.bf16.mxu0 0
    %4958 = vmatmul.mubr.bf16.gmra.mxu0 %v4920
    %v4959 = vpop.f32.mrf.mxu0
    %v4960 = vadd.f32 0.0, %v4959
    %v4961 = vpop.f32.mrf.mxu0
    %v4962 = vpop.f32.mrf.mxu0
    %v4963 = vpop.f32.mrf.mxu0
    %4964 = vdwg.mxu0
    %v4965 = vadd.f32 %v4914, %v4960
    %s4966 = scalar_lea.vmem %s8, 16
    %v4967 = vld [vmem:[%s4966] sm:$0xf]
    %4968 = vrot.lane.b32.xlu0 %v4763, 96
    %v4969 = vpop.permute.xlu0 %4968
    %v4971 = vsel %vm4770, %v4967, 0
    %v4974 = vsel %vm4774, %v4969, 0
    %4976 = vmatprep.subr.bf16.mxu0 0
    %4977 = vmatpush1.bf16.msra.mxu0 0
    %4978 = vmatprep.subr.bf16.mxu0 0
    %4979 = vmatpush1.bf16.msra.mxu0 0
    %4980 = vmatprep.subr.bf16.mxu0 0
    %4981 = vmatpush1.bf16.msra.mxu0 0
    %4982 = vmatprep.subr.bf16.mxu0 0
    %4983 = vmatpush1.bf16.msra.mxu0 0
    %4984 = vmatprep.subr.bf16.mxu0 0
    %4985 = vmatpush1.bf16.msra.mxu0 0
    %4986 = vmatprep.subr.bf16.mxu0 0
    %4987 = vmatpush1.bf16.msra.mxu0 0
    %4988 = vmatprep.subr.bf16.mxu0 0
    %4989 = vmatpush1.bf16.msra.mxu0 0
    %4990 = vmatprep.subr.bf16.mxu0 0
    %4991 = vmatpush1.bf16.msra.mxu0 %v4974
    %4992 = vmatprep.subr.bf16.mxu0 0
    %4993 = vmatpush2.bf16.msra.mxu0 0
    %4994 = vmatprep.subr.bf16.mxu0 0
    %4995 = vmatpush2.bf16.msra.mxu0 0
    %4996 = vmatprep.subr.bf16.mxu0 0
    %4997 = vmatpush2.bf16.msra.mxu0 0
    %4998 = vmatprep.subr.bf16.mxu0 0
    %4999 = vmatpush2.bf16.msra.mxu0 0
    %5000 = vmatprep.subr.bf16.mxu0 0
    %5001 = vmatpush2.bf16.msra.mxu0 0
    %5002 = vmatprep.subr.bf16.mxu0 0
    %5003 = vmatpush2.bf16.msra.mxu0 0
    %5004 = vmatprep.subr.bf16.mxu0 0
    %5005 = vmatpush2.bf16.msra.mxu0 0
    %5006 = vmatprep.subr.bf16.mxu0 0
    %5007 = vmatpush2.bf16.msra.mxu0 0
    %5008 = vmatprep.mubr.bf16.mxu0 0
    %5009 = vmatmul.mubr.bf16.gmra.mxu0 %v4971
    %v5010 = vpop.f32.mrf.mxu0
    %v5011 = vadd.f32 0.0, %v5010
    %v5012 = vpop.f32.mrf.mxu0
    %v5013 = vpop.f32.mrf.mxu0
    %v5014 = vpop.f32.mrf.mxu0
    %5015 = vdwg.mxu0
    %v5016 = vadd.f32 %v4965, %v5011
    %s5017 = scalar_lea.vmem %s8, 20
    %v5018 = vld [vmem:[%s5017] sm:$0xf]
    %5019 = vrot.lane.b32.xlu0 %v4763, 88
    %v5020 = vpop.permute.xlu0 %5019
    %v5022 = vsel %vm4770, %v5018, 0
    %v5025 = vsel %vm4774, %v5020, 0
    %5027 = vmatprep.subr.bf16.mxu0 0
    %5028 = vmatpush1.bf16.msra.mxu0 0
    %5029 = vmatprep.subr.bf16.mxu0 0
    %5030 = vmatpush1.bf16.msra.mxu0 0
    %5031 = vmatprep.subr.bf16.mxu0 0
    %5032 = vmatpush1.bf16.msra.mxu0 0
    %5033 = vmatprep.subr.bf16.mxu0 0
    %5034 = vmatpush1.bf16.msra.mxu0 0
    %5035 = vmatprep.subr.bf16.mxu0 0
    %5036 = vmatpush1.bf16.msra.mxu0 0
    %5037 = vmatprep.subr.bf16.mxu0 0
    %5038 = vmatpush1.bf16.msra.mxu0 0
    %5039 = vmatprep.subr.bf16.mxu0 0
    %5040 = vmatpush1.bf16.msra.mxu0 0
    %5041 = vmatprep.subr.bf16.mxu0 0
    %5042 = vmatpush1.bf16.msra.mxu0 %v5025
    %5043 = vmatprep.subr.bf16.mxu0 0
    %5044 = vmatpush2.bf16.msra.mxu0 0
    %5045 = vmatprep.subr.bf16.mxu0 0
    %5046 = vmatpush2.bf16.msra.mxu0 0
    %5047 = vmatprep.subr.bf16.mxu0 0
    %5048 = vmatpush2.bf16.msra.mxu0 0
    %5049 = vmatprep.subr.bf16.mxu0 0
    %5050 = vmatpush2.bf16.msra.mxu0 0
    %5051 = vmatprep.subr.bf16.mxu0 0
    %5052 = vmatpush2.bf16.msra.mxu0 0
    %5053 = vmatprep.subr.bf16.mxu0 0
    %5054 = vmatpush2.bf16.msra.mxu0 0
    %5055 = vmatprep.subr.bf16.mxu0 0
    %5056 = vmatpush2.bf16.msra.mxu0 0
    %5057 = vmatprep.subr.bf16.mxu0 0
    %5058 = vmatpush2.bf16.msra.mxu0 0
    %5059 = vmatprep.mubr.bf16.mxu0 0
    %5060 = vmatmul.mubr.bf16.gmra.mxu0 %v5022
    %v5061 = vpop.f32.mrf.mxu0
    %v5062 = vadd.f32 0.0, %v5061
    %v5063 = vpop.f32.mrf.mxu0
    %v5064 = vpop.f32.mrf.mxu0
    %v5065 = vpop.f32.mrf.mxu0
    %5066 = vdwg.mxu0
    %v5067 = vadd.f32 %v5016, %v5062
    %s5068 = scalar_lea.vmem %s8, 24
    %v5069 = vld [vmem:[%s5068] sm:$0xf]
    %5070 = vrot.lane.b32.xlu0 %v4763, 80
    %v5071 = vpop.permute.xlu0 %5070
    %v5073 = vsel %vm4770, %v5069, 0
    %v5076 = vsel %vm4774, %v5071, 0
    %5078 = vmatprep.subr.bf16.mxu0 0
    %5079 = vmatpush1.bf16.msra.mxu0 0
    %5080 = vmatprep.subr.bf16.mxu0 0
    %5081 = vmatpush1.bf16.msra.mxu0 0
    %5082 = vmatprep.subr.bf16.mxu0 0
    %5083 = vmatpush1.bf16.msra.mxu0 0
    %5084 = vmatprep.subr.bf16.mxu0 0
    %5085 = vmatpush1.bf16.msra.mxu0 0
    %5086 = vmatprep.subr.bf16.mxu0 0
    %5087 = vmatpush1.bf16.msra.mxu0 0
    %5088 = vmatprep.subr.bf16.mxu0 0
    %5089 = vmatpush1.bf16.msra.mxu0 0
    %5090 = vmatprep.subr.bf16.mxu0 0
    %5091 = vmatpush1.bf16.msra.mxu0 0
    %5092 = vmatprep.subr.bf16.mxu0 0
    %5093 = vmatpush1.bf16.msra.mxu0 %v5076
    %5094 = vmatprep.subr.bf16.mxu0 0
    %5095 = vmatpush2.bf16.msra.mxu0 0
    %5096 = vmatprep.subr.bf16.mxu0 0
    %5097 = vmatpush2.bf16.msra.mxu0 0
    %5098 = vmatprep.subr.bf16.mxu0 0
    %5099 = vmatpush2.bf16.msra.mxu0 0
    %5100 = vmatprep.subr.bf16.mxu0 0
    %5101 = vmatpush2.bf16.msra.mxu0 0
    %5102 = vmatprep.subr.bf16.mxu0 0
    %5103 = vmatpush2.bf16.msra.mxu0 0
    %5104 = vmatprep.subr.bf16.mxu0 0
    %5105 = vmatpush2.bf16.msra.mxu0 0
    %5106 = vmatprep.subr.bf16.mxu0 0
    %5107 = vmatpush2.bf16.msra.mxu0 0
    %5108 = vmatprep.subr.bf16.mxu0 0
    %5109 = vmatpush2.bf16.msra.mxu0 0
    %5110 = vmatprep.mubr.bf16.mxu0 0
    %5111 = vmatmul.mubr.bf16.gmra.mxu0 %v5073
    %v5112 = vpop.f32.mrf.mxu0
    %v5113 = vadd.f32 0.0, %v5112
    %v5114 = vpop.f32.mrf.mxu0
    %v5115 = vpop.f32.mrf.mxu0
    %v5116 = vpop.f32.mrf.mxu0
    %5117 = vdwg.mxu0
    %v5118 = vadd.f32 %v5067, %v5113
    %s5119 = scalar_lea.vmem %s8, 28
    %v5120 = vld [vmem:[%s5119] sm:$0xf]
    %5121 = vrot.lane.b32.xlu0 %v4763, 72
    %v5122 = vpop.permute.xlu0 %5121
    %v5124 = vsel %vm4770, %v5120, 0
    %v5127 = vsel %vm4774, %v5122, 0
    %5129 = vmatprep.subr.bf16.mxu0 0
    %5130 = vmatpush1.bf16.msra.mxu0 0
    %5131 = vmatprep.subr.bf16.mxu0 0
    %5132 = vmatpush1.bf16.msra.mxu0 0
    %5133 = vmatprep.subr.bf16.mxu0 0
    %5134 = vmatpush1.bf16.msra.mxu0 0
    %5135 = vmatprep.subr.bf16.mxu0 0
    %5136 = vmatpush1.bf16.msra.mxu0 0
    %5137 = vmatprep.subr.bf16.mxu0 0
    %5138 = vmatpush1.bf16.msra.mxu0 0
    %5139 = vmatprep.subr.bf16.mxu0 0
    %5140 = vmatpush1.bf16.msra.mxu0 0
    %5141 = vmatprep.subr.bf16.mxu0 0
    %5142 = vmatpush1.bf16.msra.mxu0 0
    %5143 = vmatprep.subr.bf16.mxu0 0
    %5144 = vmatpush1.bf16.msra.mxu0 %v5127
    %5145 = vmatprep.subr.bf16.mxu0 0
    %5146 = vmatpush2.bf16.msra.mxu0 0
    %5147 = vmatprep.subr.bf16.mxu0 0
    %5148 = vmatpush2.bf16.msra.mxu0 0
    %5149 = vmatprep.subr.bf16.mxu0 0
    %5150 = vmatpush2.bf16.msra.mxu0 0
    %5151 = vmatprep.subr.bf16.mxu0 0
    %5152 = vmatpush2.bf16.msra.mxu0 0
    %5153 = vmatprep.subr.bf16.mxu0 0
    %5154 = vmatpush2.bf16.msra.mxu0 0
    %5155 = vmatprep.subr.bf16.mxu0 0
    %5156 = vmatpush2.bf16.msra.mxu0 0
    %5157 = vmatprep.subr.bf16.mxu0 0
    %5158 = vmatpush2.bf16.msra.mxu0 0
    %5159 = vmatprep.subr.bf16.mxu0 0
    %5160 = vmatpush2.bf16.msra.mxu0 0
    %5161 = vmatprep.mubr.bf16.mxu0 0
    %5162 = vmatmul.mubr.bf16.gmra.mxu0 %v5124
    %v5163 = vpop.f32.mrf.mxu0
    %v5164 = vadd.f32 0.0, %v5163
    %v5165 = vpop.f32.mrf.mxu0
    %v5166 = vpop.f32.mrf.mxu0
    %v5167 = vpop.f32.mrf.mxu0
    %5168 = vdwg.mxu0
    %v5169 = vadd.f32 %v5118, %v5164
    %s5170 = scalar_lea.vmem %s8, 32
    %v5171 = vld [vmem:[%s5170] sm:$0xf]
    %5172 = vrot.lane.b32.xlu0 %v4763, 64
    %v5173 = vpop.permute.xlu0 %5172
    %v5175 = vsel %vm4770, %v5171, 0
    %v5178 = vsel %vm4774, %v5173, 0
    %5180 = vmatprep.subr.bf16.mxu0 0
    %5181 = vmatpush1.bf16.msra.mxu0 0
    %5182 = vmatprep.subr.bf16.mxu0 0
    %5183 = vmatpush1.bf16.msra.mxu0 0
    %5184 = vmatprep.subr.bf16.mxu0 0
    %5185 = vmatpush1.bf16.msra.mxu0 0
    %5186 = vmatprep.subr.bf16.mxu0 0
    %5187 = vmatpush1.bf16.msra.mxu0 0
    %5188 = vmatprep.subr.bf16.mxu0 0
    %5189 = vmatpush1.bf16.msra.mxu0 0
    %5190 = vmatprep.subr.bf16.mxu0 0
    %5191 = vmatpush1.bf16.msra.mxu0 0
    %5192 = vmatprep.subr.bf16.mxu0 0
    %5193 = vmatpush1.bf16.msra.mxu0 0
    %5194 = vmatprep.subr.bf16.mxu0 0
    %5195 = vmatpush1.bf16.msra.mxu0 %v5178
    %5196 = vmatprep.subr.bf16.mxu0 0
    %5197 = vmatpush2.bf16.msra.mxu0 0
    %5198 = vmatprep.subr.bf16.mxu0 0
    %5199 = vmatpush2.bf16.msra.mxu0 0
    %5200 = vmatprep.subr.bf16.mxu0 0
    %5201 = vmatpush2.bf16.msra.mxu0 0
    %5202 = vmatprep.subr.bf16.mxu0 0
    %5203 = vmatpush2.bf16.msra.mxu0 0
    %5204 = vmatprep.subr.bf16.mxu0 0
    %5205 = vmatpush2.bf16.msra.mxu0 0
    %5206 = vmatprep.subr.bf16.mxu0 0
    %5207 = vmatpush2.bf16.msra.mxu0 0
    %5208 = vmatprep.subr.bf16.mxu0 0
    %5209 = vmatpush2.bf16.msra.mxu0 0
    %5210 = vmatprep.subr.bf16.mxu0 0
    %5211 = vmatpush2.bf16.msra.mxu0 0
    %5212 = vmatprep.mubr.bf16.mxu0 0
    %5213 = vmatmul.mubr.bf16.gmra.mxu0 %v5175
    %v5214 = vpop.f32.mrf.mxu0
    %v5215 = vadd.f32 0.0, %v5214
    %v5216 = vpop.f32.mrf.mxu0
    %v5217 = vpop.f32.mrf.mxu0
    %v5218 = vpop.f32.mrf.mxu0
    %5219 = vdwg.mxu0
    %v5220 = vadd.f32 %v5169, %v5215
    %v5221 = vlaneseq
    %v5222 = vshrl.u32 %v5221, 7
    %v5223 = vsub.s32 0, %v5222
    %v5224 = vrot.slane %v4715, %v5223
    %v5225 = vadd.f32 %v5220, %v5224
    %v5226 = vmax.f32 %v5225, 0.0
    %v5227 = vadd.f32 %v5226, %v4202
    %v5228 = vpack.c.bf16 %v5227, %v5227
    %v5229 = vld [vmem:[#allocation5 + $0x5] sm:$0x1]
    %v5230 = vld [vmem:[%s2 + $0x30] sm:$0xf]
    %v5232 = vsel %vm2705, %v5228, 0
    %v5235 = vsel %vm2730, %v5230, 0
    %5237 = vmatprep.subr.bf16.mxu0 0
    %5238 = vmatpush1.bf16.msra.mxu0 0
    %5239 = vmatprep.subr.bf16.mxu0 0
    %5240 = vmatpush1.bf16.msra.mxu0 0
    %5241 = vmatprep.subr.bf16.mxu0 0
    %5242 = vmatpush1.bf16.msra.mxu0 0
    %5243 = vmatprep.subr.bf16.mxu0 0
    %5244 = vmatpush1.bf16.msra.mxu0 0
    %5245 = vmatprep.subr.bf16.mxu0 0
    %5246 = vmatpush1.bf16.msra.mxu0 0
    %5247 = vmatprep.subr.bf16.mxu0 0
    %5248 = vmatpush1.bf16.msra.mxu0 0
    %5249 = vmatprep.subr.bf16.mxu0 0
    %5250 = vmatpush1.bf16.msra.mxu0 0
    %5251 = vmatprep.subr.bf16.mxu0 0
    %5252 = vmatpush1.bf16.msra.mxu0 %v5235
    %5253 = vmatprep.subr.bf16.mxu0 0
    %5254 = vmatpush2.bf16.msra.mxu0 0
    %5255 = vmatprep.subr.bf16.mxu0 0
    %5256 = vmatpush2.bf16.msra.mxu0 0
    %5257 = vmatprep.subr.bf16.mxu0 0
    %5258 = vmatpush2.bf16.msra.mxu0 0
    %5259 = vmatprep.subr.bf16.mxu0 0
    %5260 = vmatpush2.bf16.msra.mxu0 0
    %5261 = vmatprep.subr.bf16.mxu0 0
    %5262 = vmatpush2.bf16.msra.mxu0 0
    %5263 = vmatprep.subr.bf16.mxu0 0
    %5264 = vmatpush2.bf16.msra.mxu0 0
    %5265 = vmatprep.subr.bf16.mxu0 0
    %5266 = vmatpush2.bf16.msra.mxu0 0
    %5267 = vmatprep.subr.bf16.mxu0 0
    %5268 = vmatpush2.bf16.msra.mxu0 0
    %5269 = vmatprep.mubr.bf16.mxu0 0
    %5270 = vmatmul.mubr.bf16.gmra.mxu0 %v5232
    %v5271 = vpop.f32.mrf.mxu0
    %v5272 = vadd.f32 0.0, %v5271
    %v5273 = vpop.f32.mrf.mxu0
    %v5274 = vpop.f32.mrf.mxu0
    %v5275 = vpop.f32.mrf.mxu0
    %5276 = vdwg.mxu0
    %v5277 = vpack.c.bf16 %v5272, %v5272
    %v5278 = vld [vmem:[%s9] sm:$0xf]
    %v5279 = vld [vmem:[%s9 + $0x4] sm:$0xf]
    %v5280 = vld [vmem:[%s9 + $0x8] sm:$0xf]
    %v5281 = vld [vmem:[%s9 + $0xc] sm:$0xf]
    %s5282 = scalar_lea.vmem %s9, 16
    %v5283 = vld [vmem:[%s5282] sm:$0xf]
    %v5284 = vld [vmem:[%s5282 + $0x4] sm:$0xf]
    %v5285 = vld [vmem:[%s5282 + $0x8] sm:$0xf]
    %v5286 = vld [vmem:[%s5282 + $0xc] sm:$0xf]
    %v5291 = vunpack.c.l.b16 %v5283
    %v5292 = vunpack.c.l.b16 %v5284
    %v5293 = vunpack.c.l.b16 %v5285
    %v5294 = vunpack.c.l.b16 %v5286
    %v5295 = vpack.c.b16 %v5292, %v5291
    %v5296 = vpack.c.b16 %v5294, %v5293
    %5298 = vrot.lane.b32.xlu0 %v5277, 120
    %v5299 = vpop.permute.xlu0 %5298
    %v5301 = vsel %vm2705, %v5295, 0
    %v5304 = vsel %vm2705, %v5296, 0
    %v5307 = vsel %vm2730, %v5299, 0
    %5309 = vmatprep.subr.bf16.mxu0 0
    %5310 = vmatpush1.bf16.msra.mxu0 0
    %5311 = vmatprep.subr.bf16.mxu0 0
    %5312 = vmatpush1.bf16.msra.mxu0 0
    %5313 = vmatprep.subr.bf16.mxu0 0
    %5314 = vmatpush1.bf16.msra.mxu0 0
    %5315 = vmatprep.subr.bf16.mxu0 0
    %5316 = vmatpush1.bf16.msra.mxu0 0
    %5317 = vmatprep.subr.bf16.mxu0 0
    %5318 = vmatpush1.bf16.msra.mxu0 0
    %5319 = vmatprep.subr.bf16.mxu0 0
    %5320 = vmatpush1.bf16.msra.mxu0 0
    %5321 = vmatprep.subr.bf16.mxu0 0
    %5322 = vmatpush1.bf16.msra.mxu0 0
    %5323 = vmatprep.subr.bf16.mxu0 0
    %5324 = vmatpush1.bf16.msra.mxu0 %v5307
    %5325 = vmatprep.subr.bf16.mxu0 0
    %5326 = vmatpush2.bf16.msra.mxu0 0
    %5327 = vmatprep.subr.bf16.mxu0 0
    %5328 = vmatpush2.bf16.msra.mxu0 0
    %5329 = vmatprep.subr.bf16.mxu0 0
    %5330 = vmatpush2.bf16.msra.mxu0 0
    %5331 = vmatprep.subr.bf16.mxu0 0
    %5332 = vmatpush2.bf16.msra.mxu0 0
    %5333 = vmatprep.subr.bf16.mxu0 0
    %5334 = vmatpush2.bf16.msra.mxu0 0
    %5335 = vmatprep.subr.bf16.mxu0 0
    %5336 = vmatpush2.bf16.msra.mxu0 0
    %5337 = vmatprep.subr.bf16.mxu0 0
    %5338 = vmatpush2.bf16.msra.mxu0 0
    %5339 = vmatprep.subr.bf16.mxu0 0
    %5340 = vmatpush2.bf16.msra.mxu0 0
    %5341 = vmatprep.mubr.bf16.mxu0 0
    %5342 = vmatmul.mubr.bf16.gmra.mxu0 %v5301
    %v5343 = vpop.f32.mrf.mxu0
    %v5344 = vadd.f32 0.0, %v5343
    %v5345 = vpop.f32.mrf.mxu0
    %v5346 = vpop.f32.mrf.mxu0
    %v5347 = vadd.f32 0.0, %v5346
    %v5348 = vpop.f32.mrf.mxu0
    %5349 = vmatprep.mubr.bf16.mxu0 0
    %5350 = vmatmul.mubr.bf16.gmra.mxu0 %v5304
    %v5351 = vpop.f32.mrf.mxu0
    %v5352 = vadd.f32 0.0, %v5351
    %v5353 = vpop.f32.mrf.mxu0
    %v5354 = vpop.f32.mrf.mxu0
    %v5355 = vadd.f32 0.0, %v5354
    %v5356 = vpop.f32.mrf.mxu0
    %5357 = vdwg.mxu0
    %v5362 = vunpack.c.l.b16 %v5278
    %v5363 = vunpack.c.l.b16 %v5279
    %v5364 = vunpack.c.l.b16 %v5280
    %v5365 = vunpack.c.l.b16 %v5281
    %v5366 = vpack.c.b16 %v5363, %v5362
    %v5367 = vpack.c.b16 %v5365, %v5364
    %v5369 = vsel %vm2705, %v5366, 0
    %v5372 = vsel %vm2705, %v5367, 0
    %v5375 = vsel %vm2730, %v5277, 0
    %5377 = vmatprep.subr.bf16.mxu0 0
    %5378 = vmatpush1.bf16.msra.mxu0 0
    %5379 = vmatprep.subr.bf16.mxu0 0
    %5380 = vmatpush1.bf16.msra.mxu0 0
    %5381 = vmatprep.subr.bf16.mxu0 0
    %5382 = vmatpush1.bf16.msra.mxu0 0
    %5383 = vmatprep.subr.bf16.mxu0 0
    %5384 = vmatpush1.bf16.msra.mxu0 0
    %5385 = vmatprep.subr.bf16.mxu0 0
    %5386 = vmatpush1.bf16.msra.mxu0 0
    %5387 = vmatprep.subr.bf16.mxu0 0
    %5388 = vmatpush1.bf16.msra.mxu0 0
    %5389 = vmatprep.subr.bf16.mxu0 0
    %5390 = vmatpush1.bf16.msra.mxu0 0
    %5391 = vmatprep.subr.bf16.mxu0 0
    %5392 = vmatpush1.bf16.msra.mxu0 %v5375
    %5393 = vmatprep.subr.bf16.mxu0 0
    %5394 = vmatpush2.bf16.msra.mxu0 0
    %5395 = vmatprep.subr.bf16.mxu0 0
    %5396 = vmatpush2.bf16.msra.mxu0 0
    %5397 = vmatprep.subr.bf16.mxu0 0
    %5398 = vmatpush2.bf16.msra.mxu0 0
    %5399 = vmatprep.subr.bf16.mxu0 0
    %5400 = vmatpush2.bf16.msra.mxu0 0
    %5401 = vmatprep.subr.bf16.mxu0 0
    %5402 = vmatpush2.bf16.msra.mxu0 0
    %5403 = vmatprep.subr.bf16.mxu0 0
    %5404 = vmatpush2.bf16.msra.mxu0 0
    %5405 = vmatprep.subr.bf16.mxu0 0
    %5406 = vmatpush2.bf16.msra.mxu0 0
    %5407 = vmatprep.subr.bf16.mxu0 0
    %5408 = vmatpush2.bf16.msra.mxu0 0
    %5409 = vmatprep.mubr.bf16.mxu0 0
    %5410 = vmatmul.mubr.bf16.gmra.mxu0 %v5369
    %v5411 = vpop.f32.mrf.mxu0
    %v5412 = vadd.f32 %v5344, %v5411
    %v5413 = vpop.f32.mrf.mxu0
    %v5414 = vpop.f32.mrf.mxu0
    %v5415 = vadd.f32 %v5347, %v5414
    %v5416 = vpop.f32.mrf.mxu0
    %5417 = vmatprep.mubr.bf16.mxu0 0
    %5418 = vmatmul.mubr.bf16.gmra.mxu0 %v5372
    %v5419 = vpop.f32.mrf.mxu0
    %v5420 = vadd.f32 %v5352, %v5419
    %v5421 = vpop.f32.mrf.mxu0
    %v5422 = vpop.f32.mrf.mxu0
    %v5423 = vadd.f32 %v5355, %v5422
    %v5424 = vpop.f32.mrf.mxu0
    %5425 = vdwg.mxu0
    %s5426 = scalar_lea.vmem %s9, 32
    %v5427 = vld [vmem:[%s5426] sm:$0xf]
    %v5428 = vld [vmem:[%s5426 + $0x4] sm:$0xf]
    %v5429 = vld [vmem:[%s5426 + $0x8] sm:$0xf]
    %v5430 = vld [vmem:[%s5426 + $0xc] sm:$0xf]
    %v5435 = vunpack.c.l.b16 %v5427
    %v5436 = vunpack.c.l.b16 %v5428
    %v5437 = vunpack.c.l.b16 %v5429
    %v5438 = vunpack.c.l.b16 %v5430
    %v5439 = vpack.c.b16 %v5436, %v5435
    %v5440 = vpack.c.b16 %v5438, %v5437
    %5441 = vrot.lane.b32.xlu0 %v5277, 112
    %v5442 = vpop.permute.xlu0 %5441
    %v5444 = vsel %vm2705, %v5439, 0
    %v5447 = vsel %vm2705, %v5440, 0
    %v5450 = vsel %vm2730, %v5442, 0
    %5452 = vmatprep.subr.bf16.mxu0 0
    %5453 = vmatpush1.bf16.msra.mxu0 0
    %5454 = vmatprep.subr.bf16.mxu0 0
    %5455 = vmatpush1.bf16.msra.mxu0 0
    %5456 = vmatprep.subr.bf16.mxu0 0
    %5457 = vmatpush1.bf16.msra.mxu0 0
    %5458 = vmatprep.subr.bf16.mxu0 0
    %5459 = vmatpush1.bf16.msra.mxu0 0
    %5460 = vmatprep.subr.bf16.mxu0 0
    %5461 = vmatpush1.bf16.msra.mxu0 0
    %5462 = vmatprep.subr.bf16.mxu0 0
    %5463 = vmatpush1.bf16.msra.mxu0 0
    %5464 = vmatprep.subr.bf16.mxu0 0
    %5465 = vmatpush1.bf16.msra.mxu0 0
    %5466 = vmatprep.subr.bf16.mxu0 0
    %5467 = vmatpush1.bf16.msra.mxu0 %v5450
    %5468 = vmatprep.subr.bf16.mxu0 0
    %5469 = vmatpush2.bf16.msra.mxu0 0
    %5470 = vmatprep.subr.bf16.mxu0 0
    %5471 = vmatpush2.bf16.msra.mxu0 0
    %5472 = vmatprep.subr.bf16.mxu0 0
    %5473 = vmatpush2.bf16.msra.mxu0 0
    %5474 = vmatprep.subr.bf16.mxu0 0
    %5475 = vmatpush2.bf16.msra.mxu0 0
    %5476 = vmatprep.subr.bf16.mxu0 0
    %5477 = vmatpush2.bf16.msra.mxu0 0
    %5478 = vmatprep.subr.bf16.mxu0 0
    %5479 = vmatpush2.bf16.msra.mxu0 0
    %5480 = vmatprep.subr.bf16.mxu0 0
    %5481 = vmatpush2.bf16.msra.mxu0 0
    %5482 = vmatprep.subr.bf16.mxu0 0
    %5483 = vmatpush2.bf16.msra.mxu0 0
    %5484 = vmatprep.mubr.bf16.mxu0 0
    %5485 = vmatmul.mubr.bf16.gmra.mxu0 %v5444
    %v5486 = vpop.f32.mrf.mxu0
    %v5487 = vadd.f32 0.0, %v5486
    %v5488 = vpop.f32.mrf.mxu0
    %v5489 = vpop.f32.mrf.mxu0
    %v5490 = vadd.f32 0.0, %v5489
    %v5491 = vpop.f32.mrf.mxu0
    %5492 = vmatprep.mubr.bf16.mxu0 0
    %5493 = vmatmul.mubr.bf16.gmra.mxu0 %v5447
    %v5494 = vpop.f32.mrf.mxu0
    %v5495 = vadd.f32 0.0, %v5494
    %v5496 = vpop.f32.mrf.mxu0
    %v5497 = vpop.f32.mrf.mxu0
    %v5498 = vadd.f32 0.0, %v5497
    %v5499 = vpop.f32.mrf.mxu0
    %5500 = vdwg.mxu0
    %v5501 = vadd.f32 %v5412, %v5487
    %v5502 = vadd.f32 %v5415, %v5490
    %v5503 = vadd.f32 %v5420, %v5495
    %v5504 = vadd.f32 %v5423, %v5498
    %s5505 = scalar_lea.vmem %s9, 48
    %v5506 = vld [vmem:[%s5505] sm:$0xf]
    %v5507 = vld [vmem:[%s5505 + $0x4] sm:$0xf]
    %v5508 = vld [vmem:[%s5505 + $0x8] sm:$0xf]
    %v5509 = vld [vmem:[%s5505 + $0xc] sm:$0xf]
    %v5514 = vunpack.c.l.b16 %v5506
    %v5515 = vunpack.c.l.b16 %v5507
    %v5516 = vunpack.c.l.b16 %v5508
    %v5517 = vunpack.c.l.b16 %v5509
    %v5518 = vpack.c.b16 %v5515, %v5514
    %v5519 = vpack.c.b16 %v5517, %v5516
    %5520 = vrot.lane.b32.xlu0 %v5277, 104
    %v5521 = vpop.permute.xlu0 %5520
    %v5523 = vsel %vm2705, %v5518, 0
    %v5526 = vsel %vm2705, %v5519, 0
    %v5529 = vsel %vm2730, %v5521, 0
    %5531 = vmatprep.subr.bf16.mxu0 0
    %5532 = vmatpush1.bf16.msra.mxu0 0
    %5533 = vmatprep.subr.bf16.mxu0 0
    %5534 = vmatpush1.bf16.msra.mxu0 0
    %5535 = vmatprep.subr.bf16.mxu0 0
    %5536 = vmatpush1.bf16.msra.mxu0 0
    %5537 = vmatprep.subr.bf16.mxu0 0
    %5538 = vmatpush1.bf16.msra.mxu0 0
    %5539 = vmatprep.subr.bf16.mxu0 0
    %5540 = vmatpush1.bf16.msra.mxu0 0
    %5541 = vmatprep.subr.bf16.mxu0 0
    %5542 = vmatpush1.bf16.msra.mxu0 0
    %5543 = vmatprep.subr.bf16.mxu0 0
    %5544 = vmatpush1.bf16.msra.mxu0 0
    %5545 = vmatprep.subr.bf16.mxu0 0
    %5546 = vmatpush1.bf16.msra.mxu0 %v5529
    %5547 = vmatprep.subr.bf16.mxu0 0
    %5548 = vmatpush2.bf16.msra.mxu0 0
    %5549 = vmatprep.subr.bf16.mxu0 0
    %5550 = vmatpush2.bf16.msra.mxu0 0
    %5551 = vmatprep.subr.bf16.mxu0 0
    %5552 = vmatpush2.bf16.msra.mxu0 0
    %5553 = vmatprep.subr.bf16.mxu0 0
    %5554 = vmatpush2.bf16.msra.mxu0 0
    %5555 = vmatprep.subr.bf16.mxu0 0
    %5556 = vmatpush2.bf16.msra.mxu0 0
    %5557 = vmatprep.subr.bf16.mxu0 0
    %5558 = vmatpush2.bf16.msra.mxu0 0
    %5559 = vmatprep.subr.bf16.mxu0 0
    %5560 = vmatpush2.bf16.msra.mxu0 0
    %5561 = vmatprep.subr.bf16.mxu0 0
    %5562 = vmatpush2.bf16.msra.mxu0 0
    %5563 = vmatprep.mubr.bf16.mxu0 0
    %5564 = vmatmul.mubr.bf16.gmra.mxu0 %v5523
    %v5565 = vpop.f32.mrf.mxu0
    %v5566 = vadd.f32 0.0, %v5565
    %v5567 = vpop.f32.mrf.mxu0
    %v5568 = vpop.f32.mrf.mxu0
    %v5569 = vadd.f32 0.0, %v5568
    %v5570 = vpop.f32.mrf.mxu0
    %5571 = vmatprep.mubr.bf16.mxu0 0
    %5572 = vmatmul.mubr.bf16.gmra.mxu0 %v5526
    %v5573 = vpop.f32.mrf.mxu0
    %v5574 = vadd.f32 0.0, %v5573
    %v5575 = vpop.f32.mrf.mxu0
    %v5576 = vpop.f32.mrf.mxu0
    %v5577 = vadd.f32 0.0, %v5576
    %v5578 = vpop.f32.mrf.mxu0
    %5579 = vdwg.mxu0
    %v5580 = vadd.f32 %v5501, %v5566
    %v5581 = vadd.f32 %v5502, %v5569
    %v5582 = vadd.f32 %v5503, %v5574
    %v5583 = vadd.f32 %v5504, %v5577
    %s5584 = scalar_lea.vmem %s9, 64
    %v5585 = vld [vmem:[%s5584] sm:$0xf]
    %v5586 = vld [vmem:[%s5584 + $0x4] sm:$0xf]
    %v5587 = vld [vmem:[%s5584 + $0x8] sm:$0xf]
    %v5588 = vld [vmem:[%s5584 + $0xc] sm:$0xf]
    %v5593 = vunpack.c.l.b16 %v5585
    %v5594 = vunpack.c.l.b16 %v5586
    %v5595 = vunpack.c.l.b16 %v5587
    %v5596 = vunpack.c.l.b16 %v5588
    %v5597 = vpack.c.b16 %v5594, %v5593
    %v5598 = vpack.c.b16 %v5596, %v5595
    %5599 = vrot.lane.b32.xlu0 %v5277, 96
    %v5600 = vpop.permute.xlu0 %5599
    %v5602 = vsel %vm2705, %v5597, 0
    %v5605 = vsel %vm2705, %v5598, 0
    %v5608 = vsel %vm2730, %v5600, 0
    %5610 = vmatprep.subr.bf16.mxu0 0
    %5611 = vmatpush1.bf16.msra.mxu0 0
    %5612 = vmatprep.subr.bf16.mxu0 0
    %5613 = vmatpush1.bf16.msra.mxu0 0
    %5614 = vmatprep.subr.bf16.mxu0 0
    %5615 = vmatpush1.bf16.msra.mxu0 0
    %5616 = vmatprep.subr.bf16.mxu0 0
    %5617 = vmatpush1.bf16.msra.mxu0 0
    %5618 = vmatprep.subr.bf16.mxu0 0
    %5619 = vmatpush1.bf16.msra.mxu0 0
    %5620 = vmatprep.subr.bf16.mxu0 0
    %5621 = vmatpush1.bf16.msra.mxu0 0
    %5622 = vmatprep.subr.bf16.mxu0 0
    %5623 = vmatpush1.bf16.msra.mxu0 0
    %5624 = vmatprep.subr.bf16.mxu0 0
    %5625 = vmatpush1.bf16.msra.mxu0 %v5608
    %5626 = vmatprep.subr.bf16.mxu0 0
    %5627 = vmatpush2.bf16.msra.mxu0 0
    %5628 = vmatprep.subr.bf16.mxu0 0
    %5629 = vmatpush2.bf16.msra.mxu0 0
    %5630 = vmatprep.subr.bf16.mxu0 0
    %5631 = vmatpush2.bf16.msra.mxu0 0
    %5632 = vmatprep.subr.bf16.mxu0 0
    %5633 = vmatpush2.bf16.msra.mxu0 0
    %5634 = vmatprep.subr.bf16.mxu0 0
    %5635 = vmatpush2.bf16.msra.mxu0 0
    %5636 = vmatprep.subr.bf16.mxu0 0
    %5637 = vmatpush2.bf16.msra.mxu0 0
    %5638 = vmatprep.subr.bf16.mxu0 0
    %5639 = vmatpush2.bf16.msra.mxu0 0
    %5640 = vmatprep.subr.bf16.mxu0 0
    %5641 = vmatpush2.bf16.msra.mxu0 0
    %5642 = vmatprep.mubr.bf16.mxu0 0
    %5643 = vmatmul.mubr.bf16.gmra.mxu0 %v5602
    %v5644 = vpop.f32.mrf.mxu0
    %v5645 = vadd.f32 0.0, %v5644
    %v5646 = vpop.f32.mrf.mxu0
    %v5647 = vpop.f32.mrf.mxu0
    %v5648 = vadd.f32 0.0, %v5647
    %v5649 = vpop.f32.mrf.mxu0
    %5650 = vmatprep.mubr.bf16.mxu0 0
    %5651 = vmatmul.mubr.bf16.gmra.mxu0 %v5605
    %v5652 = vpop.f32.mrf.mxu0
    %v5653 = vadd.f32 0.0, %v5652
    %v5654 = vpop.f32.mrf.mxu0
    %v5655 = vpop.f32.mrf.mxu0
    %v5656 = vadd.f32 0.0, %v5655
    %v5657 = vpop.f32.mrf.mxu0
    %5658 = vdwg.mxu0
    %v5659 = vadd.f32 %v5580, %v5645
    %v5660 = vadd.f32 %v5581, %v5648
    %v5661 = vadd.f32 %v5582, %v5653
    %v5662 = vadd.f32 %v5583, %v5656
    %s5663 = scalar_lea.vmem %s9, 80
    %v5664 = vld [vmem:[%s5663] sm:$0xf]
    %v5665 = vld [vmem:[%s5663 + $0x4] sm:$0xf]
    %v5666 = vld [vmem:[%s5663 + $0x8] sm:$0xf]
    %v5667 = vld [vmem:[%s5663 + $0xc] sm:$0xf]
    %v5672 = vunpack.c.l.b16 %v5664
    %v5673 = vunpack.c.l.b16 %v5665
    %v5674 = vunpack.c.l.b16 %v5666
    %v5675 = vunpack.c.l.b16 %v5667
    %v5676 = vpack.c.b16 %v5673, %v5672
    %v5677 = vpack.c.b16 %v5675, %v5674
    %5678 = vrot.lane.b32.xlu0 %v5277, 88
    %v5679 = vpop.permute.xlu0 %5678
    %v5681 = vsel %vm2705, %v5676, 0
    %v5684 = vsel %vm2705, %v5677, 0
    %v5687 = vsel %vm2730, %v5679, 0
    %5689 = vmatprep.subr.bf16.mxu0 0
    %5690 = vmatpush1.bf16.msra.mxu0 0
    %5691 = vmatprep.subr.bf16.mxu0 0
    %5692 = vmatpush1.bf16.msra.mxu0 0
    %5693 = vmatprep.subr.bf16.mxu0 0
    %5694 = vmatpush1.bf16.msra.mxu0 0
    %5695 = vmatprep.subr.bf16.mxu0 0
    %5696 = vmatpush1.bf16.msra.mxu0 0
    %5697 = vmatprep.subr.bf16.mxu0 0
    %5698 = vmatpush1.bf16.msra.mxu0 0
    %5699 = vmatprep.subr.bf16.mxu0 0
    %5700 = vmatpush1.bf16.msra.mxu0 0
    %5701 = vmatprep.subr.bf16.mxu0 0
    %5702 = vmatpush1.bf16.msra.mxu0 0
    %5703 = vmatprep.subr.bf16.mxu0 0
    %5704 = vmatpush1.bf16.msra.mxu0 %v5687
    %5705 = vmatprep.subr.bf16.mxu0 0
    %5706 = vmatpush2.bf16.msra.mxu0 0
    %5707 = vmatprep.subr.bf16.mxu0 0
    %5708 = vmatpush2.bf16.msra.mxu0 0
    %5709 = vmatprep.subr.bf16.mxu0 0
    %5710 = vmatpush2.bf16.msra.mxu0 0
    %5711 = vmatprep.subr.bf16.mxu0 0
    %5712 = vmatpush2.bf16.msra.mxu0 0
    %5713 = vmatprep.subr.bf16.mxu0 0
    %5714 = vmatpush2.bf16.msra.mxu0 0
    %5715 = vmatprep.subr.bf16.mxu0 0
    %5716 = vmatpush2.bf16.msra.mxu0 0
    %5717 = vmatprep.subr.bf16.mxu0 0
    %5718 = vmatpush2.bf16.msra.mxu0 0
    %5719 = vmatprep.subr.bf16.mxu0 0
    %5720 = vmatpush2.bf16.msra.mxu0 0
    %5721 = vmatprep.mubr.bf16.mxu0 0
    %5722 = vmatmul.mubr.bf16.gmra.mxu0 %v5681
    %v5723 = vpop.f32.mrf.mxu0
    %v5724 = vadd.f32 0.0, %v5723
    %v5725 = vpop.f32.mrf.mxu0
    %v5726 = vpop.f32.mrf.mxu0
    %v5727 = vadd.f32 0.0, %v5726
    %v5728 = vpop.f32.mrf.mxu0
    %5729 = vmatprep.mubr.bf16.mxu0 0
    %5730 = vmatmul.mubr.bf16.gmra.mxu0 %v5684
    %v5731 = vpop.f32.mrf.mxu0
    %v5732 = vadd.f32 0.0, %v5731
    %v5733 = vpop.f32.mrf.mxu0
    %v5734 = vpop.f32.mrf.mxu0
    %v5735 = vadd.f32 0.0, %v5734
    %v5736 = vpop.f32.mrf.mxu0
    %5737 = vdwg.mxu0
    %v5738 = vadd.f32 %v5659, %v5724
    %v5739 = vadd.f32 %v5660, %v5727
    %v5740 = vadd.f32 %v5661, %v5732
    %v5741 = vadd.f32 %v5662, %v5735
    %s5742 = scalar_lea.vmem %s9, 96
    %v5743 = vld [vmem:[%s5742] sm:$0xf]
    %v5744 = vld [vmem:[%s5742 + $0x4] sm:$0xf]
    %v5745 = vld [vmem:[%s5742 + $0x8] sm:$0xf]
    %v5746 = vld [vmem:[%s5742 + $0xc] sm:$0xf]
    %v5751 = vunpack.c.l.b16 %v5743
    %v5752 = vunpack.c.l.b16 %v5744
    %v5753 = vunpack.c.l.b16 %v5745
    %v5754 = vunpack.c.l.b16 %v5746
    %v5755 = vpack.c.b16 %v5752, %v5751
    %v5756 = vpack.c.b16 %v5754, %v5753
    %5757 = vrot.lane.b32.xlu0 %v5277, 80
    %v5758 = vpop.permute.xlu0 %5757
    %v5760 = vsel %vm2705, %v5755, 0
    %v5763 = vsel %vm2705, %v5756, 0
    %v5766 = vsel %vm2730, %v5758, 0
    %5768 = vmatprep.subr.bf16.mxu0 0
    %5769 = vmatpush1.bf16.msra.mxu0 0
    %5770 = vmatprep.subr.bf16.mxu0 0
    %5771 = vmatpush1.bf16.msra.mxu0 0
    %5772 = vmatprep.subr.bf16.mxu0 0
    %5773 = vmatpush1.bf16.msra.mxu0 0
    %5774 = vmatprep.subr.bf16.mxu0 0
    %5775 = vmatpush1.bf16.msra.mxu0 0
    %5776 = vmatprep.subr.bf16.mxu0 0
    %5777 = vmatpush1.bf16.msra.mxu0 0
    %5778 = vmatprep.subr.bf16.mxu0 0
    %5779 = vmatpush1.bf16.msra.mxu0 0
    %5780 = vmatprep.subr.bf16.mxu0 0
    %5781 = vmatpush1.bf16.msra.mxu0 0
    %5782 = vmatprep.subr.bf16.mxu0 0
    %5783 = vmatpush1.bf16.msra.mxu0 %v5766
    %5784 = vmatprep.subr.bf16.mxu0 0
    %5785 = vmatpush2.bf16.msra.mxu0 0
    %5786 = vmatprep.subr.bf16.mxu0 0
    %5787 = vmatpush2.bf16.msra.mxu0 0
    %5788 = vmatprep.subr.bf16.mxu0 0
    %5789 = vmatpush2.bf16.msra.mxu0 0
    %5790 = vmatprep.subr.bf16.mxu0 0
    %5791 = vmatpush2.bf16.msra.mxu0 0
    %5792 = vmatprep.subr.bf16.mxu0 0
    %5793 = vmatpush2.bf16.msra.mxu0 0
    %5794 = vmatprep.subr.bf16.mxu0 0
    %5795 = vmatpush2.bf16.msra.mxu0 0
    %5796 = vmatprep.subr.bf16.mxu0 0
    %5797 = vmatpush2.bf16.msra.mxu0 0
    %5798 = vmatprep.subr.bf16.mxu0 0
    %5799 = vmatpush2.bf16.msra.mxu0 0
    %5800 = vmatprep.mubr.bf16.mxu0 0
    %5801 = vmatmul.mubr.bf16.gmra.mxu0 %v5760
    %v5802 = vpop.f32.mrf.mxu0
    %v5803 = vadd.f32 0.0, %v5802
    %v5804 = vpop.f32.mrf.mxu0
    %v5805 = vpop.f32.mrf.mxu0
    %v5806 = vadd.f32 0.0, %v5805
    %v5807 = vpop.f32.mrf.mxu0
    %5808 = vmatprep.mubr.bf16.mxu0 0
    %5809 = vmatmul.mubr.bf16.gmra.mxu0 %v5763
    %v5810 = vpop.f32.mrf.mxu0
    %v5811 = vadd.f32 0.0, %v5810
    %v5812 = vpop.f32.mrf.mxu0
    %v5813 = vpop.f32.mrf.mxu0
    %v5814 = vadd.f32 0.0, %v5813
    %v5815 = vpop.f32.mrf.mxu0
    %5816 = vdwg.mxu0
    %v5817 = vadd.f32 %v5738, %v5803
    %v5818 = vadd.f32 %v5739, %v5806
    %v5819 = vadd.f32 %v5740, %v5811
    %v5820 = vadd.f32 %v5741, %v5814
    %s5821 = scalar_lea.vmem %s9, 112
    %v5822 = vld [vmem:[%s5821] sm:$0xf]
    %v5823 = vld [vmem:[%s5821 + $0x4] sm:$0xf]
    %v5824 = vld [vmem:[%s5821 + $0x8] sm:$0xf]
    %v5825 = vld [vmem:[%s5821 + $0xc] sm:$0xf]
    %v5830 = vunpack.c.l.b16 %v5822
    %v5831 = vunpack.c.l.b16 %v5823
    %v5832 = vunpack.c.l.b16 %v5824
    %v5833 = vunpack.c.l.b16 %v5825
    %v5834 = vpack.c.b16 %v5831, %v5830
    %v5835 = vpack.c.b16 %v5833, %v5832
    %5836 = vrot.lane.b32.xlu0 %v5277, 72
    %v5837 = vpop.permute.xlu0 %5836
    %v5839 = vsel %vm2705, %v5834, 0
    %v5842 = vsel %vm2705, %v5835, 0
    %v5845 = vsel %vm2730, %v5837, 0
    %5847 = vmatprep.subr.bf16.mxu0 0
    %5848 = vmatpush1.bf16.msra.mxu0 0
    %5849 = vmatprep.subr.bf16.mxu0 0
    %5850 = vmatpush1.bf16.msra.mxu0 0
    %5851 = vmatprep.subr.bf16.mxu0 0
    %5852 = vmatpush1.bf16.msra.mxu0 0
    %5853 = vmatprep.subr.bf16.mxu0 0
    %5854 = vmatpush1.bf16.msra.mxu0 0
    %5855 = vmatprep.subr.bf16.mxu0 0
    %5856 = vmatpush1.bf16.msra.mxu0 0
    %5857 = vmatprep.subr.bf16.mxu0 0
    %5858 = vmatpush1.bf16.msra.mxu0 0
    %5859 = vmatprep.subr.bf16.mxu0 0
    %5860 = vmatpush1.bf16.msra.mxu0 0
    %5861 = vmatprep.subr.bf16.mxu0 0
    %5862 = vmatpush1.bf16.msra.mxu0 %v5845
    %5863 = vmatprep.subr.bf16.mxu0 0
    %5864 = vmatpush2.bf16.msra.mxu0 0
    %5865 = vmatprep.subr.bf16.mxu0 0
    %5866 = vmatpush2.bf16.msra.mxu0 0
    %5867 = vmatprep.subr.bf16.mxu0 0
    %5868 = vmatpush2.bf16.msra.mxu0 0
    %5869 = vmatprep.subr.bf16.mxu0 0
    %5870 = vmatpush2.bf16.msra.mxu0 0
    %5871 = vmatprep.subr.bf16.mxu0 0
    %5872 = vmatpush2.bf16.msra.mxu0 0
    %5873 = vmatprep.subr.bf16.mxu0 0
    %5874 = vmatpush2.bf16.msra.mxu0 0
    %5875 = vmatprep.subr.bf16.mxu0 0
    %5876 = vmatpush2.bf16.msra.mxu0 0
    %5877 = vmatprep.subr.bf16.mxu0 0
    %5878 = vmatpush2.bf16.msra.mxu0 0
    %5879 = vmatprep.mubr.bf16.mxu0 0
    %5880 = vmatmul.mubr.bf16.gmra.mxu0 %v5839
    %v5881 = vpop.f32.mrf.mxu0
    %v5882 = vadd.f32 0.0, %v5881
    %v5883 = vpop.f32.mrf.mxu0
    %v5884 = vpop.f32.mrf.mxu0
    %v5885 = vadd.f32 0.0, %v5884
    %v5886 = vpop.f32.mrf.mxu0
    %5887 = vmatprep.mubr.bf16.mxu0 0
    %5888 = vmatmul.mubr.bf16.gmra.mxu0 %v5842
    %v5889 = vpop.f32.mrf.mxu0
    %v5890 = vadd.f32 0.0, %v5889
    %v5891 = vpop.f32.mrf.mxu0
    %v5892 = vpop.f32.mrf.mxu0
    %v5893 = vadd.f32 0.0, %v5892
    %v5894 = vpop.f32.mrf.mxu0
    %5895 = vdwg.mxu0
    %v5896 = vadd.f32 %v5817, %v5882
    %v5897 = vadd.f32 %v5818, %v5885
    %v5898 = vadd.f32 %v5819, %v5890
    %v5899 = vadd.f32 %v5820, %v5893
    %s5900 = scalar_lea.vmem %s9, 128
    %v5901 = vld [vmem:[%s5900] sm:$0xf]
    %v5902 = vld [vmem:[%s5900 + $0x4] sm:$0xf]
    %v5903 = vld [vmem:[%s5900 + $0x8] sm:$0xf]
    %v5904 = vld [vmem:[%s5900 + $0xc] sm:$0xf]
    %v5909 = vunpack.c.l.b16 %v5901
    %v5910 = vunpack.c.l.b16 %v5902
    %v5911 = vunpack.c.l.b16 %v5903
    %v5912 = vunpack.c.l.b16 %v5904
    %v5913 = vpack.c.b16 %v5910, %v5909
    %v5914 = vpack.c.b16 %v5912, %v5911
    %5915 = vrot.lane.b32.xlu0 %v5277, 64
    %v5916 = vpop.permute.xlu0 %5915
    %v5918 = vsel %vm2705, %v5913, 0
    %v5921 = vsel %vm2705, %v5914, 0
    %v5924 = vsel %vm2730, %v5916, 0
    %5926 = vmatprep.subr.bf16.mxu0 0
    %5927 = vmatpush1.bf16.msra.mxu0 0
    %5928 = vmatprep.subr.bf16.mxu0 0
    %5929 = vmatpush1.bf16.msra.mxu0 0
    %5930 = vmatprep.subr.bf16.mxu0 0
    %5931 = vmatpush1.bf16.msra.mxu0 0
    %5932 = vmatprep.subr.bf16.mxu0 0
    %5933 = vmatpush1.bf16.msra.mxu0 0
    %5934 = vmatprep.subr.bf16.mxu0 0
    %5935 = vmatpush1.bf16.msra.mxu0 0
    %5936 = vmatprep.subr.bf16.mxu0 0
    %5937 = vmatpush1.bf16.msra.mxu0 0
    %5938 = vmatprep.subr.bf16.mxu0 0
    %5939 = vmatpush1.bf16.msra.mxu0 0
    %5940 = vmatprep.subr.bf16.mxu0 0
    %5941 = vmatpush1.bf16.msra.mxu0 %v5924
    %5942 = vmatprep.subr.bf16.mxu0 0
    %5943 = vmatpush2.bf16.msra.mxu0 0
    %5944 = vmatprep.subr.bf16.mxu0 0
    %5945 = vmatpush2.bf16.msra.mxu0 0
    %5946 = vmatprep.subr.bf16.mxu0 0
    %5947 = vmatpush2.bf16.msra.mxu0 0
    %5948 = vmatprep.subr.bf16.mxu0 0
    %5949 = vmatpush2.bf16.msra.mxu0 0
    %5950 = vmatprep.subr.bf16.mxu0 0
    %5951 = vmatpush2.bf16.msra.mxu0 0
    %5952 = vmatprep.subr.bf16.mxu0 0
    %5953 = vmatpush2.bf16.msra.mxu0 0
    %5954 = vmatprep.subr.bf16.mxu0 0
    %5955 = vmatpush2.bf16.msra.mxu0 0
    %5956 = vmatprep.subr.bf16.mxu0 0
    %5957 = vmatpush2.bf16.msra.mxu0 0
    %5958 = vmatprep.mubr.bf16.mxu0 0
    %5959 = vmatmul.mubr.bf16.gmra.mxu0 %v5918
    %v5960 = vpop.f32.mrf.mxu0
    %v5961 = vadd.f32 0.0, %v5960
    %v5962 = vpop.f32.mrf.mxu0
    %v5963 = vpop.f32.mrf.mxu0
    %v5964 = vadd.f32 0.0, %v5963
    %v5965 = vpop.f32.mrf.mxu0
    %5966 = vmatprep.mubr.bf16.mxu0 0
    %5967 = vmatmul.mubr.bf16.gmra.mxu0 %v5921
    %v5968 = vpop.f32.mrf.mxu0
    %v5969 = vadd.f32 0.0, %v5968
    %v5970 = vpop.f32.mrf.mxu0
    %v5971 = vpop.f32.mrf.mxu0
    %v5972 = vadd.f32 0.0, %v5971
    %v5973 = vpop.f32.mrf.mxu0
    %5974 = vdwg.mxu0
    %v5975 = vadd.f32 %v5896, %v5961
    %v5976 = vadd.f32 %v5897, %v5964
    %v5977 = vadd.f32 %v5898, %v5969
    %v5978 = vadd.f32 %v5899, %v5972
    %v5979 = vlaneseq
    %v5980 = vshrl.u32 %v5979, 7
    %v5981 = vsub.s32 0, %v5980
    %v5982 = vrot.slane %v5229, %v5981
    %v5983 = vadd.f32 %v5975, %v5982
    %v5984 = vadd.f32 %v5976, %v5982
    %v5985 = vadd.f32 %v5977, %v5982
    %v5986 = vadd.f32 %v5978, %v5982
    %v5987 = vmax.f32 %v5983, 0.0
    %v5988 = vmax.f32 %v5984, 0.0
    %v5989 = vmax.f32 %v5985, 0.0
    %v5990 = vmax.f32 %v5986, 0.0
    %v5991 = vadd.f32 %v5987, %v3668
    %v5992 = vadd.f32 %v5988, %v3669
    %v5993 = vadd.f32 %v5989, %v3670
    %v5994 = vadd.f32 %v5990, %v3671
    %v5995 = vpack.c.bf16 %v5992, %v5991
    %v5996 = vpack.c.bf16 %v5994, %v5993
    %v5997 = vld [vmem:[#allocation5 + $0x6] sm:$0x1]
    %v5998 = vld [vmem:[%s2 + $0x38] sm:$0xf]
    %v6000 = vsel %vm2705, %v5995, 0
    %v6003 = vsel %vm2705, %v5996, 0
    %v6006 = vsel %vm2730, %v5998, 0
    %6008 = vmatprep.subr.bf16.mxu0 0
    %6009 = vmatpush1.bf16.msra.mxu0 0
    %6010 = vmatprep.subr.bf16.mxu0 0
    %6011 = vmatpush1.bf16.msra.mxu0 0
    %6012 = vmatprep.subr.bf16.mxu0 0
    %6013 = vmatpush1.bf16.msra.mxu0 0
    %6014 = vmatprep.subr.bf16.mxu0 0
    %6015 = vmatpush1.bf16.msra.mxu0 0
    %6016 = vmatprep.subr.bf16.mxu0 0
    %6017 = vmatpush1.bf16.msra.mxu0 0
    %6018 = vmatprep.subr.bf16.mxu0 0
    %6019 = vmatpush1.bf16.msra.mxu0 0
    %6020 = vmatprep.subr.bf16.mxu0 0
    %6021 = vmatpush1.bf16.msra.mxu0 0
    %6022 = vmatprep.subr.bf16.mxu0 0
    %6023 = vmatpush1.bf16.msra.mxu0 %v6006
    %6024 = vmatprep.subr.bf16.mxu0 0
    %6025 = vmatpush2.bf16.msra.mxu0 0
    %6026 = vmatprep.subr.bf16.mxu0 0
    %6027 = vmatpush2.bf16.msra.mxu0 0
    %6028 = vmatprep.subr.bf16.mxu0 0
    %6029 = vmatpush2.bf16.msra.mxu0 0
    %6030 = vmatprep.subr.bf16.mxu0 0
    %6031 = vmatpush2.bf16.msra.mxu0 0
    %6032 = vmatprep.subr.bf16.mxu0 0
    %6033 = vmatpush2.bf16.msra.mxu0 0
    %6034 = vmatprep.subr.bf16.mxu0 0
    %6035 = vmatpush2.bf16.msra.mxu0 0
    %6036 = vmatprep.subr.bf16.mxu0 0
    %6037 = vmatpush2.bf16.msra.mxu0 0
    %6038 = vmatprep.subr.bf16.mxu0 0
    %6039 = vmatpush2.bf16.msra.mxu0 0
    %6040 = vmatprep.mubr.bf16.mxu0 0
    %6041 = vmatmul.mubr.bf16.gmra.mxu0 %v6000
    %v6042 = vpop.f32.mrf.mxu0
    %v6043 = vadd.f32 0.0, %v6042
    %v6044 = vpop.f32.mrf.mxu0
    %v6045 = vpop.f32.mrf.mxu0
    %v6046 = vadd.f32 0.0, %v6045
    %v6047 = vpop.f32.mrf.mxu0
    %6048 = vmatprep.mubr.bf16.mxu0 0
    %6049 = vmatmul.mubr.bf16.gmra.mxu0 %v6003
    %v6050 = vpop.f32.mrf.mxu0
    %v6051 = vadd.f32 0.0, %v6050
    %v6052 = vpop.f32.mrf.mxu0
    %v6053 = vpop.f32.mrf.mxu0
    %v6054 = vadd.f32 0.0, %v6053
    %v6055 = vpop.f32.mrf.mxu0
    %6056 = vdwg.mxu0
    %v6057 = vpack.c.bf16 %v6046, %v6043
    %v6058 = vpack.c.bf16 %v6054, %v6051
    %v6059 = vld [vmem:[%s10] sm:$0xf]
    %v6060 = vld [vmem:[%s10 + $0x4] sm:$0xf]
    %v6061 = vld [vmem:[%s10 + $0x8] sm:$0xf]
    %v6062 = vld [vmem:[%s10 + $0xc] sm:$0xf]
    %v6063 = vld [vmem:[%s10 + $0x10] sm:$0xf]
    %v6064 = vld [vmem:[%s10 + $0x14] sm:$0xf]
    %v6065 = vld [vmem:[%s10 + $0x18] sm:$0xf]
    %v6066 = vld [vmem:[%s10 + $0x1c] sm:$0xf]
    %v6067 = vld [vmem:[%s10 + $0x20] sm:$0xf]
    %v6068 = vld [vmem:[%s10 + $0x24] sm:$0xf]
    %v6069 = vld [vmem:[%s10 + $0x28] sm:$0xf]
    %v6070 = vld [vmem:[%s10 + $0x2c] sm:$0xf]
    %v6071 = vld [vmem:[%s10 + $0x30] sm:$0xf]
    %v6072 = vld [vmem:[%s10 + $0x34] sm:$0xf]
    %v6073 = vld [vmem:[%s10 + $0x38] sm:$0xf]
    %v6074 = vld [vmem:[%s10 + $0x3c] sm:$0xf]
    %s6075 = scalar_lea.vmem %s10, 64
    %v6076 = vld [vmem:[%s6075] sm:$0xf]
    %v6077 = vld [vmem:[%s6075 + $0x4] sm:$0xf]
    %v6078 = vld [vmem:[%s6075 + $0x8] sm:$0xf]
    %v6079 = vld [vmem:[%s6075 + $0xc] sm:$0xf]
    %v6080 = vld [vmem:[%s6075 + $0x10] sm:$0xf]
    %v6081 = vld [vmem:[%s6075 + $0x14] sm:$0xf]
    %v6082 = vld [vmem:[%s6075 + $0x18] sm:$0xf]
    %v6083 = vld [vmem:[%s6075 + $0x1c] sm:$0xf]
    %v6084 = vld [vmem:[%s6075 + $0x20] sm:$0xf]
    %v6085 = vld [vmem:[%s6075 + $0x24] sm:$0xf]
    %v6086 = vld [vmem:[%s6075 + $0x28] sm:$0xf]
    %v6087 = vld [vmem:[%s6075 + $0x2c] sm:$0xf]
    %v6088 = vld [vmem:[%s6075 + $0x30] sm:$0xf]
    %v6089 = vld [vmem:[%s6075 + $0x34] sm:$0xf]
    %v6090 = vld [vmem:[%s6075 + $0x38] sm:$0xf]
    %v6091 = vld [vmem:[%s6075 + $0x3c] sm:$0xf]
    %v6108 = vunpack.c.l.b16 %v6076
    %v6109 = vunpack.c.l.b16 %v6077
    %v6110 = vunpack.c.l.b16 %v6078
    %v6111 = vunpack.c.l.b16 %v6079
    %v6112 = vunpack.c.l.b16 %v6080
    %v6113 = vunpack.c.l.b16 %v6081
    %v6114 = vunpack.c.l.b16 %v6082
    %v6115 = vunpack.c.l.b16 %v6083
    %v6116 = vunpack.c.l.b16 %v6084
    %v6117 = vunpack.c.l.b16 %v6085
    %v6118 = vunpack.c.l.b16 %v6086
    %v6119 = vunpack.c.l.b16 %v6087
    %v6120 = vunpack.c.l.b16 %v6088
    %v6121 = vunpack.c.l.b16 %v6089
    %v6122 = vunpack.c.l.b16 %v6090
    %v6123 = vunpack.c.l.b16 %v6091
    %v6124 = vpack.c.b16 %v6109, %v6108
    %v6125 = vpack.c.b16 %v6111, %v6110
    %v6126 = vpack.c.b16 %v6113, %v6112
    %v6127 = vpack.c.b16 %v6115, %v6114
    %v6128 = vpack.c.b16 %v6117, %v6116
    %v6129 = vpack.c.b16 %v6119, %v6118
    %v6130 = vpack.c.b16 %v6121, %v6120
    %v6131 = vpack.c.b16 %v6123, %v6122
    %6134 = vrot.lane.b32.xlu0 %v6057, 120
    %v6135 = vpop.permute.xlu0 %6134
    %6136 = vrot.lane.b32.xlu0 %v6058, 120
    %v6137 = vpop.permute.xlu0 %6136
    %v6141 = vsel %vm176, %v6124, 0
    %v6144 = vsel %vm176, %v6125, 0
    %v6147 = vsel %vm176, %v6126, 0
    %v6150 = vsel %vm176, %v6127, 0
    %v6153 = vsel %vm176, %v6128, 0
    %v6156 = vsel %vm176, %v6129, 0
    %v6159 = vsel %vm176, %v6130, 0
    %v6162 = vsel %vm176, %v6131, 0
    %6164 = vmatprep.subr.bf16.mxu0 0
    %6165 = vmatpush1.bf16.msra.mxu0 0
    %6166 = vmatprep.subr.bf16.mxu0 0
    %6167 = vmatpush1.bf16.msra.mxu0 0
    %6168 = vmatprep.subr.bf16.mxu0 0
    %6169 = vmatpush1.bf16.msra.mxu0 0
    %6170 = vmatprep.subr.bf16.mxu0 0
    %6171 = vmatpush1.bf16.msra.mxu0 0
    %6172 = vmatprep.subr.bf16.mxu0 0
    %6173 = vmatpush1.bf16.msra.mxu0 0
    %6174 = vmatprep.subr.bf16.mxu0 0
    %6175 = vmatpush1.bf16.msra.mxu0 0
    %6176 = vmatprep.subr.bf16.mxu0 0
    %6177 = vmatpush1.bf16.msra.mxu0 %v6137
    %6178 = vmatprep.subr.bf16.mxu0 0
    %6179 = vmatpush1.bf16.msra.mxu0 %v6135
    %6180 = vmatprep.subr.bf16.mxu0 0
    %6181 = vmatpush2.bf16.msra.mxu0 0
    %6182 = vmatprep.subr.bf16.mxu0 0
    %6183 = vmatpush2.bf16.msra.mxu0 0
    %6184 = vmatprep.subr.bf16.mxu0 0
    %6185 = vmatpush2.bf16.msra.mxu0 0
    %6186 = vmatprep.subr.bf16.mxu0 0
    %6187 = vmatpush2.bf16.msra.mxu0 0
    %6188 = vmatprep.subr.bf16.mxu0 0
    %6189 = vmatpush2.bf16.msra.mxu0 0
    %6190 = vmatprep.subr.bf16.mxu0 0
    %6191 = vmatpush2.bf16.msra.mxu0 0
    %6192 = vmatprep.subr.bf16.mxu0 0
    %6193 = vmatpush2.bf16.msra.mxu0 0
    %6194 = vmatprep.subr.bf16.mxu0 0
    %6195 = vmatpush2.bf16.msra.mxu0 0
    %6196 = vmatprep.mubr.bf16.mxu0 0
    %6197 = vmatmul.mubr.bf16.gmra.mxu0 %v6141
    %v6198 = vpop.f32.mrf.mxu0
    %v6199 = vadd.f32 0.0, %v6198
    %v6200 = vpop.f32.mrf.mxu0
    %v6201 = vpop.f32.mrf.mxu0
    %v6202 = vadd.f32 0.0, %v6201
    %v6203 = vpop.f32.mrf.mxu0
    %6204 = vmatprep.mubr.bf16.mxu0 0
    %6205 = vmatmul.mubr.bf16.gmra.mxu0 %v6144
    %v6206 = vpop.f32.mrf.mxu0
    %v6207 = vadd.f32 0.0, %v6206
    %v6208 = vpop.f32.mrf.mxu0
    %v6209 = vpop.f32.mrf.mxu0
    %v6210 = vadd.f32 0.0, %v6209
    %v6211 = vpop.f32.mrf.mxu0
    %6212 = vmatprep.mubr.bf16.mxu0 0
    %6213 = vmatmul.mubr.bf16.gmra.mxu0 %v6147
    %v6214 = vpop.f32.mrf.mxu0
    %v6215 = vadd.f32 0.0, %v6214
    %v6216 = vpop.f32.mrf.mxu0
    %v6217 = vpop.f32.mrf.mxu0
    %v6218 = vadd.f32 0.0, %v6217
    %v6219 = vpop.f32.mrf.mxu0
    %6220 = vmatprep.mubr.bf16.mxu0 0
    %6221 = vmatmul.mubr.bf16.gmra.mxu0 %v6150
    %v6222 = vpop.f32.mrf.mxu0
    %v6223 = vadd.f32 0.0, %v6222
    %v6224 = vpop.f32.mrf.mxu0
    %v6225 = vpop.f32.mrf.mxu0
    %v6226 = vadd.f32 0.0, %v6225
    %v6227 = vpop.f32.mrf.mxu0
    %6228 = vmatprep.mubr.bf16.mxu0 0
    %6229 = vmatmul.mubr.bf16.gmra.mxu0 %v6153
    %v6230 = vpop.f32.mrf.mxu0
    %v6231 = vadd.f32 0.0, %v6230
    %v6232 = vpop.f32.mrf.mxu0
    %v6233 = vpop.f32.mrf.mxu0
    %v6234 = vadd.f32 0.0, %v6233
    %v6235 = vpop.f32.mrf.mxu0
    %6236 = vmatprep.mubr.bf16.mxu0 0
    %6237 = vmatmul.mubr.bf16.gmra.mxu0 %v6156
    %v6238 = vpop.f32.mrf.mxu0
    %v6239 = vadd.f32 0.0, %v6238
    %v6240 = vpop.f32.mrf.mxu0
    %v6241 = vpop.f32.mrf.mxu0
    %v6242 = vadd.f32 0.0, %v6241
    %v6243 = vpop.f32.mrf.mxu0
    %6244 = vmatprep.mubr.bf16.mxu0 0
    %6245 = vmatmul.mubr.bf16.gmra.mxu0 %v6159
    %v6246 = vpop.f32.mrf.mxu0
    %v6247 = vadd.f32 0.0, %v6246
    %v6248 = vpop.f32.mrf.mxu0
    %v6249 = vpop.f32.mrf.mxu0
    %v6250 = vadd.f32 0.0, %v6249
    %v6251 = vpop.f32.mrf.mxu0
    %6252 = vmatprep.mubr.bf16.mxu0 0
    %6253 = vmatmul.mubr.bf16.gmra.mxu0 %v6162
    %v6254 = vpop.f32.mrf.mxu0
    %v6255 = vadd.f32 0.0, %v6254
    %v6256 = vpop.f32.mrf.mxu0
    %v6257 = vpop.f32.mrf.mxu0
    %v6258 = vadd.f32 0.0, %v6257
    %v6259 = vpop.f32.mrf.mxu0
    %6260 = vdwg.mxu0
    %v6277 = vunpack.c.l.b16 %v6059
    %v6278 = vunpack.c.l.b16 %v6060
    %v6279 = vunpack.c.l.b16 %v6061
    %v6280 = vunpack.c.l.b16 %v6062
    %v6281 = vunpack.c.l.b16 %v6063
    %v6282 = vunpack.c.l.b16 %v6064
    %v6283 = vunpack.c.l.b16 %v6065
    %v6284 = vunpack.c.l.b16 %v6066
    %v6285 = vunpack.c.l.b16 %v6067
    %v6286 = vunpack.c.l.b16 %v6068
    %v6287 = vunpack.c.l.b16 %v6069
    %v6288 = vunpack.c.l.b16 %v6070
    %v6289 = vunpack.c.l.b16 %v6071
    %v6290 = vunpack.c.l.b16 %v6072
    %v6291 = vunpack.c.l.b16 %v6073
    %v6292 = vunpack.c.l.b16 %v6074
    %v6293 = vpack.c.b16 %v6278, %v6277
    %v6294 = vpack.c.b16 %v6280, %v6279
    %v6295 = vpack.c.b16 %v6282, %v6281
    %v6296 = vpack.c.b16 %v6284, %v6283
    %v6297 = vpack.c.b16 %v6286, %v6285
    %v6298 = vpack.c.b16 %v6288, %v6287
    %v6299 = vpack.c.b16 %v6290, %v6289
    %v6300 = vpack.c.b16 %v6292, %v6291
    %v6302 = vsel %vm176, %v6293, 0
    %v6305 = vsel %vm176, %v6294, 0
    %v6308 = vsel %vm176, %v6295, 0
    %v6311 = vsel %vm176, %v6296, 0
    %v6314 = vsel %vm176, %v6297, 0
    %v6317 = vsel %vm176, %v6298, 0
    %v6320 = vsel %vm176, %v6299, 0
    %v6323 = vsel %vm176, %v6300, 0
    %6325 = vmatprep.subr.bf16.mxu0 0
    %6326 = vmatpush1.bf16.msra.mxu0 0
    %6327 = vmatprep.subr.bf16.mxu0 0
    %6328 = vmatpush1.bf16.msra.mxu0 0
    %6329 = vmatprep.subr.bf16.mxu0 0
    %6330 = vmatpush1.bf16.msra.mxu0 0
    %6331 = vmatprep.subr.bf16.mxu0 0
    %6332 = vmatpush1.bf16.msra.mxu0 0
    %6333 = vmatprep.subr.bf16.mxu0 0
    %6334 = vmatpush1.bf16.msra.mxu0 0
    %6335 = vmatprep.subr.bf16.mxu0 0
    %6336 = vmatpush1.bf16.msra.mxu0 0
    %6337 = vmatprep.subr.bf16.mxu0 0
    %6338 = vmatpush1.bf16.msra.mxu0 %v6058
    %6339 = vmatprep.subr.bf16.mxu0 0
    %6340 = vmatpush1.bf16.msra.mxu0 %v6057
    %6341 = vmatprep.subr.bf16.mxu0 0
    %6342 = vmatpush2.bf16.msra.mxu0 0
    %6343 = vmatprep.subr.bf16.mxu0 0
    %6344 = vmatpush2.bf16.msra.mxu0 0
    %6345 = vmatprep.subr.bf16.mxu0 0
    %6346 = vmatpush2.bf16.msra.mxu0 0
    %6347 = vmatprep.subr.bf16.mxu0 0
    %6348 = vmatpush2.bf16.msra.mxu0 0
    %6349 = vmatprep.subr.bf16.mxu0 0
    %6350 = vmatpush2.bf16.msra.mxu0 0
    %6351 = vmatprep.subr.bf16.mxu0 0
    %6352 = vmatpush2.bf16.msra.mxu0 0
    %6353 = vmatprep.subr.bf16.mxu0 0
    %6354 = vmatpush2.bf16.msra.mxu0 0
    %6355 = vmatprep.subr.bf16.mxu0 0
    %6356 = vmatpush2.bf16.msra.mxu0 0
    %6357 = vmatprep.mubr.bf16.mxu0 0
    %6358 = vmatmul.mubr.bf16.gmra.mxu0 %v6302
    %v6359 = vpop.f32.mrf.mxu0
    %v6360 = vadd.f32 %v6199, %v6359
    %v6361 = vpop.f32.mrf.mxu0
    %v6362 = vpop.f32.mrf.mxu0
    %v6363 = vadd.f32 %v6202, %v6362
    %v6364 = vpop.f32.mrf.mxu0
    %6365 = vmatprep.mubr.bf16.mxu0 0
    %6366 = vmatmul.mubr.bf16.gmra.mxu0 %v6305
    %v6367 = vpop.f32.mrf.mxu0
    %v6368 = vadd.f32 %v6207, %v6367
    %v6369 = vpop.f32.mrf.mxu0
    %v6370 = vpop.f32.mrf.mxu0
    %v6371 = vadd.f32 %v6210, %v6370
    %v6372 = vpop.f32.mrf.mxu0
    %6373 = vmatprep.mubr.bf16.mxu0 0
    %6374 = vmatmul.mubr.bf16.gmra.mxu0 %v6308
    %v6375 = vpop.f32.mrf.mxu0
    %v6376 = vadd.f32 %v6215, %v6375
    %v6377 = vpop.f32.mrf.mxu0
    %v6378 = vpop.f32.mrf.mxu0
    %v6379 = vadd.f32 %v6218, %v6378
    %v6380 = vpop.f32.mrf.mxu0
    %6381 = vmatprep.mubr.bf16.mxu0 0
    %6382 = vmatmul.mubr.bf16.gmra.mxu0 %v6311
    %v6383 = vpop.f32.mrf.mxu0
    %v6384 = vadd.f32 %v6223, %v6383
    %v6385 = vpop.f32.mrf.mxu0
    %v6386 = vpop.f32.mrf.mxu0
    %v6387 = vadd.f32 %v6226, %v6386
    %v6388 = vpop.f32.mrf.mxu0
    %6389 = vmatprep.mubr.bf16.mxu0 0
    %6390 = vmatmul.mubr.bf16.gmra.mxu0 %v6314
    %v6391 = vpop.f32.mrf.mxu0
    %v6392 = vadd.f32 %v6231, %v6391
    %v6393 = vpop.f32.mrf.mxu0
    %v6394 = vpop.f32.mrf.mxu0
    %v6395 = vadd.f32 %v6234, %v6394
    %v6396 = vpop.f32.mrf.mxu0
    %6397 = vmatprep.mubr.bf16.mxu0 0
    %6398 = vmatmul.mubr.bf16.gmra.mxu0 %v6317
    %v6399 = vpop.f32.mrf.mxu0
    %v6400 = vadd.f32 %v6239, %v6399
    %v6401 = vpop.f32.mrf.mxu0
    %v6402 = vpop.f32.mrf.mxu0
    %v6403 = vadd.f32 %v6242, %v6402
    %v6404 = vpop.f32.mrf.mxu0
    %6405 = vmatprep.mubr.bf16.mxu0 0
    %6406 = vmatmul.mubr.bf16.gmra.mxu0 %v6320
    %v6407 = vpop.f32.mrf.mxu0
    %v6408 = vadd.f32 %v6247, %v6407
    %v6409 = vpop.f32.mrf.mxu0
    %v6410 = vpop.f32.mrf.mxu0
    %v6411 = vadd.f32 %v6250, %v6410
    %v6412 = vpop.f32.mrf.mxu0
    %6413 = vmatprep.mubr.bf16.mxu0 0
    %6414 = vmatmul.mubr.bf16.gmra.mxu0 %v6323
    %v6415 = vpop.f32.mrf.mxu0
    %v6416 = vadd.f32 %v6255, %v6415
    %v6417 = vpop.f32.mrf.mxu0
    %v6418 = vpop.f32.mrf.mxu0
    %v6419 = vadd.f32 %v6258, %v6418
    %v6420 = vpop.f32.mrf.mxu0
    %6421 = vdwg.mxu0
    %s6422 = scalar_lea.vmem %s10, 128
    %v6423 = vld [vmem:[%s6422] sm:$0xf]
    %v6424 = vld [vmem:[%s6422 + $0x4] sm:$0xf]
    %v6425 = vld [vmem:[%s6422 + $0x8] sm:$0xf]
    %v6426 = vld [vmem:[%s6422 + $0xc] sm:$0xf]
    %v6427 = vld [vmem:[%s6422 + $0x10] sm:$0xf]
    %v6428 = vld [vmem:[%s6422 + $0x14] sm:$0xf]
    %v6429 = vld [vmem:[%s6422 + $0x18] sm:$0xf]
    %v6430 = vld [vmem:[%s6422 + $0x1c] sm:$0xf]
    %v6431 = vld [vmem:[%s6422 + $0x20] sm:$0xf]
    %v6432 = vld [vmem:[%s6422 + $0x24] sm:$0xf]
    %v6433 = vld [vmem:[%s6422 + $0x28] sm:$0xf]
    %v6434 = vld [vmem:[%s6422 + $0x2c] sm:$0xf]
    %v6435 = vld [vmem:[%s6422 + $0x30] sm:$0xf]
    %v6436 = vld [vmem:[%s6422 + $0x34] sm:$0xf]
    %v6437 = vld [vmem:[%s6422 + $0x38] sm:$0xf]
    %v6438 = vld [vmem:[%s6422 + $0x3c] sm:$0xf]
    %v6455 = vunpack.c.l.b16 %v6423
    %v6456 = vunpack.c.l.b16 %v6424
    %v6457 = vunpack.c.l.b16 %v6425
    %v6458 = vunpack.c.l.b16 %v6426
    %v6459 = vunpack.c.l.b16 %v6427
    %v6460 = vunpack.c.l.b16 %v6428
    %v6461 = vunpack.c.l.b16 %v6429
    %v6462 = vunpack.c.l.b16 %v6430
    %v6463 = vunpack.c.l.b16 %v6431
    %v6464 = vunpack.c.l.b16 %v6432
    %v6465 = vunpack.c.l.b16 %v6433
    %v6466 = vunpack.c.l.b16 %v6434
    %v6467 = vunpack.c.l.b16 %v6435
    %v6468 = vunpack.c.l.b16 %v6436
    %v6469 = vunpack.c.l.b16 %v6437
    %v6470 = vunpack.c.l.b16 %v6438
    %v6471 = vpack.c.b16 %v6456, %v6455
    %v6472 = vpack.c.b16 %v6458, %v6457
    %v6473 = vpack.c.b16 %v6460, %v6459
    %v6474 = vpack.c.b16 %v6462, %v6461
    %v6475 = vpack.c.b16 %v6464, %v6463
    %v6476 = vpack.c.b16 %v6466, %v6465
    %v6477 = vpack.c.b16 %v6468, %v6467
    %v6478 = vpack.c.b16 %v6470, %v6469
    %6479 = vrot.lane.b32.xlu0 %v6057, 112
    %v6480 = vpop.permute.xlu0 %6479
    %6481 = vrot.lane.b32.xlu0 %v6058, 112
    %v6482 = vpop.permute.xlu0 %6481
    %v6486 = vsel %vm176, %v6471, 0
    %v6489 = vsel %vm176, %v6472, 0
    %v6492 = vsel %vm176, %v6473, 0
    %v6495 = vsel %vm176, %v6474, 0
    %v6498 = vsel %vm176, %v6475, 0
    %v6501 = vsel %vm176, %v6476, 0
    %v6504 = vsel %vm176, %v6477, 0
    %v6507 = vsel %vm176, %v6478, 0
    %6509 = vmatprep.subr.bf16.mxu0 0
    %6510 = vmatpush1.bf16.msra.mxu0 0
    %6511 = vmatprep.subr.bf16.mxu0 0
    %6512 = vmatpush1.bf16.msra.mxu0 0
    %6513 = vmatprep.subr.bf16.mxu0 0
    %6514 = vmatpush1.bf16.msra.mxu0 0
    %6515 = vmatprep.subr.bf16.mxu0 0
    %6516 = vmatpush1.bf16.msra.mxu0 0
    %6517 = vmatprep.subr.bf16.mxu0 0
    %6518 = vmatpush1.bf16.msra.mxu0 0
    %6519 = vmatprep.subr.bf16.mxu0 0
    %6520 = vmatpush1.bf16.msra.mxu0 0
    %6521 = vmatprep.subr.bf16.mxu0 0
    %6522 = vmatpush1.bf16.msra.mxu0 %v6482
    %6523 = vmatprep.subr.bf16.mxu0 0
    %6524 = vmatpush1.bf16.msra.mxu0 %v6480
    %6525 = vmatprep.subr.bf16.mxu0 0
    %6526 = vmatpush2.bf16.msra.mxu0 0
    %6527 = vmatprep.subr.bf16.mxu0 0
    %6528 = vmatpush2.bf16.msra.mxu0 0
    %6529 = vmatprep.subr.bf16.mxu0 0
    %6530 = vmatpush2.bf16.msra.mxu0 0
    %6531 = vmatprep.subr.bf16.mxu0 0
    %6532 = vmatpush2.bf16.msra.mxu0 0
    %6533 = vmatprep.subr.bf16.mxu0 0
    %6534 = vmatpush2.bf16.msra.mxu0 0
    %6535 = vmatprep.subr.bf16.mxu0 0
    %6536 = vmatpush2.bf16.msra.mxu0 0
    %6537 = vmatprep.subr.bf16.mxu0 0
    %6538 = vmatpush2.bf16.msra.mxu0 0
    %6539 = vmatprep.subr.bf16.mxu0 0
    %6540 = vmatpush2.bf16.msra.mxu0 0
    %6541 = vmatprep.mubr.bf16.mxu0 0
    %6542 = vmatmul.mubr.bf16.gmra.mxu0 %v6486
    %v6543 = vpop.f32.mrf.mxu0
    %v6544 = vadd.f32 0.0, %v6543
    %v6545 = vpop.f32.mrf.mxu0
    %v6546 = vpop.f32.mrf.mxu0
    %v6547 = vadd.f32 0.0, %v6546
    %v6548 = vpop.f32.mrf.mxu0
    %6549 = vmatprep.mubr.bf16.mxu0 0
    %6550 = vmatmul.mubr.bf16.gmra.mxu0 %v6489
    %v6551 = vpop.f32.mrf.mxu0
    %v6552 = vadd.f32 0.0, %v6551
    %v6553 = vpop.f32.mrf.mxu0
    %v6554 = vpop.f32.mrf.mxu0
    %v6555 = vadd.f32 0.0, %v6554
    %v6556 = vpop.f32.mrf.mxu0
    %6557 = vmatprep.mubr.bf16.mxu0 0
    %6558 = vmatmul.mubr.bf16.gmra.mxu0 %v6492
    %v6559 = vpop.f32.mrf.mxu0
    %v6560 = vadd.f32 0.0, %v6559
    %v6561 = vpop.f32.mrf.mxu0
    %v6562 = vpop.f32.mrf.mxu0
    %v6563 = vadd.f32 0.0, %v6562
    %v6564 = vpop.f32.mrf.mxu0
    %6565 = vmatprep.mubr.bf16.mxu0 0
    %6566 = vmatmul.mubr.bf16.gmra.mxu0 %v6495
    %v6567 = vpop.f32.mrf.mxu0
    %v6568 = vadd.f32 0.0, %v6567
    %v6569 = vpop.f32.mrf.mxu0
    %v6570 = vpop.f32.mrf.mxu0
    %v6571 = vadd.f32 0.0, %v6570
    %v6572 = vpop.f32.mrf.mxu0
    %6573 = vmatprep.mubr.bf16.mxu0 0
    %6574 = vmatmul.mubr.bf16.gmra.mxu0 %v6498
    %v6575 = vpop.f32.mrf.mxu0
    %v6576 = vadd.f32 0.0, %v6575
    %v6577 = vpop.f32.mrf.mxu0
    %v6578 = vpop.f32.mrf.mxu0
    %v6579 = vadd.f32 0.0, %v6578
    %v6580 = vpop.f32.mrf.mxu0
    %6581 = vmatprep.mubr.bf16.mxu0 0
    %6582 = vmatmul.mubr.bf16.gmra.mxu0 %v6501
    %v6583 = vpop.f32.mrf.mxu0
    %v6584 = vadd.f32 0.0, %v6583
    %v6585 = vpop.f32.mrf.mxu0
    %v6586 = vpop.f32.mrf.mxu0
    %v6587 = vadd.f32 0.0, %v6586
    %v6588 = vpop.f32.mrf.mxu0
    %6589 = vmatprep.mubr.bf16.mxu0 0
    %6590 = vmatmul.mubr.bf16.gmra.mxu0 %v6504
    %v6591 = vpop.f32.mrf.mxu0
    %v6592 = vadd.f32 0.0, %v6591
    %v6593 = vpop.f32.mrf.mxu0
    %v6594 = vpop.f32.mrf.mxu0
    %v6595 = vadd.f32 0.0, %v6594
    %v6596 = vpop.f32.mrf.mxu0
    %6597 = vmatprep.mubr.bf16.mxu0 0
    %6598 = vmatmul.mubr.bf16.gmra.mxu0 %v6507
    %v6599 = vpop.f32.mrf.mxu0
    %v6600 = vadd.f32 0.0, %v6599
    %v6601 = vpop.f32.mrf.mxu0
    %v6602 = vpop.f32.mrf.mxu0
    %v6603 = vadd.f32 0.0, %v6602
    %v6604 = vpop.f32.mrf.mxu0
    %6605 = vdwg.mxu0
    %v6606 = vadd.f32 %v6360, %v6544
    %v6607 = vadd.f32 %v6363, %v6547
    %v6608 = vadd.f32 %v6368, %v6552
    %v6609 = vadd.f32 %v6371, %v6555
    %v6610 = vadd.f32 %v6376, %v6560
    %v6611 = vadd.f32 %v6379, %v6563
    %v6612 = vadd.f32 %v6384, %v6568
    %v6613 = vadd.f32 %v6387, %v6571
    %v6614 = vadd.f32 %v6392, %v6576
    %v6615 = vadd.f32 %v6395, %v6579
    %v6616 = vadd.f32 %v6400, %v6584
    %v6617 = vadd.f32 %v6403, %v6587
    %v6618 = vadd.f32 %v6408, %v6592
    %v6619 = vadd.f32 %v6411, %v6595
    %v6620 = vadd.f32 %v6416, %v6600
    %v6621 = vadd.f32 %v6419, %v6603
    %s6622 = scalar_lea.vmem %s10, 192
    %v6623 = vld [vmem:[%s6622] sm:$0xf]
    %v6624 = vld [vmem:[%s6622 + $0x4] sm:$0xf]
    %v6625 = vld [vmem:[%s6622 + $0x8] sm:$0xf]
    %v6626 = vld [vmem:[%s6622 + $0xc] sm:$0xf]
    %v6627 = vld [vmem:[%s6622 + $0x10] sm:$0xf]
    %v6628 = vld [vmem:[%s6622 + $0x14] sm:$0xf]
    %v6629 = vld [vmem:[%s6622 + $0x18] sm:$0xf]
    %v6630 = vld [vmem:[%s6622 + $0x1c] sm:$0xf]
    %v6631 = vld [vmem:[%s6622 + $0x20] sm:$0xf]
    %v6632 = vld [vmem:[%s6622 + $0x24] sm:$0xf]
    %v6633 = vld [vmem:[%s6622 + $0x28] sm:$0xf]
    %v6634 = vld [vmem:[%s6622 + $0x2c] sm:$0xf]
    %v6635 = vld [vmem:[%s6622 + $0x30] sm:$0xf]
    %v6636 = vld [vmem:[%s6622 + $0x34] sm:$0xf]
    %v6637 = vld [vmem:[%s6622 + $0x38] sm:$0xf]
    %v6638 = vld [vmem:[%s6622 + $0x3c] sm:$0xf]
    %v6655 = vunpack.c.l.b16 %v6623
    %v6656 = vunpack.c.l.b16 %v6624
    %v6657 = vunpack.c.l.b16 %v6625
    %v6658 = vunpack.c.l.b16 %v6626
    %v6659 = vunpack.c.l.b16 %v6627
    %v6660 = vunpack.c.l.b16 %v6628
    %v6661 = vunpack.c.l.b16 %v6629
    %v6662 = vunpack.c.l.b16 %v6630
    %v6663 = vunpack.c.l.b16 %v6631
    %v6664 = vunpack.c.l.b16 %v6632
    %v6665 = vunpack.c.l.b16 %v6633
    %v6666 = vunpack.c.l.b16 %v6634
    %v6667 = vunpack.c.l.b16 %v6635
    %v6668 = vunpack.c.l.b16 %v6636
    %v6669 = vunpack.c.l.b16 %v6637
    %v6670 = vunpack.c.l.b16 %v6638
    %v6671 = vpack.c.b16 %v6656, %v6655
    %v6672 = vpack.c.b16 %v6658, %v6657
    %v6673 = vpack.c.b16 %v6660, %v6659
    %v6674 = vpack.c.b16 %v6662, %v6661
    %v6675 = vpack.c.b16 %v6664, %v6663
    %v6676 = vpack.c.b16 %v6666, %v6665
    %v6677 = vpack.c.b16 %v6668, %v6667
    %v6678 = vpack.c.b16 %v6670, %v6669
    %6679 = vrot.lane.b32.xlu0 %v6057, 104
    %v6680 = vpop.permute.xlu0 %6679
    %6681 = vrot.lane.b32.xlu0 %v6058, 104
    %v6682 = vpop.permute.xlu0 %6681
    %v6686 = vsel %vm176, %v6671, 0
    %v6689 = vsel %vm176, %v6672, 0
    %v6692 = vsel %vm176, %v6673, 0
    %v6695 = vsel %vm176, %v6674, 0
    %v6698 = vsel %vm176, %v6675, 0
    %v6701 = vsel %vm176, %v6676, 0
    %v6704 = vsel %vm176, %v6677, 0
    %v6707 = vsel %vm176, %v6678, 0
    %6709 = vmatprep.subr.bf16.mxu0 0
    %6710 = vmatpush1.bf16.msra.mxu0 0
    %6711 = vmatprep.subr.bf16.mxu0 0
    %6712 = vmatpush1.bf16.msra.mxu0 0
    %6713 = vmatprep.subr.bf16.mxu0 0
    %6714 = vmatpush1.bf16.msra.mxu0 0
    %6715 = vmatprep.subr.bf16.mxu0 0
    %6716 = vmatpush1.bf16.msra.mxu0 0
    %6717 = vmatprep.subr.bf16.mxu0 0
    %6718 = vmatpush1.bf16.msra.mxu0 0
    %6719 = vmatprep.subr.bf16.mxu0 0
    %6720 = vmatpush1.bf16.msra.mxu0 0
    %6721 = vmatprep.subr.bf16.mxu0 0
    %6722 = vmatpush1.bf16.msra.mxu0 %v6682
    %6723 = vmatprep.subr.bf16.mxu0 0
    %6724 = vmatpush1.bf16.msra.mxu0 %v6680
    %6725 = vmatprep.subr.bf16.mxu0 0
    %6726 = vmatpush2.bf16.msra.mxu0 0
    %6727 = vmatprep.subr.bf16.mxu0 0
    %6728 = vmatpush2.bf16.msra.mxu0 0
    %6729 = vmatprep.subr.bf16.mxu0 0
    %6730 = vmatpush2.bf16.msra.mxu0 0
    %6731 = vmatprep.subr.bf16.mxu0 0
    %6732 = vmatpush2.bf16.msra.mxu0 0
    %6733 = vmatprep.subr.bf16.mxu0 0
    %6734 = vmatpush2.bf16.msra.mxu0 0
    %6735 = vmatprep.subr.bf16.mxu0 0
    %6736 = vmatpush2.bf16.msra.mxu0 0
    %6737 = vmatprep.subr.bf16.mxu0 0
    %6738 = vmatpush2.bf16.msra.mxu0 0
    %6739 = vmatprep.subr.bf16.mxu0 0
    %6740 = vmatpush2.bf16.msra.mxu0 0
    %6741 = vmatprep.mubr.bf16.mxu0 0
    %6742 = vmatmul.mubr.bf16.gmra.mxu0 %v6686
    %v6743 = vpop.f32.mrf.mxu0
    %v6744 = vadd.f32 0.0, %v6743
    %v6745 = vpop.f32.mrf.mxu0
    %v6746 = vpop.f32.mrf.mxu0
    %v6747 = vadd.f32 0.0, %v6746
    %v6748 = vpop.f32.mrf.mxu0
    %6749 = vmatprep.mubr.bf16.mxu0 0
    %6750 = vmatmul.mubr.bf16.gmra.mxu0 %v6689
    %v6751 = vpop.f32.mrf.mxu0
    %v6752 = vadd.f32 0.0, %v6751
    %v6753 = vpop.f32.mrf.mxu0
    %v6754 = vpop.f32.mrf.mxu0
    %v6755 = vadd.f32 0.0, %v6754
    %v6756 = vpop.f32.mrf.mxu0
    %6757 = vmatprep.mubr.bf16.mxu0 0
    %6758 = vmatmul.mubr.bf16.gmra.mxu0 %v6692
    %v6759 = vpop.f32.mrf.mxu0
    %v6760 = vadd.f32 0.0, %v6759
    %v6761 = vpop.f32.mrf.mxu0
    %v6762 = vpop.f32.mrf.mxu0
    %v6763 = vadd.f32 0.0, %v6762
    %v6764 = vpop.f32.mrf.mxu0
    %6765 = vmatprep.mubr.bf16.mxu0 0
    %6766 = vmatmul.mubr.bf16.gmra.mxu0 %v6695
    %v6767 = vpop.f32.mrf.mxu0
    %v6768 = vadd.f32 0.0, %v6767
    %v6769 = vpop.f32.mrf.mxu0
    %v6770 = vpop.f32.mrf.mxu0
    %v6771 = vadd.f32 0.0, %v6770
    %v6772 = vpop.f32.mrf.mxu0
    %6773 = vmatprep.mubr.bf16.mxu0 0
    %6774 = vmatmul.mubr.bf16.gmra.mxu0 %v6698
    %v6775 = vpop.f32.mrf.mxu0
    %v6776 = vadd.f32 0.0, %v6775
    %v6777 = vpop.f32.mrf.mxu0
    %v6778 = vpop.f32.mrf.mxu0
    %v6779 = vadd.f32 0.0, %v6778
    %v6780 = vpop.f32.mrf.mxu0
    %6781 = vmatprep.mubr.bf16.mxu0 0
    %6782 = vmatmul.mubr.bf16.gmra.mxu0 %v6701
    %v6783 = vpop.f32.mrf.mxu0
    %v6784 = vadd.f32 0.0, %v6783
    %v6785 = vpop.f32.mrf.mxu0
    %v6786 = vpop.f32.mrf.mxu0
    %v6787 = vadd.f32 0.0, %v6786
    %v6788 = vpop.f32.mrf.mxu0
    %6789 = vmatprep.mubr.bf16.mxu0 0
    %6790 = vmatmul.mubr.bf16.gmra.mxu0 %v6704
    %v6791 = vpop.f32.mrf.mxu0
    %v6792 = vadd.f32 0.0, %v6791
    %v6793 = vpop.f32.mrf.mxu0
    %v6794 = vpop.f32.mrf.mxu0
    %v6795 = vadd.f32 0.0, %v6794
    %v6796 = vpop.f32.mrf.mxu0
    %6797 = vmatprep.mubr.bf16.mxu0 0
    %6798 = vmatmul.mubr.bf16.gmra.mxu0 %v6707
    %v6799 = vpop.f32.mrf.mxu0
    %v6800 = vadd.f32 0.0, %v6799
    %v6801 = vpop.f32.mrf.mxu0
    %v6802 = vpop.f32.mrf.mxu0
    %v6803 = vadd.f32 0.0, %v6802
    %v6804 = vpop.f32.mrf.mxu0
    %6805 = vdwg.mxu0
    %v6806 = vadd.f32 %v6606, %v6744
    %v6807 = vadd.f32 %v6607, %v6747
    %v6808 = vadd.f32 %v6608, %v6752
    %v6809 = vadd.f32 %v6609, %v6755
    %v6810 = vadd.f32 %v6610, %v6760
    %v6811 = vadd.f32 %v6611, %v6763
    %v6812 = vadd.f32 %v6612, %v6768
    %v6813 = vadd.f32 %v6613, %v6771
    %v6814 = vadd.f32 %v6614, %v6776
    %v6815 = vadd.f32 %v6615, %v6779
    %v6816 = vadd.f32 %v6616, %v6784
    %v6817 = vadd.f32 %v6617, %v6787
    %v6818 = vadd.f32 %v6618, %v6792
    %v6819 = vadd.f32 %v6619, %v6795
    %v6820 = vadd.f32 %v6620, %v6800
    %v6821 = vadd.f32 %v6621, %v6803
    %s6822 = scalar_lea.vmem %s10, 256
    %v6823 = vld [vmem:[%s6822] sm:$0xf]
    %v6824 = vld [vmem:[%s6822 + $0x4] sm:$0xf]
    %v6825 = vld [vmem:[%s6822 + $0x8] sm:$0xf]
    %v6826 = vld [vmem:[%s6822 + $0xc] sm:$0xf]
    %v6827 = vld [vmem:[%s6822 + $0x10] sm:$0xf]
    %v6828 = vld [vmem:[%s6822 + $0x14] sm:$0xf]
    %v6829 = vld [vmem:[%s6822 + $0x18] sm:$0xf]
    %v6830 = vld [vmem:[%s6822 + $0x1c] sm:$0xf]
    %v6831 = vld [vmem:[%s6822 + $0x20] sm:$0xf]
    %v6832 = vld [vmem:[%s6822 + $0x24] sm:$0xf]
    %v6833 = vld [vmem:[%s6822 + $0x28] sm:$0xf]
    %v6834 = vld [vmem:[%s6822 + $0x2c] sm:$0xf]
    %v6835 = vld [vmem:[%s6822 + $0x30] sm:$0xf]
    %v6836 = vld [vmem:[%s6822 + $0x34] sm:$0xf]
    %v6837 = vld [vmem:[%s6822 + $0x38] sm:$0xf]
    %v6838 = vld [vmem:[%s6822 + $0x3c] sm:$0xf]
    %v6855 = vunpack.c.l.b16 %v6823
    %v6856 = vunpack.c.l.b16 %v6824
    %v6857 = vunpack.c.l.b16 %v6825
    %v6858 = vunpack.c.l.b16 %v6826
    %v6859 = vunpack.c.l.b16 %v6827
    %v6860 = vunpack.c.l.b16 %v6828
    %v6861 = vunpack.c.l.b16 %v6829
    %v6862 = vunpack.c.l.b16 %v6830
    %v6863 = vunpack.c.l.b16 %v6831
    %v6864 = vunpack.c.l.b16 %v6832
    %v6865 = vunpack.c.l.b16 %v6833
    %v6866 = vunpack.c.l.b16 %v6834
    %v6867 = vunpack.c.l.b16 %v6835
    %v6868 = vunpack.c.l.b16 %v6836
    %v6869 = vunpack.c.l.b16 %v6837
    %v6870 = vunpack.c.l.b16 %v6838
    %v6871 = vpack.c.b16 %v6856, %v6855
    %v6872 = vpack.c.b16 %v6858, %v6857
    %v6873 = vpack.c.b16 %v6860, %v6859
    %v6874 = vpack.c.b16 %v6862, %v6861
    %v6875 = vpack.c.b16 %v6864, %v6863
    %v6876 = vpack.c.b16 %v6866, %v6865
    %v6877 = vpack.c.b16 %v6868, %v6867
    %v6878 = vpack.c.b16 %v6870, %v6869
    %6879 = vrot.lane.b32.xlu0 %v6057, 96
    %v6880 = vpop.permute.xlu0 %6879
    %6881 = vrot.lane.b32.xlu0 %v6058, 96
    %v6882 = vpop.permute.xlu0 %6881
    %v6886 = vsel %vm176, %v6871, 0
    %v6889 = vsel %vm176, %v6872, 0
    %v6892 = vsel %vm176, %v6873, 0
    %v6895 = vsel %vm176, %v6874, 0
    %v6898 = vsel %vm176, %v6875, 0
    %v6901 = vsel %vm176, %v6876, 0
    %v6904 = vsel %vm176, %v6877, 0
    %v6907 = vsel %vm176, %v6878, 0
    %6909 = vmatprep.subr.bf16.mxu0 0
    %6910 = vmatpush1.bf16.msra.mxu0 0
    %6911 = vmatprep.subr.bf16.mxu0 0
    %6912 = vmatpush1.bf16.msra.mxu0 0
    %6913 = vmatprep.subr.bf16.mxu0 0
    %6914 = vmatpush1.bf16.msra.mxu0 0
    %6915 = vmatprep.subr.bf16.mxu0 0
    %6916 = vmatpush1.bf16.msra.mxu0 0
    %6917 = vmatprep.subr.bf16.mxu0 0
    %6918 = vmatpush1.bf16.msra.mxu0 0
    %6919 = vmatprep.subr.bf16.mxu0 0
    %6920 = vmatpush1.bf16.msra.mxu0 0
    %6921 = vmatprep.subr.bf16.mxu0 0
    %6922 = vmatpush1.bf16.msra.mxu0 %v6882
    %6923 = vmatprep.subr.bf16.mxu0 0
    %6924 = vmatpush1.bf16.msra.mxu0 %v6880
    %6925 = vmatprep.subr.bf16.mxu0 0
    %6926 = vmatpush2.bf16.msra.mxu0 0
    %6927 = vmatprep.subr.bf16.mxu0 0
    %6928 = vmatpush2.bf16.msra.mxu0 0
    %6929 = vmatprep.subr.bf16.mxu0 0
    %6930 = vmatpush2.bf16.msra.mxu0 0
    %6931 = vmatprep.subr.bf16.mxu0 0
    %6932 = vmatpush2.bf16.msra.mxu0 0
    %6933 = vmatprep.subr.bf16.mxu0 0
    %6934 = vmatpush2.bf16.msra.mxu0 0
    %6935 = vmatprep.subr.bf16.mxu0 0
    %6936 = vmatpush2.bf16.msra.mxu0 0
    %6937 = vmatprep.subr.bf16.mxu0 0
    %6938 = vmatpush2.bf16.msra.mxu0 0
    %6939 = vmatprep.subr.bf16.mxu0 0
    %6940 = vmatpush2.bf16.msra.mxu0 0
    %6941 = vmatprep.mubr.bf16.mxu0 0
    %6942 = vmatmul.mubr.bf16.gmra.mxu0 %v6886
    %v6943 = vpop.f32.mrf.mxu0
    %v6944 = vadd.f32 0.0, %v6943
    %v6945 = vpop.f32.mrf.mxu0
    %v6946 = vpop.f32.mrf.mxu0
    %v6947 = vadd.f32 0.0, %v6946
    %v6948 = vpop.f32.mrf.mxu0
    %6949 = vmatprep.mubr.bf16.mxu0 0
    %6950 = vmatmul.mubr.bf16.gmra.mxu0 %v6889
    %v6951 = vpop.f32.mrf.mxu0
    %v6952 = vadd.f32 0.0, %v6951
    %v6953 = vpop.f32.mrf.mxu0
    %v6954 = vpop.f32.mrf.mxu0
    %v6955 = vadd.f32 0.0, %v6954
    %v6956 = vpop.f32.mrf.mxu0
    %6957 = vmatprep.mubr.bf16.mxu0 0
    %6958 = vmatmul.mubr.bf16.gmra.mxu0 %v6892
    %v6959 = vpop.f32.mrf.mxu0
    %v6960 = vadd.f32 0.0, %v6959
    %v6961 = vpop.f32.mrf.mxu0
    %v6962 = vpop.f32.mrf.mxu0
    %v6963 = vadd.f32 0.0, %v6962
    %v6964 = vpop.f32.mrf.mxu0
    %6965 = vmatprep.mubr.bf16.mxu0 0
    %6966 = vmatmul.mubr.bf16.gmra.mxu0 %v6895
    %v6967 = vpop.f32.mrf.mxu0
    %v6968 = vadd.f32 0.0, %v6967
    %v6969 = vpop.f32.mrf.mxu0
    %v6970 = vpop.f32.mrf.mxu0
    %v6971 = vadd.f32 0.0, %v6970
    %v6972 = vpop.f32.mrf.mxu0
    %6973 = vmatprep.mubr.bf16.mxu0 0
    %6974 = vmatmul.mubr.bf16.gmra.mxu0 %v6898
    %v6975 = vpop.f32.mrf.mxu0
    %v6976 = vadd.f32 0.0, %v6975
    %v6977 = vpop.f32.mrf.mxu0
    %v6978 = vpop.f32.mrf.mxu0
    %v6979 = vadd.f32 0.0, %v6978
    %v6980 = vpop.f32.mrf.mxu0
    %6981 = vmatprep.mubr.bf16.mxu0 0
    %6982 = vmatmul.mubr.bf16.gmra.mxu0 %v6901
    %v6983 = vpop.f32.mrf.mxu0
    %v6984 = vadd.f32 0.0, %v6983
    %v6985 = vpop.f32.mrf.mxu0
    %v6986 = vpop.f32.mrf.mxu0
    %v6987 = vadd.f32 0.0, %v6986
    %v6988 = vpop.f32.mrf.mxu0
    %6989 = vmatprep.mubr.bf16.mxu0 0
    %6990 = vmatmul.mubr.bf16.gmra.mxu0 %v6904
    %v6991 = vpop.f32.mrf.mxu0
    %v6992 = vadd.f32 0.0, %v6991
    %v6993 = vpop.f32.mrf.mxu0
    %v6994 = vpop.f32.mrf.mxu0
    %v6995 = vadd.f32 0.0, %v6994
    %v6996 = vpop.f32.mrf.mxu0
    %6997 = vmatprep.mubr.bf16.mxu0 0
    %6998 = vmatmul.mubr.bf16.gmra.mxu0 %v6907
    %v6999 = vpop.f32.mrf.mxu0
    %v7000 = vadd.f32 0.0, %v6999
    %v7001 = vpop.f32.mrf.mxu0
    %v7002 = vpop.f32.mrf.mxu0
    %v7003 = vadd.f32 0.0, %v7002
    %v7004 = vpop.f32.mrf.mxu0
    %7005 = vdwg.mxu0
    %v7006 = vadd.f32 %v6806, %v6944
    %v7007 = vadd.f32 %v6807, %v6947
    %v7008 = vadd.f32 %v6808, %v6952
    %v7009 = vadd.f32 %v6809, %v6955
    %v7010 = vadd.f32 %v6810, %v6960
    %v7011 = vadd.f32 %v6811, %v6963
    %v7012 = vadd.f32 %v6812, %v6968
    %v7013 = vadd.f32 %v6813, %v6971
    %v7014 = vadd.f32 %v6814, %v6976
    %v7015 = vadd.f32 %v6815, %v6979
    %v7016 = vadd.f32 %v6816, %v6984
    %v7017 = vadd.f32 %v6817, %v6987
    %v7018 = vadd.f32 %v6818, %v6992
    %v7019 = vadd.f32 %v6819, %v6995
    %v7020 = vadd.f32 %v6820, %v7000
    %v7021 = vadd.f32 %v6821, %v7003
    %s7022 = scalar_lea.vmem %s10, 320
    %v7023 = vld [vmem:[%s7022] sm:$0xf]
    %v7024 = vld [vmem:[%s7022 + $0x4] sm:$0xf]
    %v7025 = vld [vmem:[%s7022 + $0x8] sm:$0xf]
    %v7026 = vld [vmem:[%s7022 + $0xc] sm:$0xf]
    %v7027 = vld [vmem:[%s7022 + $0x10] sm:$0xf]
    %v7028 = vld [vmem:[%s7022 + $0x14] sm:$0xf]
    %v7029 = vld [vmem:[%s7022 + $0x18] sm:$0xf]
    %v7030 = vld [vmem:[%s7022 + $0x1c] sm:$0xf]
    %v7031 = vld [vmem:[%s7022 + $0x20] sm:$0xf]
    %v7032 = vld [vmem:[%s7022 + $0x24] sm:$0xf]
    %v7033 = vld [vmem:[%s7022 + $0x28] sm:$0xf]
    %v7034 = vld [vmem:[%s7022 + $0x2c] sm:$0xf]
    %v7035 = vld [vmem:[%s7022 + $0x30] sm:$0xf]
    %v7036 = vld [vmem:[%s7022 + $0x34] sm:$0xf]
    %v7037 = vld [vmem:[%s7022 + $0x38] sm:$0xf]
    %v7038 = vld [vmem:[%s7022 + $0x3c] sm:$0xf]
    %v7055 = vunpack.c.l.b16 %v7023
    %v7056 = vunpack.c.l.b16 %v7024
    %v7057 = vunpack.c.l.b16 %v7025
    %v7058 = vunpack.c.l.b16 %v7026
    %v7059 = vunpack.c.l.b16 %v7027
    %v7060 = vunpack.c.l.b16 %v7028
    %v7061 = vunpack.c.l.b16 %v7029
    %v7062 = vunpack.c.l.b16 %v7030
    %v7063 = vunpack.c.l.b16 %v7031
    %v7064 = vunpack.c.l.b16 %v7032
    %v7065 = vunpack.c.l.b16 %v7033
    %v7066 = vunpack.c.l.b16 %v7034
    %v7067 = vunpack.c.l.b16 %v7035
    %v7068 = vunpack.c.l.b16 %v7036
    %v7069 = vunpack.c.l.b16 %v7037
    %v7070 = vunpack.c.l.b16 %v7038
    %v7071 = vpack.c.b16 %v7056, %v7055
    %v7072 = vpack.c.b16 %v7058, %v7057
    %v7073 = vpack.c.b16 %v7060, %v7059
    %v7074 = vpack.c.b16 %v7062, %v7061
    %v7075 = vpack.c.b16 %v7064, %v7063
    %v7076 = vpack.c.b16 %v7066, %v7065
    %v7077 = vpack.c.b16 %v7068, %v7067
    %v7078 = vpack.c.b16 %v7070, %v7069
    %7079 = vrot.lane.b32.xlu0 %v6057, 88
    %v7080 = vpop.permute.xlu0 %7079
    %7081 = vrot.lane.b32.xlu0 %v6058, 88
    %v7082 = vpop.permute.xlu0 %7081
    %v7086 = vsel %vm176, %v7071, 0
    %v7089 = vsel %vm176, %v7072, 0
    %v7092 = vsel %vm176, %v7073, 0
    %v7095 = vsel %vm176, %v7074, 0
    %v7098 = vsel %vm176, %v7075, 0
    %v7101 = vsel %vm176, %v7076, 0
    %v7104 = vsel %vm176, %v7077, 0
    %v7107 = vsel %vm176, %v7078, 0
    %7109 = vmatprep.subr.bf16.mxu0 0
    %7110 = vmatpush1.bf16.msra.mxu0 0
    %7111 = vmatprep.subr.bf16.mxu0 0
    %7112 = vmatpush1.bf16.msra.mxu0 0
    %7113 = vmatprep.subr.bf16.mxu0 0
    %7114 = vmatpush1.bf16.msra.mxu0 0
    %7115 = vmatprep.subr.bf16.mxu0 0
    %7116 = vmatpush1.bf16.msra.mxu0 0
    %7117 = vmatprep.subr.bf16.mxu0 0
    %7118 = vmatpush1.bf16.msra.mxu0 0
    %7119 = vmatprep.subr.bf16.mxu0 0
    %7120 = vmatpush1.bf16.msra.mxu0 0
    %7121 = vmatprep.subr.bf16.mxu0 0
    %7122 = vmatpush1.bf16.msra.mxu0 %v7082
    %7123 = vmatprep.subr.bf16.mxu0 0
    %7124 = vmatpush1.bf16.msra.mxu0 %v7080
    %7125 = vmatprep.subr.bf16.mxu0 0
    %7126 = vmatpush2.bf16.msra.mxu0 0
    %7127 = vmatprep.subr.bf16.mxu0 0
    %7128 = vmatpush2.bf16.msra.mxu0 0
    %7129 = vmatprep.subr.bf16.mxu0 0
    %7130 = vmatpush2.bf16.msra.mxu0 0
    %7131 = vmatprep.subr.bf16.mxu0 0
    %7132 = vmatpush2.bf16.msra.mxu0 0
    %7133 = vmatprep.subr.bf16.mxu0 0
    %7134 = vmatpush2.bf16.msra.mxu0 0
    %7135 = vmatprep.subr.bf16.mxu0 0
    %7136 = vmatpush2.bf16.msra.mxu0 0
    %7137 = vmatprep.subr.bf16.mxu0 0
    %7138 = vmatpush2.bf16.msra.mxu0 0
    %7139 = vmatprep.subr.bf16.mxu0 0
    %7140 = vmatpush2.bf16.msra.mxu0 0
    %7141 = vmatprep.mubr.bf16.mxu0 0
    %7142 = vmatmul.mubr.bf16.gmra.mxu0 %v7086
    %v7143 = vpop.f32.mrf.mxu0
    %v7144 = vadd.f32 0.0, %v7143
    %v7145 = vpop.f32.mrf.mxu0
    %v7146 = vpop.f32.mrf.mxu0
    %v7147 = vadd.f32 0.0, %v7146
    %v7148 = vpop.f32.mrf.mxu0
    %7149 = vmatprep.mubr.bf16.mxu0 0
    %7150 = vmatmul.mubr.bf16.gmra.mxu0 %v7089
    %v7151 = vpop.f32.mrf.mxu0
    %v7152 = vadd.f32 0.0, %v7151
    %v7153 = vpop.f32.mrf.mxu0
    %v7154 = vpop.f32.mrf.mxu0
    %v7155 = vadd.f32 0.0, %v7154
    %v7156 = vpop.f32.mrf.mxu0
    %7157 = vmatprep.mubr.bf16.mxu0 0
    %7158 = vmatmul.mubr.bf16.gmra.mxu0 %v7092
    %v7159 = vpop.f32.mrf.mxu0
    %v7160 = vadd.f32 0.0, %v7159
    %v7161 = vpop.f32.mrf.mxu0
    %v7162 = vpop.f32.mrf.mxu0
    %v7163 = vadd.f32 0.0, %v7162
    %v7164 = vpop.f32.mrf.mxu0
    %7165 = vmatprep.mubr.bf16.mxu0 0
    %7166 = vmatmul.mubr.bf16.gmra.mxu0 %v7095
    %v7167 = vpop.f32.mrf.mxu0
    %v7168 = vadd.f32 0.0, %v7167
    %v7169 = vpop.f32.mrf.mxu0
    %v7170 = vpop.f32.mrf.mxu0
    %v7171 = vadd.f32 0.0, %v7170
    %v7172 = vpop.f32.mrf.mxu0
    %7173 = vmatprep.mubr.bf16.mxu0 0
    %7174 = vmatmul.mubr.bf16.gmra.mxu0 %v7098
    %v7175 = vpop.f32.mrf.mxu0
    %v7176 = vadd.f32 0.0, %v7175
    %v7177 = vpop.f32.mrf.mxu0
    %v7178 = vpop.f32.mrf.mxu0
    %v7179 = vadd.f32 0.0, %v7178
    %v7180 = vpop.f32.mrf.mxu0
    %7181 = vmatprep.mubr.bf16.mxu0 0
    %7182 = vmatmul.mubr.bf16.gmra.mxu0 %v7101
    %v7183 = vpop.f32.mrf.mxu0
    %v7184 = vadd.f32 0.0, %v7183
    %v7185 = vpop.f32.mrf.mxu0
    %v7186 = vpop.f32.mrf.mxu0
    %v7187 = vadd.f32 0.0, %v7186
    %v7188 = vpop.f32.mrf.mxu0
    %7189 = vmatprep.mubr.bf16.mxu0 0
    %7190 = vmatmul.mubr.bf16.gmra.mxu0 %v7104
    %v7191 = vpop.f32.mrf.mxu0
    %v7192 = vadd.f32 0.0, %v7191
    %v7193 = vpop.f32.mrf.mxu0
    %v7194 = vpop.f32.mrf.mxu0
    %v7195 = vadd.f32 0.0, %v7194
    %v7196 = vpop.f32.mrf.mxu0
    %7197 = vmatprep.mubr.bf16.mxu0 0
    %7198 = vmatmul.mubr.bf16.gmra.mxu0 %v7107
    %v7199 = vpop.f32.mrf.mxu0
    %v7200 = vadd.f32 0.0, %v7199
    %v7201 = vpop.f32.mrf.mxu0
    %v7202 = vpop.f32.mrf.mxu0
    %v7203 = vadd.f32 0.0, %v7202
    %v7204 = vpop.f32.mrf.mxu0
    %7205 = vdwg.mxu0
    %v7206 = vadd.f32 %v7006, %v7144
    %v7207 = vadd.f32 %v7007, %v7147
    %v7208 = vadd.f32 %v7008, %v7152
    %v7209 = vadd.f32 %v7009, %v7155
    %v7210 = vadd.f32 %v7010, %v7160
    %v7211 = vadd.f32 %v7011, %v7163
    %v7212 = vadd.f32 %v7012, %v7168
    %v7213 = vadd.f32 %v7013, %v7171
    %v7214 = vadd.f32 %v7014, %v7176
    %v7215 = vadd.f32 %v7015, %v7179
    %v7216 = vadd.f32 %v7016, %v7184
    %v7217 = vadd.f32 %v7017, %v7187
    %v7218 = vadd.f32 %v7018, %v7192
    %v7219 = vadd.f32 %v7019, %v7195
    %v7220 = vadd.f32 %v7020, %v7200
    %v7221 = vadd.f32 %v7021, %v7203
    %s7222 = scalar_lea.vmem %s10, 384
    %v7223 = vld [vmem:[%s7222] sm:$0xf]
    %v7224 = vld [vmem:[%s7222 + $0x4] sm:$0xf]
    %v7225 = vld [vmem:[%s7222 + $0x8] sm:$0xf]
    %v7226 = vld [vmem:[%s7222 + $0xc] sm:$0xf]
    %v7227 = vld [vmem:[%s7222 + $0x10] sm:$0xf]
    %v7228 = vld [vmem:[%s7222 + $0x14] sm:$0xf]
    %v7229 = vld [vmem:[%s7222 + $0x18] sm:$0xf]
    %v7230 = vld [vmem:[%s7222 + $0x1c] sm:$0xf]
    %v7231 = vld [vmem:[%s7222 + $0x20] sm:$0xf]
    %v7232 = vld [vmem:[%s7222 + $0x24] sm:$0xf]
    %v7233 = vld [vmem:[%s7222 + $0x28] sm:$0xf]
    %v7234 = vld [vmem:[%s7222 + $0x2c] sm:$0xf]
    %v7235 = vld [vmem:[%s7222 + $0x30] sm:$0xf]
    %v7236 = vld [vmem:[%s7222 + $0x34] sm:$0xf]
    %v7237 = vld [vmem:[%s7222 + $0x38] sm:$0xf]
    %v7238 = vld [vmem:[%s7222 + $0x3c] sm:$0xf]
    %v7255 = vunpack.c.l.b16 %v7223
    %v7256 = vunpack.c.l.b16 %v7224
    %v7257 = vunpack.c.l.b16 %v7225
    %v7258 = vunpack.c.l.b16 %v7226
    %v7259 = vunpack.c.l.b16 %v7227
    %v7260 = vunpack.c.l.b16 %v7228
    %v7261 = vunpack.c.l.b16 %v7229
    %v7262 = vunpack.c.l.b16 %v7230
    %v7263 = vunpack.c.l.b16 %v7231
    %v7264 = vunpack.c.l.b16 %v7232
    %v7265 = vunpack.c.l.b16 %v7233
    %v7266 = vunpack.c.l.b16 %v7234
    %v7267 = vunpack.c.l.b16 %v7235
    %v7268 = vunpack.c.l.b16 %v7236
    %v7269 = vunpack.c.l.b16 %v7237
    %v7270 = vunpack.c.l.b16 %v7238
    %v7271 = vpack.c.b16 %v7256, %v7255
    %v7272 = vpack.c.b16 %v7258, %v7257
    %v7273 = vpack.c.b16 %v7260, %v7259
    %v7274 = vpack.c.b16 %v7262, %v7261
    %v7275 = vpack.c.b16 %v7264, %v7263
    %v7276 = vpack.c.b16 %v7266, %v7265
    %v7277 = vpack.c.b16 %v7268, %v7267
    %v7278 = vpack.c.b16 %v7270, %v7269
    %7279 = vrot.lane.b32.xlu0 %v6057, 80
    %v7280 = vpop.permute.xlu0 %7279
    %7281 = vrot.lane.b32.xlu0 %v6058, 80
    %v7282 = vpop.permute.xlu0 %7281
    %v7286 = vsel %vm176, %v7271, 0
    %v7289 = vsel %vm176, %v7272, 0
    %v7292 = vsel %vm176, %v7273, 0
    %v7295 = vsel %vm176, %v7274, 0
    %v7298 = vsel %vm176, %v7275, 0
    %v7301 = vsel %vm176, %v7276, 0
    %v7304 = vsel %vm176, %v7277, 0
    %v7307 = vsel %vm176, %v7278, 0
    %7309 = vmatprep.subr.bf16.mxu0 0
    %7310 = vmatpush1.bf16.msra.mxu0 0
    %7311 = vmatprep.subr.bf16.mxu0 0
    %7312 = vmatpush1.bf16.msra.mxu0 0
    %7313 = vmatprep.subr.bf16.mxu0 0
    %7314 = vmatpush1.bf16.msra.mxu0 0
    %7315 = vmatprep.subr.bf16.mxu0 0
    %7316 = vmatpush1.bf16.msra.mxu0 0
    %7317 = vmatprep.subr.bf16.mxu0 0
    %7318 = vmatpush1.bf16.msra.mxu0 0
    %7319 = vmatprep.subr.bf16.mxu0 0
    %7320 = vmatpush1.bf16.msra.mxu0 0
    %7321 = vmatprep.subr.bf16.mxu0 0
    %7322 = vmatpush1.bf16.msra.mxu0 %v7282
    %7323 = vmatprep.subr.bf16.mxu0 0
    %7324 = vmatpush1.bf16.msra.mxu0 %v7280
    %7325 = vmatprep.subr.bf16.mxu0 0
    %7326 = vmatpush2.bf16.msra.mxu0 0
    %7327 = vmatprep.subr.bf16.mxu0 0
    %7328 = vmatpush2.bf16.msra.mxu0 0
    %7329 = vmatprep.subr.bf16.mxu0 0
    %7330 = vmatpush2.bf16.msra.mxu0 0
    %7331 = vmatprep.subr.bf16.mxu0 0
    %7332 = vmatpush2.bf16.msra.mxu0 0
    %7333 = vmatprep.subr.bf16.mxu0 0
    %7334 = vmatpush2.bf16.msra.mxu0 0
    %7335 = vmatprep.subr.bf16.mxu0 0
    %7336 = vmatpush2.bf16.msra.mxu0 0
    %7337 = vmatprep.subr.bf16.mxu0 0
    %7338 = vmatpush2.bf16.msra.mxu0 0
    %7339 = vmatprep.subr.bf16.mxu0 0
    %7340 = vmatpush2.bf16.msra.mxu0 0
    %7341 = vmatprep.mubr.bf16.mxu0 0
    %7342 = vmatmul.mubr.bf16.gmra.mxu0 %v7286
    %v7343 = vpop.f32.mrf.mxu0
    %v7344 = vadd.f32 0.0, %v7343
    %v7345 = vpop.f32.mrf.mxu0
    %v7346 = vpop.f32.mrf.mxu0
    %v7347 = vadd.f32 0.0, %v7346
    %v7348 = vpop.f32.mrf.mxu0
    %7349 = vmatprep.mubr.bf16.mxu0 0
    %7350 = vmatmul.mubr.bf16.gmra.mxu0 %v7289
    %v7351 = vpop.f32.mrf.mxu0
    %v7352 = vadd.f32 0.0, %v7351
    %v7353 = vpop.f32.mrf.mxu0
    %v7354 = vpop.f32.mrf.mxu0
    %v7355 = vadd.f32 0.0, %v7354
    %v7356 = vpop.f32.mrf.mxu0
    %7357 = vmatprep.mubr.bf16.mxu0 0
    %7358 = vmatmul.mubr.bf16.gmra.mxu0 %v7292
    %v7359 = vpop.f32.mrf.mxu0
    %v7360 = vadd.f32 0.0, %v7359
    %v7361 = vpop.f32.mrf.mxu0
    %v7362 = vpop.f32.mrf.mxu0
    %v7363 = vadd.f32 0.0, %v7362
    %v7364 = vpop.f32.mrf.mxu0
    %7365 = vmatprep.mubr.bf16.mxu0 0
    %7366 = vmatmul.mubr.bf16.gmra.mxu0 %v7295
    %v7367 = vpop.f32.mrf.mxu0
    %v7368 = vadd.f32 0.0, %v7367
    %v7369 = vpop.f32.mrf.mxu0
    %v7370 = vpop.f32.mrf.mxu0
    %v7371 = vadd.f32 0.0, %v7370
    %v7372 = vpop.f32.mrf.mxu0
    %7373 = vmatprep.mubr.bf16.mxu0 0
    %7374 = vmatmul.mubr.bf16.gmra.mxu0 %v7298
    %v7375 = vpop.f32.mrf.mxu0
    %v7376 = vadd.f32 0.0, %v7375
    %v7377 = vpop.f32.mrf.mxu0
    %v7378 = vpop.f32.mrf.mxu0
    %v7379 = vadd.f32 0.0, %v7378
    %v7380 = vpop.f32.mrf.mxu0
    %7381 = vmatprep.mubr.bf16.mxu0 0
    %7382 = vmatmul.mubr.bf16.gmra.mxu0 %v7301
    %v7383 = vpop.f32.mrf.mxu0
    %v7384 = vadd.f32 0.0, %v7383
    %v7385 = vpop.f32.mrf.mxu0
    %v7386 = vpop.f32.mrf.mxu0
    %v7387 = vadd.f32 0.0, %v7386
    %v7388 = vpop.f32.mrf.mxu0
    %7389 = vmatprep.mubr.bf16.mxu0 0
    %7390 = vmatmul.mubr.bf16.gmra.mxu0 %v7304
    %v7391 = vpop.f32.mrf.mxu0
    %v7392 = vadd.f32 0.0, %v7391
    %v7393 = vpop.f32.mrf.mxu0
    %v7394 = vpop.f32.mrf.mxu0
    %v7395 = vadd.f32 0.0, %v7394
    %v7396 = vpop.f32.mrf.mxu0
    %7397 = vmatprep.mubr.bf16.mxu0 0
    %7398 = vmatmul.mubr.bf16.gmra.mxu0 %v7307
    %v7399 = vpop.f32.mrf.mxu0
    %v7400 = vadd.f32 0.0, %v7399
    %v7401 = vpop.f32.mrf.mxu0
    %v7402 = vpop.f32.mrf.mxu0
    %v7403 = vadd.f32 0.0, %v7402
    %v7404 = vpop.f32.mrf.mxu0
    %7405 = vdwg.mxu0
    %v7406 = vadd.f32 %v7206, %v7344
    %v7407 = vadd.f32 %v7207, %v7347
    %v7408 = vadd.f32 %v7208, %v7352
    %v7409 = vadd.f32 %v7209, %v7355
    %v7410 = vadd.f32 %v7210, %v7360
    %v7411 = vadd.f32 %v7211, %v7363
    %v7412 = vadd.f32 %v7212, %v7368
    %v7413 = vadd.f32 %v7213, %v7371
    %v7414 = vadd.f32 %v7214, %v7376
    %v7415 = vadd.f32 %v7215, %v7379
    %v7416 = vadd.f32 %v7216, %v7384
    %v7417 = vadd.f32 %v7217, %v7387
    %v7418 = vadd.f32 %v7218, %v7392
    %v7419 = vadd.f32 %v7219, %v7395
    %v7420 = vadd.f32 %v7220, %v7400
    %v7421 = vadd.f32 %v7221, %v7403
    %s7422 = scalar_lea.vmem %s10, 448
    %v7423 = vld [vmem:[%s7422] sm:$0xf]
    %v7424 = vld [vmem:[%s7422 + $0x4] sm:$0xf]
    %v7425 = vld [vmem:[%s7422 + $0x8] sm:$0xf]
    %v7426 = vld [vmem:[%s7422 + $0xc] sm:$0xf]
    %v7427 = vld [vmem:[%s7422 + $0x10] sm:$0xf]
    %v7428 = vld [vmem:[%s7422 + $0x14] sm:$0xf]
    %v7429 = vld [vmem:[%s7422 + $0x18] sm:$0xf]
    %v7430 = vld [vmem:[%s7422 + $0x1c] sm:$0xf]
    %v7431 = vld [vmem:[%s7422 + $0x20] sm:$0xf]
    %v7432 = vld [vmem:[%s7422 + $0x24] sm:$0xf]
    %v7433 = vld [vmem:[%s7422 + $0x28] sm:$0xf]
    %v7434 = vld [vmem:[%s7422 + $0x2c] sm:$0xf]
    %v7435 = vld [vmem:[%s7422 + $0x30] sm:$0xf]
    %v7436 = vld [vmem:[%s7422 + $0x34] sm:$0xf]
    %v7437 = vld [vmem:[%s7422 + $0x38] sm:$0xf]
    %v7438 = vld [vmem:[%s7422 + $0x3c] sm:$0xf]
    %v7455 = vunpack.c.l.b16 %v7423
    %v7456 = vunpack.c.l.b16 %v7424
    %v7457 = vunpack.c.l.b16 %v7425
    %v7458 = vunpack.c.l.b16 %v7426
    %v7459 = vunpack.c.l.b16 %v7427
    %v7460 = vunpack.c.l.b16 %v7428
    %v7461 = vunpack.c.l.b16 %v7429
    %v7462 = vunpack.c.l.b16 %v7430
    %v7463 = vunpack.c.l.b16 %v7431
    %v7464 = vunpack.c.l.b16 %v7432
    %v7465 = vunpack.c.l.b16 %v7433
    %v7466 = vunpack.c.l.b16 %v7434
    %v7467 = vunpack.c.l.b16 %v7435
    %v7468 = vunpack.c.l.b16 %v7436
    %v7469 = vunpack.c.l.b16 %v7437
    %v7470 = vunpack.c.l.b16 %v7438
    %v7471 = vpack.c.b16 %v7456, %v7455
    %v7472 = vpack.c.b16 %v7458, %v7457
    %v7473 = vpack.c.b16 %v7460, %v7459
    %v7474 = vpack.c.b16 %v7462, %v7461
    %v7475 = vpack.c.b16 %v7464, %v7463
    %v7476 = vpack.c.b16 %v7466, %v7465
    %v7477 = vpack.c.b16 %v7468, %v7467
    %v7478 = vpack.c.b16 %v7470, %v7469
    %7479 = vrot.lane.b32.xlu0 %v6057, 72
    %v7480 = vpop.permute.xlu0 %7479
    %7481 = vrot.lane.b32.xlu0 %v6058, 72
    %v7482 = vpop.permute.xlu0 %7481
    %v7486 = vsel %vm176, %v7471, 0
    %v7489 = vsel %vm176, %v7472, 0
    %v7492 = vsel %vm176, %v7473, 0
    %v7495 = vsel %vm176, %v7474, 0
    %v7498 = vsel %vm176, %v7475, 0
    %v7501 = vsel %vm176, %v7476, 0
    %v7504 = vsel %vm176, %v7477, 0
    %v7507 = vsel %vm176, %v7478, 0
    %7509 = vmatprep.subr.bf16.mxu0 0
    %7510 = vmatpush1.bf16.msra.mxu0 0
    %7511 = vmatprep.subr.bf16.mxu0 0
    %7512 = vmatpush1.bf16.msra.mxu0 0
    %7513 = vmatprep.subr.bf16.mxu0 0
    %7514 = vmatpush1.bf16.msra.mxu0 0
    %7515 = vmatprep.subr.bf16.mxu0 0
    %7516 = vmatpush1.bf16.msra.mxu0 0
    %7517 = vmatprep.subr.bf16.mxu0 0
    %7518 = vmatpush1.bf16.msra.mxu0 0
    %7519 = vmatprep.subr.bf16.mxu0 0
    %7520 = vmatpush1.bf16.msra.mxu0 0
    %7521 = vmatprep.subr.bf16.mxu0 0
    %7522 = vmatpush1.bf16.msra.mxu0 %v7482
    %7523 = vmatprep.subr.bf16.mxu0 0
    %7524 = vmatpush1.bf16.msra.mxu0 %v7480
    %7525 = vmatprep.subr.bf16.mxu0 0
    %7526 = vmatpush2.bf16.msra.mxu0 0
    %7527 = vmatprep.subr.bf16.mxu0 0
    %7528 = vmatpush2.bf16.msra.mxu0 0
    %7529 = vmatprep.subr.bf16.mxu0 0
    %7530 = vmatpush2.bf16.msra.mxu0 0
    %7531 = vmatprep.subr.bf16.mxu0 0
    %7532 = vmatpush2.bf16.msra.mxu0 0
    %7533 = vmatprep.subr.bf16.mxu0 0
    %7534 = vmatpush2.bf16.msra.mxu0 0
    %7535 = vmatprep.subr.bf16.mxu0 0
    %7536 = vmatpush2.bf16.msra.mxu0 0
    %7537 = vmatprep.subr.bf16.mxu0 0
    %7538 = vmatpush2.bf16.msra.mxu0 0
    %7539 = vmatprep.subr.bf16.mxu0 0
    %7540 = vmatpush2.bf16.msra.mxu0 0
    %7541 = vmatprep.mubr.bf16.mxu0 0
    %7542 = vmatmul.mubr.bf16.gmra.mxu0 %v7486
    %v7543 = vpop.f32.mrf.mxu0
    %v7544 = vadd.f32 0.0, %v7543
    %v7545 = vpop.f32.mrf.mxu0
    %v7546 = vpop.f32.mrf.mxu0
    %v7547 = vadd.f32 0.0, %v7546
    %v7548 = vpop.f32.mrf.mxu0
    %7549 = vmatprep.mubr.bf16.mxu0 0
    %7550 = vmatmul.mubr.bf16.gmra.mxu0 %v7489
    %v7551 = vpop.f32.mrf.mxu0
    %v7552 = vadd.f32 0.0, %v7551
    %v7553 = vpop.f32.mrf.mxu0
    %v7554 = vpop.f32.mrf.mxu0
    %v7555 = vadd.f32 0.0, %v7554
    %v7556 = vpop.f32.mrf.mxu0
    %7557 = vmatprep.mubr.bf16.mxu0 0
    %7558 = vmatmul.mubr.bf16.gmra.mxu0 %v7492
    %v7559 = vpop.f32.mrf.mxu0
    %v7560 = vadd.f32 0.0, %v7559
    %v7561 = vpop.f32.mrf.mxu0
    %v7562 = vpop.f32.mrf.mxu0
    %v7563 = vadd.f32 0.0, %v7562
    %v7564 = vpop.f32.mrf.mxu0
    %7565 = vmatprep.mubr.bf16.mxu0 0
    %7566 = vmatmul.mubr.bf16.gmra.mxu0 %v7495
    %v7567 = vpop.f32.mrf.mxu0
    %v7568 = vadd.f32 0.0, %v7567
    %v7569 = vpop.f32.mrf.mxu0
    %v7570 = vpop.f32.mrf.mxu0
    %v7571 = vadd.f32 0.0, %v7570
    %v7572 = vpop.f32.mrf.mxu0
    %7573 = vmatprep.mubr.bf16.mxu0 0
    %7574 = vmatmul.mubr.bf16.gmra.mxu0 %v7498
    %v7575 = vpop.f32.mrf.mxu0
    %v7576 = vadd.f32 0.0, %v7575
    %v7577 = vpop.f32.mrf.mxu0
    %v7578 = vpop.f32.mrf.mxu0
    %v7579 = vadd.f32 0.0, %v7578
    %v7580 = vpop.f32.mrf.mxu0
    %7581 = vmatprep.mubr.bf16.mxu0 0
    %7582 = vmatmul.mubr.bf16.gmra.mxu0 %v7501
    %v7583 = vpop.f32.mrf.mxu0
    %v7584 = vadd.f32 0.0, %v7583
    %v7585 = vpop.f32.mrf.mxu0
    %v7586 = vpop.f32.mrf.mxu0
    %v7587 = vadd.f32 0.0, %v7586
    %v7588 = vpop.f32.mrf.mxu0
    %7589 = vmatprep.mubr.bf16.mxu0 0
    %7590 = vmatmul.mubr.bf16.gmra.mxu0 %v7504
    %v7591 = vpop.f32.mrf.mxu0
    %v7592 = vadd.f32 0.0, %v7591
    %v7593 = vpop.f32.mrf.mxu0
    %v7594 = vpop.f32.mrf.mxu0
    %v7595 = vadd.f32 0.0, %v7594
    %v7596 = vpop.f32.mrf.mxu0
    %7597 = vmatprep.mubr.bf16.mxu0 0
    %7598 = vmatmul.mubr.bf16.gmra.mxu0 %v7507
    %v7599 = vpop.f32.mrf.mxu0
    %v7600 = vadd.f32 0.0, %v7599
    %v7601 = vpop.f32.mrf.mxu0
    %v7602 = vpop.f32.mrf.mxu0
    %v7603 = vadd.f32 0.0, %v7602
    %v7604 = vpop.f32.mrf.mxu0
    %7605 = vdwg.mxu0
    %v7606 = vadd.f32 %v7406, %v7544
    %v7607 = vadd.f32 %v7407, %v7547
    %v7608 = vadd.f32 %v7408, %v7552
    %v7609 = vadd.f32 %v7409, %v7555
    %v7610 = vadd.f32 %v7410, %v7560
    %v7611 = vadd.f32 %v7411, %v7563
    %v7612 = vadd.f32 %v7412, %v7568
    %v7613 = vadd.f32 %v7413, %v7571
    %v7614 = vadd.f32 %v7414, %v7576
    %v7615 = vadd.f32 %v7415, %v7579
    %v7616 = vadd.f32 %v7416, %v7584
    %v7617 = vadd.f32 %v7417, %v7587
    %v7618 = vadd.f32 %v7418, %v7592
    %v7619 = vadd.f32 %v7419, %v7595
    %v7620 = vadd.f32 %v7420, %v7600
    %v7621 = vadd.f32 %v7421, %v7603
    %s7622 = scalar_lea.vmem %s10, 512
    %v7623 = vld [vmem:[%s7622] sm:$0xf]
    %v7624 = vld [vmem:[%s7622 + $0x4] sm:$0xf]
    %v7625 = vld [vmem:[%s7622 + $0x8] sm:$0xf]
    %v7626 = vld [vmem:[%s7622 + $0xc] sm:$0xf]
    %v7627 = vld [vmem:[%s7622 + $0x10] sm:$0xf]
    %v7628 = vld [vmem:[%s7622 + $0x14] sm:$0xf]
    %v7629 = vld [vmem:[%s7622 + $0x18] sm:$0xf]
    %v7630 = vld [vmem:[%s7622 + $0x1c] sm:$0xf]
    %v7631 = vld [vmem:[%s7622 + $0x20] sm:$0xf]
    %v7632 = vld [vmem:[%s7622 + $0x24] sm:$0xf]
    %v7633 = vld [vmem:[%s7622 + $0x28] sm:$0xf]
    %v7634 = vld [vmem:[%s7622 + $0x2c] sm:$0xf]
    %v7635 = vld [vmem:[%s7622 + $0x30] sm:$0xf]
    %v7636 = vld [vmem:[%s7622 + $0x34] sm:$0xf]
    %v7637 = vld [vmem:[%s7622 + $0x38] sm:$0xf]
    %v7638 = vld [vmem:[%s7622 + $0x3c] sm:$0xf]
    %v7655 = vunpack.c.l.b16 %v7623
    %v7656 = vunpack.c.l.b16 %v7624
    %v7657 = vunpack.c.l.b16 %v7625
    %v7658 = vunpack.c.l.b16 %v7626
    %v7659 = vunpack.c.l.b16 %v7627
    %v7660 = vunpack.c.l.b16 %v7628
    %v7661 = vunpack.c.l.b16 %v7629
    %v7662 = vunpack.c.l.b16 %v7630
    %v7663 = vunpack.c.l.b16 %v7631
    %v7664 = vunpack.c.l.b16 %v7632
    %v7665 = vunpack.c.l.b16 %v7633
    %v7666 = vunpack.c.l.b16 %v7634
    %v7667 = vunpack.c.l.b16 %v7635
    %v7668 = vunpack.c.l.b16 %v7636
    %v7669 = vunpack.c.l.b16 %v7637
    %v7670 = vunpack.c.l.b16 %v7638
    %v7671 = vpack.c.b16 %v7656, %v7655
    %v7672 = vpack.c.b16 %v7658, %v7657
    %v7673 = vpack.c.b16 %v7660, %v7659
    %v7674 = vpack.c.b16 %v7662, %v7661
    %v7675 = vpack.c.b16 %v7664, %v7663
    %v7676 = vpack.c.b16 %v7666, %v7665
    %v7677 = vpack.c.b16 %v7668, %v7667
    %v7678 = vpack.c.b16 %v7670, %v7669
    %7679 = vrot.lane.b32.xlu0 %v6057, 64
    %v7680 = vpop.permute.xlu0 %7679
    %7681 = vrot.lane.b32.xlu0 %v6058, 64
    %v7682 = vpop.permute.xlu0 %7681
    %v7686 = vsel %vm176, %v7671, 0
    %v7689 = vsel %vm176, %v7672, 0
    %v7692 = vsel %vm176, %v7673, 0
    %v7695 = vsel %vm176, %v7674, 0
    %v7698 = vsel %vm176, %v7675, 0
    %v7701 = vsel %vm176, %v7676, 0
    %v7704 = vsel %vm176, %v7677, 0
    %v7707 = vsel %vm176, %v7678, 0
    %7709 = vmatprep.subr.bf16.mxu0 0
    %7710 = vmatpush1.bf16.msra.mxu0 0
    %7711 = vmatprep.subr.bf16.mxu0 0
    %7712 = vmatpush1.bf16.msra.mxu0 0
    %7713 = vmatprep.subr.bf16.mxu0 0
    %7714 = vmatpush1.bf16.msra.mxu0 0
    %7715 = vmatprep.subr.bf16.mxu0 0
    %7716 = vmatpush1.bf16.msra.mxu0 0
    %7717 = vmatprep.subr.bf16.mxu0 0
    %7718 = vmatpush1.bf16.msra.mxu0 0
    %7719 = vmatprep.subr.bf16.mxu0 0
    %7720 = vmatpush1.bf16.msra.mxu0 0
    %7721 = vmatprep.subr.bf16.mxu0 0
    %7722 = vmatpush1.bf16.msra.mxu0 %v7682
    %7723 = vmatprep.subr.bf16.mxu0 0
    %7724 = vmatpush1.bf16.msra.mxu0 %v7680
    %7725 = vmatprep.subr.bf16.mxu0 0
    %7726 = vmatpush2.bf16.msra.mxu0 0
    %7727 = vmatprep.subr.bf16.mxu0 0
    %7728 = vmatpush2.bf16.msra.mxu0 0
    %7729 = vmatprep.subr.bf16.mxu0 0
    %7730 = vmatpush2.bf16.msra.mxu0 0
    %7731 = vmatprep.subr.bf16.mxu0 0
    %7732 = vmatpush2.bf16.msra.mxu0 0
    %7733 = vmatprep.subr.bf16.mxu0 0
    %7734 = vmatpush2.bf16.msra.mxu0 0
    %7735 = vmatprep.subr.bf16.mxu0 0
    %7736 = vmatpush2.bf16.msra.mxu0 0
    %7737 = vmatprep.subr.bf16.mxu0 0
    %7738 = vmatpush2.bf16.msra.mxu0 0
    %7739 = vmatprep.subr.bf16.mxu0 0
    %7740 = vmatpush2.bf16.msra.mxu0 0
    %7741 = vmatprep.mubr.bf16.mxu0 0
    %7742 = vmatmul.mubr.bf16.gmra.mxu0 %v7686
    %v7743 = vpop.f32.mrf.mxu0
    %v7744 = vadd.f32 0.0, %v7743
    %v7745 = vpop.f32.mrf.mxu0
    %v7746 = vpop.f32.mrf.mxu0
    %v7747 = vadd.f32 0.0, %v7746
    %v7748 = vpop.f32.mrf.mxu0
    %7749 = vmatprep.mubr.bf16.mxu0 0
    %7750 = vmatmul.mubr.bf16.gmra.mxu0 %v7689
    %v7751 = vpop.f32.mrf.mxu0
    %v7752 = vadd.f32 0.0, %v7751
    %v7753 = vpop.f32.mrf.mxu0
    %v7754 = vpop.f32.mrf.mxu0
    %v7755 = vadd.f32 0.0, %v7754
    %v7756 = vpop.f32.mrf.mxu0
    %7757 = vmatprep.mubr.bf16.mxu0 0
    %7758 = vmatmul.mubr.bf16.gmra.mxu0 %v7692
    %v7759 = vpop.f32.mrf.mxu0
    %v7760 = vadd.f32 0.0, %v7759
    %v7761 = vpop.f32.mrf.mxu0
    %v7762 = vpop.f32.mrf.mxu0
    %v7763 = vadd.f32 0.0, %v7762
    %v7764 = vpop.f32.mrf.mxu0
    %7765 = vmatprep.mubr.bf16.mxu0 0
    %7766 = vmatmul.mubr.bf16.gmra.mxu0 %v7695
    %v7767 = vpop.f32.mrf.mxu0
    %v7768 = vadd.f32 0.0, %v7767
    %v7769 = vpop.f32.mrf.mxu0
    %v7770 = vpop.f32.mrf.mxu0
    %v7771 = vadd.f32 0.0, %v7770
    %v7772 = vpop.f32.mrf.mxu0
    %7773 = vmatprep.mubr.bf16.mxu0 0
    %7774 = vmatmul.mubr.bf16.gmra.mxu0 %v7698
    %v7775 = vpop.f32.mrf.mxu0
    %v7776 = vadd.f32 0.0, %v7775
    %v7777 = vpop.f32.mrf.mxu0
    %v7778 = vpop.f32.mrf.mxu0
    %v7779 = vadd.f32 0.0, %v7778
    %v7780 = vpop.f32.mrf.mxu0
    %7781 = vmatprep.mubr.bf16.mxu0 0
    %7782 = vmatmul.mubr.bf16.gmra.mxu0 %v7701
    %v7783 = vpop.f32.mrf.mxu0
    %v7784 = vadd.f32 0.0, %v7783
    %v7785 = vpop.f32.mrf.mxu0
    %v7786 = vpop.f32.mrf.mxu0
    %v7787 = vadd.f32 0.0, %v7786
    %v7788 = vpop.f32.mrf.mxu0
    %7789 = vmatprep.mubr.bf16.mxu0 0
    %7790 = vmatmul.mubr.bf16.gmra.mxu0 %v7704
    %v7791 = vpop.f32.mrf.mxu0
    %v7792 = vadd.f32 0.0, %v7791
    %v7793 = vpop.f32.mrf.mxu0
    %v7794 = vpop.f32.mrf.mxu0
    %v7795 = vadd.f32 0.0, %v7794
    %v7796 = vpop.f32.mrf.mxu0
    %7797 = vmatprep.mubr.bf16.mxu0 0
    %7798 = vmatmul.mubr.bf16.gmra.mxu0 %v7707
    %v7799 = vpop.f32.mrf.mxu0
    %v7800 = vadd.f32 0.0, %v7799
    %v7801 = vpop.f32.mrf.mxu0
    %v7802 = vpop.f32.mrf.mxu0
    %v7803 = vadd.f32 0.0, %v7802
    %v7804 = vpop.f32.mrf.mxu0
    %7805 = vdwg.mxu0
    %v7806 = vadd.f32 %v7606, %v7744
    %v7807 = vadd.f32 %v7607, %v7747
    %v7808 = vadd.f32 %v7608, %v7752
    %v7809 = vadd.f32 %v7609, %v7755
    %v7810 = vadd.f32 %v7610, %v7760
    %v7811 = vadd.f32 %v7611, %v7763
    %v7812 = vadd.f32 %v7612, %v7768
    %v7813 = vadd.f32 %v7613, %v7771
    %v7814 = vadd.f32 %v7614, %v7776
    %v7815 = vadd.f32 %v7615, %v7779
    %v7816 = vadd.f32 %v7616, %v7784
    %v7817 = vadd.f32 %v7617, %v7787
    %v7818 = vadd.f32 %v7618, %v7792
    %v7819 = vadd.f32 %v7619, %v7795
    %v7820 = vadd.f32 %v7620, %v7800
    %v7821 = vadd.f32 %v7621, %v7803
    %v7822 = vlaneseq
    %v7823 = vshrl.u32 %v7822, 7
    %v7824 = vsub.s32 0, %v7823
    %v7825 = vrot.slane %v5997, %v7824
    %v7826 = vadd.f32 %v7806, %v7825
    %v7827 = vadd.f32 %v7807, %v7825
    %v7828 = vadd.f32 %v7808, %v7825
    %v7829 = vadd.f32 %v7809, %v7825
    %v7830 = vadd.f32 %v7810, %v7825
    %v7831 = vadd.f32 %v7811, %v7825
    %v7832 = vadd.f32 %v7812, %v7825
    %v7833 = vadd.f32 %v7813, %v7825
    %v7834 = vadd.f32 %v7814, %v7825
    %v7835 = vadd.f32 %v7815, %v7825
    %v7836 = vadd.f32 %v7816, %v7825
    %v7837 = vadd.f32 %v7817, %v7825
    %v7838 = vadd.f32 %v7818, %v7825
    %v7839 = vadd.f32 %v7819, %v7825
    %v7840 = vadd.f32 %v7820, %v7825
    %v7841 = vadd.f32 %v7821, %v7825
    %v7842 = vmax.f32 %v7826, 0.0
    %v7843 = vmax.f32 %v7827, 0.0
    %v7844 = vmax.f32 %v7828, 0.0
    %v7845 = vmax.f32 %v7829, 0.0
    %v7846 = vmax.f32 %v7830, 0.0
    %v7847 = vmax.f32 %v7831, 0.0
    %v7848 = vmax.f32 %v7832, 0.0
    %v7849 = vmax.f32 %v7833, 0.0
    %v7850 = vmax.f32 %v7834, 0.0
    %v7851 = vmax.f32 %v7835, 0.0
    %v7852 = vmax.f32 %v7836, 0.0
    %v7853 = vmax.f32 %v7837, 0.0
    %v7854 = vmax.f32 %v7838, 0.0
    %v7855 = vmax.f32 %v7839, 0.0
    %v7856 = vmax.f32 %v7840, 0.0
    %v7857 = vmax.f32 %v7841, 0.0
    %v7858 = vadd.f32 %v7842, %v2679
    %v7859 = vadd.f32 %v7843, %v2680
    %v7860 = vadd.f32 %v7844, %v2681
    %v7861 = vadd.f32 %v7845, %v2682
    %v7862 = vadd.f32 %v7846, %v2683
    %v7863 = vadd.f32 %v7847, %v2684
    %v7864 = vadd.f32 %v7848, %v2685
    %v7865 = vadd.f32 %v7849, %v2686
    %v7866 = vadd.f32 %v7850, %v2687
    %v7867 = vadd.f32 %v7851, %v2688
    %v7868 = vadd.f32 %v7852, %v2689
    %v7869 = vadd.f32 %v7853, %v2690
    %v7870 = vadd.f32 %v7854, %v2691
    %v7871 = vadd.f32 %v7855, %v2692
    %v7872 = vadd.f32 %v7856, %v2693
    %v7873 = vadd.f32 %v7857, %v2694
    %v7874 = vpack.c.bf16 %v7859, %v7858
    %v7875 = vpack.c.bf16 %v7861, %v7860
    %v7876 = vpack.c.bf16 %v7863, %v7862
    %v7877 = vpack.c.bf16 %v7865, %v7864
    %v7878 = vpack.c.bf16 %v7867, %v7866
    %v7879 = vpack.c.bf16 %v7869, %v7868
    %v7880 = vpack.c.bf16 %v7871, %v7870
    %v7881 = vpack.c.bf16 %v7873, %v7872
    %v7882 = vld [vmem:[#allocation5 + $0x7] sm:$0x1]
    %v7883 = vld [vmem:[%s11] sm:$0xf]
    %v7884 = vld [vmem:[%s11 + $0x4] sm:$0xf]
    %v7885 = vld [vmem:[%s11 + $0x8] sm:$0xf]
    %v7886 = vld [vmem:[%s11 + $0xc] sm:$0xf]
    %v7887 = vld [vmem:[%s11 + $0x10] sm:$0xf]
    %v7888 = vld [vmem:[%s11 + $0x14] sm:$0xf]
    %v7889 = vld [vmem:[%s11 + $0x18] sm:$0xf]
    %v7890 = vld [vmem:[%s11 + $0x1c] sm:$0xf]
    %v7891 = vld [vmem:[%s11 + $0x20] sm:$0xf]
    %v7892 = vld [vmem:[%s11 + $0x24] sm:$0xf]
    %v7893 = vld [vmem:[%s11 + $0x28] sm:$0xf]
    %v7894 = vld [vmem:[%s11 + $0x2c] sm:$0xf]
    %v7895 = vld [vmem:[%s11 + $0x30] sm:$0xf]
    %v7896 = vld [vmem:[%s11 + $0x34] sm:$0xf]
    %v7897 = vld [vmem:[%s11 + $0x38] sm:$0xf]
    %v7898 = vld [vmem:[%s11 + $0x3c] sm:$0xf]
    %v7899 = vld [vmem:[%s11 + $0x40] sm:$0xf]
    %v7900 = vld [vmem:[%s11 + $0x44] sm:$0xf]
    %v7901 = vld [vmem:[%s11 + $0x48] sm:$0xf]
    %v7902 = vld [vmem:[%s11 + $0x4c] sm:$0xf]
    %v7903 = vld [vmem:[%s11 + $0x50] sm:$0xf]
    %v7904 = vld [vmem:[%s11 + $0x54] sm:$0xf]
    %v7905 = vld [vmem:[%s11 + $0x58] sm:$0xf]
    %v7906 = vld [vmem:[%s11 + $0x5c] sm:$0xf]
    %v7907 = vld [vmem:[%s11 + $0x60] sm:$0xf]
    %v7908 = vld [vmem:[%s11 + $0x64] sm:$0xf]
    %v7909 = vld [vmem:[%s11 + $0x68] sm:$0xf]
    %v7910 = vld [vmem:[%s11 + $0x6c] sm:$0xf]
    %v7911 = vld [vmem:[%s11 + $0x70] sm:$0xf]
    %v7912 = vld [vmem:[%s11 + $0x74] sm:$0xf]
    %v7913 = vld [vmem:[%s11 + $0x78] sm:$0xf]
    %v7914 = vld [vmem:[%s11 + $0x7c] sm:$0xf]
    %v7947 = vunpack.c.l.b16 %v7883
    %v7948 = vunpack.c.l.b16 %v7884
    %v7949 = vunpack.c.l.b16 %v7885
    %v7950 = vunpack.c.l.b16 %v7886
    %v7951 = vunpack.c.l.b16 %v7887
    %v7952 = vunpack.c.l.b16 %v7888
    %v7953 = vunpack.c.l.b16 %v7889
    %v7954 = vunpack.c.l.b16 %v7890
    %v7955 = vunpack.c.l.b16 %v7891
    %v7956 = vunpack.c.l.b16 %v7892
    %v7957 = vunpack.c.l.b16 %v7893
    %v7958 = vunpack.c.l.b16 %v7894
    %v7959 = vunpack.c.l.b16 %v7895
    %v7960 = vunpack.c.l.b16 %v7896
    %v7961 = vunpack.c.l.b16 %v7897
    %v7962 = vunpack.c.l.b16 %v7898
    %v7963 = vunpack.c.l.b16 %v7899
    %v7964 = vunpack.c.l.b16 %v7900
    %v7965 = vunpack.c.l.b16 %v7901
    %v7966 = vunpack.c.l.b16 %v7902
    %v7967 = vunpack.c.l.b16 %v7903
    %v7968 = vunpack.c.l.b16 %v7904
    %v7969 = vunpack.c.l.b16 %v7905
    %v7970 = vunpack.c.l.b16 %v7906
    %v7971 = vunpack.c.l.b16 %v7907
    %v7972 = vunpack.c.l.b16 %v7908
    %v7973 = vunpack.c.l.b16 %v7909
    %v7974 = vunpack.c.l.b16 %v7910
    %v7975 = vunpack.c.l.b16 %v7911
    %v7976 = vunpack.c.l.b16 %v7912
    %v7977 = vunpack.c.l.b16 %v7913
    %v7978 = vunpack.c.l.b16 %v7914
    %v7979 = vpack.c.b16 %v7948, %v7947
    %v7980 = vpack.c.b16 %v7950, %v7949
    %v7981 = vpack.c.b16 %v7952, %v7951
    %v7982 = vpack.c.b16 %v7954, %v7953
    %v7983 = vpack.c.b16 %v7956, %v7955
    %v7984 = vpack.c.b16 %v7958, %v7957
    %v7985 = vpack.c.b16 %v7960, %v7959
    %v7986 = vpack.c.b16 %v7962, %v7961
    %v7987 = vpack.c.b16 %v7964, %v7963
    %v7988 = vpack.c.b16 %v7966, %v7965
    %v7989 = vpack.c.b16 %v7968, %v7967
    %v7990 = vpack.c.b16 %v7970, %v7969
    %v7991 = vpack.c.b16 %v7972, %v7971
    %v7992 = vpack.c.b16 %v7974, %v7973
    %v7993 = vpack.c.b16 %v7976, %v7975
    %v7994 = vpack.c.b16 %v7978, %v7977
    %8011 = vmatprep.subr.bf16.mxu0 0
    %8012 = vmatpush1.bf16.msra.mxu0 %v7881
    %8013 = vmatprep.subr.bf16.mxu0 0
    %8014 = vmatpush1.bf16.msra.mxu0 %v7880
    %8015 = vmatprep.subr.bf16.mxu0 0
    %8016 = vmatpush1.bf16.msra.mxu0 %v7879
    %8017 = vmatprep.subr.bf16.mxu0 0
    %8018 = vmatpush1.bf16.msra.mxu0 %v7878
    %8019 = vmatprep.subr.bf16.mxu0 0
    %8020 = vmatpush1.bf16.msra.mxu0 %v7877
    %8021 = vmatprep.subr.bf16.mxu0 0
    %8022 = vmatpush1.bf16.msra.mxu0 %v7876
    %8023 = vmatprep.subr.bf16.mxu0 0
    %8024 = vmatpush1.bf16.msra.mxu0 %v7875
    %8025 = vmatprep.subr.bf16.mxu0 0
    %8026 = vmatpush1.bf16.msra.mxu0 %v7874
    %8027 = vmatprep.subr.bf16.mxu0 0
    %8028 = vmatpush2.bf16.msra.mxu0 0
    %8029 = vmatprep.subr.bf16.mxu0 0
    %8030 = vmatpush2.bf16.msra.mxu0 0
    %8031 = vmatprep.subr.bf16.mxu0 0
    %8032 = vmatpush2.bf16.msra.mxu0 0
    %8033 = vmatprep.subr.bf16.mxu0 0
    %8034 = vmatpush2.bf16.msra.mxu0 0
    %8035 = vmatprep.subr.bf16.mxu0 0
    %8036 = vmatpush2.bf16.msra.mxu0 0
    %8037 = vmatprep.subr.bf16.mxu0 0
    %8038 = vmatpush2.bf16.msra.mxu0 0
    %8039 = vmatprep.subr.bf16.mxu0 0
    %8040 = vmatpush2.bf16.msra.mxu0 0
    %8041 = vmatprep.subr.bf16.mxu0 0
    %8042 = vmatpush2.bf16.msra.mxu0 0
    %8043 = vmatprep.mubr.bf16.mxu0 0
    %8044 = vmatmul.mubr.bf16.gmra.mxu0 %v7979
    %v8045 = vpop.f32.mrf.mxu0
    %v8046 = vadd.f32 0.0, %v8045
    %v8047 = vpop.f32.mrf.mxu0
    %v8048 = vpop.f32.mrf.mxu0
    %v8049 = vadd.f32 0.0, %v8048
    %v8050 = vpop.f32.mrf.mxu0
    %8051 = vmatprep.mubr.bf16.mxu0 0
    %8052 = vmatmul.mubr.bf16.gmra.mxu0 %v7980
    %v8053 = vpop.f32.mrf.mxu0
    %v8054 = vadd.f32 0.0, %v8053
    %v8055 = vpop.f32.mrf.mxu0
    %v8056 = vpop.f32.mrf.mxu0
    %v8057 = vadd.f32 0.0, %v8056
    %v8058 = vpop.f32.mrf.mxu0
    %8059 = vmatprep.mubr.bf16.mxu0 0
    %8060 = vmatmul.mubr.bf16.gmra.mxu0 %v7981
    %v8061 = vpop.f32.mrf.mxu0
    %v8062 = vadd.f32 0.0, %v8061
    %v8063 = vpop.f32.mrf.mxu0
    %v8064 = vpop.f32.mrf.mxu0
    %v8065 = vadd.f32 0.0, %v8064
    %v8066 = vpop.f32.mrf.mxu0
    %8067 = vmatprep.mubr.bf16.mxu0 0
    %8068 = vmatmul.mubr.bf16.gmra.mxu0 %v7982
    %v8069 = vpop.f32.mrf.mxu0
    %v8070 = vadd.f32 0.0, %v8069
    %v8071 = vpop.f32.mrf.mxu0
    %v8072 = vpop.f32.mrf.mxu0
    %v8073 = vadd.f32 0.0, %v8072
    %v8074 = vpop.f32.mrf.mxu0
    %8075 = vmatprep.mubr.bf16.mxu0 0
    %8076 = vmatmul.mubr.bf16.gmra.mxu0 %v7983
    %v8077 = vpop.f32.mrf.mxu0
    %v8078 = vadd.f32 0.0, %v8077
    %v8079 = vpop.f32.mrf.mxu0
    %v8080 = vpop.f32.mrf.mxu0
    %v8081 = vadd.f32 0.0, %v8080
    %v8082 = vpop.f32.mrf.mxu0
    %8083 = vmatprep.mubr.bf16.mxu0 0
    %8084 = vmatmul.mubr.bf16.gmra.mxu0 %v7984
    %v8085 = vpop.f32.mrf.mxu0
    %v8086 = vadd.f32 0.0, %v8085
    %v8087 = vpop.f32.mrf.mxu0
    %v8088 = vpop.f32.mrf.mxu0
    %v8089 = vadd.f32 0.0, %v8088
    %v8090 = vpop.f32.mrf.mxu0
    %8091 = vmatprep.mubr.bf16.mxu0 0
    %8092 = vmatmul.mubr.bf16.gmra.mxu0 %v7985
    %v8093 = vpop.f32.mrf.mxu0
    %v8094 = vadd.f32 0.0, %v8093
    %v8095 = vpop.f32.mrf.mxu0
    %v8096 = vpop.f32.mrf.mxu0
    %v8097 = vadd.f32 0.0, %v8096
    %v8098 = vpop.f32.mrf.mxu0
    %8099 = vmatprep.mubr.bf16.mxu0 0
    %8100 = vmatmul.mubr.bf16.gmra.mxu0 %v7986
    %v8101 = vpop.f32.mrf.mxu0
    %v8102 = vadd.f32 0.0, %v8101
    %v8103 = vpop.f32.mrf.mxu0
    %v8104 = vpop.f32.mrf.mxu0
    %v8105 = vadd.f32 0.0, %v8104
    %v8106 = vpop.f32.mrf.mxu0
    %8107 = vmatprep.mubr.bf16.mxu0 0
    %8108 = vmatmul.mubr.bf16.gmra.mxu0 %v7987
    %v8109 = vpop.f32.mrf.mxu0
    %v8110 = vadd.f32 0.0, %v8109
    %v8111 = vpop.f32.mrf.mxu0
    %v8112 = vpop.f32.mrf.mxu0
    %v8113 = vadd.f32 0.0, %v8112
    %v8114 = vpop.f32.mrf.mxu0
    %8115 = vmatprep.mubr.bf16.mxu0 0
    %8116 = vmatmul.mubr.bf16.gmra.mxu0 %v7988
    %v8117 = vpop.f32.mrf.mxu0
    %v8118 = vadd.f32 0.0, %v8117
    %v8119 = vpop.f32.mrf.mxu0
    %v8120 = vpop.f32.mrf.mxu0
    %v8121 = vadd.f32 0.0, %v8120
    %v8122 = vpop.f32.mrf.mxu0
    %8123 = vmatprep.mubr.bf16.mxu0 0
    %8124 = vmatmul.mubr.bf16.gmra.mxu0 %v7989
    %v8125 = vpop.f32.mrf.mxu0
    %v8126 = vadd.f32 0.0, %v8125
    %v8127 = vpop.f32.mrf.mxu0
    %v8128 = vpop.f32.mrf.mxu0
    %v8129 = vadd.f32 0.0, %v8128
    %v8130 = vpop.f32.mrf.mxu0
    %8131 = vmatprep.mubr.bf16.mxu0 0
    %8132 = vmatmul.mubr.bf16.gmra.mxu0 %v7990
    %v8133 = vpop.f32.mrf.mxu0
    %v8134 = vadd.f32 0.0, %v8133
    %v8135 = vpop.f32.mrf.mxu0
    %v8136 = vpop.f32.mrf.mxu0
    %v8137 = vadd.f32 0.0, %v8136
    %v8138 = vpop.f32.mrf.mxu0
    %8139 = vmatprep.mubr.bf16.mxu0 0
    %8140 = vmatmul.mubr.bf16.gmra.mxu0 %v7991
    %v8141 = vpop.f32.mrf.mxu0
    %v8142 = vadd.f32 0.0, %v8141
    %v8143 = vpop.f32.mrf.mxu0
    %v8144 = vpop.f32.mrf.mxu0
    %v8145 = vadd.f32 0.0, %v8144
    %v8146 = vpop.f32.mrf.mxu0
    %8147 = vmatprep.mubr.bf16.mxu0 0
    %8148 = vmatmul.mubr.bf16.gmra.mxu0 %v7992
    %v8149 = vpop.f32.mrf.mxu0
    %v8150 = vadd.f32 0.0, %v8149
    %v8151 = vpop.f32.mrf.mxu0
    %v8152 = vpop.f32.mrf.mxu0
    %v8153 = vadd.f32 0.0, %v8152
    %v8154 = vpop.f32.mrf.mxu0
    %8155 = vmatprep.mubr.bf16.mxu0 0
    %8156 = vmatmul.mubr.bf16.gmra.mxu0 %v7993
    %v8157 = vpop.f32.mrf.mxu0
    %v8158 = vadd.f32 0.0, %v8157
    %v8159 = vpop.f32.mrf.mxu0
    %v8160 = vpop.f32.mrf.mxu0
    %v8161 = vadd.f32 0.0, %v8160
    %v8162 = vpop.f32.mrf.mxu0
    %8163 = vmatprep.mubr.bf16.mxu0 0
    %8164 = vmatmul.mubr.bf16.gmra.mxu0 %v7994
    %v8165 = vpop.f32.mrf.mxu0
    %v8166 = vadd.f32 0.0, %v8165
    %v8167 = vpop.f32.mrf.mxu0
    %v8168 = vpop.f32.mrf.mxu0
    %v8169 = vadd.f32 0.0, %v8168
    %v8170 = vpop.f32.mrf.mxu0
    %8171 = vdwg.mxu0
    %v8172 = vpack.c.bf16 %v8049, %v8046
    %v8173 = vpack.c.bf16 %v8057, %v8054
    %v8174 = vpack.c.bf16 %v8065, %v8062
    %v8175 = vpack.c.bf16 %v8073, %v8070
    %v8176 = vpack.c.bf16 %v8081, %v8078
    %v8177 = vpack.c.bf16 %v8089, %v8086
    %v8178 = vpack.c.bf16 %v8097, %v8094
    %v8179 = vpack.c.bf16 %v8105, %v8102
    %v8180 = vpack.c.bf16 %v8113, %v8110
    %v8181 = vpack.c.bf16 %v8121, %v8118
    %v8182 = vpack.c.bf16 %v8129, %v8126
    %v8183 = vpack.c.bf16 %v8137, %v8134
    %v8184 = vpack.c.bf16 %v8145, %v8142
    %v8185 = vpack.c.bf16 %v8153, %v8150
    %v8186 = vpack.c.bf16 %v8161, %v8158
    %v8187 = vpack.c.bf16 %v8169, %v8166
    %s8188 = scalar_lea.vmem %s11, 128
    %v8189 = vld [vmem:[%s8188] sm:$0xf]
    %v8190 = vld [vmem:[%s8188 + $0x4] sm:$0xf]
    %v8191 = vld [vmem:[%s8188 + $0x8] sm:$0xf]
    %v8192 = vld [vmem:[%s8188 + $0xc] sm:$0xf]
    %v8193 = vld [vmem:[%s8188 + $0x10] sm:$0xf]
    %v8194 = vld [vmem:[%s8188 + $0x14] sm:$0xf]
    %v8195 = vld [vmem:[%s8188 + $0x18] sm:$0xf]
    %v8196 = vld [vmem:[%s8188 + $0x1c] sm:$0xf]
    %v8197 = vld [vmem:[%s8188 + $0x20] sm:$0xf]
    %v8198 = vld [vmem:[%s8188 + $0x24] sm:$0xf]
    %v8199 = vld [vmem:[%s8188 + $0x28] sm:$0xf]
    %v8200 = vld [vmem:[%s8188 + $0x2c] sm:$0xf]
    %v8201 = vld [vmem:[%s8188 + $0x30] sm:$0xf]
    %v8202 = vld [vmem:[%s8188 + $0x34] sm:$0xf]
    %v8203 = vld [vmem:[%s8188 + $0x38] sm:$0xf]
    %v8204 = vld [vmem:[%s8188 + $0x3c] sm:$0xf]
    %v8205 = vld [vmem:[%s8188 + $0x40] sm:$0xf]
    %v8206 = vld [vmem:[%s8188 + $0x44] sm:$0xf]
    %v8207 = vld [vmem:[%s8188 + $0x48] sm:$0xf]
    %v8208 = vld [vmem:[%s8188 + $0x4c] sm:$0xf]
    %v8209 = vld [vmem:[%s8188 + $0x50] sm:$0xf]
    %v8210 = vld [vmem:[%s8188 + $0x54] sm:$0xf]
    %v8211 = vld [vmem:[%s8188 + $0x58] sm:$0xf]
    %v8212 = vld [vmem:[%s8188 + $0x5c] sm:$0xf]
    %v8213 = vld [vmem:[%s8188 + $0x60] sm:$0xf]
    %v8214 = vld [vmem:[%s8188 + $0x64] sm:$0xf]
    %v8215 = vld [vmem:[%s8188 + $0x68] sm:$0xf]
    %v8216 = vld [vmem:[%s8188 + $0x6c] sm:$0xf]
    %v8217 = vld [vmem:[%s8188 + $0x70] sm:$0xf]
    %v8218 = vld [vmem:[%s8188 + $0x74] sm:$0xf]
    %v8219 = vld [vmem:[%s8188 + $0x78] sm:$0xf]
    %v8220 = vld [vmem:[%s8188 + $0x7c] sm:$0xf]
    %v8253 = vunpack.c.l.b16 %v8189
    %v8254 = vunpack.c.l.b16 %v8190
    %v8255 = vunpack.c.l.b16 %v8191
    %v8256 = vunpack.c.l.b16 %v8192
    %v8257 = vunpack.c.l.b16 %v8193
    %v8258 = vunpack.c.l.b16 %v8194
    %v8259 = vunpack.c.l.b16 %v8195
    %v8260 = vunpack.c.l.b16 %v8196
    %v8261 = vunpack.c.l.b16 %v8197
    %v8262 = vunpack.c.l.b16 %v8198
    %v8263 = vunpack.c.l.b16 %v8199
    %v8264 = vunpack.c.l.b16 %v8200
    %v8265 = vunpack.c.l.b16 %v8201
    %v8266 = vunpack.c.l.b16 %v8202
    %v8267 = vunpack.c.l.b16 %v8203
    %v8268 = vunpack.c.l.b16 %v8204
    %v8269 = vunpack.c.l.b16 %v8205
    %v8270 = vunpack.c.l.b16 %v8206
    %v8271 = vunpack.c.l.b16 %v8207
    %v8272 = vunpack.c.l.b16 %v8208
    %v8273 = vunpack.c.l.b16 %v8209
    %v8274 = vunpack.c.l.b16 %v8210
    %v8275 = vunpack.c.l.b16 %v8211
    %v8276 = vunpack.c.l.b16 %v8212
    %v8277 = vunpack.c.l.b16 %v8213
    %v8278 = vunpack.c.l.b16 %v8214
    %v8279 = vunpack.c.l.b16 %v8215
    %v8280 = vunpack.c.l.b16 %v8216
    %v8281 = vunpack.c.l.b16 %v8217
    %v8282 = vunpack.c.l.b16 %v8218
    %v8283 = vunpack.c.l.b16 %v8219
    %v8284 = vunpack.c.l.b16 %v8220
    %v8285 = vpack.c.b16 %v8254, %v8253
    %v8286 = vpack.c.b16 %v8256, %v8255
    %v8287 = vpack.c.b16 %v8258, %v8257
    %v8288 = vpack.c.b16 %v8260, %v8259
    %v8289 = vpack.c.b16 %v8262, %v8261
    %v8290 = vpack.c.b16 %v8264, %v8263
    %v8291 = vpack.c.b16 %v8266, %v8265
    %v8292 = vpack.c.b16 %v8268, %v8267
    %v8293 = vpack.c.b16 %v8270, %v8269
    %v8294 = vpack.c.b16 %v8272, %v8271
    %v8295 = vpack.c.b16 %v8274, %v8273
    %v8296 = vpack.c.b16 %v8276, %v8275
    %v8297 = vpack.c.b16 %v8278, %v8277
    %v8298 = vpack.c.b16 %v8280, %v8279
    %v8299 = vpack.c.b16 %v8282, %v8281
    %v8300 = vpack.c.b16 %v8284, %v8283
    %8317 = vmatprep.subr.bf16.mxu0 0
    %8318 = vmatpush1.bf16.msra.mxu0 %v7881
    %8319 = vmatprep.subr.bf16.mxu0 0
    %8320 = vmatpush1.bf16.msra.mxu0 %v7880
    %8321 = vmatprep.subr.bf16.mxu0 0
    %8322 = vmatpush1.bf16.msra.mxu0 %v7879
    %8323 = vmatprep.subr.bf16.mxu0 0
    %8324 = vmatpush1.bf16.msra.mxu0 %v7878
    %8325 = vmatprep.subr.bf16.mxu0 0
    %8326 = vmatpush1.bf16.msra.mxu0 %v7877
    %8327 = vmatprep.subr.bf16.mxu0 0
    %8328 = vmatpush1.bf16.msra.mxu0 %v7876
    %8329 = vmatprep.subr.bf16.mxu0 0
    %8330 = vmatpush1.bf16.msra.mxu0 %v7875
    %8331 = vmatprep.subr.bf16.mxu0 0
    %8332 = vmatpush1.bf16.msra.mxu0 %v7874
    %8333 = vmatprep.subr.bf16.mxu0 0
    %8334 = vmatpush2.bf16.msra.mxu0 0
    %8335 = vmatprep.subr.bf16.mxu0 0
    %8336 = vmatpush2.bf16.msra.mxu0 0
    %8337 = vmatprep.subr.bf16.mxu0 0
    %8338 = vmatpush2.bf16.msra.mxu0 0
    %8339 = vmatprep.subr.bf16.mxu0 0
    %8340 = vmatpush2.bf16.msra.mxu0 0
    %8341 = vmatprep.subr.bf16.mxu0 0
    %8342 = vmatpush2.bf16.msra.mxu0 0
    %8343 = vmatprep.subr.bf16.mxu0 0
    %8344 = vmatpush2.bf16.msra.mxu0 0
    %8345 = vmatprep.subr.bf16.mxu0 0
    %8346 = vmatpush2.bf16.msra.mxu0 0
    %8347 = vmatprep.subr.bf16.mxu0 0
    %8348 = vmatpush2.bf16.msra.mxu0 0
    %8349 = vmatprep.mubr.bf16.mxu0 0
    %8350 = vmatmul.mubr.bf16.gmra.mxu0 %v8285
    %v8351 = vpop.f32.mrf.mxu0
    %v8352 = vadd.f32 0.0, %v8351
    %v8353 = vpop.f32.mrf.mxu0
    %v8354 = vpop.f32.mrf.mxu0
    %v8355 = vadd.f32 0.0, %v8354
    %v8356 = vpop.f32.mrf.mxu0
    %8357 = vmatprep.mubr.bf16.mxu0 0
    %8358 = vmatmul.mubr.bf16.gmra.mxu0 %v8286
    %v8359 = vpop.f32.mrf.mxu0
    %v8360 = vadd.f32 0.0, %v8359
    %v8361 = vpop.f32.mrf.mxu0
    %v8362 = vpop.f32.mrf.mxu0
    %v8363 = vadd.f32 0.0, %v8362
    %v8364 = vpop.f32.mrf.mxu0
    %8365 = vmatprep.mubr.bf16.mxu0 0
    %8366 = vmatmul.mubr.bf16.gmra.mxu0 %v8287
    %v8367 = vpop.f32.mrf.mxu0
    %v8368 = vadd.f32 0.0, %v8367
    %v8369 = vpop.f32.mrf.mxu0
    %v8370 = vpop.f32.mrf.mxu0
    %v8371 = vadd.f32 0.0, %v8370
    %v8372 = vpop.f32.mrf.mxu0
    %8373 = vmatprep.mubr.bf16.mxu0 0
    %8374 = vmatmul.mubr.bf16.gmra.mxu0 %v8288
    %v8375 = vpop.f32.mrf.mxu0
    %v8376 = vadd.f32 0.0, %v8375
    %v8377 = vpop.f32.mrf.mxu0
    %v8378 = vpop.f32.mrf.mxu0
    %v8379 = vadd.f32 0.0, %v8378
    %v8380 = vpop.f32.mrf.mxu0
    %8381 = vmatprep.mubr.bf16.mxu0 0
    %8382 = vmatmul.mubr.bf16.gmra.mxu0 %v8289
    %v8383 = vpop.f32.mrf.mxu0
    %v8384 = vadd.f32 0.0, %v8383
    %v8385 = vpop.f32.mrf.mxu0
    %v8386 = vpop.f32.mrf.mxu0
    %v8387 = vadd.f32 0.0, %v8386
    %v8388 = vpop.f32.mrf.mxu0
    %8389 = vmatprep.mubr.bf16.mxu0 0
    %8390 = vmatmul.mubr.bf16.gmra.mxu0 %v8290
    %v8391 = vpop.f32.mrf.mxu0
    %v8392 = vadd.f32 0.0, %v8391
    %v8393 = vpop.f32.mrf.mxu0
    %v8394 = vpop.f32.mrf.mxu0
    %v8395 = vadd.f32 0.0, %v8394
    %v8396 = vpop.f32.mrf.mxu0
    %8397 = vmatprep.mubr.bf16.mxu0 0
    %8398 = vmatmul.mubr.bf16.gmra.mxu0 %v8291
    %v8399 = vpop.f32.mrf.mxu0
    %v8400 = vadd.f32 0.0, %v8399
    %v8401 = vpop.f32.mrf.mxu0
    %v8402 = vpop.f32.mrf.mxu0
    %v8403 = vadd.f32 0.0, %v8402
    %v8404 = vpop.f32.mrf.mxu0
    %8405 = vmatprep.mubr.bf16.mxu0 0
    %8406 = vmatmul.mubr.bf16.gmra.mxu0 %v8292
    %v8407 = vpop.f32.mrf.mxu0
    %v8408 = vadd.f32 0.0, %v8407
    %v8409 = vpop.f32.mrf.mxu0
    %v8410 = vpop.f32.mrf.mxu0
    %v8411 = vadd.f32 0.0, %v8410
    %v8412 = vpop.f32.mrf.mxu0
    %8413 = vmatprep.mubr.bf16.mxu0 0
    %8414 = vmatmul.mubr.bf16.gmra.mxu0 %v8293
    %v8415 = vpop.f32.mrf.mxu0
    %v8416 = vadd.f32 0.0, %v8415
    %v8417 = vpop.f32.mrf.mxu0
    %v8418 = vpop.f32.mrf.mxu0
    %v8419 = vadd.f32 0.0, %v8418
    %v8420 = vpop.f32.mrf.mxu0
    %8421 = vmatprep.mubr.bf16.mxu0 0
    %8422 = vmatmul.mubr.bf16.gmra.mxu0 %v8294
    %v8423 = vpop.f32.mrf.mxu0
    %v8424 = vadd.f32 0.0, %v8423
    %v8425 = vpop.f32.mrf.mxu0
    %v8426 = vpop.f32.mrf.mxu0
    %v8427 = vadd.f32 0.0, %v8426
    %v8428 = vpop.f32.mrf.mxu0
    %8429 = vmatprep.mubr.bf16.mxu0 0
    %8430 = vmatmul.mubr.bf16.gmra.mxu0 %v8295
    %v8431 = vpop.f32.mrf.mxu0
    %v8432 = vadd.f32 0.0, %v8431
    %v8433 = vpop.f32.mrf.mxu0
    %v8434 = vpop.f32.mrf.mxu0
    %v8435 = vadd.f32 0.0, %v8434
    %v8436 = vpop.f32.mrf.mxu0
    %8437 = vmatprep.mubr.bf16.mxu0 0
    %8438 = vmatmul.mubr.bf16.gmra.mxu0 %v8296
    %v8439 = vpop.f32.mrf.mxu0
    %v8440 = vadd.f32 0.0, %v8439
    %v8441 = vpop.f32.mrf.mxu0
    %v8442 = vpop.f32.mrf.mxu0
    %v8443 = vadd.f32 0.0, %v8442
    %v8444 = vpop.f32.mrf.mxu0
    %8445 = vmatprep.mubr.bf16.mxu0 0
    %8446 = vmatmul.mubr.bf16.gmra.mxu0 %v8297
    %v8447 = vpop.f32.mrf.mxu0
    %v8448 = vadd.f32 0.0, %v8447
    %v8449 = vpop.f32.mrf.mxu0
    %v8450 = vpop.f32.mrf.mxu0
    %v8451 = vadd.f32 0.0, %v8450
    %v8452 = vpop.f32.mrf.mxu0
    %8453 = vmatprep.mubr.bf16.mxu0 0
    %8454 = vmatmul.mubr.bf16.gmra.mxu0 %v8298
    %v8455 = vpop.f32.mrf.mxu0
    %v8456 = vadd.f32 0.0, %v8455
    %v8457 = vpop.f32.mrf.mxu0
    %v8458 = vpop.f32.mrf.mxu0
    %v8459 = vadd.f32 0.0, %v8458
    %v8460 = vpop.f32.mrf.mxu0
    %8461 = vmatprep.mubr.bf16.mxu0 0
    %8462 = vmatmul.mubr.bf16.gmra.mxu0 %v8299
    %v8463 = vpop.f32.mrf.mxu0
    %v8464 = vadd.f32 0.0, %v8463
    %v8465 = vpop.f32.mrf.mxu0
    %v8466 = vpop.f32.mrf.mxu0
    %v8467 = vadd.f32 0.0, %v8466
    %v8468 = vpop.f32.mrf.mxu0
    %8469 = vmatprep.mubr.bf16.mxu0 0
    %8470 = vmatmul.mubr.bf16.gmra.mxu0 %v8300
    %v8471 = vpop.f32.mrf.mxu0
    %v8472 = vadd.f32 0.0, %v8471
    %v8473 = vpop.f32.mrf.mxu0
    %v8474 = vpop.f32.mrf.mxu0
    %v8475 = vadd.f32 0.0, %v8474
    %v8476 = vpop.f32.mrf.mxu0
    %8477 = vdwg.mxu0
    %v8478 = vpack.c.bf16 %v8355, %v8352
    %v8479 = vpack.c.bf16 %v8363, %v8360
    %v8480 = vpack.c.bf16 %v8371, %v8368
    %v8481 = vpack.c.bf16 %v8379, %v8376
    %v8482 = vpack.c.bf16 %v8387, %v8384
    %v8483 = vpack.c.bf16 %v8395, %v8392
    %v8484 = vpack.c.bf16 %v8403, %v8400
    %v8485 = vpack.c.bf16 %v8411, %v8408
    %v8486 = vpack.c.bf16 %v8419, %v8416
    %v8487 = vpack.c.bf16 %v8427, %v8424
    %v8488 = vpack.c.bf16 %v8435, %v8432
    %v8489 = vpack.c.bf16 %v8443, %v8440
    %v8490 = vpack.c.bf16 %v8451, %v8448
    %v8491 = vpack.c.bf16 %v8459, %v8456
    %v8492 = vpack.c.bf16 %v8467, %v8464
    %v8493 = vpack.c.bf16 %v8475, %v8472
    %s8494 = scalar_lea.vmem %s11, 256
    %v8495 = vld [vmem:[%s8494] sm:$0xf]
    %v8496 = vld [vmem:[%s8494 + $0x4] sm:$0xf]
    %v8497 = vld [vmem:[%s8494 + $0x8] sm:$0xf]
    %v8498 = vld [vmem:[%s8494 + $0xc] sm:$0xf]
    %v8499 = vld [vmem:[%s8494 + $0x10] sm:$0xf]
    %v8500 = vld [vmem:[%s8494 + $0x14] sm:$0xf]
    %v8501 = vld [vmem:[%s8494 + $0x18] sm:$0xf]
    %v8502 = vld [vmem:[%s8494 + $0x1c] sm:$0xf]
    %v8503 = vld [vmem:[%s8494 + $0x20] sm:$0xf]
    %v8504 = vld [vmem:[%s8494 + $0x24] sm:$0xf]
    %v8505 = vld [vmem:[%s8494 + $0x28] sm:$0xf]
    %v8506 = vld [vmem:[%s8494 + $0x2c] sm:$0xf]
    %v8507 = vld [vmem:[%s8494 + $0x30] sm:$0xf]
    %v8508 = vld [vmem:[%s8494 + $0x34] sm:$0xf]
    %v8509 = vld [vmem:[%s8494 + $0x38] sm:$0xf]
    %v8510 = vld [vmem:[%s8494 + $0x3c] sm:$0xf]
    %v8511 = vld [vmem:[%s8494 + $0x40] sm:$0xf]
    %v8512 = vld [vmem:[%s8494 + $0x44] sm:$0xf]
    %v8513 = vld [vmem:[%s8494 + $0x48] sm:$0xf]
    %v8514 = vld [vmem:[%s8494 + $0x4c] sm:$0xf]
    %v8515 = vld [vmem:[%s8494 + $0x50] sm:$0xf]
    %v8516 = vld [vmem:[%s8494 + $0x54] sm:$0xf]
    %v8517 = vld [vmem:[%s8494 + $0x58] sm:$0xf]
    %v8518 = vld [vmem:[%s8494 + $0x5c] sm:$0xf]
    %v8519 = vld [vmem:[%s8494 + $0x60] sm:$0xf]
    %v8520 = vld [vmem:[%s8494 + $0x64] sm:$0xf]
    %v8521 = vld [vmem:[%s8494 + $0x68] sm:$0xf]
    %v8522 = vld [vmem:[%s8494 + $0x6c] sm:$0xf]
    %v8523 = vld [vmem:[%s8494 + $0x70] sm:$0xf]
    %v8524 = vld [vmem:[%s8494 + $0x74] sm:$0xf]
    %v8525 = vld [vmem:[%s8494 + $0x78] sm:$0xf]
    %v8526 = vld [vmem:[%s8494 + $0x7c] sm:$0xf]
    %v8559 = vunpack.c.l.b16 %v8495
    %v8560 = vunpack.c.l.b16 %v8496
    %v8561 = vunpack.c.l.b16 %v8497
    %v8562 = vunpack.c.l.b16 %v8498
    %v8563 = vunpack.c.l.b16 %v8499
    %v8564 = vunpack.c.l.b16 %v8500
    %v8565 = vunpack.c.l.b16 %v8501
    %v8566 = vunpack.c.l.b16 %v8502
    %v8567 = vunpack.c.l.b16 %v8503
    %v8568 = vunpack.c.l.b16 %v8504
    %v8569 = vunpack.c.l.b16 %v8505
    %v8570 = vunpack.c.l.b16 %v8506
    %v8571 = vunpack.c.l.b16 %v8507
    %v8572 = vunpack.c.l.b16 %v8508
    %v8573 = vunpack.c.l.b16 %v8509
    %v8574 = vunpack.c.l.b16 %v8510
    %v8575 = vunpack.c.l.b16 %v8511
    %v8576 = vunpack.c.l.b16 %v8512
    %v8577 = vunpack.c.l.b16 %v8513
    %v8578 = vunpack.c.l.b16 %v8514
    %v8579 = vunpack.c.l.b16 %v8515
    %v8580 = vunpack.c.l.b16 %v8516
    %v8581 = vunpack.c.l.b16 %v8517
    %v8582 = vunpack.c.l.b16 %v8518
    %v8583 = vunpack.c.l.b16 %v8519
    %v8584 = vunpack.c.l.b16 %v8520
    %v8585 = vunpack.c.l.b16 %v8521
    %v8586 = vunpack.c.l.b16 %v8522
    %v8587 = vunpack.c.l.b16 %v8523
    %v8588 = vunpack.c.l.b16 %v8524
    %v8589 = vunpack.c.l.b16 %v8525
    %v8590 = vunpack.c.l.b16 %v8526
    %v8591 = vpack.c.b16 %v8560, %v8559
    %v8592 = vpack.c.b16 %v8562, %v8561
    %v8593 = vpack.c.b16 %v8564, %v8563
    %v8594 = vpack.c.b16 %v8566, %v8565
    %v8595 = vpack.c.b16 %v8568, %v8567
    %v8596 = vpack.c.b16 %v8570, %v8569
    %v8597 = vpack.c.b16 %v8572, %v8571
    %v8598 = vpack.c.b16 %v8574, %v8573
    %v8599 = vpack.c.b16 %v8576, %v8575
    %v8600 = vpack.c.b16 %v8578, %v8577
    %v8601 = vpack.c.b16 %v8580, %v8579
    %v8602 = vpack.c.b16 %v8582, %v8581
    %v8603 = vpack.c.b16 %v8584, %v8583
    %v8604 = vpack.c.b16 %v8586, %v8585
    %v8605 = vpack.c.b16 %v8588, %v8587
    %v8606 = vpack.c.b16 %v8590, %v8589
    %8623 = vmatprep.subr.bf16.mxu0 0
    %8624 = vmatpush1.bf16.msra.mxu0 %v7881
    %8625 = vmatprep.subr.bf16.mxu0 0
    %8626 = vmatpush1.bf16.msra.mxu0 %v7880
    %8627 = vmatprep.subr.bf16.mxu0 0
    %8628 = vmatpush1.bf16.msra.mxu0 %v7879
    %8629 = vmatprep.subr.bf16.mxu0 0
    %8630 = vmatpush1.bf16.msra.mxu0 %v7878
    %8631 = vmatprep.subr.bf16.mxu0 0
    %8632 = vmatpush1.bf16.msra.mxu0 %v7877
    %8633 = vmatprep.subr.bf16.mxu0 0
    %8634 = vmatpush1.bf16.msra.mxu0 %v7876
    %8635 = vmatprep.subr.bf16.mxu0 0
    %8636 = vmatpush1.bf16.msra.mxu0 %v7875
    %8637 = vmatprep.subr.bf16.mxu0 0
    %8638 = vmatpush1.bf16.msra.mxu0 %v7874
    %8639 = vmatprep.subr.bf16.mxu0 0
    %8640 = vmatpush2.bf16.msra.mxu0 0
    %8641 = vmatprep.subr.bf16.mxu0 0
    %8642 = vmatpush2.bf16.msra.mxu0 0
    %8643 = vmatprep.subr.bf16.mxu0 0
    %8644 = vmatpush2.bf16.msra.mxu0 0
    %8645 = vmatprep.subr.bf16.mxu0 0
    %8646 = vmatpush2.bf16.msra.mxu0 0
    %8647 = vmatprep.subr.bf16.mxu0 0
    %8648 = vmatpush2.bf16.msra.mxu0 0
    %8649 = vmatprep.subr.bf16.mxu0 0
    %8650 = vmatpush2.bf16.msra.mxu0 0
    %8651 = vmatprep.subr.bf16.mxu0 0
    %8652 = vmatpush2.bf16.msra.mxu0 0
    %8653 = vmatprep.subr.bf16.mxu0 0
    %8654 = vmatpush2.bf16.msra.mxu0 0
    %8655 = vmatprep.mubr.bf16.mxu0 0
    %8656 = vmatmul.mubr.bf16.gmra.mxu0 %v8591
    %v8657 = vpop.f32.mrf.mxu0
    %v8658 = vadd.f32 0.0, %v8657
    %v8659 = vpop.f32.mrf.mxu0
    %v8660 = vpop.f32.mrf.mxu0
    %v8661 = vadd.f32 0.0, %v8660
    %v8662 = vpop.f32.mrf.mxu0
    %8663 = vmatprep.mubr.bf16.mxu0 0
    %8664 = vmatmul.mubr.bf16.gmra.mxu0 %v8592
    %v8665 = vpop.f32.mrf.mxu0
    %v8666 = vadd.f32 0.0, %v8665
    %v8667 = vpop.f32.mrf.mxu0
    %v8668 = vpop.f32.mrf.mxu0
    %v8669 = vadd.f32 0.0, %v8668
    %v8670 = vpop.f32.mrf.mxu0
    %8671 = vmatprep.mubr.bf16.mxu0 0
    %8672 = vmatmul.mubr.bf16.gmra.mxu0 %v8593
    %v8673 = vpop.f32.mrf.mxu0
    %v8674 = vadd.f32 0.0, %v8673
    %v8675 = vpop.f32.mrf.mxu0
    %v8676 = vpop.f32.mrf.mxu0
    %v8677 = vadd.f32 0.0, %v8676
    %v8678 = vpop.f32.mrf.mxu0
    %8679 = vmatprep.mubr.bf16.mxu0 0
    %8680 = vmatmul.mubr.bf16.gmra.mxu0 %v8594
    %v8681 = vpop.f32.mrf.mxu0
    %v8682 = vadd.f32 0.0, %v8681
    %v8683 = vpop.f32.mrf.mxu0
    %v8684 = vpop.f32.mrf.mxu0
    %v8685 = vadd.f32 0.0, %v8684
    %v8686 = vpop.f32.mrf.mxu0
    %8687 = vmatprep.mubr.bf16.mxu0 0
    %8688 = vmatmul.mubr.bf16.gmra.mxu0 %v8595
    %v8689 = vpop.f32.mrf.mxu0
    %v8690 = vadd.f32 0.0, %v8689
    %v8691 = vpop.f32.mrf.mxu0
    %v8692 = vpop.f32.mrf.mxu0
    %v8693 = vadd.f32 0.0, %v8692
    %v8694 = vpop.f32.mrf.mxu0
    %8695 = vmatprep.mubr.bf16.mxu0 0
    %8696 = vmatmul.mubr.bf16.gmra.mxu0 %v8596
    %v8697 = vpop.f32.mrf.mxu0
    %v8698 = vadd.f32 0.0, %v8697
    %v8699 = vpop.f32.mrf.mxu0
    %v8700 = vpop.f32.mrf.mxu0
    %v8701 = vadd.f32 0.0, %v8700
    %v8702 = vpop.f32.mrf.mxu0
    %8703 = vmatprep.mubr.bf16.mxu0 0
    %8704 = vmatmul.mubr.bf16.gmra.mxu0 %v8597
    %v8705 = vpop.f32.mrf.mxu0
    %v8706 = vadd.f32 0.0, %v8705
    %v8707 = vpop.f32.mrf.mxu0
    %v8708 = vpop.f32.mrf.mxu0
    %v8709 = vadd.f32 0.0, %v8708
    %v8710 = vpop.f32.mrf.mxu0
    %8711 = vmatprep.mubr.bf16.mxu0 0
    %8712 = vmatmul.mubr.bf16.gmra.mxu0 %v8598
    %v8713 = vpop.f32.mrf.mxu0
    %v8714 = vadd.f32 0.0, %v8713
    %v8715 = vpop.f32.mrf.mxu0
    %v8716 = vpop.f32.mrf.mxu0
    %v8717 = vadd.f32 0.0, %v8716
    %v8718 = vpop.f32.mrf.mxu0
    %8719 = vmatprep.mubr.bf16.mxu0 0
    %8720 = vmatmul.mubr.bf16.gmra.mxu0 %v8599
    %v8721 = vpop.f32.mrf.mxu0
    %v8722 = vadd.f32 0.0, %v8721
    %v8723 = vpop.f32.mrf.mxu0
    %v8724 = vpop.f32.mrf.mxu0
    %v8725 = vadd.f32 0.0, %v8724
    %v8726 = vpop.f32.mrf.mxu0
    %8727 = vmatprep.mubr.bf16.mxu0 0
    %8728 = vmatmul.mubr.bf16.gmra.mxu0 %v8600
    %v8729 = vpop.f32.mrf.mxu0
    %v8730 = vadd.f32 0.0, %v8729
    %v8731 = vpop.f32.mrf.mxu0
    %v8732 = vpop.f32.mrf.mxu0
    %v8733 = vadd.f32 0.0, %v8732
    %v8734 = vpop.f32.mrf.mxu0
    %8735 = vmatprep.mubr.bf16.mxu0 0
    %8736 = vmatmul.mubr.bf16.gmra.mxu0 %v8601
    %v8737 = vpop.f32.mrf.mxu0
    %v8738 = vadd.f32 0.0, %v8737
    %v8739 = vpop.f32.mrf.mxu0
    %v8740 = vpop.f32.mrf.mxu0
    %v8741 = vadd.f32 0.0, %v8740
    %v8742 = vpop.f32.mrf.mxu0
    %8743 = vmatprep.mubr.bf16.mxu0 0
    %8744 = vmatmul.mubr.bf16.gmra.mxu0 %v8602
    %v8745 = vpop.f32.mrf.mxu0
    %v8746 = vadd.f32 0.0, %v8745
    %v8747 = vpop.f32.mrf.mxu0
    %v8748 = vpop.f32.mrf.mxu0
    %v8749 = vadd.f32 0.0, %v8748
    %v8750 = vpop.f32.mrf.mxu0
    %8751 = vmatprep.mubr.bf16.mxu0 0
    %8752 = vmatmul.mubr.bf16.gmra.mxu0 %v8603
    %v8753 = vpop.f32.mrf.mxu0
    %v8754 = vadd.f32 0.0, %v8753
    %v8755 = vpop.f32.mrf.mxu0
    %v8756 = vpop.f32.mrf.mxu0
    %v8757 = vadd.f32 0.0, %v8756
    %v8758 = vpop.f32.mrf.mxu0
    %8759 = vmatprep.mubr.bf16.mxu0 0
    %8760 = vmatmul.mubr.bf16.gmra.mxu0 %v8604
    %v8761 = vpop.f32.mrf.mxu0
    %v8762 = vadd.f32 0.0, %v8761
    %v8763 = vpop.f32.mrf.mxu0
    %v8764 = vpop.f32.mrf.mxu0
    %v8765 = vadd.f32 0.0, %v8764
    %v8766 = vpop.f32.mrf.mxu0
    %8767 = vmatprep.mubr.bf16.mxu0 0
    %8768 = vmatmul.mubr.bf16.gmra.mxu0 %v8605
    %v8769 = vpop.f32.mrf.mxu0
    %v8770 = vadd.f32 0.0, %v8769
    %v8771 = vpop.f32.mrf.mxu0
    %v8772 = vpop.f32.mrf.mxu0
    %v8773 = vadd.f32 0.0, %v8772
    %v8774 = vpop.f32.mrf.mxu0
    %8775 = vmatprep.mubr.bf16.mxu0 0
    %8776 = vmatmul.mubr.bf16.gmra.mxu0 %v8606
    %v8777 = vpop.f32.mrf.mxu0
    %v8778 = vadd.f32 0.0, %v8777
    %v8779 = vpop.f32.mrf.mxu0
    %v8780 = vpop.f32.mrf.mxu0
    %v8781 = vadd.f32 0.0, %v8780
    %v8782 = vpop.f32.mrf.mxu0
    %8783 = vdwg.mxu0
    %v8784 = vpack.c.bf16 %v8661, %v8658
    %v8785 = vpack.c.bf16 %v8669, %v8666
    %v8786 = vpack.c.bf16 %v8677, %v8674
    %v8787 = vpack.c.bf16 %v8685, %v8682
    %v8788 = vpack.c.bf16 %v8693, %v8690
    %v8789 = vpack.c.bf16 %v8701, %v8698
    %v8790 = vpack.c.bf16 %v8709, %v8706
    %v8791 = vpack.c.bf16 %v8717, %v8714
    %v8792 = vpack.c.bf16 %v8725, %v8722
    %v8793 = vpack.c.bf16 %v8733, %v8730
    %v8794 = vpack.c.bf16 %v8741, %v8738
    %v8795 = vpack.c.bf16 %v8749, %v8746
    %v8796 = vpack.c.bf16 %v8757, %v8754
    %v8797 = vpack.c.bf16 %v8765, %v8762
    %v8798 = vpack.c.bf16 %v8773, %v8770
    %v8799 = vpack.c.bf16 %v8781, %v8778
    %s8800 = scalar_lea.vmem %s11, 384
    %v8801 = vld [vmem:[%s8800] sm:$0xf]
    %v8802 = vld [vmem:[%s8800 + $0x4] sm:$0xf]
    %v8803 = vld [vmem:[%s8800 + $0x8] sm:$0xf]
    %v8804 = vld [vmem:[%s8800 + $0xc] sm:$0xf]
    %v8805 = vld [vmem:[%s8800 + $0x10] sm:$0xf]
    %v8806 = vld [vmem:[%s8800 + $0x14] sm:$0xf]
    %v8807 = vld [vmem:[%s8800 + $0x18] sm:$0xf]
    %v8808 = vld [vmem:[%s8800 + $0x1c] sm:$0xf]
    %v8809 = vld [vmem:[%s8800 + $0x20] sm:$0xf]
    %v8810 = vld [vmem:[%s8800 + $0x24] sm:$0xf]
    %v8811 = vld [vmem:[%s8800 + $0x28] sm:$0xf]
    %v8812 = vld [vmem:[%s8800 + $0x2c] sm:$0xf]
    %v8813 = vld [vmem:[%s8800 + $0x30] sm:$0xf]
    %v8814 = vld [vmem:[%s8800 + $0x34] sm:$0xf]
    %v8815 = vld [vmem:[%s8800 + $0x38] sm:$0xf]
    %v8816 = vld [vmem:[%s8800 + $0x3c] sm:$0xf]
    %v8817 = vld [vmem:[%s8800 + $0x40] sm:$0xf]
    %v8818 = vld [vmem:[%s8800 + $0x44] sm:$0xf]
    %v8819 = vld [vmem:[%s8800 + $0x48] sm:$0xf]
    %v8820 = vld [vmem:[%s8800 + $0x4c] sm:$0xf]
    %v8821 = vld [vmem:[%s8800 + $0x50] sm:$0xf]
    %v8822 = vld [vmem:[%s8800 + $0x54] sm:$0xf]
    %v8823 = vld [vmem:[%s8800 + $0x58] sm:$0xf]
    %v8824 = vld [vmem:[%s8800 + $0x5c] sm:$0xf]
    %v8825 = vld [vmem:[%s8800 + $0x60] sm:$0xf]
    %v8826 = vld [vmem:[%s8800 + $0x64] sm:$0xf]
    %v8827 = vld [vmem:[%s8800 + $0x68] sm:$0xf]
    %v8828 = vld [vmem:[%s8800 + $0x6c] sm:$0xf]
    %v8829 = vld [vmem:[%s8800 + $0x70] sm:$0xf]
    %v8830 = vld [vmem:[%s8800 + $0x74] sm:$0xf]
    %v8831 = vld [vmem:[%s8800 + $0x78] sm:$0xf]
    %v8832 = vld [vmem:[%s8800 + $0x7c] sm:$0xf]
    %v8865 = vunpack.c.l.b16 %v8801
    %v8866 = vunpack.c.l.b16 %v8802
    %v8867 = vunpack.c.l.b16 %v8803
    %v8868 = vunpack.c.l.b16 %v8804
    %v8869 = vunpack.c.l.b16 %v8805
    %v8870 = vunpack.c.l.b16 %v8806
    %v8871 = vunpack.c.l.b16 %v8807
    %v8872 = vunpack.c.l.b16 %v8808
    %v8873 = vunpack.c.l.b16 %v8809
    %v8874 = vunpack.c.l.b16 %v8810
    %v8875 = vunpack.c.l.b16 %v8811
    %v8876 = vunpack.c.l.b16 %v8812
    %v8877 = vunpack.c.l.b16 %v8813
    %v8878 = vunpack.c.l.b16 %v8814
    %v8879 = vunpack.c.l.b16 %v8815
    %v8880 = vunpack.c.l.b16 %v8816
    %v8881 = vunpack.c.l.b16 %v8817
    %v8882 = vunpack.c.l.b16 %v8818
    %v8883 = vunpack.c.l.b16 %v8819
    %v8884 = vunpack.c.l.b16 %v8820
    %v8885 = vunpack.c.l.b16 %v8821
    %v8886 = vunpack.c.l.b16 %v8822
    %v8887 = vunpack.c.l.b16 %v8823
    %v8888 = vunpack.c.l.b16 %v8824
    %v8889 = vunpack.c.l.b16 %v8825
    %v8890 = vunpack.c.l.b16 %v8826
    %v8891 = vunpack.c.l.b16 %v8827
    %v8892 = vunpack.c.l.b16 %v8828
    %v8893 = vunpack.c.l.b16 %v8829
    %v8894 = vunpack.c.l.b16 %v8830
    %v8895 = vunpack.c.l.b16 %v8831
    %v8896 = vunpack.c.l.b16 %v8832
    %v8897 = vpack.c.b16 %v8866, %v8865
    %v8898 = vpack.c.b16 %v8868, %v8867
    %v8899 = vpack.c.b16 %v8870, %v8869
    %v8900 = vpack.c.b16 %v8872, %v8871
    %v8901 = vpack.c.b16 %v8874, %v8873
    %v8902 = vpack.c.b16 %v8876, %v8875
    %v8903 = vpack.c.b16 %v8878, %v8877
    %v8904 = vpack.c.b16 %v8880, %v8879
    %v8905 = vpack.c.b16 %v8882, %v8881
    %v8906 = vpack.c.b16 %v8884, %v8883
    %v8907 = vpack.c.b16 %v8886, %v8885
    %v8908 = vpack.c.b16 %v8888, %v8887
    %v8909 = vpack.c.b16 %v8890, %v8889
    %v8910 = vpack.c.b16 %v8892, %v8891
    %v8911 = vpack.c.b16 %v8894, %v8893
    %v8912 = vpack.c.b16 %v8896, %v8895
    %8929 = vmatprep.subr.bf16.mxu0 0
    %8930 = vmatpush1.bf16.msra.mxu0 %v7881
    %8931 = vmatprep.subr.bf16.mxu0 0
    %8932 = vmatpush1.bf16.msra.mxu0 %v7880
    %8933 = vmatprep.subr.bf16.mxu0 0
    %8934 = vmatpush1.bf16.msra.mxu0 %v7879
    %8935 = vmatprep.subr.bf16.mxu0 0
    %8936 = vmatpush1.bf16.msra.mxu0 %v7878
    %8937 = vmatprep.subr.bf16.mxu0 0
    %8938 = vmatpush1.bf16.msra.mxu0 %v7877
    %8939 = vmatprep.subr.bf16.mxu0 0
    %8940 = vmatpush1.bf16.msra.mxu0 %v7876
    %8941 = vmatprep.subr.bf16.mxu0 0
    %8942 = vmatpush1.bf16.msra.mxu0 %v7875
    %8943 = vmatprep.subr.bf16.mxu0 0
    %8944 = vmatpush1.bf16.msra.mxu0 %v7874
    %8945 = vmatprep.subr.bf16.mxu0 0
    %8946 = vmatpush2.bf16.msra.mxu0 0
    %8947 = vmatprep.subr.bf16.mxu0 0
    %8948 = vmatpush2.bf16.msra.mxu0 0
    %8949 = vmatprep.subr.bf16.mxu0 0
    %8950 = vmatpush2.bf16.msra.mxu0 0
    %8951 = vmatprep.subr.bf16.mxu0 0
    %8952 = vmatpush2.bf16.msra.mxu0 0
    %8953 = vmatprep.subr.bf16.mxu0 0
    %8954 = vmatpush2.bf16.msra.mxu0 0
    %8955 = vmatprep.subr.bf16.mxu0 0
    %8956 = vmatpush2.bf16.msra.mxu0 0
    %8957 = vmatprep.subr.bf16.mxu0 0
    %8958 = vmatpush2.bf16.msra.mxu0 0
    %8959 = vmatprep.subr.bf16.mxu0 0
    %8960 = vmatpush2.bf16.msra.mxu0 0
    %8961 = vmatprep.mubr.bf16.mxu0 0
    %8962 = vmatmul.mubr.bf16.gmra.mxu0 %v8897
    %v8963 = vpop.f32.mrf.mxu0
    %v8964 = vadd.f32 0.0, %v8963
    %v8965 = vpop.f32.mrf.mxu0
    %v8966 = vpop.f32.mrf.mxu0
    %v8967 = vadd.f32 0.0, %v8966
    %v8968 = vpop.f32.mrf.mxu0
    %8969 = vmatprep.mubr.bf16.mxu0 0
    %8970 = vmatmul.mubr.bf16.gmra.mxu0 %v8898
    %v8971 = vpop.f32.mrf.mxu0
    %v8972 = vadd.f32 0.0, %v8971
    %v8973 = vpop.f32.mrf.mxu0
    %v8974 = vpop.f32.mrf.mxu0
    %v8975 = vadd.f32 0.0, %v8974
    %v8976 = vpop.f32.mrf.mxu0
    %8977 = vmatprep.mubr.bf16.mxu0 0
    %8978 = vmatmul.mubr.bf16.gmra.mxu0 %v8899
    %v8979 = vpop.f32.mrf.mxu0
    %v8980 = vadd.f32 0.0, %v8979
    %v8981 = vpop.f32.mrf.mxu0
    %v8982 = vpop.f32.mrf.mxu0
    %v8983 = vadd.f32 0.0, %v8982
    %v8984 = vpop.f32.mrf.mxu0
    %8985 = vmatprep.mubr.bf16.mxu0 0
    %8986 = vmatmul.mubr.bf16.gmra.mxu0 %v8900
    %v8987 = vpop.f32.mrf.mxu0
    %v8988 = vadd.f32 0.0, %v8987
    %v8989 = vpop.f32.mrf.mxu0
    %v8990 = vpop.f32.mrf.mxu0
    %v8991 = vadd.f32 0.0, %v8990
    %v8992 = vpop.f32.mrf.mxu0
    %8993 = vmatprep.mubr.bf16.mxu0 0
    %8994 = vmatmul.mubr.bf16.gmra.mxu0 %v8901
    %v8995 = vpop.f32.mrf.mxu0
    %v8996 = vadd.f32 0.0, %v8995
    %v8997 = vpop.f32.mrf.mxu0
    %v8998 = vpop.f32.mrf.mxu0
    %v8999 = vadd.f32 0.0, %v8998
    %v9000 = vpop.f32.mrf.mxu0
    %9001 = vmatprep.mubr.bf16.mxu0 0
    %9002 = vmatmul.mubr.bf16.gmra.mxu0 %v8902
    %v9003 = vpop.f32.mrf.mxu0
    %v9004 = vadd.f32 0.0, %v9003
    %v9005 = vpop.f32.mrf.mxu0
    %v9006 = vpop.f32.mrf.mxu0
    %v9007 = vadd.f32 0.0, %v9006
    %v9008 = vpop.f32.mrf.mxu0
    %9009 = vmatprep.mubr.bf16.mxu0 0
    %9010 = vmatmul.mubr.bf16.gmra.mxu0 %v8903
    %v9011 = vpop.f32.mrf.mxu0
    %v9012 = vadd.f32 0.0, %v9011
    %v9013 = vpop.f32.mrf.mxu0
    %v9014 = vpop.f32.mrf.mxu0
    %v9015 = vadd.f32 0.0, %v9014
    %v9016 = vpop.f32.mrf.mxu0
    %9017 = vmatprep.mubr.bf16.mxu0 0
    %9018 = vmatmul.mubr.bf16.gmra.mxu0 %v8904
    %v9019 = vpop.f32.mrf.mxu0
    %v9020 = vadd.f32 0.0, %v9019
    %v9021 = vpop.f32.mrf.mxu0
    %v9022 = vpop.f32.mrf.mxu0
    %v9023 = vadd.f32 0.0, %v9022
    %v9024 = vpop.f32.mrf.mxu0
    %9025 = vmatprep.mubr.bf16.mxu0 0
    %9026 = vmatmul.mubr.bf16.gmra.mxu0 %v8905
    %v9027 = vpop.f32.mrf.mxu0
    %v9028 = vadd.f32 0.0, %v9027
    %v9029 = vpop.f32.mrf.mxu0
    %v9030 = vpop.f32.mrf.mxu0
    %v9031 = vadd.f32 0.0, %v9030
    %v9032 = vpop.f32.mrf.mxu0
    %9033 = vmatprep.mubr.bf16.mxu0 0
    %9034 = vmatmul.mubr.bf16.gmra.mxu0 %v8906
    %v9035 = vpop.f32.mrf.mxu0
    %v9036 = vadd.f32 0.0, %v9035
    %v9037 = vpop.f32.mrf.mxu0
    %v9038 = vpop.f32.mrf.mxu0
    %v9039 = vadd.f32 0.0, %v9038
    %v9040 = vpop.f32.mrf.mxu0
    %9041 = vmatprep.mubr.bf16.mxu0 0
    %9042 = vmatmul.mubr.bf16.gmra.mxu0 %v8907
    %v9043 = vpop.f32.mrf.mxu0
    %v9044 = vadd.f32 0.0, %v9043
    %v9045 = vpop.f32.mrf.mxu0
    %v9046 = vpop.f32.mrf.mxu0
    %v9047 = vadd.f32 0.0, %v9046
    %v9048 = vpop.f32.mrf.mxu0
    %9049 = vmatprep.mubr.bf16.mxu0 0
    %9050 = vmatmul.mubr.bf16.gmra.mxu0 %v8908
    %v9051 = vpop.f32.mrf.mxu0
    %v9052 = vadd.f32 0.0, %v9051
    %v9053 = vpop.f32.mrf.mxu0
    %v9054 = vpop.f32.mrf.mxu0
    %v9055 = vadd.f32 0.0, %v9054
    %v9056 = vpop.f32.mrf.mxu0
    %9057 = vmatprep.mubr.bf16.mxu0 0
    %9058 = vmatmul.mubr.bf16.gmra.mxu0 %v8909
    %v9059 = vpop.f32.mrf.mxu0
    %v9060 = vadd.f32 0.0, %v9059
    %v9061 = vpop.f32.mrf.mxu0
    %v9062 = vpop.f32.mrf.mxu0
    %v9063 = vadd.f32 0.0, %v9062
    %v9064 = vpop.f32.mrf.mxu0
    %9065 = vmatprep.mubr.bf16.mxu0 0
    %9066 = vmatmul.mubr.bf16.gmra.mxu0 %v8910
    %v9067 = vpop.f32.mrf.mxu0
    %v9068 = vadd.f32 0.0, %v9067
    %v9069 = vpop.f32.mrf.mxu0
    %v9070 = vpop.f32.mrf.mxu0
    %v9071 = vadd.f32 0.0, %v9070
    %v9072 = vpop.f32.mrf.mxu0
    %9073 = vmatprep.mubr.bf16.mxu0 0
    %9074 = vmatmul.mubr.bf16.gmra.mxu0 %v8911
    %v9075 = vpop.f32.mrf.mxu0
    %v9076 = vadd.f32 0.0, %v9075
    %v9077 = vpop.f32.mrf.mxu0
    %v9078 = vpop.f32.mrf.mxu0
    %v9079 = vadd.f32 0.0, %v9078
    %v9080 = vpop.f32.mrf.mxu0
    %9081 = vmatprep.mubr.bf16.mxu0 0
    %9082 = vmatmul.mubr.bf16.gmra.mxu0 %v8912
    %v9083 = vpop.f32.mrf.mxu0
    %v9084 = vadd.f32 0.0, %v9083
    %v9085 = vpop.f32.mrf.mxu0
    %v9086 = vpop.f32.mrf.mxu0
    %v9087 = vadd.f32 0.0, %v9086
    %v9088 = vpop.f32.mrf.mxu0
    %9089 = vdwg.mxu0
    %v9090 = vpack.c.bf16 %v8967, %v8964
    %v9091 = vpack.c.bf16 %v8975, %v8972
    %v9092 = vpack.c.bf16 %v8983, %v8980
    %v9093 = vpack.c.bf16 %v8991, %v8988
    %v9094 = vpack.c.bf16 %v8999, %v8996
    %v9095 = vpack.c.bf16 %v9007, %v9004
    %v9096 = vpack.c.bf16 %v9015, %v9012
    %v9097 = vpack.c.bf16 %v9023, %v9020
    %v9098 = vpack.c.bf16 %v9031, %v9028
    %v9099 = vpack.c.bf16 %v9039, %v9036
    %v9100 = vpack.c.bf16 %v9047, %v9044
    %v9101 = vpack.c.bf16 %v9055, %v9052
    %v9102 = vpack.c.bf16 %v9063, %v9060
    %v9103 = vpack.c.bf16 %v9071, %v9068
    %v9104 = vpack.c.bf16 %v9079, %v9076
    %v9105 = vpack.c.bf16 %v9087, %v9084
    %s9106 = scalar_lea.vmem %s11, 512
    %v9107 = vld [vmem:[%s9106] sm:$0xf]
    %v9108 = vld [vmem:[%s9106 + $0x4] sm:$0xf]
    %v9109 = vld [vmem:[%s9106 + $0x8] sm:$0xf]
    %v9110 = vld [vmem:[%s9106 + $0xc] sm:$0xf]
    %v9111 = vld [vmem:[%s9106 + $0x10] sm:$0xf]
    %v9112 = vld [vmem:[%s9106 + $0x14] sm:$0xf]
    %v9113 = vld [vmem:[%s9106 + $0x18] sm:$0xf]
    %v9114 = vld [vmem:[%s9106 + $0x1c] sm:$0xf]
    %v9115 = vld [vmem:[%s9106 + $0x20] sm:$0xf]
    %v9116 = vld [vmem:[%s9106 + $0x24] sm:$0xf]
    %v9117 = vld [vmem:[%s9106 + $0x28] sm:$0xf]
    %v9118 = vld [vmem:[%s9106 + $0x2c] sm:$0xf]
    %v9119 = vld [vmem:[%s9106 + $0x30] sm:$0xf]
    %v9120 = vld [vmem:[%s9106 + $0x34] sm:$0xf]
    %v9121 = vld [vmem:[%s9106 + $0x38] sm:$0xf]
    %v9122 = vld [vmem:[%s9106 + $0x3c] sm:$0xf]
    %v9123 = vld [vmem:[%s9106 + $0x40] sm:$0xf]
    %v9124 = vld [vmem:[%s9106 + $0x44] sm:$0xf]
    %v9125 = vld [vmem:[%s9106 + $0x48] sm:$0xf]
    %v9126 = vld [vmem:[%s9106 + $0x4c] sm:$0xf]
    %v9127 = vld [vmem:[%s9106 + $0x50] sm:$0xf]
    %v9128 = vld [vmem:[%s9106 + $0x54] sm:$0xf]
    %v9129 = vld [vmem:[%s9106 + $0x58] sm:$0xf]
    %v9130 = vld [vmem:[%s9106 + $0x5c] sm:$0xf]
    %v9131 = vld [vmem:[%s9106 + $0x60] sm:$0xf]
    %v9132 = vld [vmem:[%s9106 + $0x64] sm:$0xf]
    %v9133 = vld [vmem:[%s9106 + $0x68] sm:$0xf]
    %v9134 = vld [vmem:[%s9106 + $0x6c] sm:$0xf]
    %v9135 = vld [vmem:[%s9106 + $0x70] sm:$0xf]
    %v9136 = vld [vmem:[%s9106 + $0x74] sm:$0xf]
    %v9137 = vld [vmem:[%s9106 + $0x78] sm:$0xf]
    %v9138 = vld [vmem:[%s9106 + $0x7c] sm:$0xf]
    %v9171 = vunpack.c.l.b16 %v9107
    %v9172 = vunpack.c.l.b16 %v9108
    %v9173 = vunpack.c.l.b16 %v9109
    %v9174 = vunpack.c.l.b16 %v9110
    %v9175 = vunpack.c.l.b16 %v9111
    %v9176 = vunpack.c.l.b16 %v9112
    %v9177 = vunpack.c.l.b16 %v9113
    %v9178 = vunpack.c.l.b16 %v9114
    %v9179 = vunpack.c.l.b16 %v9115
    %v9180 = vunpack.c.l.b16 %v9116
    %v9181 = vunpack.c.l.b16 %v9117
    %v9182 = vunpack.c.l.b16 %v9118
    %v9183 = vunpack.c.l.b16 %v9119
    %v9184 = vunpack.c.l.b16 %v9120
    %v9185 = vunpack.c.l.b16 %v9121
    %v9186 = vunpack.c.l.b16 %v9122
    %v9187 = vunpack.c.l.b16 %v9123
    %v9188 = vunpack.c.l.b16 %v9124
    %v9189 = vunpack.c.l.b16 %v9125
    %v9190 = vunpack.c.l.b16 %v9126
    %v9191 = vunpack.c.l.b16 %v9127
    %v9192 = vunpack.c.l.b16 %v9128
    %v9193 = vunpack.c.l.b16 %v9129
    %v9194 = vunpack.c.l.b16 %v9130
    %v9195 = vunpack.c.l.b16 %v9131
    %v9196 = vunpack.c.l.b16 %v9132
    %v9197 = vunpack.c.l.b16 %v9133
    %v9198 = vunpack.c.l.b16 %v9134
    %v9199 = vunpack.c.l.b16 %v9135
    %v9200 = vunpack.c.l.b16 %v9136
    %v9201 = vunpack.c.l.b16 %v9137
    %v9202 = vunpack.c.l.b16 %v9138
    %v9203 = vpack.c.b16 %v9172, %v9171
    %v9204 = vpack.c.b16 %v9174, %v9173
    %v9205 = vpack.c.b16 %v9176, %v9175
    %v9206 = vpack.c.b16 %v9178, %v9177
    %v9207 = vpack.c.b16 %v9180, %v9179
    %v9208 = vpack.c.b16 %v9182, %v9181
    %v9209 = vpack.c.b16 %v9184, %v9183
    %v9210 = vpack.c.b16 %v9186, %v9185
    %v9211 = vpack.c.b16 %v9188, %v9187
    %v9212 = vpack.c.b16 %v9190, %v9189
    %v9213 = vpack.c.b16 %v9192, %v9191
    %v9214 = vpack.c.b16 %v9194, %v9193
    %v9215 = vpack.c.b16 %v9196, %v9195
    %v9216 = vpack.c.b16 %v9198, %v9197
    %v9217 = vpack.c.b16 %v9200, %v9199
    %v9218 = vpack.c.b16 %v9202, %v9201
    %9235 = vmatprep.subr.bf16.mxu0 0
    %9236 = vmatpush1.bf16.msra.mxu0 %v7881
    %9237 = vmatprep.subr.bf16.mxu0 0
    %9238 = vmatpush1.bf16.msra.mxu0 %v7880
    %9239 = vmatprep.subr.bf16.mxu0 0
    %9240 = vmatpush1.bf16.msra.mxu0 %v7879
    %9241 = vmatprep.subr.bf16.mxu0 0
    %9242 = vmatpush1.bf16.msra.mxu0 %v7878
    %9243 = vmatprep.subr.bf16.mxu0 0
    %9244 = vmatpush1.bf16.msra.mxu0 %v7877
    %9245 = vmatprep.subr.bf16.mxu0 0
    %9246 = vmatpush1.bf16.msra.mxu0 %v7876
    %9247 = vmatprep.subr.bf16.mxu0 0
    %9248 = vmatpush1.bf16.msra.mxu0 %v7875
    %9249 = vmatprep.subr.bf16.mxu0 0
    %9250 = vmatpush1.bf16.msra.mxu0 %v7874
    %9251 = vmatprep.subr.bf16.mxu0 0
    %9252 = vmatpush2.bf16.msra.mxu0 0
    %9253 = vmatprep.subr.bf16.mxu0 0
    %9254 = vmatpush2.bf16.msra.mxu0 0
    %9255 = vmatprep.subr.bf16.mxu0 0
    %9256 = vmatpush2.bf16.msra.mxu0 0
    %9257 = vmatprep.subr.bf16.mxu0 0
    %9258 = vmatpush2.bf16.msra.mxu0 0
    %9259 = vmatprep.subr.bf16.mxu0 0
    %9260 = vmatpush2.bf16.msra.mxu0 0
    %9261 = vmatprep.subr.bf16.mxu0 0
    %9262 = vmatpush2.bf16.msra.mxu0 0
    %9263 = vmatprep.subr.bf16.mxu0 0
    %9264 = vmatpush2.bf16.msra.mxu0 0
    %9265 = vmatprep.subr.bf16.mxu0 0
    %9266 = vmatpush2.bf16.msra.mxu0 0
    %9267 = vmatprep.mubr.bf16.mxu0 0
    %9268 = vmatmul.mubr.bf16.gmra.mxu0 %v9203
    %v9269 = vpop.f32.mrf.mxu0
    %v9270 = vadd.f32 0.0, %v9269
    %v9271 = vpop.f32.mrf.mxu0
    %v9272 = vpop.f32.mrf.mxu0
    %v9273 = vadd.f32 0.0, %v9272
    %v9274 = vpop.f32.mrf.mxu0
    %9275 = vmatprep.mubr.bf16.mxu0 0
    %9276 = vmatmul.mubr.bf16.gmra.mxu0 %v9204
    %v9277 = vpop.f32.mrf.mxu0
    %v9278 = vadd.f32 0.0, %v9277
    %v9279 = vpop.f32.mrf.mxu0
    %v9280 = vpop.f32.mrf.mxu0
    %v9281 = vadd.f32 0.0, %v9280
    %v9282 = vpop.f32.mrf.mxu0
    %9283 = vmatprep.mubr.bf16.mxu0 0
    %9284 = vmatmul.mubr.bf16.gmra.mxu0 %v9205
    %v9285 = vpop.f32.mrf.mxu0
    %v9286 = vadd.f32 0.0, %v9285
    %v9287 = vpop.f32.mrf.mxu0
    %v9288 = vpop.f32.mrf.mxu0
    %v9289 = vadd.f32 0.0, %v9288
    %v9290 = vpop.f32.mrf.mxu0
    %9291 = vmatprep.mubr.bf16.mxu0 0
    %9292 = vmatmul.mubr.bf16.gmra.mxu0 %v9206
    %v9293 = vpop.f32.mrf.mxu0
    %v9294 = vadd.f32 0.0, %v9293
    %v9295 = vpop.f32.mrf.mxu0
    %v9296 = vpop.f32.mrf.mxu0
    %v9297 = vadd.f32 0.0, %v9296
    %v9298 = vpop.f32.mrf.mxu0
    %9299 = vmatprep.mubr.bf16.mxu0 0
    %9300 = vmatmul.mubr.bf16.gmra.mxu0 %v9207
    %v9301 = vpop.f32.mrf.mxu0
    %v9302 = vadd.f32 0.0, %v9301
    %v9303 = vpop.f32.mrf.mxu0
    %v9304 = vpop.f32.mrf.mxu0
    %v9305 = vadd.f32 0.0, %v9304
    %v9306 = vpop.f32.mrf.mxu0
    %9307 = vmatprep.mubr.bf16.mxu0 0
    %9308 = vmatmul.mubr.bf16.gmra.mxu0 %v9208
    %v9309 = vpop.f32.mrf.mxu0
    %v9310 = vadd.f32 0.0, %v9309
    %v9311 = vpop.f32.mrf.mxu0
    %v9312 = vpop.f32.mrf.mxu0
    %v9313 = vadd.f32 0.0, %v9312
    %v9314 = vpop.f32.mrf.mxu0
    %9315 = vmatprep.mubr.bf16.mxu0 0
    %9316 = vmatmul.mubr.bf16.gmra.mxu0 %v9209
    %v9317 = vpop.f32.mrf.mxu0
    %v9318 = vadd.f32 0.0, %v9317
    %v9319 = vpop.f32.mrf.mxu0
    %v9320 = vpop.f32.mrf.mxu0
    %v9321 = vadd.f32 0.0, %v9320
    %v9322 = vpop.f32.mrf.mxu0
    %9323 = vmatprep.mubr.bf16.mxu0 0
    %9324 = vmatmul.mubr.bf16.gmra.mxu0 %v9210
    %v9325 = vpop.f32.mrf.mxu0
    %v9326 = vadd.f32 0.0, %v9325
    %v9327 = vpop.f32.mrf.mxu0
    %v9328 = vpop.f32.mrf.mxu0
    %v9329 = vadd.f32 0.0, %v9328
    %v9330 = vpop.f32.mrf.mxu0
    %9331 = vmatprep.mubr.bf16.mxu0 0
    %9332 = vmatmul.mubr.bf16.gmra.mxu0 %v9211
    %v9333 = vpop.f32.mrf.mxu0
    %v9334 = vadd.f32 0.0, %v9333
    %v9335 = vpop.f32.mrf.mxu0
    %v9336 = vpop.f32.mrf.mxu0
    %v9337 = vadd.f32 0.0, %v9336
    %v9338 = vpop.f32.mrf.mxu0
    %9339 = vmatprep.mubr.bf16.mxu0 0
    %9340 = vmatmul.mubr.bf16.gmra.mxu0 %v9212
    %v9341 = vpop.f32.mrf.mxu0
    %v9342 = vadd.f32 0.0, %v9341
    %v9343 = vpop.f32.mrf.mxu0
    %v9344 = vpop.f32.mrf.mxu0
    %v9345 = vadd.f32 0.0, %v9344
    %v9346 = vpop.f32.mrf.mxu0
    %9347 = vmatprep.mubr.bf16.mxu0 0
    %9348 = vmatmul.mubr.bf16.gmra.mxu0 %v9213
    %v9349 = vpop.f32.mrf.mxu0
    %v9350 = vadd.f32 0.0, %v9349
    %v9351 = vpop.f32.mrf.mxu0
    %v9352 = vpop.f32.mrf.mxu0
    %v9353 = vadd.f32 0.0, %v9352
    %v9354 = vpop.f32.mrf.mxu0
    %9355 = vmatprep.mubr.bf16.mxu0 0
    %9356 = vmatmul.mubr.bf16.gmra.mxu0 %v9214
    %v9357 = vpop.f32.mrf.mxu0
    %v9358 = vadd.f32 0.0, %v9357
    %v9359 = vpop.f32.mrf.mxu0
    %v9360 = vpop.f32.mrf.mxu0
    %v9361 = vadd.f32 0.0, %v9360
    %v9362 = vpop.f32.mrf.mxu0
    %9363 = vmatprep.mubr.bf16.mxu0 0
    %9364 = vmatmul.mubr.bf16.gmra.mxu0 %v9215
    %v9365 = vpop.f32.mrf.mxu0
    %v9366 = vadd.f32 0.0, %v9365
    %v9367 = vpop.f32.mrf.mxu0
    %v9368 = vpop.f32.mrf.mxu0
    %v9369 = vadd.f32 0.0, %v9368
    %v9370 = vpop.f32.mrf.mxu0
    %9371 = vmatprep.mubr.bf16.mxu0 0
    %9372 = vmatmul.mubr.bf16.gmra.mxu0 %v9216
    %v9373 = vpop.f32.mrf.mxu0
    %v9374 = vadd.f32 0.0, %v9373
    %v9375 = vpop.f32.mrf.mxu0
    %v9376 = vpop.f32.mrf.mxu0
    %v9377 = vadd.f32 0.0, %v9376
    %v9378 = vpop.f32.mrf.mxu0
    %9379 = vmatprep.mubr.bf16.mxu0 0
    %9380 = vmatmul.mubr.bf16.gmra.mxu0 %v9217
    %v9381 = vpop.f32.mrf.mxu0
    %v9382 = vadd.f32 0.0, %v9381
    %v9383 = vpop.f32.mrf.mxu0
    %v9384 = vpop.f32.mrf.mxu0
    %v9385 = vadd.f32 0.0, %v9384
    %v9386 = vpop.f32.mrf.mxu0
    %9387 = vmatprep.mubr.bf16.mxu0 0
    %9388 = vmatmul.mubr.bf16.gmra.mxu0 %v9218
    %v9389 = vpop.f32.mrf.mxu0
    %v9390 = vadd.f32 0.0, %v9389
    %v9391 = vpop.f32.mrf.mxu0
    %v9392 = vpop.f32.mrf.mxu0
    %v9393 = vadd.f32 0.0, %v9392
    %v9394 = vpop.f32.mrf.mxu0
    %9395 = vdwg.mxu0
    %v9396 = vpack.c.bf16 %v9273, %v9270
    %v9397 = vpack.c.bf16 %v9281, %v9278
    %v9398 = vpack.c.bf16 %v9289, %v9286
    %v9399 = vpack.c.bf16 %v9297, %v9294
    %v9400 = vpack.c.bf16 %v9305, %v9302
    %v9401 = vpack.c.bf16 %v9313, %v9310
    %v9402 = vpack.c.bf16 %v9321, %v9318
    %v9403 = vpack.c.bf16 %v9329, %v9326
    %v9404 = vpack.c.bf16 %v9337, %v9334
    %v9405 = vpack.c.bf16 %v9345, %v9342
    %v9406 = vpack.c.bf16 %v9353, %v9350
    %v9407 = vpack.c.bf16 %v9361, %v9358
    %v9408 = vpack.c.bf16 %v9369, %v9366
    %v9409 = vpack.c.bf16 %v9377, %v9374
    %v9410 = vpack.c.bf16 %v9385, %v9382
    %v9411 = vpack.c.bf16 %v9393, %v9390
    %s9412 = scalar_lea.vmem %s11, 640
    %v9413 = vld [vmem:[%s9412] sm:$0xf]
    %v9414 = vld [vmem:[%s9412 + $0x4] sm:$0xf]
    %v9415 = vld [vmem:[%s9412 + $0x8] sm:$0xf]
    %v9416 = vld [vmem:[%s9412 + $0xc] sm:$0xf]
    %v9417 = vld [vmem:[%s9412 + $0x10] sm:$0xf]
    %v9418 = vld [vmem:[%s9412 + $0x14] sm:$0xf]
    %v9419 = vld [vmem:[%s9412 + $0x18] sm:$0xf]
    %v9420 = vld [vmem:[%s9412 + $0x1c] sm:$0xf]
    %v9421 = vld [vmem:[%s9412 + $0x20] sm:$0xf]
    %v9422 = vld [vmem:[%s9412 + $0x24] sm:$0xf]
    %v9423 = vld [vmem:[%s9412 + $0x28] sm:$0xf]
    %v9424 = vld [vmem:[%s9412 + $0x2c] sm:$0xf]
    %v9425 = vld [vmem:[%s9412 + $0x30] sm:$0xf]
    %v9426 = vld [vmem:[%s9412 + $0x34] sm:$0xf]
    %v9427 = vld [vmem:[%s9412 + $0x38] sm:$0xf]
    %v9428 = vld [vmem:[%s9412 + $0x3c] sm:$0xf]
    %v9429 = vld [vmem:[%s9412 + $0x40] sm:$0xf]
    %v9430 = vld [vmem:[%s9412 + $0x44] sm:$0xf]
    %v9431 = vld [vmem:[%s9412 + $0x48] sm:$0xf]
    %v9432 = vld [vmem:[%s9412 + $0x4c] sm:$0xf]
    %v9433 = vld [vmem:[%s9412 + $0x50] sm:$0xf]
    %v9434 = vld [vmem:[%s9412 + $0x54] sm:$0xf]
    %v9435 = vld [vmem:[%s9412 + $0x58] sm:$0xf]
    %v9436 = vld [vmem:[%s9412 + $0x5c] sm:$0xf]
    %v9437 = vld [vmem:[%s9412 + $0x60] sm:$0xf]
    %v9438 = vld [vmem:[%s9412 + $0x64] sm:$0xf]
    %v9439 = vld [vmem:[%s9412 + $0x68] sm:$0xf]
    %v9440 = vld [vmem:[%s9412 + $0x6c] sm:$0xf]
    %v9441 = vld [vmem:[%s9412 + $0x70] sm:$0xf]
    %v9442 = vld [vmem:[%s9412 + $0x74] sm:$0xf]
    %v9443 = vld [vmem:[%s9412 + $0x78] sm:$0xf]
    %v9444 = vld [vmem:[%s9412 + $0x7c] sm:$0xf]
    %v9477 = vunpack.c.l.b16 %v9413
    %v9478 = vunpack.c.l.b16 %v9414
    %v9479 = vunpack.c.l.b16 %v9415
    %v9480 = vunpack.c.l.b16 %v9416
    %v9481 = vunpack.c.l.b16 %v9417
    %v9482 = vunpack.c.l.b16 %v9418
    %v9483 = vunpack.c.l.b16 %v9419
    %v9484 = vunpack.c.l.b16 %v9420
    %v9485 = vunpack.c.l.b16 %v9421
    %v9486 = vunpack.c.l.b16 %v9422
    %v9487 = vunpack.c.l.b16 %v9423
    %v9488 = vunpack.c.l.b16 %v9424
    %v9489 = vunpack.c.l.b16 %v9425
    %v9490 = vunpack.c.l.b16 %v9426
    %v9491 = vunpack.c.l.b16 %v9427
    %v9492 = vunpack.c.l.b16 %v9428
    %v9493 = vunpack.c.l.b16 %v9429
    %v9494 = vunpack.c.l.b16 %v9430
    %v9495 = vunpack.c.l.b16 %v9431
    %v9496 = vunpack.c.l.b16 %v9432
    %v9497 = vunpack.c.l.b16 %v9433
    %v9498 = vunpack.c.l.b16 %v9434
    %v9499 = vunpack.c.l.b16 %v9435
    %v9500 = vunpack.c.l.b16 %v9436
    %v9501 = vunpack.c.l.b16 %v9437
    %v9502 = vunpack.c.l.b16 %v9438
    %v9503 = vunpack.c.l.b16 %v9439
    %v9504 = vunpack.c.l.b16 %v9440
    %v9505 = vunpack.c.l.b16 %v9441
    %v9506 = vunpack.c.l.b16 %v9442
    %v9507 = vunpack.c.l.b16 %v9443
    %v9508 = vunpack.c.l.b16 %v9444
    %v9509 = vpack.c.b16 %v9478, %v9477
    %v9510 = vpack.c.b16 %v9480, %v9479
    %v9511 = vpack.c.b16 %v9482, %v9481
    %v9512 = vpack.c.b16 %v9484, %v9483
    %v9513 = vpack.c.b16 %v9486, %v9485
    %v9514 = vpack.c.b16 %v9488, %v9487
    %v9515 = vpack.c.b16 %v9490, %v9489
    %v9516 = vpack.c.b16 %v9492, %v9491
    %v9517 = vpack.c.b16 %v9494, %v9493
    %v9518 = vpack.c.b16 %v9496, %v9495
    %v9519 = vpack.c.b16 %v9498, %v9497
    %v9520 = vpack.c.b16 %v9500, %v9499
    %v9521 = vpack.c.b16 %v9502, %v9501
    %v9522 = vpack.c.b16 %v9504, %v9503
    %v9523 = vpack.c.b16 %v9506, %v9505
    %v9524 = vpack.c.b16 %v9508, %v9507
    %9541 = vmatprep.subr.bf16.mxu0 0
    %9542 = vmatpush1.bf16.msra.mxu0 %v7881
    %9543 = vmatprep.subr.bf16.mxu0 0
    %9544 = vmatpush1.bf16.msra.mxu0 %v7880
    %9545 = vmatprep.subr.bf16.mxu0 0
    %9546 = vmatpush1.bf16.msra.mxu0 %v7879
    %9547 = vmatprep.subr.bf16.mxu0 0
    %9548 = vmatpush1.bf16.msra.mxu0 %v7878
    %9549 = vmatprep.subr.bf16.mxu0 0
    %9550 = vmatpush1.bf16.msra.mxu0 %v7877
    %9551 = vmatprep.subr.bf16.mxu0 0
    %9552 = vmatpush1.bf16.msra.mxu0 %v7876
    %9553 = vmatprep.subr.bf16.mxu0 0
    %9554 = vmatpush1.bf16.msra.mxu0 %v7875
    %9555 = vmatprep.subr.bf16.mxu0 0
    %9556 = vmatpush1.bf16.msra.mxu0 %v7874
    %9557 = vmatprep.subr.bf16.mxu0 0
    %9558 = vmatpush2.bf16.msra.mxu0 0
    %9559 = vmatprep.subr.bf16.mxu0 0
    %9560 = vmatpush2.bf16.msra.mxu0 0
    %9561 = vmatprep.subr.bf16.mxu0 0
    %9562 = vmatpush2.bf16.msra.mxu0 0
    %9563 = vmatprep.subr.bf16.mxu0 0
    %9564 = vmatpush2.bf16.msra.mxu0 0
    %9565 = vmatprep.subr.bf16.mxu0 0
    %9566 = vmatpush2.bf16.msra.mxu0 0
    %9567 = vmatprep.subr.bf16.mxu0 0
    %9568 = vmatpush2.bf16.msra.mxu0 0
    %9569 = vmatprep.subr.bf16.mxu0 0
    %9570 = vmatpush2.bf16.msra.mxu0 0
    %9571 = vmatprep.subr.bf16.mxu0 0
    %9572 = vmatpush2.bf16.msra.mxu0 0
    %9573 = vmatprep.mubr.bf16.mxu0 0
    %9574 = vmatmul.mubr.bf16.gmra.mxu0 %v9509
    %v9575 = vpop.f32.mrf.mxu0
    %v9576 = vadd.f32 0.0, %v9575
    %v9577 = vpop.f32.mrf.mxu0
    %v9578 = vpop.f32.mrf.mxu0
    %v9579 = vadd.f32 0.0, %v9578
    %v9580 = vpop.f32.mrf.mxu0
    %9581 = vmatprep.mubr.bf16.mxu0 0
    %9582 = vmatmul.mubr.bf16.gmra.mxu0 %v9510
    %v9583 = vpop.f32.mrf.mxu0
    %v9584 = vadd.f32 0.0, %v9583
    %v9585 = vpop.f32.mrf.mxu0
    %v9586 = vpop.f32.mrf.mxu0
    %v9587 = vadd.f32 0.0, %v9586
    %v9588 = vpop.f32.mrf.mxu0
    %9589 = vmatprep.mubr.bf16.mxu0 0
    %9590 = vmatmul.mubr.bf16.gmra.mxu0 %v9511
    %v9591 = vpop.f32.mrf.mxu0
    %v9592 = vadd.f32 0.0, %v9591
    %v9593 = vpop.f32.mrf.mxu0
    %v9594 = vpop.f32.mrf.mxu0
    %v9595 = vadd.f32 0.0, %v9594
    %v9596 = vpop.f32.mrf.mxu0
    %9597 = vmatprep.mubr.bf16.mxu0 0
    %9598 = vmatmul.mubr.bf16.gmra.mxu0 %v9512
    %v9599 = vpop.f32.mrf.mxu0
    %v9600 = vadd.f32 0.0, %v9599
    %v9601 = vpop.f32.mrf.mxu0
    %v9602 = vpop.f32.mrf.mxu0
    %v9603 = vadd.f32 0.0, %v9602
    %v9604 = vpop.f32.mrf.mxu0
    %9605 = vmatprep.mubr.bf16.mxu0 0
    %9606 = vmatmul.mubr.bf16.gmra.mxu0 %v9513
    %v9607 = vpop.f32.mrf.mxu0
    %v9608 = vadd.f32 0.0, %v9607
    %v9609 = vpop.f32.mrf.mxu0
    %v9610 = vpop.f32.mrf.mxu0
    %v9611 = vadd.f32 0.0, %v9610
    %v9612 = vpop.f32.mrf.mxu0
    %9613 = vmatprep.mubr.bf16.mxu0 0
    %9614 = vmatmul.mubr.bf16.gmra.mxu0 %v9514
    %v9615 = vpop.f32.mrf.mxu0
    %v9616 = vadd.f32 0.0, %v9615
    %v9617 = vpop.f32.mrf.mxu0
    %v9618 = vpop.f32.mrf.mxu0
    %v9619 = vadd.f32 0.0, %v9618
    %v9620 = vpop.f32.mrf.mxu0
    %9621 = vmatprep.mubr.bf16.mxu0 0
    %9622 = vmatmul.mubr.bf16.gmra.mxu0 %v9515
    %v9623 = vpop.f32.mrf.mxu0
    %v9624 = vadd.f32 0.0, %v9623
    %v9625 = vpop.f32.mrf.mxu0
    %v9626 = vpop.f32.mrf.mxu0
    %v9627 = vadd.f32 0.0, %v9626
    %v9628 = vpop.f32.mrf.mxu0
    %9629 = vmatprep.mubr.bf16.mxu0 0
    %9630 = vmatmul.mubr.bf16.gmra.mxu0 %v9516
    %v9631 = vpop.f32.mrf.mxu0
    %v9632 = vadd.f32 0.0, %v9631
    %v9633 = vpop.f32.mrf.mxu0
    %v9634 = vpop.f32.mrf.mxu0
    %v9635 = vadd.f32 0.0, %v9634
    %v9636 = vpop.f32.mrf.mxu0
    %9637 = vmatprep.mubr.bf16.mxu0 0
    %9638 = vmatmul.mubr.bf16.gmra.mxu0 %v9517
    %v9639 = vpop.f32.mrf.mxu0
    %v9640 = vadd.f32 0.0, %v9639
    %v9641 = vpop.f32.mrf.mxu0
    %v9642 = vpop.f32.mrf.mxu0
    %v9643 = vadd.f32 0.0, %v9642
    %v9644 = vpop.f32.mrf.mxu0
    %9645 = vmatprep.mubr.bf16.mxu0 0
    %9646 = vmatmul.mubr.bf16.gmra.mxu0 %v9518
    %v9647 = vpop.f32.mrf.mxu0
    %v9648 = vadd.f32 0.0, %v9647
    %v9649 = vpop.f32.mrf.mxu0
    %v9650 = vpop.f32.mrf.mxu0
    %v9651 = vadd.f32 0.0, %v9650
    %v9652 = vpop.f32.mrf.mxu0
    %9653 = vmatprep.mubr.bf16.mxu0 0
    %9654 = vmatmul.mubr.bf16.gmra.mxu0 %v9519
    %v9655 = vpop.f32.mrf.mxu0
    %v9656 = vadd.f32 0.0, %v9655
    %v9657 = vpop.f32.mrf.mxu0
    %v9658 = vpop.f32.mrf.mxu0
    %v9659 = vadd.f32 0.0, %v9658
    %v9660 = vpop.f32.mrf.mxu0
    %9661 = vmatprep.mubr.bf16.mxu0 0
    %9662 = vmatmul.mubr.bf16.gmra.mxu0 %v9520
    %v9663 = vpop.f32.mrf.mxu0
    %v9664 = vadd.f32 0.0, %v9663
    %v9665 = vpop.f32.mrf.mxu0
    %v9666 = vpop.f32.mrf.mxu0
    %v9667 = vadd.f32 0.0, %v9666
    %v9668 = vpop.f32.mrf.mxu0
    %9669 = vmatprep.mubr.bf16.mxu0 0
    %9670 = vmatmul.mubr.bf16.gmra.mxu0 %v9521
    %v9671 = vpop.f32.mrf.mxu0
    %v9672 = vadd.f32 0.0, %v9671
    %v9673 = vpop.f32.mrf.mxu0
    %v9674 = vpop.f32.mrf.mxu0
    %v9675 = vadd.f32 0.0, %v9674
    %v9676 = vpop.f32.mrf.mxu0
    %9677 = vmatprep.mubr.bf16.mxu0 0
    %9678 = vmatmul.mubr.bf16.gmra.mxu0 %v9522
    %v9679 = vpop.f32.mrf.mxu0
    %v9680 = vadd.f32 0.0, %v9679
    %v9681 = vpop.f32.mrf.mxu0
    %v9682 = vpop.f32.mrf.mxu0
    %v9683 = vadd.f32 0.0, %v9682
    %v9684 = vpop.f32.mrf.mxu0
    %9685 = vmatprep.mubr.bf16.mxu0 0
    %9686 = vmatmul.mubr.bf16.gmra.mxu0 %v9523
    %v9687 = vpop.f32.mrf.mxu0
    %v9688 = vadd.f32 0.0, %v9687
    %v9689 = vpop.f32.mrf.mxu0
    %v9690 = vpop.f32.mrf.mxu0
    %v9691 = vadd.f32 0.0, %v9690
    %v9692 = vpop.f32.mrf.mxu0
    %9693 = vmatprep.mubr.bf16.mxu0 0
    %9694 = vmatmul.mubr.bf16.gmra.mxu0 %v9524
    %v9695 = vpop.f32.mrf.mxu0
    %v9696 = vadd.f32 0.0, %v9695
    %v9697 = vpop.f32.mrf.mxu0
    %v9698 = vpop.f32.mrf.mxu0
    %v9699 = vadd.f32 0.0, %v9698
    %v9700 = vpop.f32.mrf.mxu0
    %9701 = vdwg.mxu0
    %v9702 = vpack.c.bf16 %v9579, %v9576
    %v9703 = vpack.c.bf16 %v9587, %v9584
    %v9704 = vpack.c.bf16 %v9595, %v9592
    %v9705 = vpack.c.bf16 %v9603, %v9600
    %v9706 = vpack.c.bf16 %v9611, %v9608
    %v9707 = vpack.c.bf16 %v9619, %v9616
    %v9708 = vpack.c.bf16 %v9627, %v9624
    %v9709 = vpack.c.bf16 %v9635, %v9632
    %v9710 = vpack.c.bf16 %v9643, %v9640
    %v9711 = vpack.c.bf16 %v9651, %v9648
    %v9712 = vpack.c.bf16 %v9659, %v9656
    %v9713 = vpack.c.bf16 %v9667, %v9664
    %v9714 = vpack.c.bf16 %v9675, %v9672
    %v9715 = vpack.c.bf16 %v9683, %v9680
    %v9716 = vpack.c.bf16 %v9691, %v9688
    %v9717 = vpack.c.bf16 %v9699, %v9696
    %s9718 = scalar_lea.vmem %s11, 768
    %v9719 = vld [vmem:[%s9718] sm:$0xf]
    %v9720 = vld [vmem:[%s9718 + $0x4] sm:$0xf]
    %v9721 = vld [vmem:[%s9718 + $0x8] sm:$0xf]
    %v9722 = vld [vmem:[%s9718 + $0xc] sm:$0xf]
    %v9723 = vld [vmem:[%s9718 + $0x10] sm:$0xf]
    %v9724 = vld [vmem:[%s9718 + $0x14] sm:$0xf]
    %v9725 = vld [vmem:[%s9718 + $0x18] sm:$0xf]
    %v9726 = vld [vmem:[%s9718 + $0x1c] sm:$0xf]
    %v9727 = vld [vmem:[%s9718 + $0x20] sm:$0xf]
    %v9728 = vld [vmem:[%s9718 + $0x24] sm:$0xf]
    %v9729 = vld [vmem:[%s9718 + $0x28] sm:$0xf]
    %v9730 = vld [vmem:[%s9718 + $0x2c] sm:$0xf]
    %v9731 = vld [vmem:[%s9718 + $0x30] sm:$0xf]
    %v9732 = vld [vmem:[%s9718 + $0x34] sm:$0xf]
    %v9733 = vld [vmem:[%s9718 + $0x38] sm:$0xf]
    %v9734 = vld [vmem:[%s9718 + $0x3c] sm:$0xf]
    %v9735 = vld [vmem:[%s9718 + $0x40] sm:$0xf]
    %v9736 = vld [vmem:[%s9718 + $0x44] sm:$0xf]
    %v9737 = vld [vmem:[%s9718 + $0x48] sm:$0xf]
    %v9738 = vld [vmem:[%s9718 + $0x4c] sm:$0xf]
    %v9739 = vld [vmem:[%s9718 + $0x50] sm:$0xf]
    %v9740 = vld [vmem:[%s9718 + $0x54] sm:$0xf]
    %v9741 = vld [vmem:[%s9718 + $0x58] sm:$0xf]
    %v9742 = vld [vmem:[%s9718 + $0x5c] sm:$0xf]
    %v9743 = vld [vmem:[%s9718 + $0x60] sm:$0xf]
    %v9744 = vld [vmem:[%s9718 + $0x64] sm:$0xf]
    %v9745 = vld [vmem:[%s9718 + $0x68] sm:$0xf]
    %v9746 = vld [vmem:[%s9718 + $0x6c] sm:$0xf]
    %v9747 = vld [vmem:[%s9718 + $0x70] sm:$0xf]
    %v9748 = vld [vmem:[%s9718 + $0x74] sm:$0xf]
    %v9749 = vld [vmem:[%s9718 + $0x78] sm:$0xf]
    %v9750 = vld [vmem:[%s9718 + $0x7c] sm:$0xf]
    %v9783 = vunpack.c.l.b16 %v9719
    %v9784 = vunpack.c.l.b16 %v9720
    %v9785 = vunpack.c.l.b16 %v9721
    %v9786 = vunpack.c.l.b16 %v9722
    %v9787 = vunpack.c.l.b16 %v9723
    %v9788 = vunpack.c.l.b16 %v9724
    %v9789 = vunpack.c.l.b16 %v9725
    %v9790 = vunpack.c.l.b16 %v9726
    %v9791 = vunpack.c.l.b16 %v9727
    %v9792 = vunpack.c.l.b16 %v9728
    %v9793 = vunpack.c.l.b16 %v9729
    %v9794 = vunpack.c.l.b16 %v9730
    %v9795 = vunpack.c.l.b16 %v9731
    %v9796 = vunpack.c.l.b16 %v9732
    %v9797 = vunpack.c.l.b16 %v9733
    %v9798 = vunpack.c.l.b16 %v9734
    %v9799 = vunpack.c.l.b16 %v9735
    %v9800 = vunpack.c.l.b16 %v9736
    %v9801 = vunpack.c.l.b16 %v9737
    %v9802 = vunpack.c.l.b16 %v9738
    %v9803 = vunpack.c.l.b16 %v9739
    %v9804 = vunpack.c.l.b16 %v9740
    %v9805 = vunpack.c.l.b16 %v9741
    %v9806 = vunpack.c.l.b16 %v9742
    %v9807 = vunpack.c.l.b16 %v9743
    %v9808 = vunpack.c.l.b16 %v9744
    %v9809 = vunpack.c.l.b16 %v9745
    %v9810 = vunpack.c.l.b16 %v9746
    %v9811 = vunpack.c.l.b16 %v9747
    %v9812 = vunpack.c.l.b16 %v9748
    %v9813 = vunpack.c.l.b16 %v9749
    %v9814 = vunpack.c.l.b16 %v9750
    %v9815 = vpack.c.b16 %v9784, %v9783
    %v9816 = vpack.c.b16 %v9786, %v9785
    %v9817 = vpack.c.b16 %v9788, %v9787
    %v9818 = vpack.c.b16 %v9790, %v9789
    %v9819 = vpack.c.b16 %v9792, %v9791
    %v9820 = vpack.c.b16 %v9794, %v9793
    %v9821 = vpack.c.b16 %v9796, %v9795
    %v9822 = vpack.c.b16 %v9798, %v9797
    %v9823 = vpack.c.b16 %v9800, %v9799
    %v9824 = vpack.c.b16 %v9802, %v9801
    %v9825 = vpack.c.b16 %v9804, %v9803
    %v9826 = vpack.c.b16 %v9806, %v9805
    %v9827 = vpack.c.b16 %v9808, %v9807
    %v9828 = vpack.c.b16 %v9810, %v9809
    %v9829 = vpack.c.b16 %v9812, %v9811
    %v9830 = vpack.c.b16 %v9814, %v9813
    %9847 = vmatprep.subr.bf16.mxu0 0
    %9848 = vmatpush1.bf16.msra.mxu0 %v7881
    %9849 = vmatprep.subr.bf16.mxu0 0
    %9850 = vmatpush1.bf16.msra.mxu0 %v7880
    %9851 = vmatprep.subr.bf16.mxu0 0
    %9852 = vmatpush1.bf16.msra.mxu0 %v7879
    %9853 = vmatprep.subr.bf16.mxu0 0
    %9854 = vmatpush1.bf16.msra.mxu0 %v7878
    %9855 = vmatprep.subr.bf16.mxu0 0
    %9856 = vmatpush1.bf16.msra.mxu0 %v7877
    %9857 = vmatprep.subr.bf16.mxu0 0
    %9858 = vmatpush1.bf16.msra.mxu0 %v7876
    %9859 = vmatprep.subr.bf16.mxu0 0
    %9860 = vmatpush1.bf16.msra.mxu0 %v7875
    %9861 = vmatprep.subr.bf16.mxu0 0
    %9862 = vmatpush1.bf16.msra.mxu0 %v7874
    %9863 = vmatprep.subr.bf16.mxu0 0
    %9864 = vmatpush2.bf16.msra.mxu0 0
    %9865 = vmatprep.subr.bf16.mxu0 0
    %9866 = vmatpush2.bf16.msra.mxu0 0
    %9867 = vmatprep.subr.bf16.mxu0 0
    %9868 = vmatpush2.bf16.msra.mxu0 0
    %9869 = vmatprep.subr.bf16.mxu0 0
    %9870 = vmatpush2.bf16.msra.mxu0 0
    %9871 = vmatprep.subr.bf16.mxu0 0
    %9872 = vmatpush2.bf16.msra.mxu0 0
    %9873 = vmatprep.subr.bf16.mxu0 0
    %9874 = vmatpush2.bf16.msra.mxu0 0
    %9875 = vmatprep.subr.bf16.mxu0 0
    %9876 = vmatpush2.bf16.msra.mxu0 0
    %9877 = vmatprep.subr.bf16.mxu0 0
    %9878 = vmatpush2.bf16.msra.mxu0 0
    %9879 = vmatprep.mubr.bf16.mxu0 0
    %9880 = vmatmul.mubr.bf16.gmra.mxu0 %v9815
    %v9881 = vpop.f32.mrf.mxu0
    %v9882 = vadd.f32 0.0, %v9881
    %v9883 = vpop.f32.mrf.mxu0
    %v9884 = vpop.f32.mrf.mxu0
    %v9885 = vadd.f32 0.0, %v9884
    %v9886 = vpop.f32.mrf.mxu0
    %9887 = vmatprep.mubr.bf16.mxu0 0
    %9888 = vmatmul.mubr.bf16.gmra.mxu0 %v9816
    %v9889 = vpop.f32.mrf.mxu0
    %v9890 = vadd.f32 0.0, %v9889
    %v9891 = vpop.f32.mrf.mxu0
    %v9892 = vpop.f32.mrf.mxu0
    %v9893 = vadd.f32 0.0, %v9892
    %v9894 = vpop.f32.mrf.mxu0
    %9895 = vmatprep.mubr.bf16.mxu0 0
    %9896 = vmatmul.mubr.bf16.gmra.mxu0 %v9817
    %v9897 = vpop.f32.mrf.mxu0
    %v9898 = vadd.f32 0.0, %v9897
    %v9899 = vpop.f32.mrf.mxu0
    %v9900 = vpop.f32.mrf.mxu0
    %v9901 = vadd.f32 0.0, %v9900
    %v9902 = vpop.f32.mrf.mxu0
    %9903 = vmatprep.mubr.bf16.mxu0 0
    %9904 = vmatmul.mubr.bf16.gmra.mxu0 %v9818
    %v9905 = vpop.f32.mrf.mxu0
    %v9906 = vadd.f32 0.0, %v9905
    %v9907 = vpop.f32.mrf.mxu0
    %v9908 = vpop.f32.mrf.mxu0
    %v9909 = vadd.f32 0.0, %v9908
    %v9910 = vpop.f32.mrf.mxu0
    %9911 = vmatprep.mubr.bf16.mxu0 0
    %9912 = vmatmul.mubr.bf16.gmra.mxu0 %v9819
    %v9913 = vpop.f32.mrf.mxu0
    %v9914 = vadd.f32 0.0, %v9913
    %v9915 = vpop.f32.mrf.mxu0
    %v9916 = vpop.f32.mrf.mxu0
    %v9917 = vadd.f32 0.0, %v9916
    %v9918 = vpop.f32.mrf.mxu0
    %9919 = vmatprep.mubr.bf16.mxu0 0
    %9920 = vmatmul.mubr.bf16.gmra.mxu0 %v9820
    %v9921 = vpop.f32.mrf.mxu0
    %v9922 = vadd.f32 0.0, %v9921
    %v9923 = vpop.f32.mrf.mxu0
    %v9924 = vpop.f32.mrf.mxu0
    %v9925 = vadd.f32 0.0, %v9924
    %v9926 = vpop.f32.mrf.mxu0
    %9927 = vmatprep.mubr.bf16.mxu0 0
    %9928 = vmatmul.mubr.bf16.gmra.mxu0 %v9821
    %v9929 = vpop.f32.mrf.mxu0
    %v9930 = vadd.f32 0.0, %v9929
    %v9931 = vpop.f32.mrf.mxu0
    %v9932 = vpop.f32.mrf.mxu0
    %v9933 = vadd.f32 0.0, %v9932
    %v9934 = vpop.f32.mrf.mxu0
    %9935 = vmatprep.mubr.bf16.mxu0 0
    %9936 = vmatmul.mubr.bf16.gmra.mxu0 %v9822
    %v9937 = vpop.f32.mrf.mxu0
    %v9938 = vadd.f32 0.0, %v9937
    %v9939 = vpop.f32.mrf.mxu0
    %v9940 = vpop.f32.mrf.mxu0
    %v9941 = vadd.f32 0.0, %v9940
    %v9942 = vpop.f32.mrf.mxu0
    %9943 = vmatprep.mubr.bf16.mxu0 0
    %9944 = vmatmul.mubr.bf16.gmra.mxu0 %v9823
    %v9945 = vpop.f32.mrf.mxu0
    %v9946 = vadd.f32 0.0, %v9945
    %v9947 = vpop.f32.mrf.mxu0
    %v9948 = vpop.f32.mrf.mxu0
    %v9949 = vadd.f32 0.0, %v9948
    %v9950 = vpop.f32.mrf.mxu0
    %9951 = vmatprep.mubr.bf16.mxu0 0
    %9952 = vmatmul.mubr.bf16.gmra.mxu0 %v9824
    %v9953 = vpop.f32.mrf.mxu0
    %v9954 = vadd.f32 0.0, %v9953
    %v9955 = vpop.f32.mrf.mxu0
    %v9956 = vpop.f32.mrf.mxu0
    %v9957 = vadd.f32 0.0, %v9956
    %v9958 = vpop.f32.mrf.mxu0
    %9959 = vmatprep.mubr.bf16.mxu0 0
    %9960 = vmatmul.mubr.bf16.gmra.mxu0 %v9825
    %v9961 = vpop.f32.mrf.mxu0
    %v9962 = vadd.f32 0.0, %v9961
    %v9963 = vpop.f32.mrf.mxu0
    %v9964 = vpop.f32.mrf.mxu0
    %v9965 = vadd.f32 0.0, %v9964
    %v9966 = vpop.f32.mrf.mxu0
    %9967 = vmatprep.mubr.bf16.mxu0 0
    %9968 = vmatmul.mubr.bf16.gmra.mxu0 %v9826
    %v9969 = vpop.f32.mrf.mxu0
    %v9970 = vadd.f32 0.0, %v9969
    %v9971 = vpop.f32.mrf.mxu0
    %v9972 = vpop.f32.mrf.mxu0
    %v9973 = vadd.f32 0.0, %v9972
    %v9974 = vpop.f32.mrf.mxu0
    %9975 = vmatprep.mubr.bf16.mxu0 0
    %9976 = vmatmul.mubr.bf16.gmra.mxu0 %v9827
    %v9977 = vpop.f32.mrf.mxu0
    %v9978 = vadd.f32 0.0, %v9977
    %v9979 = vpop.f32.mrf.mxu0
    %v9980 = vpop.f32.mrf.mxu0
    %v9981 = vadd.f32 0.0, %v9980
    %v9982 = vpop.f32.mrf.mxu0
    %9983 = vmatprep.mubr.bf16.mxu0 0
    %9984 = vmatmul.mubr.bf16.gmra.mxu0 %v9828
    %v9985 = vpop.f32.mrf.mxu0
    %v9986 = vadd.f32 0.0, %v9985
    %v9987 = vpop.f32.mrf.mxu0
    %v9988 = vpop.f32.mrf.mxu0
    %v9989 = vadd.f32 0.0, %v9988
    %v9990 = vpop.f32.mrf.mxu0
    %9991 = vmatprep.mubr.bf16.mxu0 0
    %9992 = vmatmul.mubr.bf16.gmra.mxu0 %v9829
    %v9993 = vpop.f32.mrf.mxu0
    %v9994 = vadd.f32 0.0, %v9993
    %v9995 = vpop.f32.mrf.mxu0
    %v9996 = vpop.f32.mrf.mxu0
    %v9997 = vadd.f32 0.0, %v9996
    %v9998 = vpop.f32.mrf.mxu0
    %9999 = vmatprep.mubr.bf16.mxu0 0
    %10000 = vmatmul.mubr.bf16.gmra.mxu0 %v9830
    %v10001 = vpop.f32.mrf.mxu0
    %v10002 = vadd.f32 0.0, %v10001
    %v10003 = vpop.f32.mrf.mxu0
    %v10004 = vpop.f32.mrf.mxu0
    %v10005 = vadd.f32 0.0, %v10004
    %v10006 = vpop.f32.mrf.mxu0
    %10007 = vdwg.mxu0
    %v10008 = vpack.c.bf16 %v9885, %v9882
    %v10009 = vpack.c.bf16 %v9893, %v9890
    %v10010 = vpack.c.bf16 %v9901, %v9898
    %v10011 = vpack.c.bf16 %v9909, %v9906
    %v10012 = vpack.c.bf16 %v9917, %v9914
    %v10013 = vpack.c.bf16 %v9925, %v9922
    %v10014 = vpack.c.bf16 %v9933, %v9930
    %v10015 = vpack.c.bf16 %v9941, %v9938
    %v10016 = vpack.c.bf16 %v9949, %v9946
    %v10017 = vpack.c.bf16 %v9957, %v9954
    %v10018 = vpack.c.bf16 %v9965, %v9962
    %v10019 = vpack.c.bf16 %v9973, %v9970
    %v10020 = vpack.c.bf16 %v9981, %v9978
    %v10021 = vpack.c.bf16 %v9989, %v9986
    %v10022 = vpack.c.bf16 %v9997, %v9994
    %v10023 = vpack.c.bf16 %v10005, %v10002
    %s10024 = scalar_lea.vmem %s11, 896
    %v10025 = vld [vmem:[%s10024] sm:$0xf]
    %v10026 = vld [vmem:[%s10024 + $0x4] sm:$0xf]
    %v10027 = vld [vmem:[%s10024 + $0x8] sm:$0xf]
    %v10028 = vld [vmem:[%s10024 + $0xc] sm:$0xf]
    %v10029 = vld [vmem:[%s10024 + $0x10] sm:$0xf]
    %v10030 = vld [vmem:[%s10024 + $0x14] sm:$0xf]
    %v10031 = vld [vmem:[%s10024 + $0x18] sm:$0xf]
    %v10032 = vld [vmem:[%s10024 + $0x1c] sm:$0xf]
    %v10033 = vld [vmem:[%s10024 + $0x20] sm:$0xf]
    %v10034 = vld [vmem:[%s10024 + $0x24] sm:$0xf]
    %v10035 = vld [vmem:[%s10024 + $0x28] sm:$0xf]
    %v10036 = vld [vmem:[%s10024 + $0x2c] sm:$0xf]
    %v10037 = vld [vmem:[%s10024 + $0x30] sm:$0xf]
    %v10038 = vld [vmem:[%s10024 + $0x34] sm:$0xf]
    %v10039 = vld [vmem:[%s10024 + $0x38] sm:$0xf]
    %v10040 = vld [vmem:[%s10024 + $0x3c] sm:$0xf]
    %v10041 = vld [vmem:[%s10024 + $0x40] sm:$0xf]
    %v10042 = vld [vmem:[%s10024 + $0x44] sm:$0xf]
    %v10043 = vld [vmem:[%s10024 + $0x48] sm:$0xf]
    %v10044 = vld [vmem:[%s10024 + $0x4c] sm:$0xf]
    %v10045 = vld [vmem:[%s10024 + $0x50] sm:$0xf]
    %v10046 = vld [vmem:[%s10024 + $0x54] sm:$0xf]
    %v10047 = vld [vmem:[%s10024 + $0x58] sm:$0xf]
    %v10048 = vld [vmem:[%s10024 + $0x5c] sm:$0xf]
    %v10049 = vld [vmem:[%s10024 + $0x60] sm:$0xf]
    %v10050 = vld [vmem:[%s10024 + $0x64] sm:$0xf]
    %v10051 = vld [vmem:[%s10024 + $0x68] sm:$0xf]
    %v10052 = vld [vmem:[%s10024 + $0x6c] sm:$0xf]
    %v10053 = vld [vmem:[%s10024 + $0x70] sm:$0xf]
    %v10054 = vld [vmem:[%s10024 + $0x74] sm:$0xf]
    %v10055 = vld [vmem:[%s10024 + $0x78] sm:$0xf]
    %v10056 = vld [vmem:[%s10024 + $0x7c] sm:$0xf]
    %v10089 = vunpack.c.l.b16 %v10025
    %v10090 = vunpack.c.l.b16 %v10026
    %v10091 = vunpack.c.l.b16 %v10027
    %v10092 = vunpack.c.l.b16 %v10028
    %v10093 = vunpack.c.l.b16 %v10029
    %v10094 = vunpack.c.l.b16 %v10030
    %v10095 = vunpack.c.l.b16 %v10031
    %v10096 = vunpack.c.l.b16 %v10032
    %v10097 = vunpack.c.l.b16 %v10033
    %v10098 = vunpack.c.l.b16 %v10034
    %v10099 = vunpack.c.l.b16 %v10035
    %v10100 = vunpack.c.l.b16 %v10036
    %v10101 = vunpack.c.l.b16 %v10037
    %v10102 = vunpack.c.l.b16 %v10038
    %v10103 = vunpack.c.l.b16 %v10039
    %v10104 = vunpack.c.l.b16 %v10040
    %v10105 = vunpack.c.l.b16 %v10041
    %v10106 = vunpack.c.l.b16 %v10042
    %v10107 = vunpack.c.l.b16 %v10043
    %v10108 = vunpack.c.l.b16 %v10044
    %v10109 = vunpack.c.l.b16 %v10045
    %v10110 = vunpack.c.l.b16 %v10046
    %v10111 = vunpack.c.l.b16 %v10047
    %v10112 = vunpack.c.l.b16 %v10048
    %v10113 = vunpack.c.l.b16 %v10049
    %v10114 = vunpack.c.l.b16 %v10050
    %v10115 = vunpack.c.l.b16 %v10051
    %v10116 = vunpack.c.l.b16 %v10052
    %v10117 = vunpack.c.l.b16 %v10053
    %v10118 = vunpack.c.l.b16 %v10054
    %v10119 = vunpack.c.l.b16 %v10055
    %v10120 = vunpack.c.l.b16 %v10056
    %v10121 = vpack.c.b16 %v10090, %v10089
    %v10122 = vpack.c.b16 %v10092, %v10091
    %v10123 = vpack.c.b16 %v10094, %v10093
    %v10124 = vpack.c.b16 %v10096, %v10095
    %v10125 = vpack.c.b16 %v10098, %v10097
    %v10126 = vpack.c.b16 %v10100, %v10099
    %v10127 = vpack.c.b16 %v10102, %v10101
    %v10128 = vpack.c.b16 %v10104, %v10103
    %v10129 = vpack.c.b16 %v10106, %v10105
    %v10130 = vpack.c.b16 %v10108, %v10107
    %v10131 = vpack.c.b16 %v10110, %v10109
    %v10132 = vpack.c.b16 %v10112, %v10111
    %v10133 = vpack.c.b16 %v10114, %v10113
    %v10134 = vpack.c.b16 %v10116, %v10115
    %v10135 = vpack.c.b16 %v10118, %v10117
    %v10136 = vpack.c.b16 %v10120, %v10119
    %10153 = vmatprep.subr.bf16.mxu0 0
    %10154 = vmatpush1.bf16.msra.mxu0 %v7881
    %10155 = vmatprep.subr.bf16.mxu0 0
    %10156 = vmatpush1.bf16.msra.mxu0 %v7880
    %10157 = vmatprep.subr.bf16.mxu0 0
    %10158 = vmatpush1.bf16.msra.mxu0 %v7879
    %10159 = vmatprep.subr.bf16.mxu0 0
    %10160 = vmatpush1.bf16.msra.mxu0 %v7878
    %10161 = vmatprep.subr.bf16.mxu0 0
    %10162 = vmatpush1.bf16.msra.mxu0 %v7877
    %10163 = vmatprep.subr.bf16.mxu0 0
    %10164 = vmatpush1.bf16.msra.mxu0 %v7876
    %10165 = vmatprep.subr.bf16.mxu0 0
    %10166 = vmatpush1.bf16.msra.mxu0 %v7875
    %10167 = vmatprep.subr.bf16.mxu0 0
    %10168 = vmatpush1.bf16.msra.mxu0 %v7874
    %10169 = vmatprep.subr.bf16.mxu0 0
    %10170 = vmatpush2.bf16.msra.mxu0 0
    %10171 = vmatprep.subr.bf16.mxu0 0
    %10172 = vmatpush2.bf16.msra.mxu0 0
    %10173 = vmatprep.subr.bf16.mxu0 0
    %10174 = vmatpush2.bf16.msra.mxu0 0
    %10175 = vmatprep.subr.bf16.mxu0 0
    %10176 = vmatpush2.bf16.msra.mxu0 0
    %10177 = vmatprep.subr.bf16.mxu0 0
    %10178 = vmatpush2.bf16.msra.mxu0 0
    %10179 = vmatprep.subr.bf16.mxu0 0
    %10180 = vmatpush2.bf16.msra.mxu0 0
    %10181 = vmatprep.subr.bf16.mxu0 0
    %10182 = vmatpush2.bf16.msra.mxu0 0
    %10183 = vmatprep.subr.bf16.mxu0 0
    %10184 = vmatpush2.bf16.msra.mxu0 0
    %10185 = vmatprep.mubr.bf16.mxu0 0
    %10186 = vmatmul.mubr.bf16.gmra.mxu0 %v10121
    %v10187 = vpop.f32.mrf.mxu0
    %v10188 = vadd.f32 0.0, %v10187
    %v10189 = vpop.f32.mrf.mxu0
    %v10190 = vpop.f32.mrf.mxu0
    %v10191 = vadd.f32 0.0, %v10190
    %v10192 = vpop.f32.mrf.mxu0
    %10193 = vmatprep.mubr.bf16.mxu0 0
    %10194 = vmatmul.mubr.bf16.gmra.mxu0 %v10122
    %v10195 = vpop.f32.mrf.mxu0
    %v10196 = vadd.f32 0.0, %v10195
    %v10197 = vpop.f32.mrf.mxu0
    %v10198 = vpop.f32.mrf.mxu0
    %v10199 = vadd.f32 0.0, %v10198
    %v10200 = vpop.f32.mrf.mxu0
    %10201 = vmatprep.mubr.bf16.mxu0 0
    %10202 = vmatmul.mubr.bf16.gmra.mxu0 %v10123
    %v10203 = vpop.f32.mrf.mxu0
    %v10204 = vadd.f32 0.0, %v10203
    %v10205 = vpop.f32.mrf.mxu0
    %v10206 = vpop.f32.mrf.mxu0
    %v10207 = vadd.f32 0.0, %v10206
    %v10208 = vpop.f32.mrf.mxu0
    %10209 = vmatprep.mubr.bf16.mxu0 0
    %10210 = vmatmul.mubr.bf16.gmra.mxu0 %v10124
    %v10211 = vpop.f32.mrf.mxu0
    %v10212 = vadd.f32 0.0, %v10211
    %v10213 = vpop.f32.mrf.mxu0
    %v10214 = vpop.f32.mrf.mxu0
    %v10215 = vadd.f32 0.0, %v10214
    %v10216 = vpop.f32.mrf.mxu0
    %10217 = vmatprep.mubr.bf16.mxu0 0
    %10218 = vmatmul.mubr.bf16.gmra.mxu0 %v10125
    %v10219 = vpop.f32.mrf.mxu0
    %v10220 = vadd.f32 0.0, %v10219
    %v10221 = vpop.f32.mrf.mxu0
    %v10222 = vpop.f32.mrf.mxu0
    %v10223 = vadd.f32 0.0, %v10222
    %v10224 = vpop.f32.mrf.mxu0
    %10225 = vmatprep.mubr.bf16.mxu0 0
    %10226 = vmatmul.mubr.bf16.gmra.mxu0 %v10126
    %v10227 = vpop.f32.mrf.mxu0
    %v10228 = vadd.f32 0.0, %v10227
    %v10229 = vpop.f32.mrf.mxu0
    %v10230 = vpop.f32.mrf.mxu0
    %v10231 = vadd.f32 0.0, %v10230
    %v10232 = vpop.f32.mrf.mxu0
    %10233 = vmatprep.mubr.bf16.mxu0 0
    %10234 = vmatmul.mubr.bf16.gmra.mxu0 %v10127
    %v10235 = vpop.f32.mrf.mxu0
    %v10236 = vadd.f32 0.0, %v10235
    %v10237 = vpop.f32.mrf.mxu0
    %v10238 = vpop.f32.mrf.mxu0
    %v10239 = vadd.f32 0.0, %v10238
    %v10240 = vpop.f32.mrf.mxu0
    %10241 = vmatprep.mubr.bf16.mxu0 0
    %10242 = vmatmul.mubr.bf16.gmra.mxu0 %v10128
    %v10243 = vpop.f32.mrf.mxu0
    %v10244 = vadd.f32 0.0, %v10243
    %v10245 = vpop.f32.mrf.mxu0
    %v10246 = vpop.f32.mrf.mxu0
    %v10247 = vadd.f32 0.0, %v10246
    %v10248 = vpop.f32.mrf.mxu0
    %10249 = vmatprep.mubr.bf16.mxu0 0
    %10250 = vmatmul.mubr.bf16.gmra.mxu0 %v10129
    %v10251 = vpop.f32.mrf.mxu0
    %v10252 = vadd.f32 0.0, %v10251
    %v10253 = vpop.f32.mrf.mxu0
    %v10254 = vpop.f32.mrf.mxu0
    %v10255 = vadd.f32 0.0, %v10254
    %v10256 = vpop.f32.mrf.mxu0
    %10257 = vmatprep.mubr.bf16.mxu0 0
    %10258 = vmatmul.mubr.bf16.gmra.mxu0 %v10130
    %v10259 = vpop.f32.mrf.mxu0
    %v10260 = vadd.f32 0.0, %v10259
    %v10261 = vpop.f32.mrf.mxu0
    %v10262 = vpop.f32.mrf.mxu0
    %v10263 = vadd.f32 0.0, %v10262
    %v10264 = vpop.f32.mrf.mxu0
    %10265 = vmatprep.mubr.bf16.mxu0 0
    %10266 = vmatmul.mubr.bf16.gmra.mxu0 %v10131
    %v10267 = vpop.f32.mrf.mxu0
    %v10268 = vadd.f32 0.0, %v10267
    %v10269 = vpop.f32.mrf.mxu0
    %v10270 = vpop.f32.mrf.mxu0
    %v10271 = vadd.f32 0.0, %v10270
    %v10272 = vpop.f32.mrf.mxu0
    %10273 = vmatprep.mubr.bf16.mxu0 0
    %10274 = vmatmul.mubr.bf16.gmra.mxu0 %v10132
    %v10275 = vpop.f32.mrf.mxu0
    %v10276 = vadd.f32 0.0, %v10275
    %v10277 = vpop.f32.mrf.mxu0
    %v10278 = vpop.f32.mrf.mxu0
    %v10279 = vadd.f32 0.0, %v10278
    %v10280 = vpop.f32.mrf.mxu0
    %10281 = vmatprep.mubr.bf16.mxu0 0
    %10282 = vmatmul.mubr.bf16.gmra.mxu0 %v10133
    %v10283 = vpop.f32.mrf.mxu0
    %v10284 = vadd.f32 0.0, %v10283
    %v10285 = vpop.f32.mrf.mxu0
    %v10286 = vpop.f32.mrf.mxu0
    %v10287 = vadd.f32 0.0, %v10286
    %v10288 = vpop.f32.mrf.mxu0
    %10289 = vmatprep.mubr.bf16.mxu0 0
    %10290 = vmatmul.mubr.bf16.gmra.mxu0 %v10134
    %v10291 = vpop.f32.mrf.mxu0
    %v10292 = vadd.f32 0.0, %v10291
    %v10293 = vpop.f32.mrf.mxu0
    %v10294 = vpop.f32.mrf.mxu0
    %v10295 = vadd.f32 0.0, %v10294
    %v10296 = vpop.f32.mrf.mxu0
    %10297 = vmatprep.mubr.bf16.mxu0 0
    %10298 = vmatmul.mubr.bf16.gmra.mxu0 %v10135
    %v10299 = vpop.f32.mrf.mxu0
    %v10300 = vadd.f32 0.0, %v10299
    %v10301 = vpop.f32.mrf.mxu0
    %v10302 = vpop.f32.mrf.mxu0
    %v10303 = vadd.f32 0.0, %v10302
    %v10304 = vpop.f32.mrf.mxu0
    %10305 = vmatprep.mubr.bf16.mxu0 0
    %10306 = vmatmul.mubr.bf16.gmra.mxu0 %v10136
    %v10307 = vpop.f32.mrf.mxu0
    %v10308 = vadd.f32 0.0, %v10307
    %v10309 = vpop.f32.mrf.mxu0
    %v10310 = vpop.f32.mrf.mxu0
    %v10311 = vadd.f32 0.0, %v10310
    %v10312 = vpop.f32.mrf.mxu0
    %10313 = vdwg.mxu0
    %v10314 = vpack.c.bf16 %v10191, %v10188
    %v10315 = vpack.c.bf16 %v10199, %v10196
    %v10316 = vpack.c.bf16 %v10207, %v10204
    %v10317 = vpack.c.bf16 %v10215, %v10212
    %v10318 = vpack.c.bf16 %v10223, %v10220
    %v10319 = vpack.c.bf16 %v10231, %v10228
    %v10320 = vpack.c.bf16 %v10239, %v10236
    %v10321 = vpack.c.bf16 %v10247, %v10244
    %v10322 = vpack.c.bf16 %v10255, %v10252
    %v10323 = vpack.c.bf16 %v10263, %v10260
    %v10324 = vpack.c.bf16 %v10271, %v10268
    %v10325 = vpack.c.bf16 %v10279, %v10276
    %v10326 = vpack.c.bf16 %v10287, %v10284
    %v10327 = vpack.c.bf16 %v10295, %v10292
    %v10328 = vpack.c.bf16 %v10303, %v10300
    %v10329 = vpack.c.bf16 %v10311, %v10308
    %s10330 = scalar_lea.vmem %s11, 1024
    %v10331 = vld [vmem:[%s10330] sm:$0xf]
    %v10332 = vld [vmem:[%s10330 + $0x4] sm:$0xf]
    %v10333 = vld [vmem:[%s10330 + $0x8] sm:$0xf]
    %v10334 = vld [vmem:[%s10330 + $0xc] sm:$0xf]
    %v10335 = vld [vmem:[%s10330 + $0x10] sm:$0xf]
    %v10336 = vld [vmem:[%s10330 + $0x14] sm:$0xf]
    %v10337 = vld [vmem:[%s10330 + $0x18] sm:$0xf]
    %v10338 = vld [vmem:[%s10330 + $0x1c] sm:$0xf]
    %v10339 = vld [vmem:[%s10330 + $0x20] sm:$0xf]
    %v10340 = vld [vmem:[%s10330 + $0x24] sm:$0xf]
    %v10341 = vld [vmem:[%s10330 + $0x28] sm:$0xf]
    %v10342 = vld [vmem:[%s10330 + $0x2c] sm:$0xf]
    %v10343 = vld [vmem:[%s10330 + $0x30] sm:$0xf]
    %v10344 = vld [vmem:[%s10330 + $0x34] sm:$0xf]
    %v10345 = vld [vmem:[%s10330 + $0x38] sm:$0xf]
    %v10346 = vld [vmem:[%s10330 + $0x3c] sm:$0xf]
    %v10347 = vld [vmem:[%s10330 + $0x40] sm:$0xf]
    %v10348 = vld [vmem:[%s10330 + $0x44] sm:$0xf]
    %v10349 = vld [vmem:[%s10330 + $0x48] sm:$0xf]
    %v10350 = vld [vmem:[%s10330 + $0x4c] sm:$0xf]
    %v10351 = vld [vmem:[%s10330 + $0x50] sm:$0xf]
    %v10352 = vld [vmem:[%s10330 + $0x54] sm:$0xf]
    %v10353 = vld [vmem:[%s10330 + $0x58] sm:$0xf]
    %v10354 = vld [vmem:[%s10330 + $0x5c] sm:$0xf]
    %v10355 = vld [vmem:[%s10330 + $0x60] sm:$0xf]
    %v10356 = vld [vmem:[%s10330 + $0x64] sm:$0xf]
    %v10357 = vld [vmem:[%s10330 + $0x68] sm:$0xf]
    %v10358 = vld [vmem:[%s10330 + $0x6c] sm:$0xf]
    %v10359 = vld [vmem:[%s10330 + $0x70] sm:$0xf]
    %v10360 = vld [vmem:[%s10330 + $0x74] sm:$0xf]
    %v10361 = vld [vmem:[%s10330 + $0x78] sm:$0xf]
    %v10362 = vld [vmem:[%s10330 + $0x7c] sm:$0xf]
    %v10395 = vunpack.c.l.b16 %v10331
    %v10396 = vunpack.c.l.b16 %v10332
    %v10397 = vunpack.c.l.b16 %v10333
    %v10398 = vunpack.c.l.b16 %v10334
    %v10399 = vunpack.c.l.b16 %v10335
    %v10400 = vunpack.c.l.b16 %v10336
    %v10401 = vunpack.c.l.b16 %v10337
    %v10402 = vunpack.c.l.b16 %v10338
    %v10403 = vunpack.c.l.b16 %v10339
    %v10404 = vunpack.c.l.b16 %v10340
    %v10405 = vunpack.c.l.b16 %v10341
    %v10406 = vunpack.c.l.b16 %v10342
    %v10407 = vunpack.c.l.b16 %v10343
    %v10408 = vunpack.c.l.b16 %v10344
    %v10409 = vunpack.c.l.b16 %v10345
    %v10410 = vunpack.c.l.b16 %v10346
    %v10411 = vunpack.c.l.b16 %v10347
    %v10412 = vunpack.c.l.b16 %v10348
    %v10413 = vunpack.c.l.b16 %v10349
    %v10414 = vunpack.c.l.b16 %v10350
    %v10415 = vunpack.c.l.b16 %v10351
    %v10416 = vunpack.c.l.b16 %v10352
    %v10417 = vunpack.c.l.b16 %v10353
    %v10418 = vunpack.c.l.b16 %v10354
    %v10419 = vunpack.c.l.b16 %v10355
    %v10420 = vunpack.c.l.b16 %v10356
    %v10421 = vunpack.c.l.b16 %v10357
    %v10422 = vunpack.c.l.b16 %v10358
    %v10423 = vunpack.c.l.b16 %v10359
    %v10424 = vunpack.c.l.b16 %v10360
    %v10425 = vunpack.c.l.b16 %v10361
    %v10426 = vunpack.c.l.b16 %v10362
    %v10427 = vpack.c.b16 %v10396, %v10395
    %v10428 = vpack.c.b16 %v10398, %v10397
    %v10429 = vpack.c.b16 %v10400, %v10399
    %v10430 = vpack.c.b16 %v10402, %v10401
    %v10431 = vpack.c.b16 %v10404, %v10403
    %v10432 = vpack.c.b16 %v10406, %v10405
    %v10433 = vpack.c.b16 %v10408, %v10407
    %v10434 = vpack.c.b16 %v10410, %v10409
    %v10435 = vpack.c.b16 %v10412, %v10411
    %v10436 = vpack.c.b16 %v10414, %v10413
    %v10437 = vpack.c.b16 %v10416, %v10415
    %v10438 = vpack.c.b16 %v10418, %v10417
    %v10439 = vpack.c.b16 %v10420, %v10419
    %v10440 = vpack.c.b16 %v10422, %v10421
    %v10441 = vpack.c.b16 %v10424, %v10423
    %v10442 = vpack.c.b16 %v10426, %v10425
    %10459 = vmatprep.subr.bf16.mxu0 0
    %10460 = vmatpush1.bf16.msra.mxu0 %v7881
    %10461 = vmatprep.subr.bf16.mxu0 0
    %10462 = vmatpush1.bf16.msra.mxu0 %v7880
    %10463 = vmatprep.subr.bf16.mxu0 0
    %10464 = vmatpush1.bf16.msra.mxu0 %v7879
    %10465 = vmatprep.subr.bf16.mxu0 0
    %10466 = vmatpush1.bf16.msra.mxu0 %v7878
    %10467 = vmatprep.subr.bf16.mxu0 0
    %10468 = vmatpush1.bf16.msra.mxu0 %v7877
    %10469 = vmatprep.subr.bf16.mxu0 0
    %10470 = vmatpush1.bf16.msra.mxu0 %v7876
    %10471 = vmatprep.subr.bf16.mxu0 0
    %10472 = vmatpush1.bf16.msra.mxu0 %v7875
    %10473 = vmatprep.subr.bf16.mxu0 0
    %10474 = vmatpush1.bf16.msra.mxu0 %v7874
    %10475 = vmatprep.subr.bf16.mxu0 0
    %10476 = vmatpush2.bf16.msra.mxu0 0
    %10477 = vmatprep.subr.bf16.mxu0 0
    %10478 = vmatpush2.bf16.msra.mxu0 0
    %10479 = vmatprep.subr.bf16.mxu0 0
    %10480 = vmatpush2.bf16.msra.mxu0 0
    %10481 = vmatprep.subr.bf16.mxu0 0
    %10482 = vmatpush2.bf16.msra.mxu0 0
    %10483 = vmatprep.subr.bf16.mxu0 0
    %10484 = vmatpush2.bf16.msra.mxu0 0
    %10485 = vmatprep.subr.bf16.mxu0 0
    %10486 = vmatpush2.bf16.msra.mxu0 0
    %10487 = vmatprep.subr.bf16.mxu0 0
    %10488 = vmatpush2.bf16.msra.mxu0 0
    %10489 = vmatprep.subr.bf16.mxu0 0
    %10490 = vmatpush2.bf16.msra.mxu0 0
    %10491 = vmatprep.mubr.bf16.mxu0 0
    %10492 = vmatmul.mubr.bf16.gmra.mxu0 %v10427
    %v10493 = vpop.f32.mrf.mxu0
    %v10494 = vadd.f32 0.0, %v10493
    %v10495 = vpop.f32.mrf.mxu0
    %v10496 = vpop.f32.mrf.mxu0
    %v10497 = vadd.f32 0.0, %v10496
    %v10498 = vpop.f32.mrf.mxu0
    %10499 = vmatprep.mubr.bf16.mxu0 0
    %10500 = vmatmul.mubr.bf16.gmra.mxu0 %v10428
    %v10501 = vpop.f32.mrf.mxu0
    %v10502 = vadd.f32 0.0, %v10501
    %v10503 = vpop.f32.mrf.mxu0
    %v10504 = vpop.f32.mrf.mxu0
    %v10505 = vadd.f32 0.0, %v10504
    %v10506 = vpop.f32.mrf.mxu0
    %10507 = vmatprep.mubr.bf16.mxu0 0
    %10508 = vmatmul.mubr.bf16.gmra.mxu0 %v10429
    %v10509 = vpop.f32.mrf.mxu0
    %v10510 = vadd.f32 0.0, %v10509
    %v10511 = vpop.f32.mrf.mxu0
    %v10512 = vpop.f32.mrf.mxu0
    %v10513 = vadd.f32 0.0, %v10512
    %v10514 = vpop.f32.mrf.mxu0
    %10515 = vmatprep.mubr.bf16.mxu0 0
    %10516 = vmatmul.mubr.bf16.gmra.mxu0 %v10430
    %v10517 = vpop.f32.mrf.mxu0
    %v10518 = vadd.f32 0.0, %v10517
    %v10519 = vpop.f32.mrf.mxu0
    %v10520 = vpop.f32.mrf.mxu0
    %v10521 = vadd.f32 0.0, %v10520
    %v10522 = vpop.f32.mrf.mxu0
    %10523 = vmatprep.mubr.bf16.mxu0 0
    %10524 = vmatmul.mubr.bf16.gmra.mxu0 %v10431
    %v10525 = vpop.f32.mrf.mxu0
    %v10526 = vadd.f32 0.0, %v10525
    %v10527 = vpop.f32.mrf.mxu0
    %v10528 = vpop.f32.mrf.mxu0
    %v10529 = vadd.f32 0.0, %v10528
    %v10530 = vpop.f32.mrf.mxu0
    %10531 = vmatprep.mubr.bf16.mxu0 0
    %10532 = vmatmul.mubr.bf16.gmra.mxu0 %v10432
    %v10533 = vpop.f32.mrf.mxu0
    %v10534 = vadd.f32 0.0, %v10533
    %v10535 = vpop.f32.mrf.mxu0
    %v10536 = vpop.f32.mrf.mxu0
    %v10537 = vadd.f32 0.0, %v10536
    %v10538 = vpop.f32.mrf.mxu0
    %10539 = vmatprep.mubr.bf16.mxu0 0
    %10540 = vmatmul.mubr.bf16.gmra.mxu0 %v10433
    %v10541 = vpop.f32.mrf.mxu0
    %v10542 = vadd.f32 0.0, %v10541
    %v10543 = vpop.f32.mrf.mxu0
    %v10544 = vpop.f32.mrf.mxu0
    %v10545 = vadd.f32 0.0, %v10544
    %v10546 = vpop.f32.mrf.mxu0
    %10547 = vmatprep.mubr.bf16.mxu0 0
    %10548 = vmatmul.mubr.bf16.gmra.mxu0 %v10434
    %v10549 = vpop.f32.mrf.mxu0
    %v10550 = vadd.f32 0.0, %v10549
    %v10551 = vpop.f32.mrf.mxu0
    %v10552 = vpop.f32.mrf.mxu0
    %v10553 = vadd.f32 0.0, %v10552
    %v10554 = vpop.f32.mrf.mxu0
    %10555 = vmatprep.mubr.bf16.mxu0 0
    %10556 = vmatmul.mubr.bf16.gmra.mxu0 %v10435
    %v10557 = vpop.f32.mrf.mxu0
    %v10558 = vadd.f32 0.0, %v10557
    %v10559 = vpop.f32.mrf.mxu0
    %v10560 = vpop.f32.mrf.mxu0
    %v10561 = vadd.f32 0.0, %v10560
    %v10562 = vpop.f32.mrf.mxu0
    %10563 = vmatprep.mubr.bf16.mxu0 0
    %10564 = vmatmul.mubr.bf16.gmra.mxu0 %v10436
    %v10565 = vpop.f32.mrf.mxu0
    %v10566 = vadd.f32 0.0, %v10565
    %v10567 = vpop.f32.mrf.mxu0
    %v10568 = vpop.f32.mrf.mxu0
    %v10569 = vadd.f32 0.0, %v10568
    %v10570 = vpop.f32.mrf.mxu0
    %10571 = vmatprep.mubr.bf16.mxu0 0
    %10572 = vmatmul.mubr.bf16.gmra.mxu0 %v10437
    %v10573 = vpop.f32.mrf.mxu0
    %v10574 = vadd.f32 0.0, %v10573
    %v10575 = vpop.f32.mrf.mxu0
    %v10576 = vpop.f32.mrf.mxu0
    %v10577 = vadd.f32 0.0, %v10576
    %v10578 = vpop.f32.mrf.mxu0
    %10579 = vmatprep.mubr.bf16.mxu0 0
    %10580 = vmatmul.mubr.bf16.gmra.mxu0 %v10438
    %v10581 = vpop.f32.mrf.mxu0
    %v10582 = vadd.f32 0.0, %v10581
    %v10583 = vpop.f32.mrf.mxu0
    %v10584 = vpop.f32.mrf.mxu0
    %v10585 = vadd.f32 0.0, %v10584
    %v10586 = vpop.f32.mrf.mxu0
    %10587 = vmatprep.mubr.bf16.mxu0 0
    %10588 = vmatmul.mubr.bf16.gmra.mxu0 %v10439
    %v10589 = vpop.f32.mrf.mxu0
    %v10590 = vadd.f32 0.0, %v10589
    %v10591 = vpop.f32.mrf.mxu0
    %v10592 = vpop.f32.mrf.mxu0
    %v10593 = vadd.f32 0.0, %v10592
    %v10594 = vpop.f32.mrf.mxu0
    %10595 = vmatprep.mubr.bf16.mxu0 0
    %10596 = vmatmul.mubr.bf16.gmra.mxu0 %v10440
    %v10597 = vpop.f32.mrf.mxu0
    %v10598 = vadd.f32 0.0, %v10597
    %v10599 = vpop.f32.mrf.mxu0
    %v10600 = vpop.f32.mrf.mxu0
    %v10601 = vadd.f32 0.0, %v10600
    %v10602 = vpop.f32.mrf.mxu0
    %10603 = vmatprep.mubr.bf16.mxu0 0
    %10604 = vmatmul.mubr.bf16.gmra.mxu0 %v10441
    %v10605 = vpop.f32.mrf.mxu0
    %v10606 = vadd.f32 0.0, %v10605
    %v10607 = vpop.f32.mrf.mxu0
    %v10608 = vpop.f32.mrf.mxu0
    %v10609 = vadd.f32 0.0, %v10608
    %v10610 = vpop.f32.mrf.mxu0
    %10611 = vmatprep.mubr.bf16.mxu0 0
    %10612 = vmatmul.mubr.bf16.gmra.mxu0 %v10442
    %v10613 = vpop.f32.mrf.mxu0
    %v10614 = vadd.f32 0.0, %v10613
    %v10615 = vpop.f32.mrf.mxu0
    %v10616 = vpop.f32.mrf.mxu0
    %v10617 = vadd.f32 0.0, %v10616
    %v10618 = vpop.f32.mrf.mxu0
    %10619 = vdwg.mxu0
    %v10620 = vpack.c.bf16 %v10497, %v10494
    %v10621 = vpack.c.bf16 %v10505, %v10502
    %v10622 = vpack.c.bf16 %v10513, %v10510
    %v10623 = vpack.c.bf16 %v10521, %v10518
    %v10624 = vpack.c.bf16 %v10529, %v10526
    %v10625 = vpack.c.bf16 %v10537, %v10534
    %v10626 = vpack.c.bf16 %v10545, %v10542
    %v10627 = vpack.c.bf16 %v10553, %v10550
    %v10628 = vpack.c.bf16 %v10561, %v10558
    %v10629 = vpack.c.bf16 %v10569, %v10566
    %v10630 = vpack.c.bf16 %v10577, %v10574
    %v10631 = vpack.c.bf16 %v10585, %v10582
    %v10632 = vpack.c.bf16 %v10593, %v10590
    %v10633 = vpack.c.bf16 %v10601, %v10598
    %v10634 = vpack.c.bf16 %v10609, %v10606
    %v10635 = vpack.c.bf16 %v10617, %v10614
    %10652 = vrot.lane.b32.xlu0 %v8478, 8
    %v10653 = vpop.permute.xlu0 %10652
    %10654 = vrot.lane.b32.xlu0 %v8479, 8
    %v10655 = vpop.permute.xlu0 %10654
    %10656 = vrot.lane.b32.xlu0 %v8480, 8
    %v10657 = vpop.permute.xlu0 %10656
    %10658 = vrot.lane.b32.xlu0 %v8481, 8
    %v10659 = vpop.permute.xlu0 %10658
    %10660 = vrot.lane.b32.xlu0 %v8482, 8
    %v10661 = vpop.permute.xlu0 %10660
    %10662 = vrot.lane.b32.xlu0 %v8483, 8
    %v10663 = vpop.permute.xlu0 %10662
    %10664 = vrot.lane.b32.xlu0 %v8484, 8
    %v10665 = vpop.permute.xlu0 %10664
    %10666 = vrot.lane.b32.xlu0 %v8485, 8
    %v10667 = vpop.permute.xlu0 %10666
    %10668 = vrot.lane.b32.xlu0 %v8486, 8
    %v10669 = vpop.permute.xlu0 %10668
    %10670 = vrot.lane.b32.xlu0 %v8487, 8
    %v10671 = vpop.permute.xlu0 %10670
    %10672 = vrot.lane.b32.xlu0 %v8488, 8
    %v10673 = vpop.permute.xlu0 %10672
    %10674 = vrot.lane.b32.xlu0 %v8489, 8
    %v10675 = vpop.permute.xlu0 %10674
    %10676 = vrot.lane.b32.xlu0 %v8490, 8
    %v10677 = vpop.permute.xlu0 %10676
    %10678 = vrot.lane.b32.xlu0 %v8491, 8
    %v10679 = vpop.permute.xlu0 %10678
    %10680 = vrot.lane.b32.xlu0 %v8492, 8
    %v10681 = vpop.permute.xlu0 %10680
    %10682 = vrot.lane.b32.xlu0 %v8493, 8
    %v10683 = vpop.permute.xlu0 %10682
    %10700 = vrot.lane.b32.xlu0 %v8784, 16
    %v10701 = vpop.permute.xlu0 %10700
    %10702 = vrot.lane.b32.xlu0 %v8785, 16
    %v10703 = vpop.permute.xlu0 %10702
    %10704 = vrot.lane.b32.xlu0 %v8786, 16
    %v10705 = vpop.permute.xlu0 %10704
    %10706 = vrot.lane.b32.xlu0 %v8787, 16
    %v10707 = vpop.permute.xlu0 %10706
    %10708 = vrot.lane.b32.xlu0 %v8788, 16
    %v10709 = vpop.permute.xlu0 %10708
    %10710 = vrot.lane.b32.xlu0 %v8789, 16
    %v10711 = vpop.permute.xlu0 %10710
    %10712 = vrot.lane.b32.xlu0 %v8790, 16
    %v10713 = vpop.permute.xlu0 %10712
    %10714 = vrot.lane.b32.xlu0 %v8791, 16
    %v10715 = vpop.permute.xlu0 %10714
    %10716 = vrot.lane.b32.xlu0 %v8792, 16
    %v10717 = vpop.permute.xlu0 %10716
    %10718 = vrot.lane.b32.xlu0 %v8793, 16
    %v10719 = vpop.permute.xlu0 %10718
    %10720 = vrot.lane.b32.xlu0 %v8794, 16
    %v10721 = vpop.permute.xlu0 %10720
    %10722 = vrot.lane.b32.xlu0 %v8795, 16
    %v10723 = vpop.permute.xlu0 %10722
    %10724 = vrot.lane.b32.xlu0 %v8796, 16
    %v10725 = vpop.permute.xlu0 %10724
    %10726 = vrot.lane.b32.xlu0 %v8797, 16
    %v10727 = vpop.permute.xlu0 %10726
    %10728 = vrot.lane.b32.xlu0 %v8798, 16
    %v10729 = vpop.permute.xlu0 %10728
    %10730 = vrot.lane.b32.xlu0 %v8799, 16
    %v10731 = vpop.permute.xlu0 %10730
    %10748 = vrot.lane.b32.xlu0 %v9090, 24
    %v10749 = vpop.permute.xlu0 %10748
    %10750 = vrot.lane.b32.xlu0 %v9091, 24
    %v10751 = vpop.permute.xlu0 %10750
    %10752 = vrot.lane.b32.xlu0 %v9092, 24
    %v10753 = vpop.permute.xlu0 %10752
    %10754 = vrot.lane.b32.xlu0 %v9093, 24
    %v10755 = vpop.permute.xlu0 %10754
    %10756 = vrot.lane.b32.xlu0 %v9094, 24
    %v10757 = vpop.permute.xlu0 %10756
    %10758 = vrot.lane.b32.xlu0 %v9095, 24
    %v10759 = vpop.permute.xlu0 %10758
    %10760 = vrot.lane.b32.xlu0 %v9096, 24
    %v10761 = vpop.permute.xlu0 %10760
    %10762 = vrot.lane.b32.xlu0 %v9097, 24
    %v10763 = vpop.permute.xlu0 %10762
    %10764 = vrot.lane.b32.xlu0 %v9098, 24
    %v10765 = vpop.permute.xlu0 %10764
    %10766 = vrot.lane.b32.xlu0 %v9099, 24
    %v10767 = vpop.permute.xlu0 %10766
    %10768 = vrot.lane.b32.xlu0 %v9100, 24
    %v10769 = vpop.permute.xlu0 %10768
    %10770 = vrot.lane.b32.xlu0 %v9101, 24
    %v10771 = vpop.permute.xlu0 %10770
    %10772 = vrot.lane.b32.xlu0 %v9102, 24
    %v10773 = vpop.permute.xlu0 %10772
    %10774 = vrot.lane.b32.xlu0 %v9103, 24
    %v10775 = vpop.permute.xlu0 %10774
    %10776 = vrot.lane.b32.xlu0 %v9104, 24
    %v10777 = vpop.permute.xlu0 %10776
    %10778 = vrot.lane.b32.xlu0 %v9105, 24
    %v10779 = vpop.permute.xlu0 %10778
    %10796 = vrot.lane.b32.xlu0 %v9396, 32
    %v10797 = vpop.permute.xlu0 %10796
    %10798 = vrot.lane.b32.xlu0 %v9397, 32
    %v10799 = vpop.permute.xlu0 %10798
    %10800 = vrot.lane.b32.xlu0 %v9398, 32
    %v10801 = vpop.permute.xlu0 %10800
    %10802 = vrot.lane.b32.xlu0 %v9399, 32
    %v10803 = vpop.permute.xlu0 %10802
    %10804 = vrot.lane.b32.xlu0 %v9400, 32
    %v10805 = vpop.permute.xlu0 %10804
    %10806 = vrot.lane.b32.xlu0 %v9401, 32
    %v10807 = vpop.permute.xlu0 %10806
    %10808 = vrot.lane.b32.xlu0 %v9402, 32
    %v10809 = vpop.permute.xlu0 %10808
    %10810 = vrot.lane.b32.xlu0 %v9403, 32
    %v10811 = vpop.permute.xlu0 %10810
    %10812 = vrot.lane.b32.xlu0 %v9404, 32
    %v10813 = vpop.permute.xlu0 %10812
    %10814 = vrot.lane.b32.xlu0 %v9405, 32
    %v10815 = vpop.permute.xlu0 %10814
    %10816 = vrot.lane.b32.xlu0 %v9406, 32
    %v10817 = vpop.permute.xlu0 %10816
    %10818 = vrot.lane.b32.xlu0 %v9407, 32
    %v10819 = vpop.permute.xlu0 %10818
    %10820 = vrot.lane.b32.xlu0 %v9408, 32
    %v10821 = vpop.permute.xlu0 %10820
    %10822 = vrot.lane.b32.xlu0 %v9409, 32
    %v10823 = vpop.permute.xlu0 %10822
    %10824 = vrot.lane.b32.xlu0 %v9410, 32
    %v10825 = vpop.permute.xlu0 %10824
    %10826 = vrot.lane.b32.xlu0 %v9411, 32
    %v10827 = vpop.permute.xlu0 %10826
    %10844 = vrot.lane.b32.xlu0 %v9702, 40
    %v10845 = vpop.permute.xlu0 %10844
    %10846 = vrot.lane.b32.xlu0 %v9703, 40
    %v10847 = vpop.permute.xlu0 %10846
    %10848 = vrot.lane.b32.xlu0 %v9704, 40
    %v10849 = vpop.permute.xlu0 %10848
    %10850 = vrot.lane.b32.xlu0 %v9705, 40
    %v10851 = vpop.permute.xlu0 %10850
    %10852 = vrot.lane.b32.xlu0 %v9706, 40
    %v10853 = vpop.permute.xlu0 %10852
    %10854 = vrot.lane.b32.xlu0 %v9707, 40
    %v10855 = vpop.permute.xlu0 %10854
    %10856 = vrot.lane.b32.xlu0 %v9708, 40
    %v10857 = vpop.permute.xlu0 %10856
    %10858 = vrot.lane.b32.xlu0 %v9709, 40
    %v10859 = vpop.permute.xlu0 %10858
    %10860 = vrot.lane.b32.xlu0 %v9710, 40
    %v10861 = vpop.permute.xlu0 %10860
    %10862 = vrot.lane.b32.xlu0 %v9711, 40
    %v10863 = vpop.permute.xlu0 %10862
    %10864 = vrot.lane.b32.xlu0 %v9712, 40
    %v10865 = vpop.permute.xlu0 %10864
    %10866 = vrot.lane.b32.xlu0 %v9713, 40
    %v10867 = vpop.permute.xlu0 %10866
    %10868 = vrot.lane.b32.xlu0 %v9714, 40
    %v10869 = vpop.permute.xlu0 %10868
    %10870 = vrot.lane.b32.xlu0 %v9715, 40
    %v10871 = vpop.permute.xlu0 %10870
    %10872 = vrot.lane.b32.xlu0 %v9716, 40
    %v10873 = vpop.permute.xlu0 %10872
    %10874 = vrot.lane.b32.xlu0 %v9717, 40
    %v10875 = vpop.permute.xlu0 %10874
    %10892 = vrot.lane.b32.xlu0 %v10008, 48
    %v10893 = vpop.permute.xlu0 %10892
    %10894 = vrot.lane.b32.xlu0 %v10009, 48
    %v10895 = vpop.permute.xlu0 %10894
    %10896 = vrot.lane.b32.xlu0 %v10010, 48
    %v10897 = vpop.permute.xlu0 %10896
    %10898 = vrot.lane.b32.xlu0 %v10011, 48
    %v10899 = vpop.permute.xlu0 %10898
    %10900 = vrot.lane.b32.xlu0 %v10012, 48
    %v10901 = vpop.permute.xlu0 %10900
    %10902 = vrot.lane.b32.xlu0 %v10013, 48
    %v10903 = vpop.permute.xlu0 %10902
    %10904 = vrot.lane.b32.xlu0 %v10014, 48
    %v10905 = vpop.permute.xlu0 %10904
    %10906 = vrot.lane.b32.xlu0 %v10015, 48
    %v10907 = vpop.permute.xlu0 %10906
    %10908 = vrot.lane.b32.xlu0 %v10016, 48
    %v10909 = vpop.permute.xlu0 %10908
    %10910 = vrot.lane.b32.xlu0 %v10017, 48
    %v10911 = vpop.permute.xlu0 %10910
    %10912 = vrot.lane.b32.xlu0 %v10018, 48
    %v10913 = vpop.permute.xlu0 %10912
    %10914 = vrot.lane.b32.xlu0 %v10019, 48
    %v10915 = vpop.permute.xlu0 %10914
    %10916 = vrot.lane.b32.xlu0 %v10020, 48
    %v10917 = vpop.permute.xlu0 %10916
    %10918 = vrot.lane.b32.xlu0 %v10021, 48
    %v10919 = vpop.permute.xlu0 %10918
    %10920 = vrot.lane.b32.xlu0 %v10022, 48
    %v10921 = vpop.permute.xlu0 %10920
    %10922 = vrot.lane.b32.xlu0 %v10023, 48
    %v10923 = vpop.permute.xlu0 %10922
    %10940 = vrot.lane.b32.xlu0 %v10314, 56
    %v10941 = vpop.permute.xlu0 %10940
    %10942 = vrot.lane.b32.xlu0 %v10315, 56
    %v10943 = vpop.permute.xlu0 %10942
    %10944 = vrot.lane.b32.xlu0 %v10316, 56
    %v10945 = vpop.permute.xlu0 %10944
    %10946 = vrot.lane.b32.xlu0 %v10317, 56
    %v10947 = vpop.permute.xlu0 %10946
    %10948 = vrot.lane.b32.xlu0 %v10318, 56
    %v10949 = vpop.permute.xlu0 %10948
    %10950 = vrot.lane.b32.xlu0 %v10319, 56
    %v10951 = vpop.permute.xlu0 %10950
    %10952 = vrot.lane.b32.xlu0 %v10320, 56
    %v10953 = vpop.permute.xlu0 %10952
    %10954 = vrot.lane.b32.xlu0 %v10321, 56
    %v10955 = vpop.permute.xlu0 %10954
    %10956 = vrot.lane.b32.xlu0 %v10322, 56
    %v10957 = vpop.permute.xlu0 %10956
    %10958 = vrot.lane.b32.xlu0 %v10323, 56
    %v10959 = vpop.permute.xlu0 %10958
    %10960 = vrot.lane.b32.xlu0 %v10324, 56
    %v10961 = vpop.permute.xlu0 %10960
    %10962 = vrot.lane.b32.xlu0 %v10325, 56
    %v10963 = vpop.permute.xlu0 %10962
    %10964 = vrot.lane.b32.xlu0 %v10326, 56
    %v10965 = vpop.permute.xlu0 %10964
    %10966 = vrot.lane.b32.xlu0 %v10327, 56
    %v10967 = vpop.permute.xlu0 %10966
    %10968 = vrot.lane.b32.xlu0 %v10328, 56
    %v10969 = vpop.permute.xlu0 %10968
    %10970 = vrot.lane.b32.xlu0 %v10329, 56
    %v10971 = vpop.permute.xlu0 %10970
    %10988 = vrot.lane.b32.xlu0 %v10620, 64
    %v10989 = vpop.permute.xlu0 %10988
    %10990 = vrot.lane.b32.xlu0 %v10621, 64
    %v10991 = vpop.permute.xlu0 %10990
    %10992 = vrot.lane.b32.xlu0 %v10622, 64
    %v10993 = vpop.permute.xlu0 %10992
    %10994 = vrot.lane.b32.xlu0 %v10623, 64
    %v10995 = vpop.permute.xlu0 %10994
    %10996 = vrot.lane.b32.xlu0 %v10624, 64
    %v10997 = vpop.permute.xlu0 %10996
    %10998 = vrot.lane.b32.xlu0 %v10625, 64
    %v10999 = vpop.permute.xlu0 %10998
    %11000 = vrot.lane.b32.xlu0 %v10626, 64
    %v11001 = vpop.permute.xlu0 %11000
    %11002 = vrot.lane.b32.xlu0 %v10627, 64
    %v11003 = vpop.permute.xlu0 %11002
    %11004 = vrot.lane.b32.xlu0 %v10628, 64
    %v11005 = vpop.permute.xlu0 %11004
    %11006 = vrot.lane.b32.xlu0 %v10629, 64
    %v11007 = vpop.permute.xlu0 %11006
    %11008 = vrot.lane.b32.xlu0 %v10630, 64
    %v11009 = vpop.permute.xlu0 %11008
    %11010 = vrot.lane.b32.xlu0 %v10631, 64
    %v11011 = vpop.permute.xlu0 %11010
    %11012 = vrot.lane.b32.xlu0 %v10632, 64
    %v11013 = vpop.permute.xlu0 %11012
    %11014 = vrot.lane.b32.xlu0 %v10633, 64
    %v11015 = vpop.permute.xlu0 %11014
    %11016 = vrot.lane.b32.xlu0 %v10634, 64
    %v11017 = vpop.permute.xlu0 %11016
    %11018 = vrot.lane.b32.xlu0 %v10635, 64
    %v11019 = vpop.permute.xlu0 %11018
    %v11022 = vsel %vm2705, %v8172, %v10653
    %v11025 = vsel %vm2705, %v8173, %v10655
    %v11028 = vsel %vm2705, %v8174, %v10657
    %v11031 = vsel %vm2705, %v8175, %v10659
    %v11034 = vsel %vm2705, %v8176, %v10661
    %v11037 = vsel %vm2705, %v8177, %v10663
    %v11040 = vsel %vm2705, %v8178, %v10665
    %v11043 = vsel %vm2705, %v8179, %v10667
    %v11046 = vsel %vm2705, %v8180, %v10669
    %v11049 = vsel %vm2705, %v8181, %v10671
    %v11052 = vsel %vm2705, %v8182, %v10673
    %v11055 = vsel %vm2705, %v8183, %v10675
    %v11058 = vsel %vm2705, %v8184, %v10677
    %v11061 = vsel %vm2705, %v8185, %v10679
    %v11064 = vsel %vm2705, %v8186, %v10681
    %v11067 = vsel %vm2705, %v8187, %v10683
    %vm11068 = vcmask 130048
    %v11070 = vsel %vm11068, %v11022, %v10701
    %v11072 = vsel %vm11068, %v11025, %v10703
    %v11074 = vsel %vm11068, %v11028, %v10705
    %v11076 = vsel %vm11068, %v11031, %v10707
    %v11078 = vsel %vm11068, %v11034, %v10709
    %v11080 = vsel %vm11068, %v11037, %v10711
    %v11082 = vsel %vm11068, %v11040, %v10713
    %v11084 = vsel %vm11068, %v11043, %v10715
    %v11086 = vsel %vm11068, %v11046, %v10717
    %v11088 = vsel %vm11068, %v11049, %v10719
    %v11090 = vsel %vm11068, %v11052, %v10721
    %v11092 = vsel %vm11068, %v11055, %v10723
    %v11094 = vsel %vm11068, %v11058, %v10725
    %v11096 = vsel %vm11068, %v11061, %v10727
    %v11098 = vsel %vm11068, %v11064, %v10729
    %v11100 = vsel %vm11068, %v11067, %v10731
    %vm11101 = vcmask 195584
    %v11103 = vsel %vm11101, %v11070, %v10749
    %v11105 = vsel %vm11101, %v11072, %v10751
    %v11107 = vsel %vm11101, %v11074, %v10753
    %v11109 = vsel %vm11101, %v11076, %v10755
    %v11111 = vsel %vm11101, %v11078, %v10757
    %v11113 = vsel %vm11101, %v11080, %v10759
    %v11115 = vsel %vm11101, %v11082, %v10761
    %v11117 = vsel %vm11101, %v11084, %v10763
    %v11119 = vsel %vm11101, %v11086, %v10765
    %v11121 = vsel %vm11101, %v11088, %v10767
    %v11123 = vsel %vm11101, %v11090, %v10769
    %v11125 = vsel %vm11101, %v11092, %v10771
    %v11127 = vsel %vm11101, %v11094, %v10773
    %v11129 = vsel %vm11101, %v11096, %v10775
    %v11131 = vsel %vm11101, %v11098, %v10777
    %v11133 = vsel %vm11101, %v11100, %v10779
    %v11135 = vsel %vm176, %v11103, %v10797
    %v11137 = vsel %vm176, %v11105, %v10799
    %v11139 = vsel %vm176, %v11107, %v10801
    %v11141 = vsel %vm176, %v11109, %v10803
    %v11143 = vsel %vm176, %v11111, %v10805
    %v11145 = vsel %vm176, %v11113, %v10807
    %v11147 = vsel %vm176, %v11115, %v10809
    %v11149 = vsel %vm176, %v11117, %v10811
    %v11151 = vsel %vm176, %v11119, %v10813
    %v11153 = vsel %vm176, %v11121, %v10815
    %v11155 = vsel %vm176, %v11123, %v10817
    %v11157 = vsel %vm176, %v11125, %v10819
    %v11159 = vsel %vm176, %v11127, %v10821
    %v11161 = vsel %vm176, %v11129, %v10823
    %v11163 = vsel %vm176, %v11131, %v10825
    %v11165 = vsel %vm176, %v11133, %v10827
    %vm11166 = vcmask 326656
    %v11168 = vsel %vm11166, %v11135, %v10845
    %v11170 = vsel %vm11166, %v11137, %v10847
    %v11172 = vsel %vm11166, %v11139, %v10849
    %v11174 = vsel %vm11166, %v11141, %v10851
    %v11176 = vsel %vm11166, %v11143, %v10853
    %v11178 = vsel %vm11166, %v11145, %v10855
    %v11180 = vsel %vm11166, %v11147, %v10857
    %v11182 = vsel %vm11166, %v11149, %v10859
    %v11184 = vsel %vm11166, %v11151, %v10861
    %v11186 = vsel %vm11166, %v11153, %v10863
    %v11188 = vsel %vm11166, %v11155, %v10865
    %v11190 = vsel %vm11166, %v11157, %v10867
    %v11192 = vsel %vm11166, %v11159, %v10869
    %v11194 = vsel %vm11166, %v11161, %v10871
    %v11196 = vsel %vm11166, %v11163, %v10873
    %v11198 = vsel %vm11166, %v11165, %v10875
    %vm11199 = vcmask 392192
    %v11201 = vsel %vm11199, %v11168, %v10893
    %v11203 = vsel %vm11199, %v11170, %v10895
    %v11205 = vsel %vm11199, %v11172, %v10897
    %v11207 = vsel %vm11199, %v11174, %v10899
    %v11209 = vsel %vm11199, %v11176, %v10901
    %v11211 = vsel %vm11199, %v11178, %v10903
    %v11213 = vsel %vm11199, %v11180, %v10905
    %v11215 = vsel %vm11199, %v11182, %v10907
    %v11217 = vsel %vm11199, %v11184, %v10909
    %v11219 = vsel %vm11199, %v11186, %v10911
    %v11221 = vsel %vm11199, %v11188, %v10913
    %v11223 = vsel %vm11199, %v11190, %v10915
    %v11225 = vsel %vm11199, %v11192, %v10917
    %v11227 = vsel %vm11199, %v11194, %v10919
    %v11229 = vsel %vm11199, %v11196, %v10921
    %v11231 = vsel %vm11199, %v11198, %v10923
    %vm11232 = vcmask 457728
    %v11234 = vsel %vm11232, %v11201, %v10941
    %v11236 = vsel %vm11232, %v11203, %v10943
    %v11238 = vsel %vm11232, %v11205, %v10945
    %v11240 = vsel %vm11232, %v11207, %v10947
    %v11242 = vsel %vm11232, %v11209, %v10949
    %v11244 = vsel %vm11232, %v11211, %v10951
    %v11246 = vsel %vm11232, %v11213, %v10953
    %v11248 = vsel %vm11232, %v11215, %v10955
    %v11250 = vsel %vm11232, %v11217, %v10957
    %v11252 = vsel %vm11232, %v11219, %v10959
    %v11254 = vsel %vm11232, %v11221, %v10961
    %v11256 = vsel %vm11232, %v11223, %v10963
    %v11258 = vsel %vm11232, %v11225, %v10965
    %v11260 = vsel %vm11232, %v11227, %v10967
    %v11262 = vsel %vm11232, %v11229, %v10969
    %v11264 = vsel %vm11232, %v11231, %v10971
    %vm11265 = vcmask 523264
    %v11267 = vsel %vm11265, %v11234, %v10989
    %v11269 = vsel %vm11265, %v11236, %v10991
    %v11271 = vsel %vm11265, %v11238, %v10993
    %v11273 = vsel %vm11265, %v11240, %v10995
    %v11275 = vsel %vm11265, %v11242, %v10997
    %v11277 = vsel %vm11265, %v11244, %v10999
    %v11279 = vsel %vm11265, %v11246, %v11001
    %v11281 = vsel %vm11265, %v11248, %v11003
    %v11283 = vsel %vm11265, %v11250, %v11005
    %v11285 = vsel %vm11265, %v11252, %v11007
    %v11287 = vsel %vm11265, %v11254, %v11009
    %v11289 = vsel %vm11265, %v11256, %v11011
    %v11291 = vsel %vm11265, %v11258, %v11013
    %v11293 = vsel %vm11265, %v11260, %v11015
    %v11295 = vsel %vm11265, %v11262, %v11017
    %v11297 = vsel %vm11265, %v11264, %v11019
    %v11298 = vld [vmem:[%s2 + $0x40] sm:$0xf]
    %v11299 = vld [vmem:[%s2 + $0x44] sm:$0xf]
    %v11300 = vld [vmem:[%s2 + $0x48] sm:$0xf]
    %v11301 = vld [vmem:[%s2 + $0x4c] sm:$0xf]
    %v11302 = vld [vmem:[%s2 + $0x50] sm:$0xf]
    %v11303 = vld [vmem:[%s2 + $0x54] sm:$0xf]
    %v11304 = vld [vmem:[%s2 + $0x58] sm:$0xf]
    %v11305 = vld [vmem:[%s2 + $0x5c] sm:$0xf]
    %v11306 = vld [vmem:[%s2 + $0x60] sm:$0xf]
    %v11307 = vlaneseq
    %v11308 = vshrl.u32 %v11307, 7
    %v11309 = vsub.s32 0, %v11308
    %v11310 = vrot.slane %v7882, %v11309
    %v11320 = vunpack.c.l.b16 %v11298
    %v11321 = vunpack.c.l.b16 %v11299
    %v11322 = vunpack.c.l.b16 %v11300
    %v11323 = vunpack.c.l.b16 %v11301
    %v11324 = vunpack.c.l.b16 %v11302
    %v11325 = vunpack.c.l.b16 %v11303
    %v11326 = vunpack.c.l.b16 %v11304
    %v11327 = vunpack.c.l.b16 %v11305
    %v11328 = vunpack.c.l.b16 %v11306
    %v11329 = vpack.c.b16 %v11321, %v11320
    %v11330 = vpack.c.b16 %v11323, %v11322
    %v11331 = vpack.c.b16 %v11325, %v11324
    %v11332 = vpack.c.b16 %v11327, %v11326
    %v11333 = vpack.c.b16 %v11328, %v11328
    %vm11338 = vcmask 588800
    %v11339 = vsel %vm11338, %v11267, 0
    %v11341 = vsel %vm11338, %v11269, 0
    %v11343 = vsel %vm11338, %v11271, 0
    %v11345 = vsel %vm11338, %v11273, 0
    %v11347 = vsel %vm11338, %v11275, 0
    %v11349 = vsel %vm11338, %v11277, 0
    %v11351 = vsel %vm11338, %v11279, 0
    %v11353 = vsel %vm11338, %v11281, 0
    %v11355 = vsel %vm11338, %v11283, 0
    %v11357 = vsel %vm11338, %v11285, 0
    %v11359 = vsel %vm11338, %v11287, 0
    %v11361 = vsel %vm11338, %v11289, 0
    %v11363 = vsel %vm11338, %v11291, 0
    %v11365 = vsel %vm11338, %v11293, 0
    %v11367 = vsel %vm11338, %v11295, 0
    %v11369 = vsel %vm11338, %v11297, 0
    %v11372 = vsel %vm2730, %v11333, 0
    %11374 = vmatprep.subr.bf16.mxu0 0
    %11375 = vmatpush1.bf16.msra.mxu0 0
    %11376 = vmatprep.subr.bf16.mxu0 0
    %11377 = vmatpush1.bf16.msra.mxu0 0
    %11378 = vmatprep.subr.bf16.mxu0 0
    %11379 = vmatpush1.bf16.msra.mxu0 0
    %11380 = vmatprep.subr.bf16.mxu0 0
    %11381 = vmatpush1.bf16.msra.mxu0 %v11372
    %11382 = vmatprep.subr.bf16.mxu0 0
    %11383 = vmatpush1.bf16.msra.mxu0 %v11332
    %11384 = vmatprep.subr.bf16.mxu0 0
    %11385 = vmatpush1.bf16.msra.mxu0 %v11331
    %11386 = vmatprep.subr.bf16.mxu0 0
    %11387 = vmatpush1.bf16.msra.mxu0 %v11330
    %11388 = vmatprep.subr.bf16.mxu0 0
    %11389 = vmatpush1.bf16.msra.mxu0 %v11329
    %11390 = vmatprep.subr.bf16.mxu0 0
    %11391 = vmatpush2.bf16.msra.mxu0 0
    %11392 = vmatprep.subr.bf16.mxu0 0
    %11393 = vmatpush2.bf16.msra.mxu0 0
    %11394 = vmatprep.subr.bf16.mxu0 0
    %11395 = vmatpush2.bf16.msra.mxu0 0
    %11396 = vmatprep.subr.bf16.mxu0 0
    %11397 = vmatpush2.bf16.msra.mxu0 0
    %11398 = vmatprep.subr.bf16.mxu0 0
    %11399 = vmatpush2.bf16.msra.mxu0 0
    %11400 = vmatprep.subr.bf16.mxu0 0
    %11401 = vmatpush2.bf16.msra.mxu0 0
    %11402 = vmatprep.subr.bf16.mxu0 0
    %11403 = vmatpush2.bf16.msra.mxu0 0
    %11404 = vmatprep.subr.bf16.mxu0 0
    %11405 = vmatpush2.bf16.msra.mxu0 0
    %11406 = vmatprep.mubr.bf16.mxu0 0
    %11407 = vmatmul.mubr.bf16.gmra.mxu0 %v11339
    %v11408 = vpop.f32.mrf.mxu0
    %v11409 = vadd.f32 %v11310, %v11408
    %v11410 = vpop.f32.mrf.mxu0
    %v11411 = vpop.f32.mrf.mxu0
    %v11412 = vadd.f32 %v11310, %v11411
    %v11413 = vpop.f32.mrf.mxu0
    %11414 = vmatprep.mubr.bf16.mxu0 0
    %11415 = vmatmul.mubr.bf16.gmra.mxu0 %v11341
    %v11416 = vpop.f32.mrf.mxu0
    %v11417 = vadd.f32 %v11310, %v11416
    %v11418 = vpop.f32.mrf.mxu0
    %v11419 = vpop.f32.mrf.mxu0
    %v11420 = vadd.f32 %v11310, %v11419
    %v11421 = vpop.f32.mrf.mxu0
    %11422 = vmatprep.mubr.bf16.mxu0 0
    %11423 = vmatmul.mubr.bf16.gmra.mxu0 %v11343
    %v11424 = vpop.f32.mrf.mxu0
    %v11425 = vadd.f32 %v11310, %v11424
    %v11426 = vpop.f32.mrf.mxu0
    %v11427 = vpop.f32.mrf.mxu0
    %v11428 = vadd.f32 %v11310, %v11427
    %v11429 = vpop.f32.mrf.mxu0
    %11430 = vmatprep.mubr.bf16.mxu0 0
    %11431 = vmatmul.mubr.bf16.gmra.mxu0 %v11345
    %v11432 = vpop.f32.mrf.mxu0
    %v11433 = vadd.f32 %v11310, %v11432
    %v11434 = vpop.f32.mrf.mxu0
    %v11435 = vpop.f32.mrf.mxu0
    %v11436 = vadd.f32 %v11310, %v11435
    %v11437 = vpop.f32.mrf.mxu0
    %11438 = vmatprep.mubr.bf16.mxu0 0
    %11439 = vmatmul.mubr.bf16.gmra.mxu0 %v11347
    %v11440 = vpop.f32.mrf.mxu0
    %v11441 = vadd.f32 %v11310, %v11440
    %v11442 = vpop.f32.mrf.mxu0
    %v11443 = vpop.f32.mrf.mxu0
    %v11444 = vadd.f32 %v11310, %v11443
    %v11445 = vpop.f32.mrf.mxu0
    %11446 = vmatprep.mubr.bf16.mxu0 0
    %11447 = vmatmul.mubr.bf16.gmra.mxu0 %v11349
    %v11448 = vpop.f32.mrf.mxu0
    %v11449 = vadd.f32 %v11310, %v11448
    %v11450 = vpop.f32.mrf.mxu0
    %v11451 = vpop.f32.mrf.mxu0
    %v11452 = vadd.f32 %v11310, %v11451
    %v11453 = vpop.f32.mrf.mxu0
    %11454 = vmatprep.mubr.bf16.mxu0 0
    %11455 = vmatmul.mubr.bf16.gmra.mxu0 %v11351
    %v11456 = vpop.f32.mrf.mxu0
    %v11457 = vadd.f32 %v11310, %v11456
    %v11458 = vpop.f32.mrf.mxu0
    %v11459 = vpop.f32.mrf.mxu0
    %v11460 = vadd.f32 %v11310, %v11459
    %v11461 = vpop.f32.mrf.mxu0
    %11462 = vmatprep.mubr.bf16.mxu0 0
    %11463 = vmatmul.mubr.bf16.gmra.mxu0 %v11353
    %v11464 = vpop.f32.mrf.mxu0
    %v11465 = vadd.f32 %v11310, %v11464
    %v11466 = vpop.f32.mrf.mxu0
    %v11467 = vpop.f32.mrf.mxu0
    %v11468 = vadd.f32 %v11310, %v11467
    %v11469 = vpop.f32.mrf.mxu0
    %11470 = vmatprep.mubr.bf16.mxu0 0
    %11471 = vmatmul.mubr.bf16.gmra.mxu0 %v11355
    %v11472 = vpop.f32.mrf.mxu0
    %v11473 = vadd.f32 %v11310, %v11472
    %v11474 = vpop.f32.mrf.mxu0
    %v11475 = vpop.f32.mrf.mxu0
    %v11476 = vadd.f32 %v11310, %v11475
    %v11477 = vpop.f32.mrf.mxu0
    %11478 = vmatprep.mubr.bf16.mxu0 0
    %11479 = vmatmul.mubr.bf16.gmra.mxu0 %v11357
    %v11480 = vpop.f32.mrf.mxu0
    %v11481 = vadd.f32 %v11310, %v11480
    %v11482 = vpop.f32.mrf.mxu0
    %v11483 = vpop.f32.mrf.mxu0
    %v11484 = vadd.f32 %v11310, %v11483
    %v11485 = vpop.f32.mrf.mxu0
    %11486 = vmatprep.mubr.bf16.mxu0 0
    %11487 = vmatmul.mubr.bf16.gmra.mxu0 %v11359
    %v11488 = vpop.f32.mrf.mxu0
    %v11489 = vadd.f32 %v11310, %v11488
    %v11490 = vpop.f32.mrf.mxu0
    %v11491 = vpop.f32.mrf.mxu0
    %v11492 = vadd.f32 %v11310, %v11491
    %v11493 = vpop.f32.mrf.mxu0
    %11494 = vmatprep.mubr.bf16.mxu0 0
    %11495 = vmatmul.mubr.bf16.gmra.mxu0 %v11361
    %v11496 = vpop.f32.mrf.mxu0
    %v11497 = vadd.f32 %v11310, %v11496
    %v11498 = vpop.f32.mrf.mxu0
    %v11499 = vpop.f32.mrf.mxu0
    %v11500 = vadd.f32 %v11310, %v11499
    %v11501 = vpop.f32.mrf.mxu0
    %11502 = vmatprep.mubr.bf16.mxu0 0
    %11503 = vmatmul.mubr.bf16.gmra.mxu0 %v11363
    %v11504 = vpop.f32.mrf.mxu0
    %v11505 = vadd.f32 %v11310, %v11504
    %v11506 = vpop.f32.mrf.mxu0
    %v11507 = vpop.f32.mrf.mxu0
    %v11508 = vadd.f32 %v11310, %v11507
    %v11509 = vpop.f32.mrf.mxu0
    %11510 = vmatprep.mubr.bf16.mxu0 0
    %11511 = vmatmul.mubr.bf16.gmra.mxu0 %v11365
    %v11512 = vpop.f32.mrf.mxu0
    %v11513 = vadd.f32 %v11310, %v11512
    %v11514 = vpop.f32.mrf.mxu0
    %v11515 = vpop.f32.mrf.mxu0
    %v11516 = vadd.f32 %v11310, %v11515
    %v11517 = vpop.f32.mrf.mxu0
    %11518 = vmatprep.mubr.bf16.mxu0 0
    %11519 = vmatmul.mubr.bf16.gmra.mxu0 %v11367
    %v11520 = vpop.f32.mrf.mxu0
    %v11521 = vadd.f32 %v11310, %v11520
    %v11522 = vpop.f32.mrf.mxu0
    %v11523 = vpop.f32.mrf.mxu0
    %v11524 = vadd.f32 %v11310, %v11523
    %v11525 = vpop.f32.mrf.mxu0
    %11526 = vmatprep.mubr.bf16.mxu0 0
    %11527 = vmatmul.mubr.bf16.gmra.mxu0 %v11369
    %v11528 = vpop.f32.mrf.mxu0
    %v11529 = vadd.f32 %v11310, %v11528
    %v11530 = vpop.f32.mrf.mxu0
    %v11531 = vpop.f32.mrf.mxu0
    %v11532 = vadd.f32 %v11310, %v11531
    %v11533 = vpop.f32.mrf.mxu0
    %11534 = vdwg.mxu0
    %v11535 = vmax.f32 %v11409, 0.0
    %v11536 = vmax.f32 %v11412, 0.0
    %v11537 = vmax.f32 %v11417, 0.0
    %v11538 = vmax.f32 %v11420, 0.0
    %v11539 = vmax.f32 %v11425, 0.0
    %v11540 = vmax.f32 %v11428, 0.0
    %v11541 = vmax.f32 %v11433, 0.0
    %v11542 = vmax.f32 %v11436, 0.0
    %v11543 = vmax.f32 %v11441, 0.0
    %v11544 = vmax.f32 %v11444, 0.0
    %v11545 = vmax.f32 %v11449, 0.0
    %v11546 = vmax.f32 %v11452, 0.0
    %v11547 = vmax.f32 %v11457, 0.0
    %v11548 = vmax.f32 %v11460, 0.0
    %v11549 = vmax.f32 %v11465, 0.0
    %v11550 = vmax.f32 %v11468, 0.0
    %v11551 = vmax.f32 %v11473, 0.0
    %v11552 = vmax.f32 %v11476, 0.0
    %v11553 = vmax.f32 %v11481, 0.0
    %v11554 = vmax.f32 %v11484, 0.0
    %v11555 = vmax.f32 %v11489, 0.0
    %v11556 = vmax.f32 %v11492, 0.0
    %v11557 = vmax.f32 %v11497, 0.0
    %v11558 = vmax.f32 %v11500, 0.0
    %v11559 = vmax.f32 %v11505, 0.0
    %v11560 = vmax.f32 %v11508, 0.0
    %v11561 = vmax.f32 %v11513, 0.0
    %v11562 = vmax.f32 %v11516, 0.0
    %v11563 = vmax.f32 %v11521, 0.0
    %v11564 = vmax.f32 %v11524, 0.0
    %v11565 = vmax.f32 %v11529, 0.0
    %v11566 = vmax.f32 %v11532, 0.0
    %v11567 = vld [vmem:[%s1] sm:$0xf]
    %v11568 = vpack.c.bf16 %v11536, %v11535
    %v11569 = vpack.c.bf16 %v11538, %v11537
    %v11570 = vpack.c.bf16 %v11540, %v11539
    %v11571 = vpack.c.bf16 %v11542, %v11541
    %v11572 = vpack.c.bf16 %v11544, %v11543
    %v11573 = vpack.c.bf16 %v11546, %v11545
    %v11574 = vpack.c.bf16 %v11548, %v11547
    %v11575 = vpack.c.bf16 %v11550, %v11549
    %v11576 = vpack.c.bf16 %v11552, %v11551
    %v11577 = vpack.c.bf16 %v11554, %v11553
    %v11578 = vpack.c.bf16 %v11556, %v11555
    %v11579 = vpack.c.bf16 %v11558, %v11557
    %v11580 = vpack.c.bf16 %v11560, %v11559
    %v11581 = vpack.c.bf16 %v11562, %v11561
    %v11582 = vpack.c.bf16 %v11564, %v11563
    %v11583 = vpack.c.bf16 %v11566, %v11565
    %v11585 = vsel %vm11338, %v11567, 0
    %v11588 = vsel %vm11338, %v11568, 0
    %v11591 = vsel %vm11338, %v11569, 0
    %v11594 = vsel %vm11338, %v11570, 0
    %v11597 = vsel %vm11338, %v11571, 0
    %v11600 = vsel %vm11338, %v11572, 0
    %v11603 = vsel %vm11338, %v11573, 0
    %v11606 = vsel %vm11338, %v11574, 0
    %v11609 = vsel %vm11338, %v11575, 0
    %v11612 = vsel %vm11338, %v11576, 0
    %v11615 = vsel %vm11338, %v11577, 0
    %v11618 = vsel %vm11338, %v11578, 0
    %v11621 = vsel %vm11338, %v11579, 0
    %v11624 = vsel %vm11338, %v11580, 0
    %v11627 = vsel %vm11338, %v11581, 0
    %v11630 = vsel %vm11338, %v11582, 0
    %v11633 = vsel %vm11338, %v11583, 0
    %11635 = vmatprep.subr.bf16.mxu0 0
    %11636 = vmatpush1.bf16.xpose.msra.mxu0 %v11609
    %11637 = vmatprep.subr.bf16.mxu0 0
    %11638 = vmatpush1.bf16.xpose.msra.mxu0 %v11606
    %11639 = vmatprep.subr.bf16.mxu0 0
    %11640 = vmatpush1.bf16.xpose.msra.mxu0 %v11603
    %11641 = vmatprep.subr.bf16.mxu0 0
    %11642 = vmatpush1.bf16.xpose.msra.mxu0 %v11600
    %11643 = vmatprep.subr.bf16.mxu0 0
    %11644 = vmatpush1.bf16.xpose.msra.mxu0 %v11597
    %11645 = vmatprep.subr.bf16.mxu0 0
    %11646 = vmatpush1.bf16.xpose.msra.mxu0 %v11594
    %11647 = vmatprep.subr.bf16.mxu0 0
    %11648 = vmatpush1.bf16.xpose.msra.mxu0 %v11591
    %11649 = vmatprep.subr.bf16.mxu0 0
    %11650 = vmatpush1.bf16.xpose.msra.mxu0 %v11588
    %11651 = vmatprep.subr.bf16.mxu0 0
    %11652 = vmatpush2.bf16.xpose.msra.mxu0 %v11633
    %11653 = vmatprep.subr.bf16.mxu0 0
    %11654 = vmatpush2.bf16.xpose.msra.mxu0 %v11630
    %11655 = vmatprep.subr.bf16.mxu0 0
    %11656 = vmatpush2.bf16.xpose.msra.mxu0 %v11627
    %11657 = vmatprep.subr.bf16.mxu0 0
    %11658 = vmatpush2.bf16.xpose.msra.mxu0 %v11624
    %11659 = vmatprep.subr.bf16.mxu0 0
    %11660 = vmatpush2.bf16.xpose.msra.mxu0 %v11621
    %11661 = vmatprep.subr.bf16.mxu0 0
    %11662 = vmatpush2.bf16.xpose.msra.mxu0 %v11618
    %11663 = vmatprep.subr.bf16.mxu0 0
    %11664 = vmatpush2.bf16.xpose.msra.mxu0 %v11615
    %11665 = vmatprep.subr.bf16.mxu0 0
    %11666 = vmatpush2.bf16.xpose.msra.mxu0 %v11612
    %11667 = vmatprep.mubr.bf16.mxu0 0
    %11668 = vmatmul.mubr.bf16.gmra.mxu0 %v11585
    %v11669 = vpop.f32.mrf.mxu0
    %v11670 = vadd.f32 0.0, %v11669
    %v11671 = vpop.f32.mrf.mxu0
    %v11672 = vadd.f32 0.0, %v11671
    %v11673 = vpop.f32.mrf.mxu0
    %v11674 = vpop.f32.mrf.mxu0
    %11675 = vdwg.mxu0
    %11676 = vmax.xlane.f32.xlu0 %v11670
    %v11677 = vpop.xlane.xlu0 %11676
    %v11678 = vsub.f32 %v11670, %v11677
    %v11679 = vmul.f32 %v11678, 1.442695
    %v11680 = vpow.pop %v11679
    %11681 = vadd.xlane.f32.xlu0 %v11680
    %v11682 = vpop.xlane.xlu0 %11681
    %v11683 = vrcp.pop %v11682
    %v11684 = vmul.f32 %v11682, %v11683
    %v11685 = vsub.f32 2.0, %v11684
    %v11686 = vmul.f32 %v11683, %v11685
    %v11687 = vmul.f32 %v11680, %v11686
    %11688 = vst [vmem:[%s13] sm:$0xff] %v11687
    %11689 = vmatprep.subr.mxu0 0.0
    %11690 = vmatpush1.msra.mxu0 %v126
    %11691 = vmatprep.subr.mxu0 0.0
    %11692 = vmatpush1.msra.mxu0 %v125
    %11693 = vmatprep.subr.mxu0 0.0
    %11694 = vmatpush1.msra.mxu0 %v124
    %11695 = vmatprep.subr.mxu0 0.0
    %11696 = vmatpush1.msra.mxu0 %v123
    %11697 = vmatprep.subr.mxu0 0.0
    %11698 = vmatpush1.msra.mxu0 %v122
    %11699 = vmatprep.subr.mxu0 0.0
    %11700 = vmatpush1.msra.mxu0 %v121
    %11701 = vmatprep.subr.mxu0 0.0
    %11702 = vmatpush1.msra.mxu0 %v120
    %11703 = vmatprep.subr.mxu0 0.0
    %11704 = vmatpush1.msra.mxu0 %v119
    %11705 = vmatprep.subr.mxu0 0.0
    %11706 = vmatpush1.msra.mxu0 %v118
    %11707 = vmatprep.subr.mxu0 0.0
    %11708 = vmatpush1.msra.mxu0 %v117
    %11709 = vmatprep.subr.mxu0 0.0
    %11710 = vmatpush1.msra.mxu0 %v116
    %11711 = vmatprep.subr.mxu0 0.0
    %11712 = vmatpush1.msra.mxu0 %v115
    %11713 = vmatprep.subr.mxu0 0.0
    %11714 = vmatpush1.msra.mxu0 %v114
    %11715 = vmatprep.subr.mxu0 0.0
    %11716 = vmatpush1.msra.mxu0 %v113
    %11717 = vmatprep.subr.mxu0 0.0
    %11718 = vmatpush1.msra.mxu0 %v112
    %11719 = vmatprep.subr.mxu0 0.0
    %11720 = vmatpush1.msra.mxu0 %v111
    %11721 = vmatprep.subr.mxu0 0.0
    %11722 = vmatpush2.msra.mxu0 0.0
    %11723 = vmatprep.subr.mxu0 0.0
    %11724 = vmatpush2.msra.mxu0 0.0
    %11725 = vmatprep.subr.mxu0 0.0
    %11726 = vmatpush2.msra.mxu0 0.0
    %11727 = vmatprep.subr.mxu0 0.0
    %11728 = vmatpush2.msra.mxu0 0.0
    %11729 = vmatprep.subr.mxu0 0.0
    %11730 = vmatpush2.msra.mxu0 0.0
    %11731 = vmatprep.subr.mxu0 0.0
    %11732 = vmatpush2.msra.mxu0 0.0
    %11733 = vmatprep.subr.mxu0 0.0
    %11734 = vmatpush2.msra.mxu0 0.0
    %11735 = vmatprep.subr.mxu0 0.0
    %11736 = vmatpush2.msra.mxu0 0.0
    %11737 = vmatprep.subr.mxu0 0.0
    %11738 = vmatpush2.msra.mxu0 0.0
    %11739 = vmatprep.subr.mxu0 0.0
    %11740 = vmatpush2.msra.mxu0 0.0
    %11741 = vmatprep.subr.mxu0 0.0
    %11742 = vmatpush2.msra.mxu0 0.0
    %11743 = vmatprep.subr.mxu0 0.0
    %11744 = vmatpush2.msra.mxu0 0.0
    %11745 = vmatprep.subr.mxu0 0.0
    %11746 = vmatpush2.msra.mxu0 0.0
    %11747 = vmatprep.subr.mxu0 0.0
    %11748 = vmatpush2.msra.mxu0 0.0
    %11749 = vmatprep.subr.mxu0 0.0
    %11750 = vmatpush2.msra.mxu0 0.0
    %11751 = vmatprep.subr.mxu0 0.0
    %11752 = vmatpush2.msra.mxu0 0.0
    %11753 = vmatprep.mubr.f32.mxu0 0.0
    %11754 = vmatmul.mubr.f32.gmra.mxu0 %v11687
    %v11755 = vpop.f32.mrf.mxu0
    %v11756 = vadd.f32 0.0, %v11755
    %v11757 = vpop.f32.mrf.mxu0
    %11758 = vdwg.mxu0
    %11759 = vst.msk [vmem:[#allocation11] sm:$0xff] %vm176, %v11756
    %11760 = vmax.xlane.f32.xlu0 %v11672
    %v11761 = vpop.xlane.xlu0 %11760
    %v11762 = vsub.f32 %v11672, %v11761
    %v11763 = vmul.f32 %v11762, 1.442695
    %v11764 = vpow.pop %v11763
    %11765 = vadd.xlane.f32.xlu0 %v11764
    %v11766 = vpop.xlane.xlu0 %11765
    %v11767 = vrcp.pop %v11766
    %v11768 = vmul.f32 %v11766, %v11767
    %v11769 = vsub.f32 2.0, %v11768
    %v11770 = vmul.f32 %v11767, %v11769
    %v11771 = vmul.f32 %v11764, %v11770
    %s11772 = scalar_lea.vmem %s13, 8
    %11773 = vst [vmem:[%s11772] sm:$0xff] %v11771
    %11774 = vmatprep.subr.mxu0 0.0
    %11775 = vmatpush1.msra.mxu0 %v142
    %11776 = vmatprep.subr.mxu0 0.0
    %11777 = vmatpush1.msra.mxu0 %v141
    %11778 = vmatprep.subr.mxu0 0.0
    %11779 = vmatpush1.msra.mxu0 %v140
    %11780 = vmatprep.subr.mxu0 0.0
    %11781 = vmatpush1.msra.mxu0 %v139
    %11782 = vmatprep.subr.mxu0 0.0
    %11783 = vmatpush1.msra.mxu0 %v138
    %11784 = vmatprep.subr.mxu0 0.0
    %11785 = vmatpush1.msra.mxu0 %v137
    %11786 = vmatprep.subr.mxu0 0.0
    %11787 = vmatpush1.msra.mxu0 %v136
    %11788 = vmatprep.subr.mxu0 0.0
    %11789 = vmatpush1.msra.mxu0 %v135
    %11790 = vmatprep.subr.mxu0 0.0
    %11791 = vmatpush1.msra.mxu0 %v134
    %11792 = vmatprep.subr.mxu0 0.0
    %11793 = vmatpush1.msra.mxu0 %v133
    %11794 = vmatprep.subr.mxu0 0.0
    %11795 = vmatpush1.msra.mxu0 %v132
    %11796 = vmatprep.subr.mxu0 0.0
    %11797 = vmatpush1.msra.mxu0 %v131
    %11798 = vmatprep.subr.mxu0 0.0
    %11799 = vmatpush1.msra.mxu0 %v130
    %11800 = vmatprep.subr.mxu0 0.0
    %11801 = vmatpush1.msra.mxu0 %v129
    %11802 = vmatprep.subr.mxu0 0.0
    %11803 = vmatpush1.msra.mxu0 %v128
    %11804 = vmatprep.subr.mxu0 0.0
    %11805 = vmatpush1.msra.mxu0 %v127
    %11806 = vmatprep.subr.mxu0 0.0
    %11807 = vmatpush2.msra.mxu0 0.0
    %11808 = vmatprep.subr.mxu0 0.0
    %11809 = vmatpush2.msra.mxu0 0.0
    %11810 = vmatprep.subr.mxu0 0.0
    %11811 = vmatpush2.msra.mxu0 0.0
    %11812 = vmatprep.subr.mxu0 0.0
    %11813 = vmatpush2.msra.mxu0 0.0
    %11814 = vmatprep.subr.mxu0 0.0
    %11815 = vmatpush2.msra.mxu0 0.0
    %11816 = vmatprep.subr.mxu0 0.0
    %11817 = vmatpush2.msra.mxu0 0.0
    %11818 = vmatprep.subr.mxu0 0.0
    %11819 = vmatpush2.msra.mxu0 0.0
    %11820 = vmatprep.subr.mxu0 0.0
    %11821 = vmatpush2.msra.mxu0 0.0
    %11822 = vmatprep.subr.mxu0 0.0
    %11823 = vmatpush2.msra.mxu0 0.0
    %11824 = vmatprep.subr.mxu0 0.0
    %11825 = vmatpush2.msra.mxu0 0.0
    %11826 = vmatprep.subr.mxu0 0.0
    %11827 = vmatpush2.msra.mxu0 0.0
    %11828 = vmatprep.subr.mxu0 0.0
    %11829 = vmatpush2.msra.mxu0 0.0
    %11830 = vmatprep.subr.mxu0 0.0
    %11831 = vmatpush2.msra.mxu0 0.0
    %11832 = vmatprep.subr.mxu0 0.0
    %11833 = vmatpush2.msra.mxu0 0.0
    %11834 = vmatprep.subr.mxu0 0.0
    %11835 = vmatpush2.msra.mxu0 0.0
    %11836 = vmatprep.subr.mxu0 0.0
    %11837 = vmatpush2.msra.mxu0 0.0
    %11838 = vmatprep.mubr.f32.mxu0 0.0
    %11839 = vmatmul.mubr.f32.gmra.mxu0 %v11771
    %v11840 = vpop.f32.mrf.mxu0
    %v11841 = vadd.f32 0.0, %v11840
    %v11842 = vpop.f32.mrf.mxu0
    %11843 = vdwg.mxu0
    %s11844 = scalar_lea.vmem [#allocation11], 8
    %11845 = vst.msk [vmem:[%s11844] sm:$0xff] %vm176, %v11841
    // Predicated region
    $region70: #{_forward_impl.1} parent=1 // pred_check
      _
    $region71: #{_forward_impl.1} parent=1 // pred_check_branch
      %11847 = sbr.rel (0) target = $region73
    $region72: #{_forward_impl.1} parent=1 // pred_region
      %s11849 = ssub.s32 256, 256
      %11850 = vsyncadd [#allocation4], %s11849
      %s11851 = sshll.u32 [#allocation11], 4
      %s11852 = int_to_ptr.vmem [resolvable:$true] %s11851
      %11857 = dma.vmem_to_hbm [thread:$0]  %s11852, 256, %s12, [#allocation4], 128, 128, 8
    $region73: #{_forward_impl.1} parent=1 // pred_fallthru
      _
    // Predicated region
    $region74: #{_forward_impl.1} parent=1 // pred_check
      _
    $region75: #{_forward_impl.1} parent=1 // pred_check_branch
      %11859 = sbr.rel (0) target = $region77
    $region76: #{_forward_impl.1} parent=1 // pred_region
      _
    $region77: #{_forward_impl.1} parent=1 // pred_fallthru
      _
    // Predicated region
    $region78: #{_forward_impl.1} parent=1 // pred_check
      _
    $region79: #{_forward_impl.1} parent=1 // pred_check_branch
      %11861 = sbr.rel (0) target = $region81
    $region80: #{_forward_impl.1} parent=1 // pred_region
      %11862 = dma.done [#allocation4], 256
    $region81: #{_forward_impl.1} parent=1 // pred_fallthru
      _
    // Predicated region
    $region82: #{_forward_impl.1} parent=1 // pred_check
      _
    $region83: #{_forward_impl.1} parent=1 // pred_check_branch
      %11864 = sbr.rel (0) target = $region85
    $region84: #{_forward_impl.1} parent=1 // pred_region
      _
    $region85: #{_forward_impl.1} parent=1 // pred_fallthru
      _
    %11865 = vsyncpa [#allocation3], 1
    %11866 = vsyncpa [#allocation6], 1
    %11867 = vsyncpa [#allocation9], 1
    %11868 = vsyncpa [#allocation4], 1

</llo_original>
